<compile_context>
chip_gen: v7x
topology: tpu7x:2x2x1
jax: 0.10.0
libtpu: 0.0.40
codegen_flags: <defaults>
</compile_context>

<pallas_src>
import functools
import numpy as np
import jax
import jax.numpy as jnp
from jax import lax
from jax.experimental import pallas as pl
from jax.experimental.pallas import tpu as pltpu

EPS_BN = 1e-5     # PyTorch BatchNorm1d default eps
EPS_NORM = 1e-6   # the +1e-06 in the norm denominators of CustomCLIP.forward

NFEAT = 300       # word-embedding width (Projection input)
HID = 600         # Projection.layer1 width
D = 1024          # Projection.layer2 width == CLIP feature dim


def _round_up(x, m):
    return ((x + m - 1) // m) * m


def _full_spec(shape):
    return pl.BlockSpec(shape, lambda i: (0,) * len(shape))


# ----------------------------------------------------------------------------
# Kernel 1: K-tiled visual backbone Linear (flattened image -> D features)
# ----------------------------------------------------------------------------

def _linear_tiled_kernel(x_ref, w_ref, b_ref, o_ref, acc_ref):
    k = pl.program_id(1)

    @pl.when(k == 0)
    def _():
        acc_ref[...] = jnp.zeros_like(acc_ref)

    # cast x to the (possibly bf16) streaming weight dtype; accumulate in f32
    acc_ref[...] += jnp.dot(x_ref[...].astype(w_ref.dtype), w_ref[...],
                            preferred_element_type=jnp.float32)

    @pl.when(k == pl.num_programs(1) - 1)
    def _():
        o_ref[...] = acc_ref[...] + b_ref[...]


def linear_tiled(x, w, b, *, tk=4096, tn=None):
    """y = x @ w + b, streaming the (K, M) weight through VMEM in K tiles.

    tn=None -> full output width (contiguous weight DMA rows; best on the
    single-TC v5e/v6e).  Pass tn = M // 2 to give v7x's two TensorCores a
    parallel output axis.
    """
    n, k = x.shape
    k2, m = w.shape
    assert k == k2
    if tn is None or m % tn != 0:
        tn = m
    # Zero-padding the contraction dim is exact (padded products are 0).
    k_pad = _round_up(k, 128)
    tk = min(tk, k_pad)
    k_pad = _round_up(k_pad, tk)
    if k_pad != k:
        x = jnp.pad(x, ((0, 0), (0, k_pad - k)))
        w = jnp.pad(w, ((0, k_pad - k), (0, 0)))
    grid = (m // tn, k_pad // tk)   # (parallel N axis, reduction K axis last)

    wbytes = jnp.dtype(w.dtype).itemsize
    vmem_needed = (2 * tk * tn * wbytes        # double-buffered weight tile
                   + 2 * n * tk * 4            # double-buffered x tile
                   + 4 * n * tn * 4            # accumulator + bias + output
                   + (2 << 20))                # slack for compiler scratch
    vmem_limit = max(int(vmem_needed), 32 * 1024 * 1024)

    return pl.pallas_call(
        _linear_tiled_kernel,
        grid=grid,
        out_shape=jax.ShapeDtypeStruct((n, m), jnp.float32),
        in_specs=[
            pl.BlockSpec((n, tk), lambda j, kk: (0, kk)),
            pl.BlockSpec((tk, tn), lambda j, kk: (kk, j)),
            pl.BlockSpec((1, tn), lambda j, kk: (0, j)),
        ],
        out_specs=pl.BlockSpec((n, tn), lambda j, kk: (0, j)),
        scratch_shapes=[pltpu.VMEM((n, tn), jnp.float32)],
        compiler_params=pltpu.CompilerParams(
            dimension_semantics=("parallel", "arbitrary"),
            vmem_limit_bytes=vmem_limit),
    )(x, w, b.reshape(1, m).astype(jnp.float32))


# ----------------------------------------------------------------------------
# Kernel 2: fused dual prompt learner + CLIP cosine logits (single launch)
# ----------------------------------------------------------------------------

def _prompt_logits_kernel(scale_ref, img_ref,
                          ecat_ref, w1c_ref, b1c_ref, w2c_ref, b2c_ref,
                          ssqc_ref, nzc_ref,
                          edom_ref, w1d_ref, b1d_ref, w2d_ref, b2d_ref,
                          ssqd_ref, nzd_ref,
                          logits_ref, txtn_ref, *, n_cls, n_dom, c_pad):
    def learner(e, w1, b1, w2, b2, ssq, nz):
        # Projection: h = sigmoid(BN1(L1(x))); y = relu(BN2(L2(h)))
        # (eval-mode BN folded into w/b on the host)
        h = jax.nn.sigmoid(
            jnp.dot(e, w1, preferred_element_type=jnp.float32) + b1)
        y = jnp.maximum(
            jnp.dot(h, w2, preferred_element_type=jnp.float32) + b2, 0.0)
        # TODO(synk): verify against the original Bayes-CAL PromptLearner
        # whether the reparameterized sample uses sigma or sigma**2; sigma**2
        # (precomputed on host as ctx_sigma_sq) kept from the original port.
        return y + ssq * nz

    y_cat = learner(ecat_ref[...], w1c_ref[...], b1c_ref[...],
                    w2c_ref[...], b2c_ref[...], ssqc_ref[...], nzc_ref[...])
    y_dom = learner(edom_ref[...], w1d_ref[...], b1d_ref[...],
                    w2d_ref[...], b2d_ref[...], ssqd_ref[...], nzd_ref[...])
    d = y_cat.shape[1]
    n_pad = c_pad - (n_cls + n_dom)
    # Build the padded text slab in registers; ONE unmasked full-tile store.
    txt = jnp.concatenate(
        [y_cat, y_dom, jnp.zeros((n_pad, d), jnp.float32)], axis=0)

    # x / (||x|| + 1e-6), reciprocal on the EUP slot (frees VALU divides).
    txt_n = txt * pl.reciprocal(
        jnp.sqrt(jnp.sum(txt * txt, axis=-1, keepdims=True)) + EPS_NORM,
        approx=True)
    img = img_ref[...]
    img_n = img * pl.reciprocal(
        jnp.sqrt(jnp.sum(img * img, axis=-1, keepdims=True)) + EPS_NORM,
        approx=True)

    scale = scale_ref[0]          # exp(logit_scale), precomputed, in SMEM
    # transposed-RHS contraction straight on the MXU (no explicit txt_n.T)
    logits_ref[...] = scale * lax.dot_general(
        img_n, txt_n, dimension_numbers=(((1,), (1,)), ((), ())),
        preferred_element_type=jnp.float32)
    txtn_ref[...] = txt_n


def prompt_logits(img_feats, pc, pd, noise_cat, noise_dom, scale):
    n_cls = pc["embeddings"].shape[0]
    n_dom = pd["embeddings"].shape[0]
    d = pc["w2"].shape[1]
    b = img_feats.shape[0]
    c_pad = _round_up(n_cls + n_dom, 128)   # lane-dense logits output slab

    args = [
        img_feats,
        pc["embeddings"], pc["w1"], pc["b1"].reshape(1, -1),
        pc["w2"], pc["b2"].reshape(1, -1), pc["ctx_sigma_sq"], noise_cat,
        pd["embeddings"], pd["w1"], pd["b1"].reshape(1, -1),
        pd["w2"], pd["b2"].reshape(1, -1), pd["ctx_sigma_sq"], noise_dom,
    ]
    kernel = functools.partial(_prompt_logits_kernel,
                               n_cls=n_cls, n_dom=n_dom, c_pad=c_pad)
    logits, txtn = pl.pallas_call(
        kernel,
        grid=(1,),
        out_shape=(jax.ShapeDtypeStruct((b, c_pad), jnp.float32),
                   jax.ShapeDtypeStruct((c_pad, d), jnp.float32)),
        in_specs=[pl.BlockSpec(memory_space=pltpu.MemorySpace.SMEM)]
                 + [_full_spec(a.shape) for a in args],
        out_specs=(_full_spec((b, c_pad)), _full_spec((c_pad, d))),
    )(scale.reshape(1), *args)
    return logits, txtn


# ------------------------- model params / folding ---------------------------

def _torch_linear_init(key, fan_in, fan_out):
    kw, kb = jax.random.split(key)
    bound = 1.0 / np.sqrt(fan_in)
    w = jax.random.uniform(kw, (fan_in, fan_out), jnp.float32, -bound, bound)
    b = jax.random.uniform(kb, (fan_out,), jnp.float32, -bound, bound)
    return w, b


def init_prompt_learner(key, n_cls, sigma=1e-5):
    k_emb, k_l1, k_l2 = jax.random.split(key, 3)
    # TODO(synk): real module does torch.load('/DATA/NICO_*.pth') for word2vec
    # embeddings; replaced with a deterministic random init of the same shape.
    embeddings = jax.random.normal(k_emb, (n_cls, NFEAT), jnp.float32)
    w1, b1 = _torch_linear_init(k_l1, NFEAT, HID)
    w2, b2 = _torch_linear_init(k_l2, HID, D)
    return dict(
        embeddings=embeddings,
        w1=w1, b1=b1,
        bn1_g=jnp.ones((HID,), jnp.float32), bn1_b=jnp.zeros((HID,), jnp.float32),
        bn1_m=jnp.zeros((HID,), jnp.float32), bn1_v=jnp.ones((HID,), jnp.float32),
        w2=w2, b2=b2,
        bn2_g=jnp.ones((D,), jnp.float32), bn2_b=jnp.zeros((D,), jnp.float32),
        bn2_m=jnp.zeros((D,), jnp.float32), bn2_v=jnp.ones((D,), jnp.float32),
        ctx_sigma=sigma * jnp.ones((n_cls, D), jnp.float32),
    )


def init_custom_clip(key, n_cls, n_dom, img_flat_dim):
    k_cat, k_dom, k_vis = jax.random.split(key, 3)
    vis_w, vis_b = _torch_linear_init(k_vis, img_flat_dim, D)
    return dict(
        pl_category=init_prompt_learner(k_cat, n_cls),
        pl_context=init_prompt_learner(k_dom, n_dom),
        # TODO(synk): clip_model.visual is an external pretrained encoder;
        # modeled here as a single Linear on the flattened NCHW image.
        vis_w=vis_w, vis_b=vis_b,
        logit_scale=jnp.asarray(np.log(1.0 / 0.07), jnp.float32),
    )


def _fold_linear_bn(w, b, gamma, beta, mean, var):
    # eval-mode BatchNorm1d folded into the preceding Linear:
    #   BN(x@W + b) = x @ (W*s) + ((b-mean)*s + beta),  s = gamma*rsqrt(var+eps)
    s = gamma * lax.rsqrt(var + EPS_BN)
    return w * s[None, :], (b - mean) * s + beta


def fold_prompt_learner(p):
    # TODO(synk): BN is modeled in inference mode (running stats); train-mode
    # batch statistics of the PyTorch module are not reproduced.
    w1, b1 = _fold_linear_bn(p["w1"], p["b1"], p["bn1_g"], p["bn1_b"],
                             p["bn1_m"], p["bn1_v"])
    w2, b2 = _fold_linear_bn(p["w2"], p["b2"], p["bn2_g"], p["bn2_b"],
                             p["bn2_m"], p["bn2_v"])
    return dict(embeddings=p["embeddings"], w1=w1, b1=b1, w2=w2, b2=b2,
                ctx_sigma_sq=p["ctx_sigma"] ** 2)   # sigma**2 precomputed once


def fold_custom_clip(params, *, vis_weight_dtype=jnp.float32):
    # vis_weight_dtype=jnp.bfloat16 halves the dominant HBM weight stream
    # (~2x end-to-end on the visual matmul); numerics change slightly, so the
    # default stays float32.
    return dict(
        pl_category=fold_prompt_learner(params["pl_category"]),
        pl_context=fold_prompt_learner(params["pl_context"]),
        vis_w=params["vis_w"].astype(vis_weight_dtype), vis_b=params["vis_b"],
        logit_scale=params["logit_scale"],
    )


# --------------------------------- forward ----------------------------------

def custom_clip_forward(params, image, key):
    """params must be the BN-folded params from fold_custom_clip()."""
    b = image.shape[0]
    # layout: NCHW image flattened for the linear backbone stand-in.
    x = image.reshape(b, -1).astype(jnp.float32)
    image_features = linear_tiled(x, params["vis_w"], params["vis_b"])  # (B, 1024)

    pc, pd = params["pl_category"], params["pl_context"]
    n_cls = pc["embeddings"].shape[0]
    n_dom = pd["embeddings"].shape[0]

    # TODO(synk): noise could be drawn in-kernel (pltpu.prng_seed +
    # stateful_normal) to remove two Threefry launches; kept host-side so the
    # sampling distribution exactly matches jax.random.normal.
    k1, k2 = jax.random.split(key)
    noise_cat = jax.random.normal(k1, (n_cls, D), jnp.float32)
    noise_dom = jax.random.normal(k2, (n_dom, D), jnp.float32)

    # ONE fused kernel: both prompt learners + both logit sets; the ctx slab
    # stays in VMEM, exp(logit_scale) precomputed and passed through SMEM.
    scale = jnp.exp(params["logit_scale"])
    logits_all, txtn_all = prompt_logits(
        image_features, pc, pd, noise_cat, noise_dom, scale)

    logits_category = logits_all[:, :n_cls]
    logits_context = logits_all[:, n_cls:n_cls + n_dom]
    text_features_category = txtn_all[:n_cls]
    text_features_context = txtn_all[n_cls:n_cls + n_dom]

    # image_features is returned un-normalized, matching the PyTorch module.
    # (requires_grad_ has no forward-value effect; omitted.)
    return [logits_category, logits_context,
            text_features_category, text_features_context, image_features]


# ---------------------------------- main -------------------------------------

if __name__ == "__main__":
    key = jax.random.PRNGKey(0)
    k_param, k_img, k_noise = jax.random.split(key, 3)

    B, C, H, W = 2, 3, 16, 16
    N_CLS, N_DOM = 4, 3

    raw_params = init_custom_clip(k_param, N_CLS, N_DOM, C * H * W)
    params = fold_custom_clip(raw_params)        # fold BN once, host-side
    image = jax.random.normal(k_img, (B, C, H, W), jnp.float32)

    forward = jax.jit(custom_clip_forward)
    outputs = forward(params, image, k_noise)
    outputs = jax.block_until_ready(outputs)

    logits_cat, logits_ctx, txt_cat, txt_ctx, img_feats = outputs
    assert logits_cat.shape == (B, N_CLS)
    assert logits_ctx.shape == (B, N_DOM)
    assert txt_cat.shape == (N_CLS, D)
    assert txt_ctx.shape == (N_DOM, D)
    assert img_feats.shape == (B, D)
    assert all(bool(jnp.all(jnp.isfinite(o))) for o in outputs)

    print("KERNEL_OK")
</pallas_src>

<mosaic_0001>
module attributes {stable_mosaic.version = 11 : i64} {
  func.func @_linear_tiled_kernel(%arg0: i32, %arg1: i32, %arg2: memref<2x768xf32, #tpu.memory_space<vmem>>, %arg3: memref<768x1024xf32, #tpu.memory_space<vmem>>, %arg4: memref<1x1024xf32, #tpu.memory_space<vmem>>, %arg5: memref<2x1024xf32, #tpu.memory_space<vmem>>, %arg6: memref<2x1024xf32, #tpu.memory_space<vmem>>) attributes {dimension_semantics = [#tpu.dimension_semantics<parallel>, #tpu.dimension_semantics<arbitrary>], iteration_bounds = array<i64: 1, 1>, scalar_prefetch = 0 : i64, scratch_operands = 1 : i64, tpu.core_type = #tpu.core_type<tc>, window_params = [{transform_indices = @transform_0, window_bounds = array<i64: 2, 768>}, {transform_indices = @transform_1, window_bounds = array<i64: 768, 1024>}, {transform_indices = @transform_2, window_bounds = array<i64: 1, 1024>}, {transform_indices = @transform_3, window_bounds = array<i64: 2, 1024>}]} {
    %c0_i32 = arith.constant 0 : i32
    %0 = arith.cmpi eq, %arg1, %c0_i32 : i32
    %1 = arith.extui %0 : i1 to i32
    %c0_i32_0 = arith.constant 0 : i32
    %2 = arith.cmpi ne, %1, %c0_i32_0 : i32
    scf.if %2 {
      %cst_10 = arith.constant 0.000000e+00 : f32
      %12 = vector.broadcast %cst_10 : f32 to vector<2x1024xf32>
      %c0_11 = arith.constant 0 : index
      %c0_12 = arith.constant 0 : index
      %13 = vector.load %arg6[%c0_11, %c0_12] : memref<2x1024xf32, #tpu.memory_space<vmem>>, vector<2x1024xf32>
      tpu.vector_store %arg6[%c0_11, %c0_12], %12 {strides = array<i32>} : memref<2x1024xf32, #tpu.memory_space<vmem>>, vector<2x1024xf32>,
    } else {
    }
    %c0 = arith.constant 0 : index
    %c0_1 = arith.constant 0 : index
    %3 = vector.load %arg6[%c0, %c0_1] : memref<2x1024xf32, #tpu.memory_space<vmem>>, vector<2x1024xf32>
    %c0_2 = arith.constant 0 : index
    %c0_3 = arith.constant 0 : index
    %4 = vector.load %arg2[%c0_2, %c0_3] : memref<2x768xf32, #tpu.memory_space<vmem>>, vector<2x768xf32>
    %c0_4 = arith.constant 0 : index
    %c0_5 = arith.constant 0 : index
    %5 = vector.load %arg3[%c0_4, %c0_5] : memref<768x1024xf32, #tpu.memory_space<vmem>>, vector<768x1024xf32>
    %cst = arith.constant dense<0.000000e+00> : vector<2x1024xf32>
    %6 = tpu.matmul %4, %5, %cst {dimension_numbers = #tpu.dot_dimension_numbers<[1], [0], [0], [1], [0, 0, 1, 1], [], []>} : vector<2x768xf32>, vector<768x1024xf32>, vector<2x1024xf32> -> vector<2x1024xf32>
    %7 = arith.addf %3, %6 : vector<2x1024xf32>
    %c0_6 = arith.constant 0 : index
    %c0_7 = arith.constant 0 : index
    %8 = vector.load %arg6[%c0_6, %c0_7] : memref<2x1024xf32, #tpu.memory_space<vmem>>, vector<2x1024xf32>
    tpu.vector_store %arg6[%c0_6, %c0_7], %7 {strides = array<i32>} : memref<2x1024xf32, #tpu.memory_space<vmem>>, vector<2x1024xf32>,
    %c0_i32_8 = arith.constant 0 : i32
    %9 = arith.cmpi eq, %arg1, %c0_i32_8 : i32
    %10 = arith.extui %9 : i1 to i32
    %c0_i32_9 = arith.constant 0 : i32
    %11 = arith.cmpi ne, %10, %c0_i32_9 : i32
    scf.if %11 {
      %c0_10 = arith.constant 0 : index
      %c0_11 = arith.constant 0 : index
      %12 = vector.load %arg6[%c0_10, %c0_11] : memref<2x1024xf32, #tpu.memory_space<vmem>>, vector<2x1024xf32>
      %c0_12 = arith.constant 0 : index
      %c0_13 = arith.constant 0 : index
      %13 = vector.load %arg4[%c0_12, %c0_13] : memref<1x1024xf32, #tpu.memory_space<vmem>>, vector<1x1024xf32>
      %14 = vector.broadcast %13 : vector<1x1024xf32> to vector<2x1024xf32>
      %15 = arith.addf %12, %14 : vector<2x1024xf32>
      %c0_14 = arith.constant 0 : index
      %c0_15 = arith.constant 0 : index
      %16 = vector.load %arg5[%c0_14, %c0_15] : memref<2x1024xf32, #tpu.memory_space<vmem>>, vector<2x1024xf32>
      tpu.vector_store %arg5[%c0_14, %c0_15], %15 {strides = array<i32>} : memref<2x1024xf32, #tpu.memory_space<vmem>>, vector<2x1024xf32>,
    } else {
    }
    return
  }
  func.func @transform_0(%arg0: i32, %arg1: i32) -> (i32, i32) {
    %c0_i32 = arith.constant 0 : i32
    %c0_i32_0 = arith.constant 0 : i32
    return %c0_i32, %arg1 : i32, i32
  }
  func.func @transform_1(%arg0: i32, %arg1: i32) -> (i32, i32) {
    %c0_i32 = arith.constant 0 : i32
    return %arg1, %arg0 : i32, i32
  }
  func.func @transform_2(%arg0: i32, %arg1: i32) -> (i32, i32) {
    %c0_i32 = arith.constant 0 : i32
    %c0_i32_0 = arith.constant 0 : i32
    return %c0_i32, %arg0 : i32, i32
  }
  func.func @transform_3(%arg0: i32, %arg1: i32) -> (i32, i32) {
    %c0_i32 = arith.constant 0 : i32
    %c0_i32_0 = arith.constant 0 : i32
    return %c0_i32, %arg0 : i32, i32
  }
}

module attributes {stable_mosaic.version = 11 : i64} {
  func.func @_prompt_logits_kernel(%arg0: i32, %arg1: memref<1xf32, #tpu.memory_space<smem>>, %arg2: memref<2x1024xf32, #tpu.memory_space<vmem>>, %arg3: memref<4x300xf32, #tpu.memory_space<vmem>>, %arg4: memref<300x600xf32, #tpu.memory_space<vmem>>, %arg5: memref<1x600xf32, #tpu.memory_space<vmem>>, %arg6: memref<600x1024xf32, #tpu.memory_space<vmem>>, %arg7: memref<1x1024xf32, #tpu.memory_space<vmem>>, %arg8: memref<4x1024xf32, #tpu.memory_space<vmem>>, %arg9: memref<4x1024xf32, #tpu.memory_space<vmem>>, %arg10: memref<3x300xf32, #tpu.memory_space<vmem>>, %arg11: memref<300x600xf32, #tpu.memory_space<vmem>>, %arg12: memref<1x600xf32, #tpu.memory_space<vmem>>, %arg13: memref<600x1024xf32, #tpu.memory_space<vmem>>, %arg14: memref<1x1024xf32, #tpu.memory_space<vmem>>, %arg15: memref<3x1024xf32, #tpu.memory_space<vmem>>, %arg16: memref<3x1024xf32, #tpu.memory_space<vmem>>, %arg17: memref<2x128xf32, #tpu.memory_space<vmem>>, %arg18: memref<128x1024xf32, #tpu.memory_space<vmem>>) attributes {dimension_semantics = [#tpu.dimension_semantics<arbitrary>], iteration_bounds = array<i64: 1>, scalar_prefetch = 0 : i64, scratch_operands = 0 : i64, tpu.core_type = #tpu.core_type<tc>, window_params = [{transform_indices = @transform_0, window_bounds = array<i64: 1>}, {pipeline_mode = #tpu.pipeline_mode<synchronous>, transform_indices = @transform_1, window_bounds = array<i64: 2, 1024>}, {pipeline_mode = #tpu.pipeline_mode<synchronous>, transform_indices = @transform_2, window_bounds = array<i64: 4, 300>}, {pipeline_mode = #tpu.pipeline_mode<synchronous>, transform_indices = @transform_3, window_bounds = array<i64: 300, 600>}, {pipeline_mode = #tpu.pipeline_mode<synchronous>, transform_indices = @transform_4, window_bounds = array<i64: 1, 600>}, {pipeline_mode = #tpu.pipeline_mode<synchronous>, transform_indices = @transform_5, window_bounds = array<i64: 600, 1024>}, {pipeline_mode = #tpu.pipeline_mode<synchronous>, transform_indices = @transform_6, window_bounds = array<i64: 1, 1024>}, {pipeline_mode = #tpu.pipeline_mode<synchronous>, transform_indices = @transform_7, window_bounds = array<i64: 4, 1024>}, {pipeline_mode = #tpu.pipeline_mode<synchronous>, transform_indices = @transform_8, window_bounds = array<i64: 4, 1024>}, {pipeline_mode = #tpu.pipeline_mode<synchronous>, transform_indices = @transform_9, window_bounds = array<i64: 3, 300>}, {pipeline_mode = #tpu.pipeline_mode<synchronous>, transform_indices = @transform_10, window_bounds = array<i64: 300, 600>}, {pipeline_mode = #tpu.pipeline_mode<synchronous>, transform_indices = @transform_11, window_bounds = array<i64: 1, 600>}, {pipeline_mode = #tpu.pipeline_mode<synchronous>, transform_indices = @transform_12, window_bounds = array<i64: 600, 1024>}, {pipeline_mode = #tpu.pipeline_mode<synchronous>, transform_indices = @transform_13, window_bounds = array<i64: 1, 1024>}, {pipeline_mode = #tpu.pipeline_mode<synchronous>, transform_indices = @transform_14, window_bounds = array<i64: 3, 1024>}, {pipeline_mode = #tpu.pipeline_mode<synchronous>, transform_indices = @transform_15, window_bounds = array<i64: 3, 1024>}, {pipeline_mode = #tpu.pipeline_mode<synchronous>, transform_indices = @transform_16, window_bounds = array<i64: 2, 128>}, {pipeline_mode = #tpu.pipeline_mode<synchronous>, transform_indices = @transform_17, window_bounds = array<i64: 128, 1024>}]} {
    %c0 = arith.constant 0 : index
    %c0_0 = arith.constant 0 : index
    %0 = vector.load %arg3[%c0, %c0_0] : memref<4x300xf32, #tpu.memory_space<vmem>>, vector<4x300xf32>
    %c0_1 = arith.constant 0 : index
    %c0_2 = arith.constant 0 : index
    %1 = vector.load %arg4[%c0_1, %c0_2] : memref<300x600xf32, #tpu.memory_space<vmem>>, vector<300x600xf32>
    %c0_3 = arith.constant 0 : index
    %c0_4 = arith.constant 0 : index
    %2 = vector.load %arg5[%c0_3, %c0_4] : memref<1x600xf32, #tpu.memory_space<vmem>>, vector<1x600xf32>
    %c0_5 = arith.constant 0 : index
    %c0_6 = arith.constant 0 : index
    %3 = vector.load %arg6[%c0_5, %c0_6] : memref<600x1024xf32, #tpu.memory_space<vmem>>, vector<600x1024xf32>
    %c0_7 = arith.constant 0 : index
    %c0_8 = arith.constant 0 : index
    %4 = vector.load %arg7[%c0_7, %c0_8] : memref<1x1024xf32, #tpu.memory_space<vmem>>, vector<1x1024xf32>
    %c0_9 = arith.constant 0 : index
    %c0_10 = arith.constant 0 : index
    %5 = vector.load %arg8[%c0_9, %c0_10] : memref<4x1024xf32, #tpu.memory_space<vmem>>, vector<4x1024xf32>
    %c0_11 = arith.constant 0 : index
    %c0_12 = arith.constant 0 : index
    %6 = vector.load %arg9[%c0_11, %c0_12] : memref<4x1024xf32, #tpu.memory_space<vmem>>, vector<4x1024xf32>
    %cst = arith.constant dense<0.000000e+00> : vector<4x600xf32>
    %7 = tpu.matmul %0, %1, %cst {dimension_numbers = #tpu.dot_dimension_numbers<[1], [0], [0], [1], [0, 0, 1, 1], [], []>} : vector<4x300xf32>, vector<300x600xf32>, vector<4x600xf32> -> vector<4x600xf32>
    %8 = vector.broadcast %2 : vector<1x600xf32> to vector<4x600xf32>
    %9 = arith.addf %7, %8 : vector<4x600xf32>
    %10 = arith.negf %9 : vector<4x600xf32>
    %11 = math.exp %10 : vector<4x600xf32>
    %cst_13 = arith.constant 1.000000e+00 : f32
    %12 = vector.broadcast %cst_13 : f32 to vector<4x600xf32>
    %13 = arith.addf %12, %11 : vector<4x600xf32>
    %14 = arith.divf %12, %13 : vector<4x600xf32>
    %cst_14 = arith.constant dense<0.000000e+00> : vector<4x1024xf32>
    %15 = tpu.matmul %14, %3, %cst_14 {dimension_numbers = #tpu.dot_dimension_numbers<[1], [0], [0], [1], [0, 0, 1, 1], [], []>} : vector<4x600xf32>, vector<600x1024xf32>, vector<4x1024xf32> -> vector<4x1024xf32>
    %16 = vector.broadcast %4 : vector<1x1024xf32> to vector<4x1024xf32>
    %17 = arith.addf %15, %16 : vector<4x1024xf32>
    %cst_15 = arith.constant 0.000000e+00 : f32
    %18 = vector.broadcast %cst_15 : f32 to vector<4x1024xf32>
    %19 = arith.maximumf %17, %18 : vector<4x1024xf32>
    %20 = arith.mulf %5, %6 : vector<4x1024xf32>
    %21 = arith.addf %19, %20 : vector<4x1024xf32>
    %c0_16 = arith.constant 0 : index
    %c0_17 = arith.constant 0 : index
    %22 = vector.load %arg10[%c0_16, %c0_17] : memref<3x300xf32, #tpu.memory_space<vmem>>, vector<3x300xf32>
    %c0_18 = arith.constant 0 : index
    %c0_19 = arith.constant 0 : index
    %23 = vector.load %arg11[%c0_18, %c0_19] : memref<300x600xf32, #tpu.memory_space<vmem>>, vector<300x600xf32>
    %c0_20 = arith.constant 0 : index
    %c0_21 = arith.constant 0 : index
    %24 = vector.load %arg12[%c0_20, %c0_21] : memref<1x600xf32, #tpu.memory_space<vmem>>, vector<1x600xf32>
    %c0_22 = arith.constant 0 : index
    %c0_23 = arith.constant 0 : index
    %25 = vector.load %arg13[%c0_22, %c0_23] : memref<600x1024xf32, #tpu.memory_space<vmem>>, vector<600x1024xf32>
    %c0_24 = arith.constant 0 : index
    %c0_25 = arith.constant 0 : index
    %26 = vector.load %arg14[%c0_24, %c0_25] : memref<1x1024xf32, #tpu.memory_space<vmem>>, vector<1x1024xf32>
    %c0_26 = arith.constant 0 : index
    %c0_27 = arith.constant 0 : index
    %27 = vector.load %arg15[%c0_26, %c0_27] : memref<3x1024xf32, #tpu.memory_space<vmem>>, vector<3x1024xf32>
    %c0_28 = arith.constant 0 : index
    %c0_29 = arith.constant 0 : index
    %28 = vector.load %arg16[%c0_28, %c0_29] : memref<3x1024xf32, #tpu.memory_space<vmem>>, vector<3x1024xf32>
    %cst_30 = arith.constant dense<0.000000e+00> : vector<3x600xf32>
    %29 = tpu.matmul %22, %23, %cst_30 {dimension_numbers = #tpu.dot_dimension_numbers<[1], [0], [0], [1], [0, 0, 1, 1], [], []>} : vector<3x300xf32>, vector<300x600xf32>, vector<3x600xf32> -> vector<3x600xf32>
    %30 = vector.broadcast %24 : vector<1x600xf32> to vector<3x600xf32>
    %31 = arith.addf %29, %30 : vector<3x600xf32>
    %32 = arith.negf %31 : vector<3x600xf32>
    %33 = math.exp %32 : vector<3x600xf32>
    %cst_31 = arith.constant 1.000000e+00 : f32
    %34 = vector.broadcast %cst_31 : f32 to vector<3x600xf32>
    %35 = arith.addf %34, %33 : vector<3x600xf32>
    %36 = arith.divf %34, %35 : vector<3x600xf32>
    %cst_32 = arith.constant dense<0.000000e+00> : vector<3x1024xf32>
    %37 = tpu.matmul %36, %25, %cst_32 {dimension_numbers = #tpu.dot_dimension_numbers<[1], [0], [0], [1], [0, 0, 1, 1], [], []>} : vector<3x600xf32>, vector<600x1024xf32>, vector<3x1024xf32> -> vector<3x1024xf32>
    %38 = vector.broadcast %26 : vector<1x1024xf32> to vector<3x1024xf32>
    %39 = arith.addf %37, %38 : vector<3x1024xf32>
    %cst_33 = arith.constant 0.000000e+00 : f32
    %40 = vector.broadcast %cst_33 : f32 to vector<3x1024xf32>
    %41 = arith.maximumf %39, %40 : vector<3x1024xf32>
    %42 = arith.mulf %27, %28 : vector<3x1024xf32>
    %43 = arith.addf %41, %42 : vector<3x1024xf32>
    %cst_34 = arith.constant 0.000000e+00 : f32
    %44 = vector.broadcast %cst_34 : f32 to vector<121x1024xf32>
    %45 = tpu.concatenate %21, %43, %44 in 0 : vector<4x1024xf32>, vector<3x1024xf32>, vector<121x1024xf32> -> vector<128x1024xf32>
    %46 = arith.mulf %45, %45 : vector<128x1024xf32>
    %cst_35 = arith.constant dense<0.000000e+00> : vector<128xf32>
    %47 = vector.multi_reduction <add>, %46, %cst_35 [1] : vector<128x1024xf32> to vector<128xf32>
    %48 = vector.shape_cast %47 : vector<128xf32> to vector<128x1xf32>
    %49 = math.sqrt %48 : vector<128x1xf32>
    %cst_36 = arith.constant 9.99999997E-7 : f32
    %50 = vector.broadcast %cst_36 : f32 to vector<128x1xf32>
    %51 = arith.addf %49, %50 : vector<128x1xf32>
    %52 = tpu.reciprocal %51 {approx = true} : vector<128x1xf32> -> vector<128x1xf32>
    %53 = vector.broadcast %52 : vector<128x1xf32> to vector<128x1024xf32>
    %54 = arith.mulf %45, %53 : vector<128x1024xf32>
    %c0_37 = arith.constant 0 : index
    %c0_38 = arith.constant 0 : index
    %55 = vector.load %arg2[%c0_37, %c0_38] : memref<2x1024xf32, #tpu.memory_space<vmem>>, vector<2x1024xf32>
    %56 = arith.mulf %55, %55 : vector<2x1024xf32>
    %cst_39 = arith.constant dense<0.000000e+00> : vector<2xf32>
    %57 = vector.multi_reduction <add>, %56, %cst_39 [1] : vector<2x1024xf32> to vector<2xf32>
    %58 = vector.shape_cast %57 : vector<2xf32> to vector<2x1xf32>
    %59 = math.sqrt %58 : vector<2x1xf32>
    %cst_40 = arith.constant 9.99999997E-7 : f32
    %60 = vector.broadcast %cst_40 : f32 to vector<2x1xf32>
    %61 = arith.addf %59, %60 : vector<2x1xf32>
    %62 = tpu.reciprocal %61 {approx = true} : vector<2x1xf32> -> vector<2x1xf32>
    %63 = vector.broadcast %62 : vector<2x1xf32> to vector<2x1024xf32>
    %64 = arith.mulf %55, %63 : vector<2x1024xf32>
    %c0_41 = arith.constant 0 : index
    %65 = memref.load %arg1[%c0_41] : memref<1xf32, #tpu.memory_space<smem>>
    %cst_42 = arith.constant dense<0.000000e+00> : vector<2x128xf32>
    %66 = tpu.matmul %64, %54, %cst_42 {dimension_numbers = #tpu.dot_dimension_numbers<[1], [1], [0], [0], [0, 0, 1, 0], [], []>} : vector<2x1024xf32>, vector<128x1024xf32>, vector<2x128xf32> -> vector<2x128xf32>
    %67 = vector.broadcast %65 : f32 to vector<2x128xf32>
    %68 = arith.mulf %67, %66 : vector<2x128xf32>
    %c0_43 = arith.constant 0 : index
    %c0_44 = arith.constant 0 : index
    %69 = vector.load %arg17[%c0_43, %c0_44] : memref<2x128xf32, #tpu.memory_space<vmem>>, vector<2x128xf32>
    tpu.vector_store %arg17[%c0_43, %c0_44], %68 {strides = array<i32>} : memref<2x128xf32, #tpu.memory_space<vmem>>, vector<2x128xf32>,
    %c0_45 = arith.constant 0 : index
    %c0_46 = arith.constant 0 : index
    %70 = vector.load %arg18[%c0_45, %c0_46] : memref<128x1024xf32, #tpu.memory_space<vmem>>, vector<128x1024xf32>
    tpu.vector_store %arg18[%c0_45, %c0_46], %54 {strides = array<i32>} : memref<128x1024xf32, #tpu.memory_space<vmem>>, vector<128x1024xf32>,
    return
  }
  func.func @transform_0(%arg0: i32) -> i32 {
    %c0_i32 = arith.constant 0 : i32
    %c0_i32_0 = arith.constant 0 : i32
    return %c0_i32 : i32
  }
  func.func @transform_1(%arg0: i32) -> (i32, i32) {
    %c0_i32 = arith.constant 0 : i32
    %c0_i32_0 = arith.constant 0 : i32
    %c0_i32_1 = arith.constant 0 : i32
    return %c0_i32, %c0_i32_0 : i32, i32
  }
  func.func @transform_2(%arg0: i32) -> (i32, i32) {
    %c0_i32 = arith.constant 0 : i32
    %c0_i32_0 = arith.constant 0 : i32
    %c0_i32_1 = arith.constant 0 : i32
    return %c0_i32, %c0_i32_0 : i32, i32
  }
  func.func @transform_3(%arg0: i32) -> (i32, i32) {
    %c0_i32 = arith.constant 0 : i32
    %c0_i32_0 = arith.constant 0 : i32
    %c0_i32_1 = arith.constant 0 : i32
    return %c0_i32, %c0_i32_0 : i32, i32
  }
  func.func @transform_4(%arg0: i32) -> (i32, i32) {
    %c0_i32 = arith.constant 0 : i32
    %c0_i32_0 = arith.constant 0 : i32
    %c0_i32_1 = arith.constant 0 : i32
    return %c0_i32, %c0_i32_0 : i32, i32
  }
  func.func @transform_5(%arg0: i32) -> (i32, i32) {
    %c0_i32 = arith.constant 0 : i32
    %c0_i32_0 = arith.constant 0 : i32
    %c0_i32_1 = arith.constant 0 : i32
    return %c0_i32, %c0_i32_0 : i32, i32
  }
  func.func @transform_6(%arg0: i32) -> (i32, i32) {
    %c0_i32 = arith.constant 0 : i32
    %c0_i32_0 = arith.constant 0 : i32
    %c0_i32_1 = arith.constant 0 : i32
    return %c0_i32, %c0_i32_0 : i32, i32
  }
  func.func @transform_7(%arg0: i32) -> (i32, i32) {
    %c0_i32 = arith.constant 0 : i32
    %c0_i32_0 = arith.constant 0 : i32
    %c0_i32_1 = arith.constant 0 : i32
    return %c0_i32, %c0_i32_0 : i32, i32
  }
  func.func @transform_8(%arg0: i32) -> (i32, i32) {
    %c0_i32 = arith.constant 0 : i32
    %c0_i32_0 = arith.constant 0 : i32
    %c0_i32_1 = arith.constant 0 : i32
    return %c0_i32, %c0_i32_0 : i32, i32
  }
  func.func @transform_9(%arg0: i32) -> (i32, i32) {
    %c0_i32 = arith.constant 0 : i32
    %c0_i32_0 = arith.constant 0 : i32
    %c0_i32_1 = arith.constant 0 : i32
    return %c0_i32, %c0_i32_0 : i32, i32
  }
  func.func @transform_10(%arg0: i32) -> (i32, i32) {
    %c0_i32 = arith.constant 0 : i32
    %c0_i32_0 = arith.constant 0 : i32
    %c0_i32_1 = arith.constant 0 : i32
    return %c0_i32, %c0_i32_0 : i32, i32
  }
  func.func @transform_11(%arg0: i32) -> (i32, i32) {
    %c0_i32 = arith.constant 0 : i32
    %c0_i32_0 = arith.constant 0 : i32
    %c0_i32_1 = arith.constant 0 : i32
    return %c0_i32, %c0_i32_0 : i32, i32
  }
  func.func @transform_12(%arg0: i32) -> (i32, i32) {
    %c0_i32 = arith.constant 0 : i32
    %c0_i32_0 = arith.constant 0 : i32
    %c0_i32_1 = arith.constant 0 : i32
    return %c0_i32, %c0_i32_0 : i32, i32
  }
  func.func @transform_13(%arg0: i32) -> (i32, i32) {
    %c0_i32 = arith.constant 0 : i32
    %c0_i32_0 = arith.constant 0 : i32
    %c0_i32_1 = arith.constant 0 : i32
    return %c0_i32, %c0_i32_0 : i32, i32
  }
  func.func @transform_14(%arg0: i32) -> (i32, i32) {
    %c0_i32 = arith.constant 0 : i32
    %c0_i32_0 = arith.constant 0 : i32
    %c0_i32_1 = arith.constant 0 : i32
    return %c0_i32, %c0_i32_0 : i32, i32
  }
  func.func @transform_15(%arg0: i32) -> (i32, i32) {
    %c0_i32 = arith.constant 0 : i32
    %c0_i32_0 = arith.constant 0 : i32
    %c0_i32_1 = arith.constant 0 : i32
    return %c0_i32, %c0_i32_0 : i32, i32
  }
  func.func @transform_16(%arg0: i32) -> (i32, i32) {
    %c0_i32 = arith.constant 0 : i32
    %c0_i32_0 = arith.constant 0 : i32
    %c0_i32_1 = arith.constant 0 : i32
    return %c0_i32, %c0_i32_0 : i32, i32
  }
  func.func @transform_17(%arg0: i32) -> (i32, i32) {
    %c0_i32 = arith.constant 0 : i32
    %c0_i32_0 = arith.constant 0 : i32
    %c0_i32_1 = arith.constant 0 : i32
    return %c0_i32, %c0_i32_0 : i32, i32
  }
}

</mosaic_0001>

<llo_original>
// kernel: custom_clip_forward.4
$region0: #{custom_clip_forward.4}
  #allocation0 [shape = 'u32[]', space=smem, size = 0x4, offset = 0x4, fixed_abs, tag = 'smem constant byte address 0x4 - core index']
  #allocation1 [shape = 'u32[144,128]{1,0:T(1,128)}', space=vmem, size = 0x12000, scoped, tag = 'internal scratch']
  #allocation2 [shape = 'f32[2,1024]{1,0:T(2,128)}', space=vmem, size = 0x2000, scoped, tag = 'scratch operand']
  %s0 = inlined_call_operand.vmem [shape: f32[2,768], index: 0, kind: input, shape index: {}]
  %s1 = inlined_call_operand.hbm [shape: f32[768,1024], index: 1, kind: input, shape index: {}]
  %s2 = inlined_call_operand.hbm [shape: f32[1,1024], index: 2, kind: input, shape index: {}]
  %s3 = inlined_call_operand.vmem [shape: f32[2,1024], index: 3, kind: output, shape index: {}]
  %s4 = sld [smem:[#allocation0]]
  $region38: #{custom_clip_forward.4} parent=0
    _
  %s6 = ssub.s32 1, %s4
  %s7 = scalar_select 0, %s6, %s4
  $region1: #{custom_clip_forward.4} parent=0
    #allocation3 [shape = 'u8[3145728]{0}', space=vmem, size = 0x300000, scoped, tag = 'input window, operand 1, single buffered']
    #allocation4 [shape = 's32[1]{0}', space=sflag, size = 0x4, scoped, tag = 'scoped memory for custom_clip_forward.4']
    #allocation5 [shape = 'u8[4096]{0}', space=vmem, size = 0x1000, scoped, tag = 'input window, operand 2, single buffered']
    #allocation6 [shape = 's32[1]{0}', space=sflag, size = 0x4, scoped, tag = 'scoped memory for custom_clip_forward.4']
    %8 = vsyncpa [#allocation4], 0
    %9 = vsyncpa [#allocation6], 0
    // Predicated region
    $region2: #{custom_clip_forward.4} parent=1 // pred_check
      _
    $region3: #{custom_clip_forward.4} parent=1 // pred_check_branch
      %11 = sbr.rel (0) target = $region5
    $region4: #{custom_clip_forward.4} parent=1 // pred_region
      _
    $region5: #{custom_clip_forward.4} parent=1 // pred_fallthru
      _
    // Predicated region
    $region6: #{custom_clip_forward.4} parent=1 // pred_check
      _
    $region7: #{custom_clip_forward.4} parent=1 // pred_check_branch
      %13 = sbr.rel (0) target = $region9
    $region8: #{custom_clip_forward.4} parent=1 // pred_region
      %s15 = ssub.s32 98304, 98304
      %16 = vsyncadd [#allocation4], %s15
      %s17 = sshll.u32 [#allocation3], 4
      %s18 = int_to_ptr.vmem [resolvable:$true] %s17
      %23 = dma.hbm_to_vmem [thread:$0]  %s1, 98304, %s18, [#allocation4], 1024, 1024, 64
    $region9: #{custom_clip_forward.4} parent=1 // pred_fallthru
      _
    // Predicated region
    $region10: #{custom_clip_forward.4} parent=1 // pred_check
      _
    $region11: #{custom_clip_forward.4} parent=1 // pred_check_branch
      %25 = sbr.rel (0) target = $region13
    $region12: #{custom_clip_forward.4} parent=1 // pred_region
      %s27 = ssub.s32 128, 128
      %28 = vsyncadd [#allocation6], %s27
      %s30 = sshll.u32 [#allocation5], 4
      %s31 = int_to_ptr.vmem [resolvable:$true] %s30
      %33 = dma.hbm_to_vmem [thread:$0]  %s2, 128, %s31, [#allocation6]
    $region13: #{custom_clip_forward.4} parent=1 // pred_fallthru
      _
    // Predicated region
    $region14: #{custom_clip_forward.4} parent=1 // pred_check
      _
    $region15: #{custom_clip_forward.4} parent=1 // pred_check_branch
      %35 = sbr.rel (0) target = $region17
    $region16: #{custom_clip_forward.4} parent=1 // pred_region
      %36 = dma.done [#allocation4], 98304
    $region17: #{custom_clip_forward.4} parent=1 // pred_fallthru
      _
    // Predicated region
    $region18: #{custom_clip_forward.4} parent=1 // pred_check
      _
    $region19: #{custom_clip_forward.4} parent=1 // pred_check_branch
      %38 = sbr.rel (0) target = $region21
    $region20: #{custom_clip_forward.4} parent=1 // pred_region
      %39 = dma.done [#allocation6], 128
    $region21: #{custom_clip_forward.4} parent=1 // pred_fallthru
      _
    %p40 = scmp.eq.s32.totalorder 0, 0
    // Predicated region
    $region22: #{custom_clip_forward.4} parent=1 // pred_check
      %p41 = pneg %p40
    $region23: #{custom_clip_forward.4} parent=1 // pred_check_branch
      %43 = sbr.rel (%p41) target = $region25
    $region24: #{custom_clip_forward.4} parent=1 // pred_region
      %44 = vst [vmem:[#allocation2] sm:$0xff] 0.0
      %45 = vst [vmem:[#allocation2 + $0x8] sm:$0xff] 0.0
    $region25: #{custom_clip_forward.4} parent=1 // pred_fallthru
      _
    %v46 = vld [vmem:[#allocation2] sm:$0xff]
    %v47 = vld [vmem:[#allocation2 + $0x8] sm:$0xff]
    %v48 = vld [vmem:[%s0] sm:$0xff]
    %v49 = vld [vmem:[%s0 + $0x8] sm:$0xf]
    %v50 = vld [vmem:[#allocation3] sm:$0xff]
    %v51 = vld [vmem:[#allocation3 + $0x8] sm:$0xff]
    %v52 = vld [vmem:[#allocation3 + $0x10] sm:$0xff]
    %v53 = vld [vmem:[#allocation3 + $0x18] sm:$0xff]
    %v54 = vld [vmem:[#allocation3 + $0x20] sm:$0xff]
    %v55 = vld [vmem:[#allocation3 + $0x28] sm:$0xff]
    %v56 = vld [vmem:[#allocation3 + $0x30] sm:$0xff]
    %v57 = vld [vmem:[#allocation3 + $0x38] sm:$0xff]
    %v58 = vld [vmem:[#allocation3 + $0x40] sm:$0xff]
    %v59 = vld [vmem:[#allocation3 + $0x48] sm:$0xff]
    %v60 = vld [vmem:[#allocation3 + $0x50] sm:$0xff]
    %v61 = vld [vmem:[#allocation3 + $0x58] sm:$0xff]
    %v62 = vld [vmem:[#allocation3 + $0x60] sm:$0xff]
    %v63 = vld [vmem:[#allocation3 + $0x68] sm:$0xff]
    %v64 = vld [vmem:[#allocation3 + $0x70] sm:$0xff]
    %v65 = vld [vmem:[#allocation3 + $0x78] sm:$0xff]
    %v66 = vld [vmem:[#allocation3 + $0x80] sm:$0xff]
    %v67 = vld [vmem:[#allocation3 + $0x88] sm:$0xff]
    %v68 = vld [vmem:[#allocation3 + $0x90] sm:$0xff]
    %v69 = vld [vmem:[#allocation3 + $0x98] sm:$0xff]
    %v70 = vld [vmem:[#allocation3 + $0xa0] sm:$0xff]
    %v71 = vld [vmem:[#allocation3 + $0xa8] sm:$0xff]
    %v72 = vld [vmem:[#allocation3 + $0xb0] sm:$0xff]
    %v73 = vld [vmem:[#allocation3 + $0xb8] sm:$0xff]
    %v74 = vld [vmem:[#allocation3 + $0xc0] sm:$0xff]
    %v75 = vld [vmem:[#allocation3 + $0xc8] sm:$0xff]
    %v76 = vld [vmem:[#allocation3 + $0xd0] sm:$0xff]
    %v77 = vld [vmem:[#allocation3 + $0xd8] sm:$0xff]
    %v78 = vld [vmem:[#allocation3 + $0xe0] sm:$0xff]
    %v79 = vld [vmem:[#allocation3 + $0xe8] sm:$0xff]
    %v80 = vld [vmem:[#allocation3 + $0xf0] sm:$0xff]
    %v81 = vld [vmem:[#allocation3 + $0xf8] sm:$0xff]
    %v82 = vld [vmem:[#allocation3 + $0x100] sm:$0xff]
    %v83 = vld [vmem:[#allocation3 + $0x108] sm:$0xff]
    %v84 = vld [vmem:[#allocation3 + $0x110] sm:$0xff]
    %v85 = vld [vmem:[#allocation3 + $0x118] sm:$0xff]
    %v86 = vld [vmem:[#allocation3 + $0x120] sm:$0xff]
    %v87 = vld [vmem:[#allocation3 + $0x128] sm:$0xff]
    %v88 = vld [vmem:[#allocation3 + $0x130] sm:$0xff]
    %v89 = vld [vmem:[#allocation3 + $0x138] sm:$0xff]
    %v90 = vld [vmem:[#allocation3 + $0x140] sm:$0xff]
    %v91 = vld [vmem:[#allocation3 + $0x148] sm:$0xff]
    %v92 = vld [vmem:[#allocation3 + $0x150] sm:$0xff]
    %v93 = vld [vmem:[#allocation3 + $0x158] sm:$0xff]
    %v94 = vld [vmem:[#allocation3 + $0x160] sm:$0xff]
    %v95 = vld [vmem:[#allocation3 + $0x168] sm:$0xff]
    %v96 = vld [vmem:[#allocation3 + $0x170] sm:$0xff]
    %v97 = vld [vmem:[#allocation3 + $0x178] sm:$0xff]
    %v98 = vld [vmem:[#allocation3 + $0x180] sm:$0xff]
    %v99 = vld [vmem:[#allocation3 + $0x188] sm:$0xff]
    %v100 = vld [vmem:[#allocation3 + $0x190] sm:$0xff]
    %v101 = vld [vmem:[#allocation3 + $0x198] sm:$0xff]
    %v102 = vld [vmem:[#allocation3 + $0x1a0] sm:$0xff]
    %v103 = vld [vmem:[#allocation3 + $0x1a8] sm:$0xff]
    %v104 = vld [vmem:[#allocation3 + $0x1b0] sm:$0xff]
    %v105 = vld [vmem:[#allocation3 + $0x1b8] sm:$0xff]
    %v106 = vld [vmem:[#allocation3 + $0x1c0] sm:$0xff]
    %v107 = vld [vmem:[#allocation3 + $0x1c8] sm:$0xff]
    %v108 = vld [vmem:[#allocation3 + $0x1d0] sm:$0xff]
    %v109 = vld [vmem:[#allocation3 + $0x1d8] sm:$0xff]
    %v110 = vld [vmem:[#allocation3 + $0x1e0] sm:$0xff]
    %v111 = vld [vmem:[#allocation3 + $0x1e8] sm:$0xff]
    %v112 = vld [vmem:[#allocation3 + $0x1f0] sm:$0xff]
    %v113 = vld [vmem:[#allocation3 + $0x1f8] sm:$0xff]
    %v114 = vld [vmem:[#allocation3 + $0x200] sm:$0xff]
    %v115 = vld [vmem:[#allocation3 + $0x208] sm:$0xff]
    %v116 = vld [vmem:[#allocation3 + $0x210] sm:$0xff]
    %v117 = vld [vmem:[#allocation3 + $0x218] sm:$0xff]
    %v118 = vld [vmem:[#allocation3 + $0x220] sm:$0xff]
    %v119 = vld [vmem:[#allocation3 + $0x228] sm:$0xff]
    %v120 = vld [vmem:[#allocation3 + $0x230] sm:$0xff]
    %v121 = vld [vmem:[#allocation3 + $0x238] sm:$0xff]
    %v122 = vld [vmem:[#allocation3 + $0x240] sm:$0xff]
    %v123 = vld [vmem:[#allocation3 + $0x248] sm:$0xff]
    %v124 = vld [vmem:[#allocation3 + $0x250] sm:$0xff]
    %v125 = vld [vmem:[#allocation3 + $0x258] sm:$0xff]
    %v126 = vld [vmem:[#allocation3 + $0x260] sm:$0xff]
    %v127 = vld [vmem:[#allocation3 + $0x268] sm:$0xff]
    %v128 = vld [vmem:[#allocation3 + $0x270] sm:$0xff]
    %v129 = vld [vmem:[#allocation3 + $0x278] sm:$0xff]
    %v130 = vld [vmem:[#allocation3 + $0x280] sm:$0xff]
    %v131 = vld [vmem:[#allocation3 + $0x288] sm:$0xff]
    %v132 = vld [vmem:[#allocation3 + $0x290] sm:$0xff]
    %v133 = vld [vmem:[#allocation3 + $0x298] sm:$0xff]
    %v134 = vld [vmem:[#allocation3 + $0x2a0] sm:$0xff]
    %v135 = vld [vmem:[#allocation3 + $0x2a8] sm:$0xff]
    %v136 = vld [vmem:[#allocation3 + $0x2b0] sm:$0xff]
    %v137 = vld [vmem:[#allocation3 + $0x2b8] sm:$0xff]
    %v138 = vld [vmem:[#allocation3 + $0x2c0] sm:$0xff]
    %v139 = vld [vmem:[#allocation3 + $0x2c8] sm:$0xff]
    %v140 = vld [vmem:[#allocation3 + $0x2d0] sm:$0xff]
    %v141 = vld [vmem:[#allocation3 + $0x2d8] sm:$0xff]
    %v142 = vld [vmem:[#allocation3 + $0x2e0] sm:$0xff]
    %v143 = vld [vmem:[#allocation3 + $0x2e8] sm:$0xff]
    %v144 = vld [vmem:[#allocation3 + $0x2f0] sm:$0xff]
    %v145 = vld [vmem:[#allocation3 + $0x2f8] sm:$0xff]
    %v146 = vld [vmem:[#allocation3 + $0x300] sm:$0xff]
    %v147 = vld [vmem:[#allocation3 + $0x308] sm:$0xff]
    %v148 = vld [vmem:[#allocation3 + $0x310] sm:$0xff]
    %v149 = vld [vmem:[#allocation3 + $0x318] sm:$0xff]
    %v150 = vld [vmem:[#allocation3 + $0x320] sm:$0xff]
    %v151 = vld [vmem:[#allocation3 + $0x328] sm:$0xff]
    %v152 = vld [vmem:[#allocation3 + $0x330] sm:$0xff]
    %v153 = vld [vmem:[#allocation3 + $0x338] sm:$0xff]
    %v154 = vld [vmem:[#allocation3 + $0x340] sm:$0xff]
    %v155 = vld [vmem:[#allocation3 + $0x348] sm:$0xff]
    %v156 = vld [vmem:[#allocation3 + $0x350] sm:$0xff]
    %v157 = vld [vmem:[#allocation3 + $0x358] sm:$0xff]
    %v158 = vld [vmem:[#allocation3 + $0x360] sm:$0xff]
    %v159 = vld [vmem:[#allocation3 + $0x368] sm:$0xff]
    %v160 = vld [vmem:[#allocation3 + $0x370] sm:$0xff]
    %v161 = vld [vmem:[#allocation3 + $0x378] sm:$0xff]
    %v162 = vld [vmem:[#allocation3 + $0x380] sm:$0xff]
    %v163 = vld [vmem:[#allocation3 + $0x388] sm:$0xff]
    %v164 = vld [vmem:[#allocation3 + $0x390] sm:$0xff]
    %v165 = vld [vmem:[#allocation3 + $0x398] sm:$0xff]
    %v166 = vld [vmem:[#allocation3 + $0x3a0] sm:$0xff]
    %v167 = vld [vmem:[#allocation3 + $0x3a8] sm:$0xff]
    %v168 = vld [vmem:[#allocation3 + $0x3b0] sm:$0xff]
    %v169 = vld [vmem:[#allocation3 + $0x3b8] sm:$0xff]
    %v170 = vld [vmem:[#allocation3 + $0x3c0] sm:$0xff]
    %v171 = vld [vmem:[#allocation3 + $0x3c8] sm:$0xff]
    %v172 = vld [vmem:[#allocation3 + $0x3d0] sm:$0xff]
    %v173 = vld [vmem:[#allocation3 + $0x3d8] sm:$0xff]
    %v174 = vld [vmem:[#allocation3 + $0x3e0] sm:$0xff]
    %v175 = vld [vmem:[#allocation3 + $0x3e8] sm:$0xff]
    %v176 = vld [vmem:[#allocation3 + $0x3f0] sm:$0xff]
    %v177 = vld [vmem:[#allocation3 + $0x3f8] sm:$0xff]
    %v178 = vld [vmem:[#allocation3 + $0x400] sm:$0xff]
    %v179 = vld [vmem:[#allocation3 + $0x408] sm:$0xff]
    %v180 = vld [vmem:[#allocation3 + $0x410] sm:$0xff]
    %v181 = vld [vmem:[#allocation3 + $0x418] sm:$0xff]
    %v182 = vld [vmem:[#allocation3 + $0x420] sm:$0xff]
    %v183 = vld [vmem:[#allocation3 + $0x428] sm:$0xff]
    %v184 = vld [vmem:[#allocation3 + $0x430] sm:$0xff]
    %v185 = vld [vmem:[#allocation3 + $0x438] sm:$0xff]
    %v186 = vld [vmem:[#allocation3 + $0x440] sm:$0xff]
    %v187 = vld [vmem:[#allocation3 + $0x448] sm:$0xff]
    %v188 = vld [vmem:[#allocation3 + $0x450] sm:$0xff]
    %v189 = vld [vmem:[#allocation3 + $0x458] sm:$0xff]
    %v190 = vld [vmem:[#allocation3 + $0x460] sm:$0xff]
    %v191 = vld [vmem:[#allocation3 + $0x468] sm:$0xff]
    %v192 = vld [vmem:[#allocation3 + $0x470] sm:$0xff]
    %v193 = vld [vmem:[#allocation3 + $0x478] sm:$0xff]
    %v194 = vld [vmem:[#allocation3 + $0x480] sm:$0xff]
    %v195 = vld [vmem:[#allocation3 + $0x488] sm:$0xff]
    %v196 = vld [vmem:[#allocation3 + $0x490] sm:$0xff]
    %v197 = vld [vmem:[#allocation3 + $0x498] sm:$0xff]
    %v198 = vld [vmem:[#allocation3 + $0x4a0] sm:$0xff]
    %v199 = vld [vmem:[#allocation3 + $0x4a8] sm:$0xff]
    %v200 = vld [vmem:[#allocation3 + $0x4b0] sm:$0xff]
    %v201 = vld [vmem:[#allocation3 + $0x4b8] sm:$0xff]
    %v202 = vld [vmem:[#allocation3 + $0x4c0] sm:$0xff]
    %v203 = vld [vmem:[#allocation3 + $0x4c8] sm:$0xff]
    %v204 = vld [vmem:[#allocation3 + $0x4d0] sm:$0xff]
    %v205 = vld [vmem:[#allocation3 + $0x4d8] sm:$0xff]
    %v206 = vld [vmem:[#allocation3 + $0x4e0] sm:$0xff]
    %v207 = vld [vmem:[#allocation3 + $0x4e8] sm:$0xff]
    %v208 = vld [vmem:[#allocation3 + $0x4f0] sm:$0xff]
    %v209 = vld [vmem:[#allocation3 + $0x4f8] sm:$0xff]
    %v210 = vld [vmem:[#allocation3 + $0x500] sm:$0xff]
    %v211 = vld [vmem:[#allocation3 + $0x508] sm:$0xff]
    %v212 = vld [vmem:[#allocation3 + $0x510] sm:$0xff]
    %v213 = vld [vmem:[#allocation3 + $0x518] sm:$0xff]
    %v214 = vld [vmem:[#allocation3 + $0x520] sm:$0xff]
    %v215 = vld [vmem:[#allocation3 + $0x528] sm:$0xff]
    %v216 = vld [vmem:[#allocation3 + $0x530] sm:$0xff]
    %v217 = vld [vmem:[#allocation3 + $0x538] sm:$0xff]
    %v218 = vld [vmem:[#allocation3 + $0x540] sm:$0xff]
    %v219 = vld [vmem:[#allocation3 + $0x548] sm:$0xff]
    %v220 = vld [vmem:[#allocation3 + $0x550] sm:$0xff]
    %v221 = vld [vmem:[#allocation3 + $0x558] sm:$0xff]
    %v222 = vld [vmem:[#allocation3 + $0x560] sm:$0xff]
    %v223 = vld [vmem:[#allocation3 + $0x568] sm:$0xff]
    %v224 = vld [vmem:[#allocation3 + $0x570] sm:$0xff]
    %v225 = vld [vmem:[#allocation3 + $0x578] sm:$0xff]
    %v226 = vld [vmem:[#allocation3 + $0x580] sm:$0xff]
    %v227 = vld [vmem:[#allocation3 + $0x588] sm:$0xff]
    %v228 = vld [vmem:[#allocation3 + $0x590] sm:$0xff]
    %v229 = vld [vmem:[#allocation3 + $0x598] sm:$0xff]
    %v230 = vld [vmem:[#allocation3 + $0x5a0] sm:$0xff]
    %v231 = vld [vmem:[#allocation3 + $0x5a8] sm:$0xff]
    %v232 = vld [vmem:[#allocation3 + $0x5b0] sm:$0xff]
    %v233 = vld [vmem:[#allocation3 + $0x5b8] sm:$0xff]
    %v234 = vld [vmem:[#allocation3 + $0x5c0] sm:$0xff]
    %v235 = vld [vmem:[#allocation3 + $0x5c8] sm:$0xff]
    %v236 = vld [vmem:[#allocation3 + $0x5d0] sm:$0xff]
    %v237 = vld [vmem:[#allocation3 + $0x5d8] sm:$0xff]
    %v238 = vld [vmem:[#allocation3 + $0x5e0] sm:$0xff]
    %v239 = vld [vmem:[#allocation3 + $0x5e8] sm:$0xff]
    %v240 = vld [vmem:[#allocation3 + $0x5f0] sm:$0xff]
    %v241 = vld [vmem:[#allocation3 + $0x5f8] sm:$0xff]
    %v242 = vld [vmem:[#allocation3 + $0x600] sm:$0xff]
    %v243 = vld [vmem:[#allocation3 + $0x608] sm:$0xff]
    %v244 = vld [vmem:[#allocation3 + $0x610] sm:$0xff]
    %v245 = vld [vmem:[#allocation3 + $0x618] sm:$0xff]
    %v246 = vld [vmem:[#allocation3 + $0x620] sm:$0xff]
    %v247 = vld [vmem:[#allocation3 + $0x628] sm:$0xff]
    %v248 = vld [vmem:[#allocation3 + $0x630] sm:$0xff]
    %v249 = vld [vmem:[#allocation3 + $0x638] sm:$0xff]
    %v250 = vld [vmem:[#allocation3 + $0x640] sm:$0xff]
    %v251 = vld [vmem:[#allocation3 + $0x648] sm:$0xff]
    %v252 = vld [vmem:[#allocation3 + $0x650] sm:$0xff]
    %v253 = vld [vmem:[#allocation3 + $0x658] sm:$0xff]
    %v254 = vld [vmem:[#allocation3 + $0x660] sm:$0xff]
    %v255 = vld [vmem:[#allocation3 + $0x668] sm:$0xff]
    %v256 = vld [vmem:[#allocation3 + $0x670] sm:$0xff]
    %v257 = vld [vmem:[#allocation3 + $0x678] sm:$0xff]
    %v258 = vld [vmem:[#allocation3 + $0x680] sm:$0xff]
    %v259 = vld [vmem:[#allocation3 + $0x688] sm:$0xff]
    %v260 = vld [vmem:[#allocation3 + $0x690] sm:$0xff]
    %v261 = vld [vmem:[#allocation3 + $0x698] sm:$0xff]
    %v262 = vld [vmem:[#allocation3 + $0x6a0] sm:$0xff]
    %v263 = vld [vmem:[#allocation3 + $0x6a8] sm:$0xff]
    %v264 = vld [vmem:[#allocation3 + $0x6b0] sm:$0xff]
    %v265 = vld [vmem:[#allocation3 + $0x6b8] sm:$0xff]
    %v266 = vld [vmem:[#allocation3 + $0x6c0] sm:$0xff]
    %v267 = vld [vmem:[#allocation3 + $0x6c8] sm:$0xff]
    %v268 = vld [vmem:[#allocation3 + $0x6d0] sm:$0xff]
    %v269 = vld [vmem:[#allocation3 + $0x6d8] sm:$0xff]
    %v270 = vld [vmem:[#allocation3 + $0x6e0] sm:$0xff]
    %v271 = vld [vmem:[#allocation3 + $0x6e8] sm:$0xff]
    %v272 = vld [vmem:[#allocation3 + $0x6f0] sm:$0xff]
    %v273 = vld [vmem:[#allocation3 + $0x6f8] sm:$0xff]
    %v274 = vld [vmem:[#allocation3 + $0x700] sm:$0xff]
    %v275 = vld [vmem:[#allocation3 + $0x708] sm:$0xff]
    %v276 = vld [vmem:[#allocation3 + $0x710] sm:$0xff]
    %v277 = vld [vmem:[#allocation3 + $0x718] sm:$0xff]
    %v278 = vld [vmem:[#allocation3 + $0x720] sm:$0xff]
    %v279 = vld [vmem:[#allocation3 + $0x728] sm:$0xff]
    %v280 = vld [vmem:[#allocation3 + $0x730] sm:$0xff]
    %v281 = vld [vmem:[#allocation3 + $0x738] sm:$0xff]
    %v282 = vld [vmem:[#allocation3 + $0x740] sm:$0xff]
    %v283 = vld [vmem:[#allocation3 + $0x748] sm:$0xff]
    %v284 = vld [vmem:[#allocation3 + $0x750] sm:$0xff]
    %v285 = vld [vmem:[#allocation3 + $0x758] sm:$0xff]
    %v286 = vld [vmem:[#allocation3 + $0x760] sm:$0xff]
    %v287 = vld [vmem:[#allocation3 + $0x768] sm:$0xff]
    %v288 = vld [vmem:[#allocation3 + $0x770] sm:$0xff]
    %v289 = vld [vmem:[#allocation3 + $0x778] sm:$0xff]
    %v290 = vld [vmem:[#allocation3 + $0x780] sm:$0xff]
    %v291 = vld [vmem:[#allocation3 + $0x788] sm:$0xff]
    %v292 = vld [vmem:[#allocation3 + $0x790] sm:$0xff]
    %v293 = vld [vmem:[#allocation3 + $0x798] sm:$0xff]
    %v294 = vld [vmem:[#allocation3 + $0x7a0] sm:$0xff]
    %v295 = vld [vmem:[#allocation3 + $0x7a8] sm:$0xff]
    %v296 = vld [vmem:[#allocation3 + $0x7b0] sm:$0xff]
    %v297 = vld [vmem:[#allocation3 + $0x7b8] sm:$0xff]
    %v298 = vld [vmem:[#allocation3 + $0x7c0] sm:$0xff]
    %v299 = vld [vmem:[#allocation3 + $0x7c8] sm:$0xff]
    %v300 = vld [vmem:[#allocation3 + $0x7d0] sm:$0xff]
    %v301 = vld [vmem:[#allocation3 + $0x7d8] sm:$0xff]
    %v302 = vld [vmem:[#allocation3 + $0x7e0] sm:$0xff]
    %v303 = vld [vmem:[#allocation3 + $0x7e8] sm:$0xff]
    %v304 = vld [vmem:[#allocation3 + $0x7f0] sm:$0xff]
    %v305 = vld [vmem:[#allocation3 + $0x7f8] sm:$0xff]
    %v306 = vld [vmem:[#allocation3 + $0x800] sm:$0xff]
    %v307 = vld [vmem:[#allocation3 + $0x808] sm:$0xff]
    %v308 = vld [vmem:[#allocation3 + $0x810] sm:$0xff]
    %v309 = vld [vmem:[#allocation3 + $0x818] sm:$0xff]
    %v310 = vld [vmem:[#allocation3 + $0x820] sm:$0xff]
    %v311 = vld [vmem:[#allocation3 + $0x828] sm:$0xff]
    %v312 = vld [vmem:[#allocation3 + $0x830] sm:$0xff]
    %v313 = vld [vmem:[#allocation3 + $0x838] sm:$0xff]
    %v314 = vld [vmem:[#allocation3 + $0x840] sm:$0xff]
    %v315 = vld [vmem:[#allocation3 + $0x848] sm:$0xff]
    %v316 = vld [vmem:[#allocation3 + $0x850] sm:$0xff]
    %v317 = vld [vmem:[#allocation3 + $0x858] sm:$0xff]
    %v318 = vld [vmem:[#allocation3 + $0x860] sm:$0xff]
    %v319 = vld [vmem:[#allocation3 + $0x868] sm:$0xff]
    %v320 = vld [vmem:[#allocation3 + $0x870] sm:$0xff]
    %v321 = vld [vmem:[#allocation3 + $0x878] sm:$0xff]
    %v322 = vld [vmem:[#allocation3 + $0x880] sm:$0xff]
    %v323 = vld [vmem:[#allocation3 + $0x888] sm:$0xff]
    %v324 = vld [vmem:[#allocation3 + $0x890] sm:$0xff]
    %v325 = vld [vmem:[#allocation3 + $0x898] sm:$0xff]
    %v326 = vld [vmem:[#allocation3 + $0x8a0] sm:$0xff]
    %v327 = vld [vmem:[#allocation3 + $0x8a8] sm:$0xff]
    %v328 = vld [vmem:[#allocation3 + $0x8b0] sm:$0xff]
    %v329 = vld [vmem:[#allocation3 + $0x8b8] sm:$0xff]
    %v330 = vld [vmem:[#allocation3 + $0x8c0] sm:$0xff]
    %v331 = vld [vmem:[#allocation3 + $0x8c8] sm:$0xff]
    %v332 = vld [vmem:[#allocation3 + $0x8d0] sm:$0xff]
    %v333 = vld [vmem:[#allocation3 + $0x8d8] sm:$0xff]
    %v334 = vld [vmem:[#allocation3 + $0x8e0] sm:$0xff]
    %v335 = vld [vmem:[#allocation3 + $0x8e8] sm:$0xff]
    %v336 = vld [vmem:[#allocation3 + $0x8f0] sm:$0xff]
    %v337 = vld [vmem:[#allocation3 + $0x8f8] sm:$0xff]
    %v338 = vld [vmem:[#allocation3 + $0x900] sm:$0xff]
    %v339 = vld [vmem:[#allocation3 + $0x908] sm:$0xff]
    %v340 = vld [vmem:[#allocation3 + $0x910] sm:$0xff]
    %v341 = vld [vmem:[#allocation3 + $0x918] sm:$0xff]
    %v342 = vld [vmem:[#allocation3 + $0x920] sm:$0xff]
    %v343 = vld [vmem:[#allocation3 + $0x928] sm:$0xff]
    %v344 = vld [vmem:[#allocation3 + $0x930] sm:$0xff]
    %v345 = vld [vmem:[#allocation3 + $0x938] sm:$0xff]
    %v346 = vld [vmem:[#allocation3 + $0x940] sm:$0xff]
    %v347 = vld [vmem:[#allocation3 + $0x948] sm:$0xff]
    %v348 = vld [vmem:[#allocation3 + $0x950] sm:$0xff]
    %v349 = vld [vmem:[#allocation3 + $0x958] sm:$0xff]
    %v350 = vld [vmem:[#allocation3 + $0x960] sm:$0xff]
    %v351 = vld [vmem:[#allocation3 + $0x968] sm:$0xff]
    %v352 = vld [vmem:[#allocation3 + $0x970] sm:$0xff]
    %v353 = vld [vmem:[#allocation3 + $0x978] sm:$0xff]
    %v354 = vld [vmem:[#allocation3 + $0x980] sm:$0xff]
    %v355 = vld [vmem:[#allocation3 + $0x988] sm:$0xff]
    %v356 = vld [vmem:[#allocation3 + $0x990] sm:$0xff]
    %v357 = vld [vmem:[#allocation3 + $0x998] sm:$0xff]
    %v358 = vld [vmem:[#allocation3 + $0x9a0] sm:$0xff]
    %v359 = vld [vmem:[#allocation3 + $0x9a8] sm:$0xff]
    %v360 = vld [vmem:[#allocation3 + $0x9b0] sm:$0xff]
    %v361 = vld [vmem:[#allocation3 + $0x9b8] sm:$0xff]
    %v362 = vld [vmem:[#allocation3 + $0x9c0] sm:$0xff]
    %v363 = vld [vmem:[#allocation3 + $0x9c8] sm:$0xff]
    %v364 = vld [vmem:[#allocation3 + $0x9d0] sm:$0xff]
    %v365 = vld [vmem:[#allocation3 + $0x9d8] sm:$0xff]
    %v366 = vld [vmem:[#allocation3 + $0x9e0] sm:$0xff]
    %v367 = vld [vmem:[#allocation3 + $0x9e8] sm:$0xff]
    %v368 = vld [vmem:[#allocation3 + $0x9f0] sm:$0xff]
    %v369 = vld [vmem:[#allocation3 + $0x9f8] sm:$0xff]
    %v370 = vld [vmem:[#allocation3 + $0xa00] sm:$0xff]
    %v371 = vld [vmem:[#allocation3 + $0xa08] sm:$0xff]
    %v372 = vld [vmem:[#allocation3 + $0xa10] sm:$0xff]
    %v373 = vld [vmem:[#allocation3 + $0xa18] sm:$0xff]
    %v374 = vld [vmem:[#allocation3 + $0xa20] sm:$0xff]
    %v375 = vld [vmem:[#allocation3 + $0xa28] sm:$0xff]
    %v376 = vld [vmem:[#allocation3 + $0xa30] sm:$0xff]
    %v377 = vld [vmem:[#allocation3 + $0xa38] sm:$0xff]
    %v378 = vld [vmem:[#allocation3 + $0xa40] sm:$0xff]
    %v379 = vld [vmem:[#allocation3 + $0xa48] sm:$0xff]
    %v380 = vld [vmem:[#allocation3 + $0xa50] sm:$0xff]
    %v381 = vld [vmem:[#allocation3 + $0xa58] sm:$0xff]
    %v382 = vld [vmem:[#allocation3 + $0xa60] sm:$0xff]
    %v383 = vld [vmem:[#allocation3 + $0xa68] sm:$0xff]
    %v384 = vld [vmem:[#allocation3 + $0xa70] sm:$0xff]
    %v385 = vld [vmem:[#allocation3 + $0xa78] sm:$0xff]
    %v386 = vld [vmem:[#allocation3 + $0xa80] sm:$0xff]
    %v387 = vld [vmem:[#allocation3 + $0xa88] sm:$0xff]
    %v388 = vld [vmem:[#allocation3 + $0xa90] sm:$0xff]
    %v389 = vld [vmem:[#allocation3 + $0xa98] sm:$0xff]
    %v390 = vld [vmem:[#allocation3 + $0xaa0] sm:$0xff]
    %v391 = vld [vmem:[#allocation3 + $0xaa8] sm:$0xff]
    %v392 = vld [vmem:[#allocation3 + $0xab0] sm:$0xff]
    %v393 = vld [vmem:[#allocation3 + $0xab8] sm:$0xff]
    %v394 = vld [vmem:[#allocation3 + $0xac0] sm:$0xff]
    %v395 = vld [vmem:[#allocation3 + $0xac8] sm:$0xff]
    %v396 = vld [vmem:[#allocation3 + $0xad0] sm:$0xff]
    %v397 = vld [vmem:[#allocation3 + $0xad8] sm:$0xff]
    %v398 = vld [vmem:[#allocation3 + $0xae0] sm:$0xff]
    %v399 = vld [vmem:[#allocation3 + $0xae8] sm:$0xff]
    %v400 = vld [vmem:[#allocation3 + $0xaf0] sm:$0xff]
    %v401 = vld [vmem:[#allocation3 + $0xaf8] sm:$0xff]
    %v402 = vld [vmem:[#allocation3 + $0xb00] sm:$0xff]
    %v403 = vld [vmem:[#allocation3 + $0xb08] sm:$0xff]
    %v404 = vld [vmem:[#allocation3 + $0xb10] sm:$0xff]
    %v405 = vld [vmem:[#allocation3 + $0xb18] sm:$0xff]
    %v406 = vld [vmem:[#allocation3 + $0xb20] sm:$0xff]
    %v407 = vld [vmem:[#allocation3 + $0xb28] sm:$0xff]
    %v408 = vld [vmem:[#allocation3 + $0xb30] sm:$0xff]
    %v409 = vld [vmem:[#allocation3 + $0xb38] sm:$0xff]
    %v410 = vld [vmem:[#allocation3 + $0xb40] sm:$0xff]
    %v411 = vld [vmem:[#allocation3 + $0xb48] sm:$0xff]
    %v412 = vld [vmem:[#allocation3 + $0xb50] sm:$0xff]
    %v413 = vld [vmem:[#allocation3 + $0xb58] sm:$0xff]
    %v414 = vld [vmem:[#allocation3 + $0xb60] sm:$0xff]
    %v415 = vld [vmem:[#allocation3 + $0xb68] sm:$0xff]
    %v416 = vld [vmem:[#allocation3 + $0xb70] sm:$0xff]
    %v417 = vld [vmem:[#allocation3 + $0xb78] sm:$0xff]
    %v418 = vld [vmem:[#allocation3 + $0xb80] sm:$0xff]
    %v419 = vld [vmem:[#allocation3 + $0xb88] sm:$0xff]
    %v420 = vld [vmem:[#allocation3 + $0xb90] sm:$0xff]
    %v421 = vld [vmem:[#allocation3 + $0xb98] sm:$0xff]
    %v422 = vld [vmem:[#allocation3 + $0xba0] sm:$0xff]
    %v423 = vld [vmem:[#allocation3 + $0xba8] sm:$0xff]
    %v424 = vld [vmem:[#allocation3 + $0xbb0] sm:$0xff]
    %v425 = vld [vmem:[#allocation3 + $0xbb8] sm:$0xff]
    %v426 = vld [vmem:[#allocation3 + $0xbc0] sm:$0xff]
    %v427 = vld [vmem:[#allocation3 + $0xbc8] sm:$0xff]
    %v428 = vld [vmem:[#allocation3 + $0xbd0] sm:$0xff]
    %v429 = vld [vmem:[#allocation3 + $0xbd8] sm:$0xff]
    %v430 = vld [vmem:[#allocation3 + $0xbe0] sm:$0xff]
    %v431 = vld [vmem:[#allocation3 + $0xbe8] sm:$0xff]
    %v432 = vld [vmem:[#allocation3 + $0xbf0] sm:$0xff]
    %v433 = vld [vmem:[#allocation3 + $0xbf8] sm:$0xff]
    %v434 = vld [vmem:[#allocation3 + $0xc00] sm:$0xff]
    %v435 = vld [vmem:[#allocation3 + $0xc08] sm:$0xff]
    %v436 = vld [vmem:[#allocation3 + $0xc10] sm:$0xff]
    %v437 = vld [vmem:[#allocation3 + $0xc18] sm:$0xff]
    %v438 = vld [vmem:[#allocation3 + $0xc20] sm:$0xff]
    %v439 = vld [vmem:[#allocation3 + $0xc28] sm:$0xff]
    %v440 = vld [vmem:[#allocation3 + $0xc30] sm:$0xff]
    %v441 = vld [vmem:[#allocation3 + $0xc38] sm:$0xff]
    %v442 = vld [vmem:[#allocation3 + $0xc40] sm:$0xff]
    %v443 = vld [vmem:[#allocation3 + $0xc48] sm:$0xff]
    %v444 = vld [vmem:[#allocation3 + $0xc50] sm:$0xff]
    %v445 = vld [vmem:[#allocation3 + $0xc58] sm:$0xff]
    %v446 = vld [vmem:[#allocation3 + $0xc60] sm:$0xff]
    %v447 = vld [vmem:[#allocation3 + $0xc68] sm:$0xff]
    %v448 = vld [vmem:[#allocation3 + $0xc70] sm:$0xff]
    %v449 = vld [vmem:[#allocation3 + $0xc78] sm:$0xff]
    %v450 = vld [vmem:[#allocation3 + $0xc80] sm:$0xff]
    %v451 = vld [vmem:[#allocation3 + $0xc88] sm:$0xff]
    %v452 = vld [vmem:[#allocation3 + $0xc90] sm:$0xff]
    %v453 = vld [vmem:[#allocation3 + $0xc98] sm:$0xff]
    %v454 = vld [vmem:[#allocation3 + $0xca0] sm:$0xff]
    %v455 = vld [vmem:[#allocation3 + $0xca8] sm:$0xff]
    %v456 = vld [vmem:[#allocation3 + $0xcb0] sm:$0xff]
    %v457 = vld [vmem:[#allocation3 + $0xcb8] sm:$0xff]
    %v458 = vld [vmem:[#allocation3 + $0xcc0] sm:$0xff]
    %v459 = vld [vmem:[#allocation3 + $0xcc8] sm:$0xff]
    %v460 = vld [vmem:[#allocation3 + $0xcd0] sm:$0xff]
    %v461 = vld [vmem:[#allocation3 + $0xcd8] sm:$0xff]
    %v462 = vld [vmem:[#allocation3 + $0xce0] sm:$0xff]
    %v463 = vld [vmem:[#allocation3 + $0xce8] sm:$0xff]
    %v464 = vld [vmem:[#allocation3 + $0xcf0] sm:$0xff]
    %v465 = vld [vmem:[#allocation3 + $0xcf8] sm:$0xff]
    %v466 = vld [vmem:[#allocation3 + $0xd00] sm:$0xff]
    %v467 = vld [vmem:[#allocation3 + $0xd08] sm:$0xff]
    %v468 = vld [vmem:[#allocation3 + $0xd10] sm:$0xff]
    %v469 = vld [vmem:[#allocation3 + $0xd18] sm:$0xff]
    %v470 = vld [vmem:[#allocation3 + $0xd20] sm:$0xff]
    %v471 = vld [vmem:[#allocation3 + $0xd28] sm:$0xff]
    %v472 = vld [vmem:[#allocation3 + $0xd30] sm:$0xff]
    %v473 = vld [vmem:[#allocation3 + $0xd38] sm:$0xff]
    %v474 = vld [vmem:[#allocation3 + $0xd40] sm:$0xff]
    %v475 = vld [vmem:[#allocation3 + $0xd48] sm:$0xff]
    %v476 = vld [vmem:[#allocation3 + $0xd50] sm:$0xff]
    %v477 = vld [vmem:[#allocation3 + $0xd58] sm:$0xff]
    %v478 = vld [vmem:[#allocation3 + $0xd60] sm:$0xff]
    %v479 = vld [vmem:[#allocation3 + $0xd68] sm:$0xff]
    %v480 = vld [vmem:[#allocation3 + $0xd70] sm:$0xff]
    %v481 = vld [vmem:[#allocation3 + $0xd78] sm:$0xff]
    %v482 = vld [vmem:[#allocation3 + $0xd80] sm:$0xff]
    %v483 = vld [vmem:[#allocation3 + $0xd88] sm:$0xff]
    %v484 = vld [vmem:[#allocation3 + $0xd90] sm:$0xff]
    %v485 = vld [vmem:[#allocation3 + $0xd98] sm:$0xff]
    %v486 = vld [vmem:[#allocation3 + $0xda0] sm:$0xff]
    %v487 = vld [vmem:[#allocation3 + $0xda8] sm:$0xff]
    %v488 = vld [vmem:[#allocation3 + $0xdb0] sm:$0xff]
    %v489 = vld [vmem:[#allocation3 + $0xdb8] sm:$0xff]
    %v490 = vld [vmem:[#allocation3 + $0xdc0] sm:$0xff]
    %v491 = vld [vmem:[#allocation3 + $0xdc8] sm:$0xff]
    %v492 = vld [vmem:[#allocation3 + $0xdd0] sm:$0xff]
    %v493 = vld [vmem:[#allocation3 + $0xdd8] sm:$0xff]
    %v494 = vld [vmem:[#allocation3 + $0xde0] sm:$0xff]
    %v495 = vld [vmem:[#allocation3 + $0xde8] sm:$0xff]
    %v496 = vld [vmem:[#allocation3 + $0xdf0] sm:$0xff]
    %v497 = vld [vmem:[#allocation3 + $0xdf8] sm:$0xff]
    %v498 = vld [vmem:[#allocation3 + $0xe00] sm:$0xff]
    %v499 = vld [vmem:[#allocation3 + $0xe08] sm:$0xff]
    %v500 = vld [vmem:[#allocation3 + $0xe10] sm:$0xff]
    %v501 = vld [vmem:[#allocation3 + $0xe18] sm:$0xff]
    %v502 = vld [vmem:[#allocation3 + $0xe20] sm:$0xff]
    %v503 = vld [vmem:[#allocation3 + $0xe28] sm:$0xff]
    %v504 = vld [vmem:[#allocation3 + $0xe30] sm:$0xff]
    %v505 = vld [vmem:[#allocation3 + $0xe38] sm:$0xff]
    %v506 = vld [vmem:[#allocation3 + $0xe40] sm:$0xff]
    %v507 = vld [vmem:[#allocation3 + $0xe48] sm:$0xff]
    %v508 = vld [vmem:[#allocation3 + $0xe50] sm:$0xff]
    %v509 = vld [vmem:[#allocation3 + $0xe58] sm:$0xff]
    %v510 = vld [vmem:[#allocation3 + $0xe60] sm:$0xff]
    %v511 = vld [vmem:[#allocation3 + $0xe68] sm:$0xff]
    %v512 = vld [vmem:[#allocation3 + $0xe70] sm:$0xff]
    %v513 = vld [vmem:[#allocation3 + $0xe78] sm:$0xff]
    %v514 = vld [vmem:[#allocation3 + $0xe80] sm:$0xff]
    %v515 = vld [vmem:[#allocation3 + $0xe88] sm:$0xff]
    %v516 = vld [vmem:[#allocation3 + $0xe90] sm:$0xff]
    %v517 = vld [vmem:[#allocation3 + $0xe98] sm:$0xff]
    %v518 = vld [vmem:[#allocation3 + $0xea0] sm:$0xff]
    %v519 = vld [vmem:[#allocation3 + $0xea8] sm:$0xff]
    %v520 = vld [vmem:[#allocation3 + $0xeb0] sm:$0xff]
    %v521 = vld [vmem:[#allocation3 + $0xeb8] sm:$0xff]
    %v522 = vld [vmem:[#allocation3 + $0xec0] sm:$0xff]
    %v523 = vld [vmem:[#allocation3 + $0xec8] sm:$0xff]
    %v524 = vld [vmem:[#allocation3 + $0xed0] sm:$0xff]
    %v525 = vld [vmem:[#allocation3 + $0xed8] sm:$0xff]
    %v526 = vld [vmem:[#allocation3 + $0xee0] sm:$0xff]
    %v527 = vld [vmem:[#allocation3 + $0xee8] sm:$0xff]
    %v528 = vld [vmem:[#allocation3 + $0xef0] sm:$0xff]
    %v529 = vld [vmem:[#allocation3 + $0xef8] sm:$0xff]
    %v530 = vld [vmem:[#allocation3 + $0xf00] sm:$0xff]
    %v531 = vld [vmem:[#allocation3 + $0xf08] sm:$0xff]
    %v532 = vld [vmem:[#allocation3 + $0xf10] sm:$0xff]
    %v533 = vld [vmem:[#allocation3 + $0xf18] sm:$0xff]
    %v534 = vld [vmem:[#allocation3 + $0xf20] sm:$0xff]
    %v535 = vld [vmem:[#allocation3 + $0xf28] sm:$0xff]
    %v536 = vld [vmem:[#allocation3 + $0xf30] sm:$0xff]
    %v537 = vld [vmem:[#allocation3 + $0xf38] sm:$0xff]
    %v538 = vld [vmem:[#allocation3 + $0xf40] sm:$0xff]
    %v539 = vld [vmem:[#allocation3 + $0xf48] sm:$0xff]
    %v540 = vld [vmem:[#allocation3 + $0xf50] sm:$0xff]
    %v541 = vld [vmem:[#allocation3 + $0xf58] sm:$0xff]
    %v542 = vld [vmem:[#allocation3 + $0xf60] sm:$0xff]
    %v543 = vld [vmem:[#allocation3 + $0xf68] sm:$0xff]
    %v544 = vld [vmem:[#allocation3 + $0xf70] sm:$0xff]
    %v545 = vld [vmem:[#allocation3 + $0xf78] sm:$0xff]
    %v546 = vld [vmem:[#allocation3 + $0xf80] sm:$0xff]
    %v547 = vld [vmem:[#allocation3 + $0xf88] sm:$0xff]
    %v548 = vld [vmem:[#allocation3 + $0xf90] sm:$0xff]
    %v549 = vld [vmem:[#allocation3 + $0xf98] sm:$0xff]
    %v550 = vld [vmem:[#allocation3 + $0xfa0] sm:$0xff]
    %v551 = vld [vmem:[#allocation3 + $0xfa8] sm:$0xff]
    %v552 = vld [vmem:[#allocation3 + $0xfb0] sm:$0xff]
    %v553 = vld [vmem:[#allocation3 + $0xfb8] sm:$0xff]
    %v554 = vld [vmem:[#allocation3 + $0xfc0] sm:$0xff]
    %v555 = vld [vmem:[#allocation3 + $0xfc8] sm:$0xff]
    %v556 = vld [vmem:[#allocation3 + $0xfd0] sm:$0xff]
    %v557 = vld [vmem:[#allocation3 + $0xfd8] sm:$0xff]
    %v558 = vld [vmem:[#allocation3 + $0xfe0] sm:$0xff]
    %v559 = vld [vmem:[#allocation3 + $0xfe8] sm:$0xff]
    %v560 = vld [vmem:[#allocation3 + $0xff0] sm:$0xff]
    %v561 = vld [vmem:[#allocation3 + $0xff8] sm:$0xff]
    %v562 = vld [vmem:[#allocation3 + $0x1000] sm:$0xff]
    %v563 = vld [vmem:[#allocation3 + $0x1008] sm:$0xff]
    %v564 = vld [vmem:[#allocation3 + $0x1010] sm:$0xff]
    %v565 = vld [vmem:[#allocation3 + $0x1018] sm:$0xff]
    %v566 = vld [vmem:[#allocation3 + $0x1020] sm:$0xff]
    %v567 = vld [vmem:[#allocation3 + $0x1028] sm:$0xff]
    %v568 = vld [vmem:[#allocation3 + $0x1030] sm:$0xff]
    %v569 = vld [vmem:[#allocation3 + $0x1038] sm:$0xff]
    %v570 = vld [vmem:[#allocation3 + $0x1040] sm:$0xff]
    %v571 = vld [vmem:[#allocation3 + $0x1048] sm:$0xff]
    %v572 = vld [vmem:[#allocation3 + $0x1050] sm:$0xff]
    %v573 = vld [vmem:[#allocation3 + $0x1058] sm:$0xff]
    %v574 = vld [vmem:[#allocation3 + $0x1060] sm:$0xff]
    %v575 = vld [vmem:[#allocation3 + $0x1068] sm:$0xff]
    %v576 = vld [vmem:[#allocation3 + $0x1070] sm:$0xff]
    %v577 = vld [vmem:[#allocation3 + $0x1078] sm:$0xff]
    %v578 = vld [vmem:[#allocation3 + $0x1080] sm:$0xff]
    %v579 = vld [vmem:[#allocation3 + $0x1088] sm:$0xff]
    %v580 = vld [vmem:[#allocation3 + $0x1090] sm:$0xff]
    %v581 = vld [vmem:[#allocation3 + $0x1098] sm:$0xff]
    %v582 = vld [vmem:[#allocation3 + $0x10a0] sm:$0xff]
    %v583 = vld [vmem:[#allocation3 + $0x10a8] sm:$0xff]
    %v584 = vld [vmem:[#allocation3 + $0x10b0] sm:$0xff]
    %v585 = vld [vmem:[#allocation3 + $0x10b8] sm:$0xff]
    %v586 = vld [vmem:[#allocation3 + $0x10c0] sm:$0xff]
    %v587 = vld [vmem:[#allocation3 + $0x10c8] sm:$0xff]
    %v588 = vld [vmem:[#allocation3 + $0x10d0] sm:$0xff]
    %v589 = vld [vmem:[#allocation3 + $0x10d8] sm:$0xff]
    %v590 = vld [vmem:[#allocation3 + $0x10e0] sm:$0xff]
    %v591 = vld [vmem:[#allocation3 + $0x10e8] sm:$0xff]
    %v592 = vld [vmem:[#allocation3 + $0x10f0] sm:$0xff]
    %v593 = vld [vmem:[#allocation3 + $0x10f8] sm:$0xff]
    %v594 = vld [vmem:[#allocation3 + $0x1100] sm:$0xff]
    %v595 = vld [vmem:[#allocation3 + $0x1108] sm:$0xff]
    %v596 = vld [vmem:[#allocation3 + $0x1110] sm:$0xff]
    %v597 = vld [vmem:[#allocation3 + $0x1118] sm:$0xff]
    %v598 = vld [vmem:[#allocation3 + $0x1120] sm:$0xff]
    %v599 = vld [vmem:[#allocation3 + $0x1128] sm:$0xff]
    %v600 = vld [vmem:[#allocation3 + $0x1130] sm:$0xff]
    %v601 = vld [vmem:[#allocation3 + $0x1138] sm:$0xff]
    %v602 = vld [vmem:[#allocation3 + $0x1140] sm:$0xff]
    %v603 = vld [vmem:[#allocation3 + $0x1148] sm:$0xff]
    %v604 = vld [vmem:[#allocation3 + $0x1150] sm:$0xff]
    %v605 = vld [vmem:[#allocation3 + $0x1158] sm:$0xff]
    %v606 = vld [vmem:[#allocation3 + $0x1160] sm:$0xff]
    %v607 = vld [vmem:[#allocation3 + $0x1168] sm:$0xff]
    %v608 = vld [vmem:[#allocation3 + $0x1170] sm:$0xff]
    %v609 = vld [vmem:[#allocation3 + $0x1178] sm:$0xff]
    %v610 = vld [vmem:[#allocation3 + $0x1180] sm:$0xff]
    %v611 = vld [vmem:[#allocation3 + $0x1188] sm:$0xff]
    %v612 = vld [vmem:[#allocation3 + $0x1190] sm:$0xff]
    %v613 = vld [vmem:[#allocation3 + $0x1198] sm:$0xff]
    %v614 = vld [vmem:[#allocation3 + $0x11a0] sm:$0xff]
    %v615 = vld [vmem:[#allocation3 + $0x11a8] sm:$0xff]
    %v616 = vld [vmem:[#allocation3 + $0x11b0] sm:$0xff]
    %v617 = vld [vmem:[#allocation3 + $0x11b8] sm:$0xff]
    %v618 = vld [vmem:[#allocation3 + $0x11c0] sm:$0xff]
    %v619 = vld [vmem:[#allocation3 + $0x11c8] sm:$0xff]
    %v620 = vld [vmem:[#allocation3 + $0x11d0] sm:$0xff]
    %v621 = vld [vmem:[#allocation3 + $0x11d8] sm:$0xff]
    %v622 = vld [vmem:[#allocation3 + $0x11e0] sm:$0xff]
    %v623 = vld [vmem:[#allocation3 + $0x11e8] sm:$0xff]
    %v624 = vld [vmem:[#allocation3 + $0x11f0] sm:$0xff]
    %v625 = vld [vmem:[#allocation3 + $0x11f8] sm:$0xff]
    %v626 = vld [vmem:[#allocation3 + $0x1200] sm:$0xff]
    %v627 = vld [vmem:[#allocation3 + $0x1208] sm:$0xff]
    %v628 = vld [vmem:[#allocation3 + $0x1210] sm:$0xff]
    %v629 = vld [vmem:[#allocation3 + $0x1218] sm:$0xff]
    %v630 = vld [vmem:[#allocation3 + $0x1220] sm:$0xff]
    %v631 = vld [vmem:[#allocation3 + $0x1228] sm:$0xff]
    %v632 = vld [vmem:[#allocation3 + $0x1230] sm:$0xff]
    %v633 = vld [vmem:[#allocation3 + $0x1238] sm:$0xff]
    %v634 = vld [vmem:[#allocation3 + $0x1240] sm:$0xff]
    %v635 = vld [vmem:[#allocation3 + $0x1248] sm:$0xff]
    %v636 = vld [vmem:[#allocation3 + $0x1250] sm:$0xff]
    %v637 = vld [vmem:[#allocation3 + $0x1258] sm:$0xff]
    %v638 = vld [vmem:[#allocation3 + $0x1260] sm:$0xff]
    %v639 = vld [vmem:[#allocation3 + $0x1268] sm:$0xff]
    %v640 = vld [vmem:[#allocation3 + $0x1270] sm:$0xff]
    %v641 = vld [vmem:[#allocation3 + $0x1278] sm:$0xff]
    %v642 = vld [vmem:[#allocation3 + $0x1280] sm:$0xff]
    %v643 = vld [vmem:[#allocation3 + $0x1288] sm:$0xff]
    %v644 = vld [vmem:[#allocation3 + $0x1290] sm:$0xff]
    %v645 = vld [vmem:[#allocation3 + $0x1298] sm:$0xff]
    %v646 = vld [vmem:[#allocation3 + $0x12a0] sm:$0xff]
    %v647 = vld [vmem:[#allocation3 + $0x12a8] sm:$0xff]
    %v648 = vld [vmem:[#allocation3 + $0x12b0] sm:$0xff]
    %v649 = vld [vmem:[#allocation3 + $0x12b8] sm:$0xff]
    %v650 = vld [vmem:[#allocation3 + $0x12c0] sm:$0xff]
    %v651 = vld [vmem:[#allocation3 + $0x12c8] sm:$0xff]
    %v652 = vld [vmem:[#allocation3 + $0x12d0] sm:$0xff]
    %v653 = vld [vmem:[#allocation3 + $0x12d8] sm:$0xff]
    %v654 = vld [vmem:[#allocation3 + $0x12e0] sm:$0xff]
    %v655 = vld [vmem:[#allocation3 + $0x12e8] sm:$0xff]
    %v656 = vld [vmem:[#allocation3 + $0x12f0] sm:$0xff]
    %v657 = vld [vmem:[#allocation3 + $0x12f8] sm:$0xff]
    %v658 = vld [vmem:[#allocation3 + $0x1300] sm:$0xff]
    %v659 = vld [vmem:[#allocation3 + $0x1308] sm:$0xff]
    %v660 = vld [vmem:[#allocation3 + $0x1310] sm:$0xff]
    %v661 = vld [vmem:[#allocation3 + $0x1318] sm:$0xff]
    %v662 = vld [vmem:[#allocation3 + $0x1320] sm:$0xff]
    %v663 = vld [vmem:[#allocation3 + $0x1328] sm:$0xff]
    %v664 = vld [vmem:[#allocation3 + $0x1330] sm:$0xff]
    %v665 = vld [vmem:[#allocation3 + $0x1338] sm:$0xff]
    %v666 = vld [vmem:[#allocation3 + $0x1340] sm:$0xff]
    %v667 = vld [vmem:[#allocation3 + $0x1348] sm:$0xff]
    %v668 = vld [vmem:[#allocation3 + $0x1350] sm:$0xff]
    %v669 = vld [vmem:[#allocation3 + $0x1358] sm:$0xff]
    %v670 = vld [vmem:[#allocation3 + $0x1360] sm:$0xff]
    %v671 = vld [vmem:[#allocation3 + $0x1368] sm:$0xff]
    %v672 = vld [vmem:[#allocation3 + $0x1370] sm:$0xff]
    %v673 = vld [vmem:[#allocation3 + $0x1378] sm:$0xff]
    %v674 = vld [vmem:[#allocation3 + $0x1380] sm:$0xff]
    %v675 = vld [vmem:[#allocation3 + $0x1388] sm:$0xff]
    %v676 = vld [vmem:[#allocation3 + $0x1390] sm:$0xff]
    %v677 = vld [vmem:[#allocation3 + $0x1398] sm:$0xff]
    %v678 = vld [vmem:[#allocation3 + $0x13a0] sm:$0xff]
    %v679 = vld [vmem:[#allocation3 + $0x13a8] sm:$0xff]
    %v680 = vld [vmem:[#allocation3 + $0x13b0] sm:$0xff]
    %v681 = vld [vmem:[#allocation3 + $0x13b8] sm:$0xff]
    %v682 = vld [vmem:[#allocation3 + $0x13c0] sm:$0xff]
    %v683 = vld [vmem:[#allocation3 + $0x13c8] sm:$0xff]
    %v684 = vld [vmem:[#allocation3 + $0x13d0] sm:$0xff]
    %v685 = vld [vmem:[#allocation3 + $0x13d8] sm:$0xff]
    %v686 = vld [vmem:[#allocation3 + $0x13e0] sm:$0xff]
    %v687 = vld [vmem:[#allocation3 + $0x13e8] sm:$0xff]
    %v688 = vld [vmem:[#allocation3 + $0x13f0] sm:$0xff]
    %v689 = vld [vmem:[#allocation3 + $0x13f8] sm:$0xff]
    %v690 = vld [vmem:[#allocation3 + $0x1400] sm:$0xff]
    %v691 = vld [vmem:[#allocation3 + $0x1408] sm:$0xff]
    %v692 = vld [vmem:[#allocation3 + $0x1410] sm:$0xff]
    %v693 = vld [vmem:[#allocation3 + $0x1418] sm:$0xff]
    %v694 = vld [vmem:[#allocation3 + $0x1420] sm:$0xff]
    %v695 = vld [vmem:[#allocation3 + $0x1428] sm:$0xff]
    %v696 = vld [vmem:[#allocation3 + $0x1430] sm:$0xff]
    %v697 = vld [vmem:[#allocation3 + $0x1438] sm:$0xff]
    %v698 = vld [vmem:[#allocation3 + $0x1440] sm:$0xff]
    %v699 = vld [vmem:[#allocation3 + $0x1448] sm:$0xff]
    %v700 = vld [vmem:[#allocation3 + $0x1450] sm:$0xff]
    %v701 = vld [vmem:[#allocation3 + $0x1458] sm:$0xff]
    %v702 = vld [vmem:[#allocation3 + $0x1460] sm:$0xff]
    %v703 = vld [vmem:[#allocation3 + $0x1468] sm:$0xff]
    %v704 = vld [vmem:[#allocation3 + $0x1470] sm:$0xff]
    %v705 = vld [vmem:[#allocation3 + $0x1478] sm:$0xff]
    %v706 = vld [vmem:[#allocation3 + $0x1480] sm:$0xff]
    %v707 = vld [vmem:[#allocation3 + $0x1488] sm:$0xff]
    %v708 = vld [vmem:[#allocation3 + $0x1490] sm:$0xff]
    %v709 = vld [vmem:[#allocation3 + $0x1498] sm:$0xff]
    %v710 = vld [vmem:[#allocation3 + $0x14a0] sm:$0xff]
    %v711 = vld [vmem:[#allocation3 + $0x14a8] sm:$0xff]
    %v712 = vld [vmem:[#allocation3 + $0x14b0] sm:$0xff]
    %v713 = vld [vmem:[#allocation3 + $0x14b8] sm:$0xff]
    %v714 = vld [vmem:[#allocation3 + $0x14c0] sm:$0xff]
    %v715 = vld [vmem:[#allocation3 + $0x14c8] sm:$0xff]
    %v716 = vld [vmem:[#allocation3 + $0x14d0] sm:$0xff]
    %v717 = vld [vmem:[#allocation3 + $0x14d8] sm:$0xff]
    %v718 = vld [vmem:[#allocation3 + $0x14e0] sm:$0xff]
    %v719 = vld [vmem:[#allocation3 + $0x14e8] sm:$0xff]
    %v720 = vld [vmem:[#allocation3 + $0x14f0] sm:$0xff]
    %v721 = vld [vmem:[#allocation3 + $0x14f8] sm:$0xff]
    %v722 = vld [vmem:[#allocation3 + $0x1500] sm:$0xff]
    %v723 = vld [vmem:[#allocation3 + $0x1508] sm:$0xff]
    %v724 = vld [vmem:[#allocation3 + $0x1510] sm:$0xff]
    %v725 = vld [vmem:[#allocation3 + $0x1518] sm:$0xff]
    %v726 = vld [vmem:[#allocation3 + $0x1520] sm:$0xff]
    %v727 = vld [vmem:[#allocation3 + $0x1528] sm:$0xff]
    %v728 = vld [vmem:[#allocation3 + $0x1530] sm:$0xff]
    %v729 = vld [vmem:[#allocation3 + $0x1538] sm:$0xff]
    %v730 = vld [vmem:[#allocation3 + $0x1540] sm:$0xff]
    %v731 = vld [vmem:[#allocation3 + $0x1548] sm:$0xff]
    %v732 = vld [vmem:[#allocation3 + $0x1550] sm:$0xff]
    %v733 = vld [vmem:[#allocation3 + $0x1558] sm:$0xff]
    %v734 = vld [vmem:[#allocation3 + $0x1560] sm:$0xff]
    %v735 = vld [vmem:[#allocation3 + $0x1568] sm:$0xff]
    %v736 = vld [vmem:[#allocation3 + $0x1570] sm:$0xff]
    %v737 = vld [vmem:[#allocation3 + $0x1578] sm:$0xff]
    %v738 = vld [vmem:[#allocation3 + $0x1580] sm:$0xff]
    %v739 = vld [vmem:[#allocation3 + $0x1588] sm:$0xff]
    %v740 = vld [vmem:[#allocation3 + $0x1590] sm:$0xff]
    %v741 = vld [vmem:[#allocation3 + $0x1598] sm:$0xff]
    %v742 = vld [vmem:[#allocation3 + $0x15a0] sm:$0xff]
    %v743 = vld [vmem:[#allocation3 + $0x15a8] sm:$0xff]
    %v744 = vld [vmem:[#allocation3 + $0x15b0] sm:$0xff]
    %v745 = vld [vmem:[#allocation3 + $0x15b8] sm:$0xff]
    %v746 = vld [vmem:[#allocation3 + $0x15c0] sm:$0xff]
    %v747 = vld [vmem:[#allocation3 + $0x15c8] sm:$0xff]
    %v748 = vld [vmem:[#allocation3 + $0x15d0] sm:$0xff]
    %v749 = vld [vmem:[#allocation3 + $0x15d8] sm:$0xff]
    %v750 = vld [vmem:[#allocation3 + $0x15e0] sm:$0xff]
    %v751 = vld [vmem:[#allocation3 + $0x15e8] sm:$0xff]
    %v752 = vld [vmem:[#allocation3 + $0x15f0] sm:$0xff]
    %v753 = vld [vmem:[#allocation3 + $0x15f8] sm:$0xff]
    %v754 = vld [vmem:[#allocation3 + $0x1600] sm:$0xff]
    %v755 = vld [vmem:[#allocation3 + $0x1608] sm:$0xff]
    %v756 = vld [vmem:[#allocation3 + $0x1610] sm:$0xff]
    %v757 = vld [vmem:[#allocation3 + $0x1618] sm:$0xff]
    %v758 = vld [vmem:[#allocation3 + $0x1620] sm:$0xff]
    %v759 = vld [vmem:[#allocation3 + $0x1628] sm:$0xff]
    %v760 = vld [vmem:[#allocation3 + $0x1630] sm:$0xff]
    %v761 = vld [vmem:[#allocation3 + $0x1638] sm:$0xff]
    %v762 = vld [vmem:[#allocation3 + $0x1640] sm:$0xff]
    %v763 = vld [vmem:[#allocation3 + $0x1648] sm:$0xff]
    %v764 = vld [vmem:[#allocation3 + $0x1650] sm:$0xff]
    %v765 = vld [vmem:[#allocation3 + $0x1658] sm:$0xff]
    %v766 = vld [vmem:[#allocation3 + $0x1660] sm:$0xff]
    %v767 = vld [vmem:[#allocation3 + $0x1668] sm:$0xff]
    %v768 = vld [vmem:[#allocation3 + $0x1670] sm:$0xff]
    %v769 = vld [vmem:[#allocation3 + $0x1678] sm:$0xff]
    %v770 = vld [vmem:[#allocation3 + $0x1680] sm:$0xff]
    %v771 = vld [vmem:[#allocation3 + $0x1688] sm:$0xff]
    %v772 = vld [vmem:[#allocation3 + $0x1690] sm:$0xff]
    %v773 = vld [vmem:[#allocation3 + $0x1698] sm:$0xff]
    %v774 = vld [vmem:[#allocation3 + $0x16a0] sm:$0xff]
    %v775 = vld [vmem:[#allocation3 + $0x16a8] sm:$0xff]
    %v776 = vld [vmem:[#allocation3 + $0x16b0] sm:$0xff]
    %v777 = vld [vmem:[#allocation3 + $0x16b8] sm:$0xff]
    %v778 = vld [vmem:[#allocation3 + $0x16c0] sm:$0xff]
    %v779 = vld [vmem:[#allocation3 + $0x16c8] sm:$0xff]
    %v780 = vld [vmem:[#allocation3 + $0x16d0] sm:$0xff]
    %v781 = vld [vmem:[#allocation3 + $0x16d8] sm:$0xff]
    %v782 = vld [vmem:[#allocation3 + $0x16e0] sm:$0xff]
    %v783 = vld [vmem:[#allocation3 + $0x16e8] sm:$0xff]
    %v784 = vld [vmem:[#allocation3 + $0x16f0] sm:$0xff]
    %v785 = vld [vmem:[#allocation3 + $0x16f8] sm:$0xff]
    %v786 = vld [vmem:[#allocation3 + $0x1700] sm:$0xff]
    %v787 = vld [vmem:[#allocation3 + $0x1708] sm:$0xff]
    %v788 = vld [vmem:[#allocation3 + $0x1710] sm:$0xff]
    %v789 = vld [vmem:[#allocation3 + $0x1718] sm:$0xff]
    %v790 = vld [vmem:[#allocation3 + $0x1720] sm:$0xff]
    %v791 = vld [vmem:[#allocation3 + $0x1728] sm:$0xff]
    %v792 = vld [vmem:[#allocation3 + $0x1730] sm:$0xff]
    %v793 = vld [vmem:[#allocation3 + $0x1738] sm:$0xff]
    %v794 = vld [vmem:[#allocation3 + $0x1740] sm:$0xff]
    %v795 = vld [vmem:[#allocation3 + $0x1748] sm:$0xff]
    %v796 = vld [vmem:[#allocation3 + $0x1750] sm:$0xff]
    %v797 = vld [vmem:[#allocation3 + $0x1758] sm:$0xff]
    %v798 = vld [vmem:[#allocation3 + $0x1760] sm:$0xff]
    %v799 = vld [vmem:[#allocation3 + $0x1768] sm:$0xff]
    %v800 = vld [vmem:[#allocation3 + $0x1770] sm:$0xff]
    %v801 = vld [vmem:[#allocation3 + $0x1778] sm:$0xff]
    %v802 = vld [vmem:[#allocation3 + $0x1780] sm:$0xff]
    %v803 = vld [vmem:[#allocation3 + $0x1788] sm:$0xff]
    %v804 = vld [vmem:[#allocation3 + $0x1790] sm:$0xff]
    %v805 = vld [vmem:[#allocation3 + $0x1798] sm:$0xff]
    %v806 = vld [vmem:[#allocation3 + $0x17a0] sm:$0xff]
    %v807 = vld [vmem:[#allocation3 + $0x17a8] sm:$0xff]
    %v808 = vld [vmem:[#allocation3 + $0x17b0] sm:$0xff]
    %v809 = vld [vmem:[#allocation3 + $0x17b8] sm:$0xff]
    %v810 = vld [vmem:[#allocation3 + $0x17c0] sm:$0xff]
    %v811 = vld [vmem:[#allocation3 + $0x17c8] sm:$0xff]
    %v812 = vld [vmem:[#allocation3 + $0x17d0] sm:$0xff]
    %v813 = vld [vmem:[#allocation3 + $0x17d8] sm:$0xff]
    %v814 = vld [vmem:[#allocation3 + $0x17e0] sm:$0xff]
    %v815 = vld [vmem:[#allocation3 + $0x17e8] sm:$0xff]
    %v816 = vld [vmem:[#allocation3 + $0x17f0] sm:$0xff]
    %v817 = vld [vmem:[#allocation3 + $0x17f8] sm:$0xff]
    %v820 = vcombine.high %v48, %v48
    %v822 = vunpack.c.l.s4 1983009808
    %v823 = vunpack.c.0.s8 %v822
    %v824 = vlaneseq
    %v825 = vshrl.u32 %v824, 7
    %v826 = vsub.s32 %v823, %v825
    %v827 = vrot.slane %v48, %v826
    %v829 = vunpack.c.l.s4 1983009808
    %v830 = vunpack.c.0.s8 %v829
    %v831 = vlaneseq
    %v832 = vshrl.u32 %v831, 7
    %v833 = vsub.s32 %v830, %v832
    %v834 = vrot.slane %v820, %v833
    %v835 = vcombine.high %v827, %v827
    %v836 = vcombine.high %v834, %v834
    %v838 = vunpack.c.l.s4 1983009808
    %v839 = vunpack.c.0.s8 %v838
    %v840 = vlaneseq
    %v841 = vshrl.u32 %v840, 7
    %v842 = vsub.s32 %v839, %v841
    %v843 = vrot.slane %v49, %v842
    %v844 = vcombine.high %v843, %v843
    %851 = vmatprep.subr.mxu0 %v51
    %852 = vmatpush1.msra.mxu0 %v50
    %853 = vmatprep.subr.mxu0 %v59
    %854 = vmatpush1.msra.mxu0 %v58
    %855 = vmatprep.subr.mxu0 %v67
    %856 = vmatpush1.msra.mxu0 %v66
    %857 = vmatprep.subr.mxu0 %v75
    %858 = vmatpush1.msra.mxu0 %v74
    %859 = vmatprep.subr.mxu0 %v83
    %860 = vmatpush1.msra.mxu0 %v82
    %861 = vmatprep.subr.mxu0 %v91
    %862 = vmatpush1.msra.mxu0 %v90
    %863 = vmatprep.subr.mxu0 %v99
    %864 = vmatpush1.msra.mxu0 %v98
    %865 = vmatprep.subr.mxu0 %v107
    %866 = vmatpush1.msra.mxu0 %v106
    %867 = vmatprep.subr.mxu0 %v115
    %868 = vmatpush1.msra.mxu0 %v114
    %869 = vmatprep.subr.mxu0 %v123
    %870 = vmatpush1.msra.mxu0 %v122
    %871 = vmatprep.subr.mxu0 %v131
    %872 = vmatpush1.msra.mxu0 %v130
    %873 = vmatprep.subr.mxu0 %v139
    %874 = vmatpush1.msra.mxu0 %v138
    %875 = vmatprep.subr.mxu0 %v147
    %876 = vmatpush1.msra.mxu0 %v146
    %877 = vmatprep.subr.mxu0 %v155
    %878 = vmatpush1.msra.mxu0 %v154
    %879 = vmatprep.subr.mxu0 %v163
    %880 = vmatpush1.msra.mxu0 %v162
    %881 = vmatprep.subr.mxu0 %v171
    %882 = vmatpush1.msra.mxu0 %v170
    %883 = vmatprep.subr.mxu0 %v179
    %884 = vmatpush1.msra.mxu0 %v178
    %885 = vmatprep.subr.mxu0 %v187
    %886 = vmatpush1.msra.mxu0 %v186
    %887 = vmatprep.subr.mxu0 %v195
    %888 = vmatpush1.msra.mxu0 %v194
    %889 = vmatprep.subr.mxu0 %v203
    %890 = vmatpush1.msra.mxu0 %v202
    %891 = vmatprep.subr.mxu0 %v211
    %892 = vmatpush1.msra.mxu0 %v210
    %893 = vmatprep.subr.mxu0 %v219
    %894 = vmatpush1.msra.mxu0 %v218
    %895 = vmatprep.subr.mxu0 %v227
    %896 = vmatpush1.msra.mxu0 %v226
    %897 = vmatprep.subr.mxu0 %v235
    %898 = vmatpush1.msra.mxu0 %v234
    %899 = vmatprep.subr.mxu0 %v243
    %900 = vmatpush1.msra.mxu0 %v242
    %901 = vmatprep.subr.mxu0 %v251
    %902 = vmatpush1.msra.mxu0 %v250
    %903 = vmatprep.subr.mxu0 %v259
    %904 = vmatpush1.msra.mxu0 %v258
    %905 = vmatprep.subr.mxu0 %v267
    %906 = vmatpush1.msra.mxu0 %v266
    %907 = vmatprep.subr.mxu0 %v275
    %908 = vmatpush1.msra.mxu0 %v274
    %909 = vmatprep.subr.mxu0 %v283
    %910 = vmatpush1.msra.mxu0 %v282
    %911 = vmatprep.subr.mxu0 %v291
    %912 = vmatpush1.msra.mxu0 %v290
    %913 = vmatprep.subr.mxu0 %v299
    %914 = vmatpush1.msra.mxu0 %v298
    %915 = vmatprep.mubr.f32.mxu0 %v835
    %916 = vmatmul.mubr.f32.gmra.mrb[0].mxu0 %v827
    %v917 = vpop.f32.mrb[0].mxu0
    %v918 = vadd.f32 0.0, %v917
    %v919 = vpop.f32.mrb[0].mxu0
    %v920 = vadd.f32 0.0, %v919
    %921 = vdwg.mxu0
    %922 = vmatprep.subr.mxu0 %v307
    %923 = vmatpush1.msra.mxu0 %v306
    %924 = vmatprep.subr.mxu0 %v315
    %925 = vmatpush1.msra.mxu0 %v314
    %926 = vmatprep.subr.mxu0 %v323
    %927 = vmatpush1.msra.mxu0 %v322
    %928 = vmatprep.subr.mxu0 %v331
    %929 = vmatpush1.msra.mxu0 %v330
    %930 = vmatprep.subr.mxu0 %v339
    %931 = vmatpush1.msra.mxu0 %v338
    %932 = vmatprep.subr.mxu0 %v347
    %933 = vmatpush1.msra.mxu0 %v346
    %934 = vmatprep.subr.mxu0 %v355
    %935 = vmatpush1.msra.mxu0 %v354
    %936 = vmatprep.subr.mxu0 %v363
    %937 = vmatpush1.msra.mxu0 %v362
    %938 = vmatprep.subr.mxu0 %v371
    %939 = vmatpush1.msra.mxu0 %v370
    %940 = vmatprep.subr.mxu0 %v379
    %941 = vmatpush1.msra.mxu0 %v378
    %942 = vmatprep.subr.mxu0 %v387
    %943 = vmatpush1.msra.mxu0 %v386
    %944 = vmatprep.subr.mxu0 %v395
    %945 = vmatpush1.msra.mxu0 %v394
    %946 = vmatprep.subr.mxu0 %v403
    %947 = vmatpush1.msra.mxu0 %v402
    %948 = vmatprep.subr.mxu0 %v411
    %949 = vmatpush1.msra.mxu0 %v410
    %950 = vmatprep.subr.mxu0 %v419
    %951 = vmatpush1.msra.mxu0 %v418
    %952 = vmatprep.subr.mxu0 %v427
    %953 = vmatpush1.msra.mxu0 %v426
    %954 = vmatprep.subr.mxu0 %v435
    %955 = vmatpush1.msra.mxu0 %v434
    %956 = vmatprep.subr.mxu0 %v443
    %957 = vmatpush1.msra.mxu0 %v442
    %958 = vmatprep.subr.mxu0 %v451
    %959 = vmatpush1.msra.mxu0 %v450
    %960 = vmatprep.subr.mxu0 %v459
    %961 = vmatpush1.msra.mxu0 %v458
    %962 = vmatprep.subr.mxu0 %v467
    %963 = vmatpush1.msra.mxu0 %v466
    %964 = vmatprep.subr.mxu0 %v475
    %965 = vmatpush1.msra.mxu0 %v474
    %966 = vmatprep.subr.mxu0 %v483
    %967 = vmatpush1.msra.mxu0 %v482
    %968 = vmatprep.subr.mxu0 %v491
    %969 = vmatpush1.msra.mxu0 %v490
    %970 = vmatprep.subr.mxu0 %v499
    %971 = vmatpush1.msra.mxu0 %v498
    %972 = vmatprep.subr.mxu0 %v507
    %973 = vmatpush1.msra.mxu0 %v506
    %974 = vmatprep.subr.mxu0 %v515
    %975 = vmatpush1.msra.mxu0 %v514
    %976 = vmatprep.subr.mxu0 %v523
    %977 = vmatpush1.msra.mxu0 %v522
    %978 = vmatprep.subr.mxu0 %v531
    %979 = vmatpush1.msra.mxu0 %v530
    %980 = vmatprep.subr.mxu0 %v539
    %981 = vmatpush1.msra.mxu0 %v538
    %982 = vmatprep.subr.mxu0 %v547
    %983 = vmatpush1.msra.mxu0 %v546
    %984 = vmatprep.subr.mxu0 %v555
    %985 = vmatpush1.msra.mxu0 %v554
    %986 = vmatprep.mubr.f32.mxu0 %v836
    %987 = vmatmul.mubr.f32.gmra.mrb[0].mxu0 %v834
    %v988 = vpop.f32.mrb[0].mxu0
    %v989 = vadd.f32 %v918, %v988
    %v990 = vpop.f32.mrb[0].mxu0
    %v991 = vadd.f32 %v920, %v990
    %992 = vdwg.mxu0
    %993 = vmatprep.subr.mxu0 %v563
    %994 = vmatpush1.msra.mxu0 %v562
    %995 = vmatprep.subr.mxu0 %v571
    %996 = vmatpush1.msra.mxu0 %v570
    %997 = vmatprep.subr.mxu0 %v579
    %998 = vmatpush1.msra.mxu0 %v578
    %999 = vmatprep.subr.mxu0 %v587
    %1000 = vmatpush1.msra.mxu0 %v586
    %1001 = vmatprep.subr.mxu0 %v595
    %1002 = vmatpush1.msra.mxu0 %v594
    %1003 = vmatprep.subr.mxu0 %v603
    %1004 = vmatpush1.msra.mxu0 %v602
    %1005 = vmatprep.subr.mxu0 %v611
    %1006 = vmatpush1.msra.mxu0 %v610
    %1007 = vmatprep.subr.mxu0 %v619
    %1008 = vmatpush1.msra.mxu0 %v618
    %1009 = vmatprep.subr.mxu0 %v627
    %1010 = vmatpush1.msra.mxu0 %v626
    %1011 = vmatprep.subr.mxu0 %v635
    %1012 = vmatpush1.msra.mxu0 %v634
    %1013 = vmatprep.subr.mxu0 %v643
    %1014 = vmatpush1.msra.mxu0 %v642
    %1015 = vmatprep.subr.mxu0 %v651
    %1016 = vmatpush1.msra.mxu0 %v650
    %1017 = vmatprep.subr.mxu0 %v659
    %1018 = vmatpush1.msra.mxu0 %v658
    %1019 = vmatprep.subr.mxu0 %v667
    %1020 = vmatpush1.msra.mxu0 %v666
    %1021 = vmatprep.subr.mxu0 %v675
    %1022 = vmatpush1.msra.mxu0 %v674
    %1023 = vmatprep.subr.mxu0 %v683
    %1024 = vmatpush1.msra.mxu0 %v682
    %1025 = vmatprep.subr.mxu0 %v691
    %1026 = vmatpush1.msra.mxu0 %v690
    %1027 = vmatprep.subr.mxu0 %v699
    %1028 = vmatpush1.msra.mxu0 %v698
    %1029 = vmatprep.subr.mxu0 %v707
    %1030 = vmatpush1.msra.mxu0 %v706
    %1031 = vmatprep.subr.mxu0 %v715
    %1032 = vmatpush1.msra.mxu0 %v714
    %1033 = vmatprep.subr.mxu0 %v723
    %1034 = vmatpush1.msra.mxu0 %v722
    %1035 = vmatprep.subr.mxu0 %v731
    %1036 = vmatpush1.msra.mxu0 %v730
    %1037 = vmatprep.subr.mxu0 %v739
    %1038 = vmatpush1.msra.mxu0 %v738
    %1039 = vmatprep.subr.mxu0 %v747
    %1040 = vmatpush1.msra.mxu0 %v746
    %1041 = vmatprep.subr.mxu0 %v755
    %1042 = vmatpush1.msra.mxu0 %v754
    %1043 = vmatprep.subr.mxu0 %v763
    %1044 = vmatpush1.msra.mxu0 %v762
    %1045 = vmatprep.subr.mxu0 %v771
    %1046 = vmatpush1.msra.mxu0 %v770
    %1047 = vmatprep.subr.mxu0 %v779
    %1048 = vmatpush1.msra.mxu0 %v778
    %1049 = vmatprep.subr.mxu0 %v787
    %1050 = vmatpush1.msra.mxu0 %v786
    %1051 = vmatprep.subr.mxu0 %v795
    %1052 = vmatpush1.msra.mxu0 %v794
    %1053 = vmatprep.subr.mxu0 %v803
    %1054 = vmatpush1.msra.mxu0 %v802
    %1055 = vmatprep.subr.mxu0 %v811
    %1056 = vmatpush1.msra.mxu0 %v810
    %1057 = vmatprep.mubr.f32.mxu0 %v844
    %1058 = vmatmul.mubr.f32.gmra.mrb[0].mxu0 %v843
    %v1059 = vpop.f32.mrb[0].mxu0
    %v1060 = vadd.f32 %v989, %v1059
    %v1061 = vpop.f32.mrb[0].mxu0
    %v1062 = vadd.f32 %v991, %v1061
    %1063 = vdwg.mxu0
    %1064 = vmatprep.subr.mxu0 %v53
    %1065 = vmatpush1.msra.mxu0 %v52
    %1066 = vmatprep.subr.mxu0 %v61
    %1067 = vmatpush1.msra.mxu0 %v60
    %1068 = vmatprep.subr.mxu0 %v69
    %1069 = vmatpush1.msra.mxu0 %v68
    %1070 = vmatprep.subr.mxu0 %v77
    %1071 = vmatpush1.msra.mxu0 %v76
    %1072 = vmatprep.subr.mxu0 %v85
    %1073 = vmatpush1.msra.mxu0 %v84
    %1074 = vmatprep.subr.mxu0 %v93
    %1075 = vmatpush1.msra.mxu0 %v92
    %1076 = vmatprep.subr.mxu0 %v101
    %1077 = vmatpush1.msra.mxu0 %v100
    %1078 = vmatprep.subr.mxu0 %v109
    %1079 = vmatpush1.msra.mxu0 %v108
    %1080 = vmatprep.subr.mxu0 %v117
    %1081 = vmatpush1.msra.mxu0 %v116
    %1082 = vmatprep.subr.mxu0 %v125
    %1083 = vmatpush1.msra.mxu0 %v124
    %1084 = vmatprep.subr.mxu0 %v133
    %1085 = vmatpush1.msra.mxu0 %v132
    %1086 = vmatprep.subr.mxu0 %v141
    %1087 = vmatpush1.msra.mxu0 %v140
    %1088 = vmatprep.subr.mxu0 %v149
    %1089 = vmatpush1.msra.mxu0 %v148
    %1090 = vmatprep.subr.mxu0 %v157
    %1091 = vmatpush1.msra.mxu0 %v156
    %1092 = vmatprep.subr.mxu0 %v165
    %1093 = vmatpush1.msra.mxu0 %v164
    %1094 = vmatprep.subr.mxu0 %v173
    %1095 = vmatpush1.msra.mxu0 %v172
    %1096 = vmatprep.subr.mxu0 %v181
    %1097 = vmatpush1.msra.mxu0 %v180
    %1098 = vmatprep.subr.mxu0 %v189
    %1099 = vmatpush1.msra.mxu0 %v188
    %1100 = vmatprep.subr.mxu0 %v197
    %1101 = vmatpush1.msra.mxu0 %v196
    %1102 = vmatprep.subr.mxu0 %v205
    %1103 = vmatpush1.msra.mxu0 %v204
    %1104 = vmatprep.subr.mxu0 %v213
    %1105 = vmatpush1.msra.mxu0 %v212
    %1106 = vmatprep.subr.mxu0 %v221
    %1107 = vmatpush1.msra.mxu0 %v220
    %1108 = vmatprep.subr.mxu0 %v229
    %1109 = vmatpush1.msra.mxu0 %v228
    %1110 = vmatprep.subr.mxu0 %v237
    %1111 = vmatpush1.msra.mxu0 %v236
    %1112 = vmatprep.subr.mxu0 %v245
    %1113 = vmatpush1.msra.mxu0 %v244
    %1114 = vmatprep.subr.mxu0 %v253
    %1115 = vmatpush1.msra.mxu0 %v252
    %1116 = vmatprep.subr.mxu0 %v261
    %1117 = vmatpush1.msra.mxu0 %v260
    %1118 = vmatprep.subr.mxu0 %v269
    %1119 = vmatpush1.msra.mxu0 %v268
    %1120 = vmatprep.subr.mxu0 %v277
    %1121 = vmatpush1.msra.mxu0 %v276
    %1122 = vmatprep.subr.mxu0 %v285
    %1123 = vmatpush1.msra.mxu0 %v284
    %1124 = vmatprep.subr.mxu0 %v293
    %1125 = vmatpush1.msra.mxu0 %v292
    %1126 = vmatprep.subr.mxu0 %v301
    %1127 = vmatpush1.msra.mxu0 %v300
    %1128 = vmatprep.mubr.f32.mxu0 %v835
    %1129 = vmatmul.mubr.f32.gmra.mrb[0].mxu0 %v827
    %v1130 = vpop.f32.mrb[0].mxu0
    %v1131 = vadd.f32 0.0, %v1130
    %v1132 = vpop.f32.mrb[0].mxu0
    %v1133 = vadd.f32 0.0, %v1132
    %1134 = vdwg.mxu0
    %1135 = vmatprep.subr.mxu0 %v309
    %1136 = vmatpush1.msra.mxu0 %v308
    %1137 = vmatprep.subr.mxu0 %v317
    %1138 = vmatpush1.msra.mxu0 %v316
    %1139 = vmatprep.subr.mxu0 %v325
    %1140 = vmatpush1.msra.mxu0 %v324
    %1141 = vmatprep.subr.mxu0 %v333
    %1142 = vmatpush1.msra.mxu0 %v332
    %1143 = vmatprep.subr.mxu0 %v341
    %1144 = vmatpush1.msra.mxu0 %v340
    %1145 = vmatprep.subr.mxu0 %v349
    %1146 = vmatpush1.msra.mxu0 %v348
    %1147 = vmatprep.subr.mxu0 %v357
    %1148 = vmatpush1.msra.mxu0 %v356
    %1149 = vmatprep.subr.mxu0 %v365
    %1150 = vmatpush1.msra.mxu0 %v364
    %1151 = vmatprep.subr.mxu0 %v373
    %1152 = vmatpush1.msra.mxu0 %v372
    %1153 = vmatprep.subr.mxu0 %v381
    %1154 = vmatpush1.msra.mxu0 %v380
    %1155 = vmatprep.subr.mxu0 %v389
    %1156 = vmatpush1.msra.mxu0 %v388
    %1157 = vmatprep.subr.mxu0 %v397
    %1158 = vmatpush1.msra.mxu0 %v396
    %1159 = vmatprep.subr.mxu0 %v405
    %1160 = vmatpush1.msra.mxu0 %v404
    %1161 = vmatprep.subr.mxu0 %v413
    %1162 = vmatpush1.msra.mxu0 %v412
    %1163 = vmatprep.subr.mxu0 %v421
    %1164 = vmatpush1.msra.mxu0 %v420
    %1165 = vmatprep.subr.mxu0 %v429
    %1166 = vmatpush1.msra.mxu0 %v428
    %1167 = vmatprep.subr.mxu0 %v437
    %1168 = vmatpush1.msra.mxu0 %v436
    %1169 = vmatprep.subr.mxu0 %v445
    %1170 = vmatpush1.msra.mxu0 %v444
    %1171 = vmatprep.subr.mxu0 %v453
    %1172 = vmatpush1.msra.mxu0 %v452
    %1173 = vmatprep.subr.mxu0 %v461
    %1174 = vmatpush1.msra.mxu0 %v460
    %1175 = vmatprep.subr.mxu0 %v469
    %1176 = vmatpush1.msra.mxu0 %v468
    %1177 = vmatprep.subr.mxu0 %v477
    %1178 = vmatpush1.msra.mxu0 %v476
    %1179 = vmatprep.subr.mxu0 %v485
    %1180 = vmatpush1.msra.mxu0 %v484
    %1181 = vmatprep.subr.mxu0 %v493
    %1182 = vmatpush1.msra.mxu0 %v492
    %1183 = vmatprep.subr.mxu0 %v501
    %1184 = vmatpush1.msra.mxu0 %v500
    %1185 = vmatprep.subr.mxu0 %v509
    %1186 = vmatpush1.msra.mxu0 %v508
    %1187 = vmatprep.subr.mxu0 %v517
    %1188 = vmatpush1.msra.mxu0 %v516
    %1189 = vmatprep.subr.mxu0 %v525
    %1190 = vmatpush1.msra.mxu0 %v524
    %1191 = vmatprep.subr.mxu0 %v533
    %1192 = vmatpush1.msra.mxu0 %v532
    %1193 = vmatprep.subr.mxu0 %v541
    %1194 = vmatpush1.msra.mxu0 %v540
    %1195 = vmatprep.subr.mxu0 %v549
    %1196 = vmatpush1.msra.mxu0 %v548
    %1197 = vmatprep.subr.mxu0 %v557
    %1198 = vmatpush1.msra.mxu0 %v556
    %1199 = vmatprep.mubr.f32.mxu0 %v836
    %1200 = vmatmul.mubr.f32.gmra.mrb[0].mxu0 %v834
    %v1201 = vpop.f32.mrb[0].mxu0
    %v1202 = vadd.f32 %v1131, %v1201
    %v1203 = vpop.f32.mrb[0].mxu0
    %v1204 = vadd.f32 %v1133, %v1203
    %1205 = vdwg.mxu0
    %1206 = vmatprep.subr.mxu0 %v565
    %1207 = vmatpush1.msra.mxu0 %v564
    %1208 = vmatprep.subr.mxu0 %v573
    %1209 = vmatpush1.msra.mxu0 %v572
    %1210 = vmatprep.subr.mxu0 %v581
    %1211 = vmatpush1.msra.mxu0 %v580
    %1212 = vmatprep.subr.mxu0 %v589
    %1213 = vmatpush1.msra.mxu0 %v588
    %1214 = vmatprep.subr.mxu0 %v597
    %1215 = vmatpush1.msra.mxu0 %v596
    %1216 = vmatprep.subr.mxu0 %v605
    %1217 = vmatpush1.msra.mxu0 %v604
    %1218 = vmatprep.subr.mxu0 %v613
    %1219 = vmatpush1.msra.mxu0 %v612
    %1220 = vmatprep.subr.mxu0 %v621
    %1221 = vmatpush1.msra.mxu0 %v620
    %1222 = vmatprep.subr.mxu0 %v629
    %1223 = vmatpush1.msra.mxu0 %v628
    %1224 = vmatprep.subr.mxu0 %v637
    %1225 = vmatpush1.msra.mxu0 %v636
    %1226 = vmatprep.subr.mxu0 %v645
    %1227 = vmatpush1.msra.mxu0 %v644
    %1228 = vmatprep.subr.mxu0 %v653
    %1229 = vmatpush1.msra.mxu0 %v652
    %1230 = vmatprep.subr.mxu0 %v661
    %1231 = vmatpush1.msra.mxu0 %v660
    %1232 = vmatprep.subr.mxu0 %v669
    %1233 = vmatpush1.msra.mxu0 %v668
    %1234 = vmatprep.subr.mxu0 %v677
    %1235 = vmatpush1.msra.mxu0 %v676
    %1236 = vmatprep.subr.mxu0 %v685
    %1237 = vmatpush1.msra.mxu0 %v684
    %1238 = vmatprep.subr.mxu0 %v693
    %1239 = vmatpush1.msra.mxu0 %v692
    %1240 = vmatprep.subr.mxu0 %v701
    %1241 = vmatpush1.msra.mxu0 %v700
    %1242 = vmatprep.subr.mxu0 %v709
    %1243 = vmatpush1.msra.mxu0 %v708
    %1244 = vmatprep.subr.mxu0 %v717
    %1245 = vmatpush1.msra.mxu0 %v716
    %1246 = vmatprep.subr.mxu0 %v725
    %1247 = vmatpush1.msra.mxu0 %v724
    %1248 = vmatprep.subr.mxu0 %v733
    %1249 = vmatpush1.msra.mxu0 %v732
    %1250 = vmatprep.subr.mxu0 %v741
    %1251 = vmatpush1.msra.mxu0 %v740
    %1252 = vmatprep.subr.mxu0 %v749
    %1253 = vmatpush1.msra.mxu0 %v748
    %1254 = vmatprep.subr.mxu0 %v757
    %1255 = vmatpush1.msra.mxu0 %v756
    %1256 = vmatprep.subr.mxu0 %v765
    %1257 = vmatpush1.msra.mxu0 %v764
    %1258 = vmatprep.subr.mxu0 %v773
    %1259 = vmatpush1.msra.mxu0 %v772
    %1260 = vmatprep.subr.mxu0 %v781
    %1261 = vmatpush1.msra.mxu0 %v780
    %1262 = vmatprep.subr.mxu0 %v789
    %1263 = vmatpush1.msra.mxu0 %v788
    %1264 = vmatprep.subr.mxu0 %v797
    %1265 = vmatpush1.msra.mxu0 %v796
    %1266 = vmatprep.subr.mxu0 %v805
    %1267 = vmatpush1.msra.mxu0 %v804
    %1268 = vmatprep.subr.mxu0 %v813
    %1269 = vmatpush1.msra.mxu0 %v812
    %1270 = vmatprep.mubr.f32.mxu0 %v844
    %1271 = vmatmul.mubr.f32.gmra.mrb[0].mxu0 %v843
    %v1272 = vpop.f32.mrb[0].mxu0
    %v1273 = vadd.f32 %v1202, %v1272
    %v1274 = vpop.f32.mrb[0].mxu0
    %v1275 = vadd.f32 %v1204, %v1274
    %1276 = vdwg.mxu0
    %1277 = vmatprep.subr.mxu0 %v55
    %1278 = vmatpush1.msra.mxu0 %v54
    %1279 = vmatprep.subr.mxu0 %v63
    %1280 = vmatpush1.msra.mxu0 %v62
    %1281 = vmatprep.subr.mxu0 %v71
    %1282 = vmatpush1.msra.mxu0 %v70
    %1283 = vmatprep.subr.mxu0 %v79
    %1284 = vmatpush1.msra.mxu0 %v78
    %1285 = vmatprep.subr.mxu0 %v87
    %1286 = vmatpush1.msra.mxu0 %v86
    %1287 = vmatprep.subr.mxu0 %v95
    %1288 = vmatpush1.msra.mxu0 %v94
    %1289 = vmatprep.subr.mxu0 %v103
    %1290 = vmatpush1.msra.mxu0 %v102
    %1291 = vmatprep.subr.mxu0 %v111
    %1292 = vmatpush1.msra.mxu0 %v110
    %1293 = vmatprep.subr.mxu0 %v119
    %1294 = vmatpush1.msra.mxu0 %v118
    %1295 = vmatprep.subr.mxu0 %v127
    %1296 = vmatpush1.msra.mxu0 %v126
    %1297 = vmatprep.subr.mxu0 %v135
    %1298 = vmatpush1.msra.mxu0 %v134
    %1299 = vmatprep.subr.mxu0 %v143
    %1300 = vmatpush1.msra.mxu0 %v142
    %1301 = vmatprep.subr.mxu0 %v151
    %1302 = vmatpush1.msra.mxu0 %v150
    %1303 = vmatprep.subr.mxu0 %v159
    %1304 = vmatpush1.msra.mxu0 %v158
    %1305 = vmatprep.subr.mxu0 %v167
    %1306 = vmatpush1.msra.mxu0 %v166
    %1307 = vmatprep.subr.mxu0 %v175
    %1308 = vmatpush1.msra.mxu0 %v174
    %1309 = vmatprep.subr.mxu0 %v183
    %1310 = vmatpush1.msra.mxu0 %v182
    %1311 = vmatprep.subr.mxu0 %v191
    %1312 = vmatpush1.msra.mxu0 %v190
    %1313 = vmatprep.subr.mxu0 %v199
    %1314 = vmatpush1.msra.mxu0 %v198
    %1315 = vmatprep.subr.mxu0 %v207
    %1316 = vmatpush1.msra.mxu0 %v206
    %1317 = vmatprep.subr.mxu0 %v215
    %1318 = vmatpush1.msra.mxu0 %v214
    %1319 = vmatprep.subr.mxu0 %v223
    %1320 = vmatpush1.msra.mxu0 %v222
    %1321 = vmatprep.subr.mxu0 %v231
    %1322 = vmatpush1.msra.mxu0 %v230
    %1323 = vmatprep.subr.mxu0 %v239
    %1324 = vmatpush1.msra.mxu0 %v238
    %1325 = vmatprep.subr.mxu0 %v247
    %1326 = vmatpush1.msra.mxu0 %v246
    %1327 = vmatprep.subr.mxu0 %v255
    %1328 = vmatpush1.msra.mxu0 %v254
    %1329 = vmatprep.subr.mxu0 %v263
    %1330 = vmatpush1.msra.mxu0 %v262
    %1331 = vmatprep.subr.mxu0 %v271
    %1332 = vmatpush1.msra.mxu0 %v270
    %1333 = vmatprep.subr.mxu0 %v279
    %1334 = vmatpush1.msra.mxu0 %v278
    %1335 = vmatprep.subr.mxu0 %v287
    %1336 = vmatpush1.msra.mxu0 %v286
    %1337 = vmatprep.subr.mxu0 %v295
    %1338 = vmatpush1.msra.mxu0 %v294
    %1339 = vmatprep.subr.mxu0 %v303
    %1340 = vmatpush1.msra.mxu0 %v302
    %1341 = vmatprep.mubr.f32.mxu0 %v835
    %1342 = vmatmul.mubr.f32.gmra.mrb[0].mxu0 %v827
    %v1343 = vpop.f32.mrb[0].mxu0
    %v1344 = vadd.f32 0.0, %v1343
    %v1345 = vpop.f32.mrb[0].mxu0
    %v1346 = vadd.f32 0.0, %v1345
    %1347 = vdwg.mxu0
    %1348 = vmatprep.subr.mxu0 %v311
    %1349 = vmatpush1.msra.mxu0 %v310
    %1350 = vmatprep.subr.mxu0 %v319
    %1351 = vmatpush1.msra.mxu0 %v318
    %1352 = vmatprep.subr.mxu0 %v327
    %1353 = vmatpush1.msra.mxu0 %v326
    %1354 = vmatprep.subr.mxu0 %v335
    %1355 = vmatpush1.msra.mxu0 %v334
    %1356 = vmatprep.subr.mxu0 %v343
    %1357 = vmatpush1.msra.mxu0 %v342
    %1358 = vmatprep.subr.mxu0 %v351
    %1359 = vmatpush1.msra.mxu0 %v350
    %1360 = vmatprep.subr.mxu0 %v359
    %1361 = vmatpush1.msra.mxu0 %v358
    %1362 = vmatprep.subr.mxu0 %v367
    %1363 = vmatpush1.msra.mxu0 %v366
    %1364 = vmatprep.subr.mxu0 %v375
    %1365 = vmatpush1.msra.mxu0 %v374
    %1366 = vmatprep.subr.mxu0 %v383
    %1367 = vmatpush1.msra.mxu0 %v382
    %1368 = vmatprep.subr.mxu0 %v391
    %1369 = vmatpush1.msra.mxu0 %v390
    %1370 = vmatprep.subr.mxu0 %v399
    %1371 = vmatpush1.msra.mxu0 %v398
    %1372 = vmatprep.subr.mxu0 %v407
    %1373 = vmatpush1.msra.mxu0 %v406
    %1374 = vmatprep.subr.mxu0 %v415
    %1375 = vmatpush1.msra.mxu0 %v414
    %1376 = vmatprep.subr.mxu0 %v423
    %1377 = vmatpush1.msra.mxu0 %v422
    %1378 = vmatprep.subr.mxu0 %v431
    %1379 = vmatpush1.msra.mxu0 %v430
    %1380 = vmatprep.subr.mxu0 %v439
    %1381 = vmatpush1.msra.mxu0 %v438
    %1382 = vmatprep.subr.mxu0 %v447
    %1383 = vmatpush1.msra.mxu0 %v446
    %1384 = vmatprep.subr.mxu0 %v455
    %1385 = vmatpush1.msra.mxu0 %v454
    %1386 = vmatprep.subr.mxu0 %v463
    %1387 = vmatpush1.msra.mxu0 %v462
    %1388 = vmatprep.subr.mxu0 %v471
    %1389 = vmatpush1.msra.mxu0 %v470
    %1390 = vmatprep.subr.mxu0 %v479
    %1391 = vmatpush1.msra.mxu0 %v478
    %1392 = vmatprep.subr.mxu0 %v487
    %1393 = vmatpush1.msra.mxu0 %v486
    %1394 = vmatprep.subr.mxu0 %v495
    %1395 = vmatpush1.msra.mxu0 %v494
    %1396 = vmatprep.subr.mxu0 %v503
    %1397 = vmatpush1.msra.mxu0 %v502
    %1398 = vmatprep.subr.mxu0 %v511
    %1399 = vmatpush1.msra.mxu0 %v510
    %1400 = vmatprep.subr.mxu0 %v519
    %1401 = vmatpush1.msra.mxu0 %v518
    %1402 = vmatprep.subr.mxu0 %v527
    %1403 = vmatpush1.msra.mxu0 %v526
    %1404 = vmatprep.subr.mxu0 %v535
    %1405 = vmatpush1.msra.mxu0 %v534
    %1406 = vmatprep.subr.mxu0 %v543
    %1407 = vmatpush1.msra.mxu0 %v542
    %1408 = vmatprep.subr.mxu0 %v551
    %1409 = vmatpush1.msra.mxu0 %v550
    %1410 = vmatprep.subr.mxu0 %v559
    %1411 = vmatpush1.msra.mxu0 %v558
    %1412 = vmatprep.mubr.f32.mxu0 %v836
    %1413 = vmatmul.mubr.f32.gmra.mrb[0].mxu0 %v834
    %v1414 = vpop.f32.mrb[0].mxu0
    %v1415 = vadd.f32 %v1344, %v1414
    %v1416 = vpop.f32.mrb[0].mxu0
    %v1417 = vadd.f32 %v1346, %v1416
    %1418 = vdwg.mxu0
    %1419 = vmatprep.subr.mxu0 %v567
    %1420 = vmatpush1.msra.mxu0 %v566
    %1421 = vmatprep.subr.mxu0 %v575
    %1422 = vmatpush1.msra.mxu0 %v574
    %1423 = vmatprep.subr.mxu0 %v583
    %1424 = vmatpush1.msra.mxu0 %v582
    %1425 = vmatprep.subr.mxu0 %v591
    %1426 = vmatpush1.msra.mxu0 %v590
    %1427 = vmatprep.subr.mxu0 %v599
    %1428 = vmatpush1.msra.mxu0 %v598
    %1429 = vmatprep.subr.mxu0 %v607
    %1430 = vmatpush1.msra.mxu0 %v606
    %1431 = vmatprep.subr.mxu0 %v615
    %1432 = vmatpush1.msra.mxu0 %v614
    %1433 = vmatprep.subr.mxu0 %v623
    %1434 = vmatpush1.msra.mxu0 %v622
    %1435 = vmatprep.subr.mxu0 %v631
    %1436 = vmatpush1.msra.mxu0 %v630
    %1437 = vmatprep.subr.mxu0 %v639
    %1438 = vmatpush1.msra.mxu0 %v638
    %1439 = vmatprep.subr.mxu0 %v647
    %1440 = vmatpush1.msra.mxu0 %v646
    %1441 = vmatprep.subr.mxu0 %v655
    %1442 = vmatpush1.msra.mxu0 %v654
    %1443 = vmatprep.subr.mxu0 %v663
    %1444 = vmatpush1.msra.mxu0 %v662
    %1445 = vmatprep.subr.mxu0 %v671
    %1446 = vmatpush1.msra.mxu0 %v670
    %1447 = vmatprep.subr.mxu0 %v679
    %1448 = vmatpush1.msra.mxu0 %v678
    %1449 = vmatprep.subr.mxu0 %v687
    %1450 = vmatpush1.msra.mxu0 %v686
    %1451 = vmatprep.subr.mxu0 %v695
    %1452 = vmatpush1.msra.mxu0 %v694
    %1453 = vmatprep.subr.mxu0 %v703
    %1454 = vmatpush1.msra.mxu0 %v702
    %1455 = vmatprep.subr.mxu0 %v711
    %1456 = vmatpush1.msra.mxu0 %v710
    %1457 = vmatprep.subr.mxu0 %v719
    %1458 = vmatpush1.msra.mxu0 %v718
    %1459 = vmatprep.subr.mxu0 %v727
    %1460 = vmatpush1.msra.mxu0 %v726
    %1461 = vmatprep.subr.mxu0 %v735
    %1462 = vmatpush1.msra.mxu0 %v734
    %1463 = vmatprep.subr.mxu0 %v743
    %1464 = vmatpush1.msra.mxu0 %v742
    %1465 = vmatprep.subr.mxu0 %v751
    %1466 = vmatpush1.msra.mxu0 %v750
    %1467 = vmatprep.subr.mxu0 %v759
    %1468 = vmatpush1.msra.mxu0 %v758
    %1469 = vmatprep.subr.mxu0 %v767
    %1470 = vmatpush1.msra.mxu0 %v766
    %1471 = vmatprep.subr.mxu0 %v775
    %1472 = vmatpush1.msra.mxu0 %v774
    %1473 = vmatprep.subr.mxu0 %v783
    %1474 = vmatpush1.msra.mxu0 %v782
    %1475 = vmatprep.subr.mxu0 %v791
    %1476 = vmatpush1.msra.mxu0 %v790
    %1477 = vmatprep.subr.mxu0 %v799
    %1478 = vmatpush1.msra.mxu0 %v798
    %1479 = vmatprep.subr.mxu0 %v807
    %1480 = vmatpush1.msra.mxu0 %v806
    %1481 = vmatprep.subr.mxu0 %v815
    %1482 = vmatpush1.msra.mxu0 %v814
    %1483 = vmatprep.mubr.f32.mxu0 %v844
    %1484 = vmatmul.mubr.f32.gmra.mrb[0].mxu0 %v843
    %v1485 = vpop.f32.mrb[0].mxu0
    %v1486 = vadd.f32 %v1415, %v1485
    %v1487 = vpop.f32.mrb[0].mxu0
    %v1488 = vadd.f32 %v1417, %v1487
    %1489 = vdwg.mxu0
    %1490 = vmatprep.subr.mxu0 %v57
    %1491 = vmatpush1.msra.mxu0 %v56
    %1492 = vmatprep.subr.mxu0 %v65
    %1493 = vmatpush1.msra.mxu0 %v64
    %1494 = vmatprep.subr.mxu0 %v73
    %1495 = vmatpush1.msra.mxu0 %v72
    %1496 = vmatprep.subr.mxu0 %v81
    %1497 = vmatpush1.msra.mxu0 %v80
    %1498 = vmatprep.subr.mxu0 %v89
    %1499 = vmatpush1.msra.mxu0 %v88
    %1500 = vmatprep.subr.mxu0 %v97
    %1501 = vmatpush1.msra.mxu0 %v96
    %1502 = vmatprep.subr.mxu0 %v105
    %1503 = vmatpush1.msra.mxu0 %v104
    %1504 = vmatprep.subr.mxu0 %v113
    %1505 = vmatpush1.msra.mxu0 %v112
    %1506 = vmatprep.subr.mxu0 %v121
    %1507 = vmatpush1.msra.mxu0 %v120
    %1508 = vmatprep.subr.mxu0 %v129
    %1509 = vmatpush1.msra.mxu0 %v128
    %1510 = vmatprep.subr.mxu0 %v137
    %1511 = vmatpush1.msra.mxu0 %v136
    %1512 = vmatprep.subr.mxu0 %v145
    %1513 = vmatpush1.msra.mxu0 %v144
    %1514 = vmatprep.subr.mxu0 %v153
    %1515 = vmatpush1.msra.mxu0 %v152
    %1516 = vmatprep.subr.mxu0 %v161
    %1517 = vmatpush1.msra.mxu0 %v160
    %1518 = vmatprep.subr.mxu0 %v169
    %1519 = vmatpush1.msra.mxu0 %v168
    %1520 = vmatprep.subr.mxu0 %v177
    %1521 = vmatpush1.msra.mxu0 %v176
    %1522 = vmatprep.subr.mxu0 %v185
    %1523 = vmatpush1.msra.mxu0 %v184
    %1524 = vmatprep.subr.mxu0 %v193
    %1525 = vmatpush1.msra.mxu0 %v192
    %1526 = vmatprep.subr.mxu0 %v201
    %1527 = vmatpush1.msra.mxu0 %v200
    %1528 = vmatprep.subr.mxu0 %v209
    %1529 = vmatpush1.msra.mxu0 %v208
    %1530 = vmatprep.subr.mxu0 %v217
    %1531 = vmatpush1.msra.mxu0 %v216
    %1532 = vmatprep.subr.mxu0 %v225
    %1533 = vmatpush1.msra.mxu0 %v224
    %1534 = vmatprep.subr.mxu0 %v233
    %1535 = vmatpush1.msra.mxu0 %v232
    %1536 = vmatprep.subr.mxu0 %v241
    %1537 = vmatpush1.msra.mxu0 %v240
    %1538 = vmatprep.subr.mxu0 %v249
    %1539 = vmatpush1.msra.mxu0 %v248
    %1540 = vmatprep.subr.mxu0 %v257
    %1541 = vmatpush1.msra.mxu0 %v256
    %1542 = vmatprep.subr.mxu0 %v265
    %1543 = vmatpush1.msra.mxu0 %v264
    %1544 = vmatprep.subr.mxu0 %v273
    %1545 = vmatpush1.msra.mxu0 %v272
    %1546 = vmatprep.subr.mxu0 %v281
    %1547 = vmatpush1.msra.mxu0 %v280
    %1548 = vmatprep.subr.mxu0 %v289
    %1549 = vmatpush1.msra.mxu0 %v288
    %1550 = vmatprep.subr.mxu0 %v297
    %1551 = vmatpush1.msra.mxu0 %v296
    %1552 = vmatprep.subr.mxu0 %v305
    %1553 = vmatpush1.msra.mxu0 %v304
    %1554 = vmatprep.mubr.f32.mxu0 %v835
    %1555 = vmatmul.mubr.f32.gmra.mrb[0].mxu0 %v827
    %v1556 = vpop.f32.mrb[0].mxu0
    %v1557 = vadd.f32 0.0, %v1556
    %v1558 = vpop.f32.mrb[0].mxu0
    %v1559 = vadd.f32 0.0, %v1558
    %1560 = vdwg.mxu0
    %1561 = vmatprep.subr.mxu0 %v313
    %1562 = vmatpush1.msra.mxu0 %v312
    %1563 = vmatprep.subr.mxu0 %v321
    %1564 = vmatpush1.msra.mxu0 %v320
    %1565 = vmatprep.subr.mxu0 %v329
    %1566 = vmatpush1.msra.mxu0 %v328
    %1567 = vmatprep.subr.mxu0 %v337
    %1568 = vmatpush1.msra.mxu0 %v336
    %1569 = vmatprep.subr.mxu0 %v345
    %1570 = vmatpush1.msra.mxu0 %v344
    %1571 = vmatprep.subr.mxu0 %v353
    %1572 = vmatpush1.msra.mxu0 %v352
    %1573 = vmatprep.subr.mxu0 %v361
    %1574 = vmatpush1.msra.mxu0 %v360
    %1575 = vmatprep.subr.mxu0 %v369
    %1576 = vmatpush1.msra.mxu0 %v368
    %1577 = vmatprep.subr.mxu0 %v377
    %1578 = vmatpush1.msra.mxu0 %v376
    %1579 = vmatprep.subr.mxu0 %v385
    %1580 = vmatpush1.msra.mxu0 %v384
    %1581 = vmatprep.subr.mxu0 %v393
    %1582 = vmatpush1.msra.mxu0 %v392
    %1583 = vmatprep.subr.mxu0 %v401
    %1584 = vmatpush1.msra.mxu0 %v400
    %1585 = vmatprep.subr.mxu0 %v409
    %1586 = vmatpush1.msra.mxu0 %v408
    %1587 = vmatprep.subr.mxu0 %v417
    %1588 = vmatpush1.msra.mxu0 %v416
    %1589 = vmatprep.subr.mxu0 %v425
    %1590 = vmatpush1.msra.mxu0 %v424
    %1591 = vmatprep.subr.mxu0 %v433
    %1592 = vmatpush1.msra.mxu0 %v432
    %1593 = vmatprep.subr.mxu0 %v441
    %1594 = vmatpush1.msra.mxu0 %v440
    %1595 = vmatprep.subr.mxu0 %v449
    %1596 = vmatpush1.msra.mxu0 %v448
    %1597 = vmatprep.subr.mxu0 %v457
    %1598 = vmatpush1.msra.mxu0 %v456
    %1599 = vmatprep.subr.mxu0 %v465
    %1600 = vmatpush1.msra.mxu0 %v464
    %1601 = vmatprep.subr.mxu0 %v473
    %1602 = vmatpush1.msra.mxu0 %v472
    %1603 = vmatprep.subr.mxu0 %v481
    %1604 = vmatpush1.msra.mxu0 %v480
    %1605 = vmatprep.subr.mxu0 %v489
    %1606 = vmatpush1.msra.mxu0 %v488
    %1607 = vmatprep.subr.mxu0 %v497
    %1608 = vmatpush1.msra.mxu0 %v496
    %1609 = vmatprep.subr.mxu0 %v505
    %1610 = vmatpush1.msra.mxu0 %v504
    %1611 = vmatprep.subr.mxu0 %v513
    %1612 = vmatpush1.msra.mxu0 %v512
    %1613 = vmatprep.subr.mxu0 %v521
    %1614 = vmatpush1.msra.mxu0 %v520
    %1615 = vmatprep.subr.mxu0 %v529
    %1616 = vmatpush1.msra.mxu0 %v528
    %1617 = vmatprep.subr.mxu0 %v537
    %1618 = vmatpush1.msra.mxu0 %v536
    %1619 = vmatprep.subr.mxu0 %v545
    %1620 = vmatpush1.msra.mxu0 %v544
    %1621 = vmatprep.subr.mxu0 %v553
    %1622 = vmatpush1.msra.mxu0 %v552
    %1623 = vmatprep.subr.mxu0 %v561
    %1624 = vmatpush1.msra.mxu0 %v560
    %1625 = vmatprep.mubr.f32.mxu0 %v836
    %1626 = vmatmul.mubr.f32.gmra.mrb[0].mxu0 %v834
    %v1627 = vpop.f32.mrb[0].mxu0
    %v1628 = vadd.f32 %v1557, %v1627
    %v1629 = vpop.f32.mrb[0].mxu0
    %v1630 = vadd.f32 %v1559, %v1629
    %1631 = vdwg.mxu0
    %1632 = vmatprep.subr.mxu0 %v569
    %1633 = vmatpush1.msra.mxu0 %v568
    %1634 = vmatprep.subr.mxu0 %v577
    %1635 = vmatpush1.msra.mxu0 %v576
    %1636 = vmatprep.subr.mxu0 %v585
    %1637 = vmatpush1.msra.mxu0 %v584
    %1638 = vmatprep.subr.mxu0 %v593
    %1639 = vmatpush1.msra.mxu0 %v592
    %1640 = vmatprep.subr.mxu0 %v601
    %1641 = vmatpush1.msra.mxu0 %v600
    %1642 = vmatprep.subr.mxu0 %v609
    %1643 = vmatpush1.msra.mxu0 %v608
    %1644 = vmatprep.subr.mxu0 %v617
    %1645 = vmatpush1.msra.mxu0 %v616
    %1646 = vmatprep.subr.mxu0 %v625
    %1647 = vmatpush1.msra.mxu0 %v624
    %1648 = vmatprep.subr.mxu0 %v633
    %1649 = vmatpush1.msra.mxu0 %v632
    %1650 = vmatprep.subr.mxu0 %v641
    %1651 = vmatpush1.msra.mxu0 %v640
    %1652 = vmatprep.subr.mxu0 %v649
    %1653 = vmatpush1.msra.mxu0 %v648
    %1654 = vmatprep.subr.mxu0 %v657
    %1655 = vmatpush1.msra.mxu0 %v656
    %1656 = vmatprep.subr.mxu0 %v665
    %1657 = vmatpush1.msra.mxu0 %v664
    %1658 = vmatprep.subr.mxu0 %v673
    %1659 = vmatpush1.msra.mxu0 %v672
    %1660 = vmatprep.subr.mxu0 %v681
    %1661 = vmatpush1.msra.mxu0 %v680
    %1662 = vmatprep.subr.mxu0 %v689
    %1663 = vmatpush1.msra.mxu0 %v688
    %1664 = vmatprep.subr.mxu0 %v697
    %1665 = vmatpush1.msra.mxu0 %v696
    %1666 = vmatprep.subr.mxu0 %v705
    %1667 = vmatpush1.msra.mxu0 %v704
    %1668 = vmatprep.subr.mxu0 %v713
    %1669 = vmatpush1.msra.mxu0 %v712
    %1670 = vmatprep.subr.mxu0 %v721
    %1671 = vmatpush1.msra.mxu0 %v720
    %1672 = vmatprep.subr.mxu0 %v729
    %1673 = vmatpush1.msra.mxu0 %v728
    %1674 = vmatprep.subr.mxu0 %v737
    %1675 = vmatpush1.msra.mxu0 %v736
    %1676 = vmatprep.subr.mxu0 %v745
    %1677 = vmatpush1.msra.mxu0 %v744
    %1678 = vmatprep.subr.mxu0 %v753
    %1679 = vmatpush1.msra.mxu0 %v752
    %1680 = vmatprep.subr.mxu0 %v761
    %1681 = vmatpush1.msra.mxu0 %v760
    %1682 = vmatprep.subr.mxu0 %v769
    %1683 = vmatpush1.msra.mxu0 %v768
    %1684 = vmatprep.subr.mxu0 %v777
    %1685 = vmatpush1.msra.mxu0 %v776
    %1686 = vmatprep.subr.mxu0 %v785
    %1687 = vmatpush1.msra.mxu0 %v784
    %1688 = vmatprep.subr.mxu0 %v793
    %1689 = vmatpush1.msra.mxu0 %v792
    %1690 = vmatprep.subr.mxu0 %v801
    %1691 = vmatpush1.msra.mxu0 %v800
    %1692 = vmatprep.subr.mxu0 %v809
    %1693 = vmatpush1.msra.mxu0 %v808
    %1694 = vmatprep.subr.mxu0 %v817
    %1695 = vmatpush1.msra.mxu0 %v816
    %1696 = vmatprep.mubr.f32.mxu0 %v844
    %1697 = vmatmul.mubr.f32.gmra.mrb[0].mxu0 %v843
    %v1698 = vpop.f32.mrb[0].mxu0
    %v1699 = vadd.f32 %v1628, %v1698
    %v1700 = vpop.f32.mrb[0].mxu0
    %v1701 = vadd.f32 %v1630, %v1700
    %1702 = vdwg.mxu0
    %v1711 = vcombine.low %v1060, %v1062
    %v1712 = vcombine.low %v1273, %v1275
    %v1714 = vunpack.c.l.s4 1983009808
    %v1715 = vunpack.c.0.s8 %v1714
    %v1716 = vlaneseq
    %v1717 = vshrl.u32 %v1716, 7
    %v1718 = vsub.s32 %v1715, %v1717
    %v1719 = vrot.slane %v1711, %v1718
    %v1721 = vunpack.c.l.s4 1983009808
    %v1722 = vunpack.c.0.s8 %v1721
    %v1723 = vlaneseq
    %v1724 = vshrl.u32 %v1723, 7
    %v1725 = vsub.s32 %v1722, %v1724
    %v1726 = vrot.slane %v1712, %v1725
    %v1727 = vcombine.low %v1719, %v1726
    %v1728 = vcombine.low %v1486, %v1488
    %v1729 = vcombine.low %v1699, %v1701
    %v1731 = vunpack.c.l.s4 1983009808
    %v1732 = vunpack.c.0.s8 %v1731
    %v1733 = vlaneseq
    %v1734 = vshrl.u32 %v1733, 7
    %v1735 = vsub.s32 %v1732, %v1734
    %v1736 = vrot.slane %v1728, %v1735
    %v1738 = vunpack.c.l.s4 1983009808
    %v1739 = vunpack.c.0.s8 %v1738
    %v1740 = vlaneseq
    %v1741 = vshrl.u32 %v1740, 7
    %v1742 = vsub.s32 %v1739, %v1741
    %v1743 = vrot.slane %v1729, %v1742
    %v1744 = vcombine.low %v1736, %v1743
    %v1747 = vadd.f32 %v46, %v1727
    %v1748 = vadd.f32 %v47, %v1744
    %1749 = vst [vmem:[#allocation2] sm:$0xff] %v1747
    %1750 = vst [vmem:[#allocation2 + $0x8] sm:$0xff] %v1748
    // Predicated region
    $region26: #{custom_clip_forward.4} parent=1 // pred_check
      %p1751 = pneg %p40
    $region27: #{custom_clip_forward.4} parent=1 // pred_check_branch
      %1753 = sbr.rel (%p1751) target = $region29
    $region28: #{custom_clip_forward.4} parent=1 // pred_region
      %v1754 = vld [vmem:[#allocation2] sm:$0xff]
      %v1755 = vld [vmem:[#allocation2 + $0x8] sm:$0xff]
      %v1756 = vld [vmem:[#allocation5] sm:$0xff]
      %v1758 = vlaneseq
      %v1759 = vshrl.u32 %v1758, 7
      %v1760 = vsub.s32 0, %v1759
      %v1761 = vrot.slane %v1756, %v1760
      %v1762 = vlaneseq
      %v1763 = vshrl.u32 %v1762, 7
      %v1764 = vsub.s32 1, %v1763
      %v1765 = vrot.slane %v1756, %v1764
      %v1766 = vlaneseq
      %v1767 = vshrl.u32 %v1766, 7
      %v1768 = vsub.s32 2, %v1767
      %v1769 = vrot.slane %v1756, %v1768
      %v1770 = vlaneseq
      %v1771 = vshrl.u32 %v1770, 7
      %v1772 = vsub.s32 3, %v1771
      %v1773 = vrot.slane %v1756, %v1772
      %v1774 = vlaneseq
      %v1775 = vshrl.u32 %v1774, 7
      %v1776 = vsub.s32 4, %v1775
      %v1777 = vrot.slane %v1756, %v1776
      %v1778 = vlaneseq
      %v1779 = vshrl.u32 %v1778, 7
      %v1780 = vsub.s32 5, %v1779
      %v1781 = vrot.slane %v1756, %v1780
      %v1782 = vlaneseq
      %v1783 = vshrl.u32 %v1782, 7
      %v1784 = vsub.s32 6, %v1783
      %v1785 = vrot.slane %v1756, %v1784
      %v1786 = vlaneseq
      %v1787 = vshrl.u32 %v1786, 7
      %v1788 = vsub.s32 7, %v1787
      %v1789 = vrot.slane %v1756, %v1788
      %v1790 = vcombine.low %v1761, %v1765
      %v1791 = vcombine.low %v1769, %v1773
      %v1793 = vunpack.c.l.s4 1983009808
      %v1794 = vunpack.c.0.s8 %v1793
      %v1795 = vlaneseq
      %v1796 = vshrl.u32 %v1795, 7
      %v1797 = vsub.s32 %v1794, %v1796
      %v1798 = vrot.slane %v1790, %v1797
      %v1800 = vunpack.c.l.s4 1983009808
      %v1801 = vunpack.c.0.s8 %v1800
      %v1802 = vlaneseq
      %v1803 = vshrl.u32 %v1802, 7
      %v1804 = vsub.s32 %v1801, %v1803
      %v1805 = vrot.slane %v1791, %v1804
      %v1806 = vcombine.low %v1798, %v1805
      %v1807 = vcombine.low %v1777, %v1781
      %v1808 = vcombine.low %v1785, %v1789
      %v1810 = vunpack.c.l.s4 1983009808
      %v1811 = vunpack.c.0.s8 %v1810
      %v1812 = vlaneseq
      %v1813 = vshrl.u32 %v1812, 7
      %v1814 = vsub.s32 %v1811, %v1813
      %v1815 = vrot.slane %v1807, %v1814
      %v1817 = vunpack.c.l.s4 1983009808
      %v1818 = vunpack.c.0.s8 %v1817
      %v1819 = vlaneseq
      %v1820 = vshrl.u32 %v1819, 7
      %v1821 = vsub.s32 %v1818, %v1820
      %v1822 = vrot.slane %v1808, %v1821
      %v1823 = vcombine.low %v1815, %v1822
      %v1826 = vadd.f32 %v1754, %v1806
      %v1827 = vadd.f32 %v1755, %v1823
      %1828 = vst [vmem:[%s3] sm:$0xff] %v1826
      %1829 = vst [vmem:[%s3 + $0x8] sm:$0xff] %v1827
    $region29: #{custom_clip_forward.4} parent=1 // pred_fallthru
      _
    // Predicated region
    $region30: #{custom_clip_forward.4} parent=1 // pred_check
      _
    $region31: #{custom_clip_forward.4} parent=1 // pred_check_branch
      %1831 = sbr.rel (0) target = $region33
    $region32: #{custom_clip_forward.4} parent=1 // pred_region
      _
    $region33: #{custom_clip_forward.4} parent=1 // pred_fallthru
      _
    // Predicated region
    $region34: #{custom_clip_forward.4} parent=1 // pred_check
      _
    $region35: #{custom_clip_forward.4} parent=1 // pred_check_branch
      %1833 = sbr.rel (0) target = $region37
    $region36: #{custom_clip_forward.4} parent=1 // pred_region
      _
    $region37: #{custom_clip_forward.4} parent=1 // pred_fallthru
      _
    %1834 = vsyncpa [#allocation4], 1
    %1835 = vsyncpa [#allocation6], 1

// kernel: custom_clip_forward.5
$region0: #{custom_clip_forward.5}
  #allocation0 [shape = 'u32[]', space=smem, size = 0x4, offset = 0x4, fixed_abs, tag = 'smem constant byte address 0x4 - core index']
  #allocation1 [shape = 'u32[144,128]{1,0:T(1,128)}', space=vmem, size = 0x12000, scoped, tag = 'internal scratch']
  #allocation2 [shape = 'f32[1]{0:T(128)S(6)}', space=smem, size = 0x200, scoped, tag = 'scoped memory for custom_clip_forward.5']
  %s0 = inlined_call_operand.<no memory space> [shape: f32[1], index: 0, kind: input, shape index: {}]
  %s1 = inlined_call_operand.vmem [shape: f32[2,1024], index: 1, kind: input, shape index: {}]
  %s2 = inlined_call_operand.vmem [shape: f32[4,300], index: 2, kind: input, shape index: {}]
  %s3 = inlined_call_operand.vmem [shape: f32[300,600], index: 3, kind: input, shape index: {}]
  %s4 = inlined_call_operand.vmem [shape: f32[1,600], index: 4, kind: input, shape index: {}]
  %s5 = inlined_call_operand.vmem [shape: f32[600,1024], index: 5, kind: input, shape index: {}]
  %s6 = inlined_call_operand.vmem [shape: f32[1,1024], index: 6, kind: input, shape index: {}]
  %s7 = inlined_call_operand.vmem [shape: f32[4,1024], index: 7, kind: input, shape index: {}]
  %s8 = inlined_call_operand.vmem [shape: f32[4,1024], index: 8, kind: input, shape index: {}]
  %s9 = inlined_call_operand.vmem [shape: f32[3,300], index: 9, kind: input, shape index: {}]
  %s10 = inlined_call_operand.hbm [shape: f32[300,600], index: 10, kind: input, shape index: {}]
  %s11 = inlined_call_operand.vmem [shape: f32[1,600], index: 11, kind: input, shape index: {}]
  %s12 = inlined_call_operand.hbm [shape: f32[600,1024], index: 12, kind: input, shape index: {}]
  %s13 = inlined_call_operand.vmem [shape: f32[1,1024], index: 13, kind: input, shape index: {}]
  %s14 = inlined_call_operand.vmem [shape: f32[3,1024], index: 14, kind: input, shape index: {}]
  %s15 = inlined_call_operand.vmem [shape: f32[3,1024], index: 15, kind: input, shape index: {}]
  %s16 = inlined_call_operand.vmem [shape: f32[2,128], index: 16, kind: output, shape index: {0}]
  %s17 = inlined_call_operand.vmem [shape: f32[128,1024], index: 17, kind: output, shape index: {1}]
  %18 = xla_tuple %s16, %s17
  %s19 = sld [smem:[#allocation0]]
  $region90: #{custom_clip_forward.5} parent=0
    _
  %s21 = ssub.s32 1, %s19
  %s22 = scalar_select 0, %s21, %s19
  %23 = sst [smem:[#allocation2]] %s0
  $region1: #{custom_clip_forward.5} parent=0
    #allocation3 [shape = 'u8[778240]{0}', space=vmem, size = 0xbe000, scoped, tag = 'input window, operand 10, single buffered']
    #allocation4 [shape = 's32[1]{0}', space=sflag, size = 0x4, scoped, tag = 'scoped memory for custom_clip_forward.5']
    #allocation5 [shape = 'u8[2457600]{0}', space=vmem, size = 0x258000, scoped, tag = 'input window, operand 12, single buffered']
    #allocation6 [shape = 's32[1]{0}', space=sflag, size = 0x4, scoped, tag = 'scoped memory for custom_clip_forward.5']
    %24 = vsyncpa [#allocation4], 0
    %25 = vsyncpa [#allocation6], 0
    // Predicated region
    $region2: #{custom_clip_forward.5} parent=1 // pred_check
      _
    $region3: #{custom_clip_forward.5} parent=1 // pred_check_branch
      %27 = sbr.rel (0) target = $region5
    $region4: #{custom_clip_forward.5} parent=1 // pred_region
      _
    $region5: #{custom_clip_forward.5} parent=1 // pred_fallthru
      _
    // Predicated region
    $region6: #{custom_clip_forward.5} parent=1 // pred_check
      _
    $region7: #{custom_clip_forward.5} parent=1 // pred_check_branch
      %29 = sbr.rel (0) target = $region9
    $region8: #{custom_clip_forward.5} parent=1 // pred_region
      _
    $region9: #{custom_clip_forward.5} parent=1 // pred_fallthru
      _
    // Predicated region
    $region10: #{custom_clip_forward.5} parent=1 // pred_check
      _
    $region11: #{custom_clip_forward.5} parent=1 // pred_check_branch
      %31 = sbr.rel (0) target = $region13
    $region12: #{custom_clip_forward.5} parent=1 // pred_region
      _
    $region13: #{custom_clip_forward.5} parent=1 // pred_fallthru
      _
    // Predicated region
    $region14: #{custom_clip_forward.5} parent=1 // pred_check
      _
    $region15: #{custom_clip_forward.5} parent=1 // pred_check_branch
      %33 = sbr.rel (0) target = $region17
    $region16: #{custom_clip_forward.5} parent=1 // pred_region
      _
    $region17: #{custom_clip_forward.5} parent=1 // pred_fallthru
      _
    // Predicated region
    $region18: #{custom_clip_forward.5} parent=1 // pred_check
      _
    $region19: #{custom_clip_forward.5} parent=1 // pred_check_branch
      %35 = sbr.rel (0) target = $region21
    $region20: #{custom_clip_forward.5} parent=1 // pred_region
      _
    $region21: #{custom_clip_forward.5} parent=1 // pred_fallthru
      _
    // Predicated region
    $region22: #{custom_clip_forward.5} parent=1 // pred_check
      _
    $region23: #{custom_clip_forward.5} parent=1 // pred_check_branch
      %37 = sbr.rel (0) target = $region25
    $region24: #{custom_clip_forward.5} parent=1 // pred_region
      _
    $region25: #{custom_clip_forward.5} parent=1 // pred_fallthru
      _
    // Predicated region
    $region26: #{custom_clip_forward.5} parent=1 // pred_check
      _
    $region27: #{custom_clip_forward.5} parent=1 // pred_check_branch
      %39 = sbr.rel (0) target = $region29
    $region28: #{custom_clip_forward.5} parent=1 // pred_region
      _
    $region29: #{custom_clip_forward.5} parent=1 // pred_fallthru
      _
    // Predicated region
    $region30: #{custom_clip_forward.5} parent=1 // pred_check
      _
    $region31: #{custom_clip_forward.5} parent=1 // pred_check_branch
      %41 = sbr.rel (0) target = $region33
    $region32: #{custom_clip_forward.5} parent=1 // pred_region
      _
    $region33: #{custom_clip_forward.5} parent=1 // pred_fallthru
      _
    // Predicated region
    $region34: #{custom_clip_forward.5} parent=1 // pred_check
      _
    $region35: #{custom_clip_forward.5} parent=1 // pred_check_branch
      %43 = sbr.rel (0) target = $region37
    $region36: #{custom_clip_forward.5} parent=1 // pred_region
      _
    $region37: #{custom_clip_forward.5} parent=1 // pred_fallthru
      _
    // Predicated region
    $region38: #{custom_clip_forward.5} parent=1 // pred_check
      _
    $region39: #{custom_clip_forward.5} parent=1 // pred_check_branch
      %45 = sbr.rel (0) target = $region41
    $region40: #{custom_clip_forward.5} parent=1 // pred_region
      _
    $region41: #{custom_clip_forward.5} parent=1 // pred_fallthru
      _
    // Predicated region
    $region42: #{custom_clip_forward.5} parent=1 // pred_check
      _
    $region43: #{custom_clip_forward.5} parent=1 // pred_check_branch
      %47 = sbr.rel (0) target = $region45
    $region44: #{custom_clip_forward.5} parent=1 // pred_region
      %s49 = ssub.s32 24320, 24320
      %50 = vsyncadd [#allocation4], %s49
      %s51 = sshll.u32 [#allocation3], 4
      %s52 = int_to_ptr.vmem [resolvable:$true] %s51
      %57 = dma.hbm_to_vmem [thread:$0]  %s10, 24320, %s52, [#allocation4], 640, 640, 40
    $region45: #{custom_clip_forward.5} parent=1 // pred_fallthru
      _
    // Predicated region
    $region46: #{custom_clip_forward.5} parent=1 // pred_check
      _
    $region47: #{custom_clip_forward.5} parent=1 // pred_check_branch
      %59 = sbr.rel (0) target = $region49
    $region48: #{custom_clip_forward.5} parent=1 // pred_region
      _
    $region49: #{custom_clip_forward.5} parent=1 // pred_fallthru
      _
    // Predicated region
    $region50: #{custom_clip_forward.5} parent=1 // pred_check
      _
    $region51: #{custom_clip_forward.5} parent=1 // pred_check_branch
      %61 = sbr.rel (0) target = $region53
    $region52: #{custom_clip_forward.5} parent=1 // pred_region
      %s63 = ssub.s32 76800, 76800
      %64 = vsyncadd [#allocation6], %s63
      %s65 = sshll.u32 [#allocation5], 4
      %s66 = int_to_ptr.vmem [resolvable:$true] %s65
      %71 = dma.hbm_to_vmem [thread:$0]  %s12, 76800, %s66, [#allocation6], 1024, 1024, 64
    $region53: #{custom_clip_forward.5} parent=1 // pred_fallthru
      _
    // Predicated region
    $region54: #{custom_clip_forward.5} parent=1 // pred_check
      _
    $region55: #{custom_clip_forward.5} parent=1 // pred_check_branch
      %73 = sbr.rel (0) target = $region57
    $region56: #{custom_clip_forward.5} parent=1 // pred_region
      _
    $region57: #{custom_clip_forward.5} parent=1 // pred_fallthru
      _
    // Predicated region
    $region58: #{custom_clip_forward.5} parent=1 // pred_check
      _
    $region59: #{custom_clip_forward.5} parent=1 // pred_check_branch
      %75 = sbr.rel (0) target = $region61
    $region60: #{custom_clip_forward.5} parent=1 // pred_region
      _
    $region61: #{custom_clip_forward.5} parent=1 // pred_fallthru
      _
    // Predicated region
    $region62: #{custom_clip_forward.5} parent=1 // pred_check
      _
    $region63: #{custom_clip_forward.5} parent=1 // pred_check_branch
      %77 = sbr.rel (0) target = $region65
    $region64: #{custom_clip_forward.5} parent=1 // pred_region
      _
    $region65: #{custom_clip_forward.5} parent=1 // pred_fallthru
      _
    // Predicated region
    $region66: #{custom_clip_forward.5} parent=1 // pred_check
      _
    $region67: #{custom_clip_forward.5} parent=1 // pred_check_branch
      %79 = sbr.rel (0) target = $region69
    $region68: #{custom_clip_forward.5} parent=1 // pred_region
      %80 = dma.done [#allocation4], 24320
    $region69: #{custom_clip_forward.5} parent=1 // pred_fallthru
      _
    // Predicated region
    $region70: #{custom_clip_forward.5} parent=1 // pred_check
      _
    $region71: #{custom_clip_forward.5} parent=1 // pred_check_branch
      %82 = sbr.rel (0) target = $region73
    $region72: #{custom_clip_forward.5} parent=1 // pred_region
      %83 = dma.done [#allocation6], 76800
    $region73: #{custom_clip_forward.5} parent=1 // pred_fallthru
      _
    %v84 = vld [vmem:[%s2] sm:$0xff]
    %v85 = vld [vmem:[%s2 + $0x8] sm:$0xf]
    %v86 = vld [vmem:[%s3] sm:$0xff]
    %v87 = vld [vmem:[%s3 + $0x8] sm:$0xff]
    %v88 = vld [vmem:[%s3 + $0x10] sm:$0xff]
    %v89 = vld [vmem:[%s3 + $0x18] sm:$0xff]
    %v90 = vld [vmem:[%s3 + $0x20] sm:$0xff]
    %v91 = vld [vmem:[%s3 + $0x28] sm:$0xff]
    %v92 = vld [vmem:[%s3 + $0x30] sm:$0xff]
    %v93 = vld [vmem:[%s3 + $0x38] sm:$0xff]
    %v94 = vld [vmem:[%s3 + $0x40] sm:$0xff]
    %v95 = vld [vmem:[%s3 + $0x48] sm:$0xff]
    %v96 = vld [vmem:[%s3 + $0x50] sm:$0xff]
    %v97 = vld [vmem:[%s3 + $0x58] sm:$0xff]
    %v98 = vld [vmem:[%s3 + $0x60] sm:$0xff]
    %v99 = vld [vmem:[%s3 + $0x68] sm:$0xff]
    %v100 = vld [vmem:[%s3 + $0x70] sm:$0xff]
    %v101 = vld [vmem:[%s3 + $0x78] sm:$0xff]
    %v102 = vld [vmem:[%s3 + $0x80] sm:$0xff]
    %v103 = vld [vmem:[%s3 + $0x88] sm:$0xff]
    %v104 = vld [vmem:[%s3 + $0x90] sm:$0xff]
    %v105 = vld [vmem:[%s3 + $0x98] sm:$0xff]
    %v106 = vld [vmem:[%s3 + $0xa0] sm:$0xff]
    %v107 = vld [vmem:[%s3 + $0xa8] sm:$0xff]
    %v108 = vld [vmem:[%s3 + $0xb0] sm:$0xff]
    %v109 = vld [vmem:[%s3 + $0xb8] sm:$0xff]
    %v110 = vld [vmem:[%s3 + $0xc0] sm:$0xff]
    %v111 = vld [vmem:[%s3 + $0xc8] sm:$0xff]
    %v112 = vld [vmem:[%s3 + $0xd0] sm:$0xff]
    %v113 = vld [vmem:[%s3 + $0xd8] sm:$0xff]
    %v114 = vld [vmem:[%s3 + $0xe0] sm:$0xff]
    %v115 = vld [vmem:[%s3 + $0xe8] sm:$0xff]
    %v116 = vld [vmem:[%s3 + $0xf0] sm:$0xff]
    %v117 = vld [vmem:[%s3 + $0xf8] sm:$0xff]
    %v118 = vld [vmem:[%s3 + $0x100] sm:$0xff]
    %v119 = vld [vmem:[%s3 + $0x108] sm:$0xff]
    %v120 = vld [vmem:[%s3 + $0x110] sm:$0xff]
    %v121 = vld [vmem:[%s3 + $0x118] sm:$0xff]
    %v122 = vld [vmem:[%s3 + $0x120] sm:$0xff]
    %v123 = vld [vmem:[%s3 + $0x128] sm:$0xff]
    %v124 = vld [vmem:[%s3 + $0x130] sm:$0xff]
    %v125 = vld [vmem:[%s3 + $0x138] sm:$0xff]
    %v126 = vld [vmem:[%s3 + $0x140] sm:$0xff]
    %v127 = vld [vmem:[%s3 + $0x148] sm:$0xff]
    %v128 = vld [vmem:[%s3 + $0x150] sm:$0xff]
    %v129 = vld [vmem:[%s3 + $0x158] sm:$0xff]
    %v130 = vld [vmem:[%s3 + $0x160] sm:$0xff]
    %v131 = vld [vmem:[%s3 + $0x168] sm:$0xff]
    %v132 = vld [vmem:[%s3 + $0x170] sm:$0xff]
    %v133 = vld [vmem:[%s3 + $0x178] sm:$0xff]
    %v134 = vld [vmem:[%s3 + $0x180] sm:$0xff]
    %v135 = vld [vmem:[%s3 + $0x188] sm:$0xff]
    %v136 = vld [vmem:[%s3 + $0x190] sm:$0xff]
    %v137 = vld [vmem:[%s3 + $0x198] sm:$0xff]
    %v138 = vld [vmem:[%s3 + $0x1a0] sm:$0xff]
    %v139 = vld [vmem:[%s3 + $0x1a8] sm:$0xff]
    %v140 = vld [vmem:[%s3 + $0x1b0] sm:$0xff]
    %v141 = vld [vmem:[%s3 + $0x1b8] sm:$0xff]
    %v142 = vld [vmem:[%s3 + $0x1c0] sm:$0xff]
    %v143 = vld [vmem:[%s3 + $0x1c8] sm:$0xff]
    %v144 = vld [vmem:[%s3 + $0x1d0] sm:$0xff]
    %v145 = vld [vmem:[%s3 + $0x1d8] sm:$0xff]
    %v146 = vld [vmem:[%s3 + $0x1e0] sm:$0xff]
    %v147 = vld [vmem:[%s3 + $0x1e8] sm:$0xff]
    %v148 = vld [vmem:[%s3 + $0x1f0] sm:$0xff]
    %v149 = vld [vmem:[%s3 + $0x1f8] sm:$0xff]
    %v150 = vld [vmem:[%s3 + $0x200] sm:$0xff]
    %v151 = vld [vmem:[%s3 + $0x208] sm:$0xff]
    %v152 = vld [vmem:[%s3 + $0x210] sm:$0xff]
    %v153 = vld [vmem:[%s3 + $0x218] sm:$0xff]
    %v154 = vld [vmem:[%s3 + $0x220] sm:$0xff]
    %v155 = vld [vmem:[%s3 + $0x228] sm:$0xff]
    %v156 = vld [vmem:[%s3 + $0x230] sm:$0xff]
    %v157 = vld [vmem:[%s3 + $0x238] sm:$0xff]
    %v158 = vld [vmem:[%s3 + $0x240] sm:$0xff]
    %v159 = vld [vmem:[%s3 + $0x248] sm:$0xff]
    %v160 = vld [vmem:[%s3 + $0x250] sm:$0xff]
    %v161 = vld [vmem:[%s3 + $0x258] sm:$0xff]
    %v162 = vld [vmem:[%s3 + $0x260] sm:$0xff]
    %v163 = vld [vmem:[%s3 + $0x268] sm:$0xff]
    %v164 = vld [vmem:[%s3 + $0x270] sm:$0xff]
    %v165 = vld [vmem:[%s3 + $0x278] sm:$0xff]
    %v166 = vld [vmem:[%s3 + $0x280] sm:$0xff]
    %v167 = vld [vmem:[%s3 + $0x288] sm:$0xff]
    %v168 = vld [vmem:[%s3 + $0x290] sm:$0xff]
    %v169 = vld [vmem:[%s3 + $0x298] sm:$0xff]
    %v170 = vld [vmem:[%s3 + $0x2a0] sm:$0xff]
    %v171 = vld [vmem:[%s3 + $0x2a8] sm:$0xff]
    %v172 = vld [vmem:[%s3 + $0x2b0] sm:$0xff]
    %v173 = vld [vmem:[%s3 + $0x2b8] sm:$0xff]
    %v174 = vld [vmem:[%s3 + $0x2c0] sm:$0xff]
    %v175 = vld [vmem:[%s3 + $0x2c8] sm:$0xff]
    %v176 = vld [vmem:[%s3 + $0x2d0] sm:$0xff]
    %v177 = vld [vmem:[%s3 + $0x2d8] sm:$0xff]
    %v178 = vld [vmem:[%s3 + $0x2e0] sm:$0xff]
    %v179 = vld [vmem:[%s3 + $0x2e8] sm:$0xff]
    %v180 = vld [vmem:[%s3 + $0x2f0] sm:$0xff]
    %v181 = vld [vmem:[%s3 + $0x2f8] sm:$0xff]
    %v182 = vld [vmem:[%s3 + $0x300] sm:$0xff]
    %v183 = vld [vmem:[%s3 + $0x308] sm:$0xff]
    %v184 = vld [vmem:[%s3 + $0x310] sm:$0xff]
    %v185 = vld [vmem:[%s3 + $0x318] sm:$0xff]
    %v186 = vld [vmem:[%s3 + $0x320] sm:$0xff]
    %v187 = vld [vmem:[%s3 + $0x328] sm:$0xff]
    %v188 = vld [vmem:[%s3 + $0x330] sm:$0xff]
    %v189 = vld [vmem:[%s3 + $0x338] sm:$0xff]
    %v190 = vld [vmem:[%s3 + $0x340] sm:$0xff]
    %v191 = vld [vmem:[%s3 + $0x348] sm:$0xff]
    %v192 = vld [vmem:[%s3 + $0x350] sm:$0xff]
    %v193 = vld [vmem:[%s3 + $0x358] sm:$0xff]
    %v194 = vld [vmem:[%s3 + $0x360] sm:$0xff]
    %v195 = vld [vmem:[%s3 + $0x368] sm:$0xff]
    %v196 = vld [vmem:[%s3 + $0x370] sm:$0xff]
    %v197 = vld [vmem:[%s3 + $0x378] sm:$0xff]
    %v198 = vld [vmem:[%s3 + $0x380] sm:$0xff]
    %v199 = vld [vmem:[%s3 + $0x388] sm:$0xff]
    %v200 = vld [vmem:[%s3 + $0x390] sm:$0xff]
    %v201 = vld [vmem:[%s3 + $0x398] sm:$0xff]
    %v202 = vld [vmem:[%s3 + $0x3a0] sm:$0xff]
    %v203 = vld [vmem:[%s3 + $0x3a8] sm:$0xff]
    %v204 = vld [vmem:[%s3 + $0x3b0] sm:$0xff]
    %v205 = vld [vmem:[%s3 + $0x3b8] sm:$0xff]
    %v206 = vld [vmem:[%s3 + $0x3c0] sm:$0xff]
    %v207 = vld [vmem:[%s3 + $0x3c8] sm:$0xff]
    %v208 = vld [vmem:[%s3 + $0x3d0] sm:$0xff]
    %v209 = vld [vmem:[%s3 + $0x3d8] sm:$0xff]
    %v210 = vld [vmem:[%s3 + $0x3e0] sm:$0xff]
    %v211 = vld [vmem:[%s3 + $0x3e8] sm:$0xff]
    %v212 = vld [vmem:[%s3 + $0x3f0] sm:$0xff]
    %v213 = vld [vmem:[%s3 + $0x3f8] sm:$0xff]
    %v214 = vld [vmem:[%s3 + $0x400] sm:$0xff]
    %v215 = vld [vmem:[%s3 + $0x408] sm:$0xff]
    %v216 = vld [vmem:[%s3 + $0x410] sm:$0xff]
    %v217 = vld [vmem:[%s3 + $0x418] sm:$0xff]
    %v218 = vld [vmem:[%s3 + $0x420] sm:$0xff]
    %v219 = vld [vmem:[%s3 + $0x428] sm:$0xff]
    %v220 = vld [vmem:[%s3 + $0x430] sm:$0xff]
    %v221 = vld [vmem:[%s3 + $0x438] sm:$0xff]
    %v222 = vld [vmem:[%s3 + $0x440] sm:$0xff]
    %v223 = vld [vmem:[%s3 + $0x448] sm:$0xff]
    %v224 = vld [vmem:[%s3 + $0x450] sm:$0xff]
    %v225 = vld [vmem:[%s3 + $0x458] sm:$0xff]
    %v226 = vld [vmem:[%s3 + $0x460] sm:$0xff]
    %v227 = vld [vmem:[%s3 + $0x468] sm:$0xff]
    %v228 = vld [vmem:[%s3 + $0x470] sm:$0xff]
    %v229 = vld [vmem:[%s3 + $0x478] sm:$0xff]
    %v230 = vld [vmem:[%s3 + $0x480] sm:$0xff]
    %v231 = vld [vmem:[%s3 + $0x488] sm:$0xff]
    %v232 = vld [vmem:[%s3 + $0x490] sm:$0xff]
    %v233 = vld [vmem:[%s3 + $0x498] sm:$0xff]
    %v234 = vld [vmem:[%s3 + $0x4a0] sm:$0xff]
    %v235 = vld [vmem:[%s3 + $0x4a8] sm:$0xff]
    %v236 = vld [vmem:[%s3 + $0x4b0] sm:$0xff]
    %v237 = vld [vmem:[%s3 + $0x4b8] sm:$0xff]
    %v238 = vld [vmem:[%s3 + $0x4c0] sm:$0xff]
    %v239 = vld [vmem:[%s3 + $0x4c8] sm:$0xff]
    %v240 = vld [vmem:[%s3 + $0x4d0] sm:$0xff]
    %v241 = vld [vmem:[%s3 + $0x4d8] sm:$0xff]
    %v242 = vld [vmem:[%s3 + $0x4e0] sm:$0xff]
    %v243 = vld [vmem:[%s3 + $0x4e8] sm:$0xff]
    %v244 = vld [vmem:[%s3 + $0x4f0] sm:$0xff]
    %v245 = vld [vmem:[%s3 + $0x4f8] sm:$0xff]
    %v246 = vld [vmem:[%s3 + $0x500] sm:$0xff]
    %v247 = vld [vmem:[%s3 + $0x508] sm:$0xff]
    %v248 = vld [vmem:[%s3 + $0x510] sm:$0xff]
    %v249 = vld [vmem:[%s3 + $0x518] sm:$0xff]
    %v250 = vld [vmem:[%s3 + $0x520] sm:$0xff]
    %v251 = vld [vmem:[%s3 + $0x528] sm:$0xff]
    %v252 = vld [vmem:[%s3 + $0x530] sm:$0xff]
    %v253 = vld [vmem:[%s3 + $0x538] sm:$0xff]
    %v254 = vld [vmem:[%s3 + $0x540] sm:$0xff]
    %v255 = vld [vmem:[%s3 + $0x548] sm:$0xff]
    %v256 = vld [vmem:[%s3 + $0x550] sm:$0xff]
    %v257 = vld [vmem:[%s3 + $0x558] sm:$0xff]
    %v258 = vld [vmem:[%s3 + $0x560] sm:$0xff]
    %v259 = vld [vmem:[%s3 + $0x568] sm:$0xff]
    %v260 = vld [vmem:[%s3 + $0x570] sm:$0xff]
    %v261 = vld [vmem:[%s3 + $0x578] sm:$0xff]
    %v262 = vld [vmem:[%s3 + $0x580] sm:$0xff]
    %v263 = vld [vmem:[%s3 + $0x588] sm:$0xff]
    %v264 = vld [vmem:[%s3 + $0x590] sm:$0xff]
    %v265 = vld [vmem:[%s3 + $0x598] sm:$0xff]
    %v266 = vld [vmem:[%s3 + $0x5a0] sm:$0xff]
    %v267 = vld [vmem:[%s3 + $0x5a8] sm:$0xff]
    %v268 = vld [vmem:[%s3 + $0x5b0] sm:$0xff]
    %v269 = vld [vmem:[%s3 + $0x5b8] sm:$0xff]
    %v270 = vld [vmem:[%s3 + $0x5c0] sm:$0xff]
    %v271 = vld [vmem:[%s3 + $0x5c8] sm:$0xf]
    %v272 = vld [vmem:[%s3 + $0x5d0] sm:$0xf]
    %v273 = vld [vmem:[%s3 + $0x5d8] sm:$0xf]
    %v274 = vld [vmem:[%s3 + $0x5e0] sm:$0xf]
    %v275 = vld [vmem:[%s3 + $0x5e8] sm:$0xf]
    %v276 = vld [vmem:[%s4] sm:$0x1f]
    %v277 = vld [vmem:[%s5] sm:$0xff]
    %v278 = vld [vmem:[%s5 + $0x8] sm:$0xff]
    %v279 = vld [vmem:[%s5 + $0x10] sm:$0xff]
    %v280 = vld [vmem:[%s5 + $0x18] sm:$0xff]
    %v281 = vld [vmem:[%s5 + $0x20] sm:$0xff]
    %v282 = vld [vmem:[%s5 + $0x28] sm:$0xff]
    %v283 = vld [vmem:[%s5 + $0x30] sm:$0xff]
    %v284 = vld [vmem:[%s5 + $0x38] sm:$0xff]
    %v285 = vld [vmem:[%s5 + $0x40] sm:$0xff]
    %v286 = vld [vmem:[%s5 + $0x48] sm:$0xff]
    %v287 = vld [vmem:[%s5 + $0x50] sm:$0xff]
    %v288 = vld [vmem:[%s5 + $0x58] sm:$0xff]
    %v289 = vld [vmem:[%s5 + $0x60] sm:$0xff]
    %v290 = vld [vmem:[%s5 + $0x68] sm:$0xff]
    %v291 = vld [vmem:[%s5 + $0x70] sm:$0xff]
    %v292 = vld [vmem:[%s5 + $0x78] sm:$0xff]
    %v293 = vld [vmem:[%s5 + $0x80] sm:$0xff]
    %v294 = vld [vmem:[%s5 + $0x88] sm:$0xff]
    %v295 = vld [vmem:[%s5 + $0x90] sm:$0xff]
    %v296 = vld [vmem:[%s5 + $0x98] sm:$0xff]
    %v297 = vld [vmem:[%s5 + $0xa0] sm:$0xff]
    %v298 = vld [vmem:[%s5 + $0xa8] sm:$0xff]
    %v299 = vld [vmem:[%s5 + $0xb0] sm:$0xff]
    %v300 = vld [vmem:[%s5 + $0xb8] sm:$0xff]
    %v301 = vld [vmem:[%s5 + $0xc0] sm:$0xff]
    %v302 = vld [vmem:[%s5 + $0xc8] sm:$0xff]
    %v303 = vld [vmem:[%s5 + $0xd0] sm:$0xff]
    %v304 = vld [vmem:[%s5 + $0xd8] sm:$0xff]
    %v305 = vld [vmem:[%s5 + $0xe0] sm:$0xff]
    %v306 = vld [vmem:[%s5 + $0xe8] sm:$0xff]
    %v307 = vld [vmem:[%s5 + $0xf0] sm:$0xff]
    %v308 = vld [vmem:[%s5 + $0xf8] sm:$0xff]
    %v309 = vld [vmem:[%s5 + $0x100] sm:$0xff]
    %v310 = vld [vmem:[%s5 + $0x108] sm:$0xff]
    %v311 = vld [vmem:[%s5 + $0x110] sm:$0xff]
    %v312 = vld [vmem:[%s5 + $0x118] sm:$0xff]
    %v313 = vld [vmem:[%s5 + $0x120] sm:$0xff]
    %v314 = vld [vmem:[%s5 + $0x128] sm:$0xff]
    %v315 = vld [vmem:[%s5 + $0x130] sm:$0xff]
    %v316 = vld [vmem:[%s5 + $0x138] sm:$0xff]
    %v317 = vld [vmem:[%s5 + $0x140] sm:$0xff]
    %v318 = vld [vmem:[%s5 + $0x148] sm:$0xff]
    %v319 = vld [vmem:[%s5 + $0x150] sm:$0xff]
    %v320 = vld [vmem:[%s5 + $0x158] sm:$0xff]
    %v321 = vld [vmem:[%s5 + $0x160] sm:$0xff]
    %v322 = vld [vmem:[%s5 + $0x168] sm:$0xff]
    %v323 = vld [vmem:[%s5 + $0x170] sm:$0xff]
    %v324 = vld [vmem:[%s5 + $0x178] sm:$0xff]
    %v325 = vld [vmem:[%s5 + $0x180] sm:$0xff]
    %v326 = vld [vmem:[%s5 + $0x188] sm:$0xff]
    %v327 = vld [vmem:[%s5 + $0x190] sm:$0xff]
    %v328 = vld [vmem:[%s5 + $0x198] sm:$0xff]
    %v329 = vld [vmem:[%s5 + $0x1a0] sm:$0xff]
    %v330 = vld [vmem:[%s5 + $0x1a8] sm:$0xff]
    %v331 = vld [vmem:[%s5 + $0x1b0] sm:$0xff]
    %v332 = vld [vmem:[%s5 + $0x1b8] sm:$0xff]
    %v333 = vld [vmem:[%s5 + $0x1c0] sm:$0xff]
    %v334 = vld [vmem:[%s5 + $0x1c8] sm:$0xff]
    %v335 = vld [vmem:[%s5 + $0x1d0] sm:$0xff]
    %v336 = vld [vmem:[%s5 + $0x1d8] sm:$0xff]
    %v337 = vld [vmem:[%s5 + $0x1e0] sm:$0xff]
    %v338 = vld [vmem:[%s5 + $0x1e8] sm:$0xff]
    %v339 = vld [vmem:[%s5 + $0x1f0] sm:$0xff]
    %v340 = vld [vmem:[%s5 + $0x1f8] sm:$0xff]
    %v341 = vld [vmem:[%s5 + $0x200] sm:$0xff]
    %v342 = vld [vmem:[%s5 + $0x208] sm:$0xff]
    %v343 = vld [vmem:[%s5 + $0x210] sm:$0xff]
    %v344 = vld [vmem:[%s5 + $0x218] sm:$0xff]
    %v345 = vld [vmem:[%s5 + $0x220] sm:$0xff]
    %v346 = vld [vmem:[%s5 + $0x228] sm:$0xff]
    %v347 = vld [vmem:[%s5 + $0x230] sm:$0xff]
    %v348 = vld [vmem:[%s5 + $0x238] sm:$0xff]
    %v349 = vld [vmem:[%s5 + $0x240] sm:$0xff]
    %v350 = vld [vmem:[%s5 + $0x248] sm:$0xff]
    %v351 = vld [vmem:[%s5 + $0x250] sm:$0xff]
    %v352 = vld [vmem:[%s5 + $0x258] sm:$0xff]
    %v353 = vld [vmem:[%s5 + $0x260] sm:$0xff]
    %v354 = vld [vmem:[%s5 + $0x268] sm:$0xff]
    %v355 = vld [vmem:[%s5 + $0x270] sm:$0xff]
    %v356 = vld [vmem:[%s5 + $0x278] sm:$0xff]
    %v357 = vld [vmem:[%s5 + $0x280] sm:$0xff]
    %v358 = vld [vmem:[%s5 + $0x288] sm:$0xff]
    %v359 = vld [vmem:[%s5 + $0x290] sm:$0xff]
    %v360 = vld [vmem:[%s5 + $0x298] sm:$0xff]
    %v361 = vld [vmem:[%s5 + $0x2a0] sm:$0xff]
    %v362 = vld [vmem:[%s5 + $0x2a8] sm:$0xff]
    %v363 = vld [vmem:[%s5 + $0x2b0] sm:$0xff]
    %v364 = vld [vmem:[%s5 + $0x2b8] sm:$0xff]
    %v365 = vld [vmem:[%s5 + $0x2c0] sm:$0xff]
    %v366 = vld [vmem:[%s5 + $0x2c8] sm:$0xff]
    %v367 = vld [vmem:[%s5 + $0x2d0] sm:$0xff]
    %v368 = vld [vmem:[%s5 + $0x2d8] sm:$0xff]
    %v369 = vld [vmem:[%s5 + $0x2e0] sm:$0xff]
    %v370 = vld [vmem:[%s5 + $0x2e8] sm:$0xff]
    %v371 = vld [vmem:[%s5 + $0x2f0] sm:$0xff]
    %v372 = vld [vmem:[%s5 + $0x2f8] sm:$0xff]
    %v373 = vld [vmem:[%s5 + $0x300] sm:$0xff]
    %v374 = vld [vmem:[%s5 + $0x308] sm:$0xff]
    %v375 = vld [vmem:[%s5 + $0x310] sm:$0xff]
    %v376 = vld [vmem:[%s5 + $0x318] sm:$0xff]
    %v377 = vld [vmem:[%s5 + $0x320] sm:$0xff]
    %v378 = vld [vmem:[%s5 + $0x328] sm:$0xff]
    %v379 = vld [vmem:[%s5 + $0x330] sm:$0xff]
    %v380 = vld [vmem:[%s5 + $0x338] sm:$0xff]
    %v381 = vld [vmem:[%s5 + $0x340] sm:$0xff]
    %v382 = vld [vmem:[%s5 + $0x348] sm:$0xff]
    %v383 = vld [vmem:[%s5 + $0x350] sm:$0xff]
    %v384 = vld [vmem:[%s5 + $0x358] sm:$0xff]
    %v385 = vld [vmem:[%s5 + $0x360] sm:$0xff]
    %v386 = vld [vmem:[%s5 + $0x368] sm:$0xff]
    %v387 = vld [vmem:[%s5 + $0x370] sm:$0xff]
    %v388 = vld [vmem:[%s5 + $0x378] sm:$0xff]
    %v389 = vld [vmem:[%s5 + $0x380] sm:$0xff]
    %v390 = vld [vmem:[%s5 + $0x388] sm:$0xff]
    %v391 = vld [vmem:[%s5 + $0x390] sm:$0xff]
    %v392 = vld [vmem:[%s5 + $0x398] sm:$0xff]
    %v393 = vld [vmem:[%s5 + $0x3a0] sm:$0xff]
    %v394 = vld [vmem:[%s5 + $0x3a8] sm:$0xff]
    %v395 = vld [vmem:[%s5 + $0x3b0] sm:$0xff]
    %v396 = vld [vmem:[%s5 + $0x3b8] sm:$0xff]
    %v397 = vld [vmem:[%s5 + $0x3c0] sm:$0xff]
    %v398 = vld [vmem:[%s5 + $0x3c8] sm:$0xff]
    %v399 = vld [vmem:[%s5 + $0x3d0] sm:$0xff]
    %v400 = vld [vmem:[%s5 + $0x3d8] sm:$0xff]
    %v401 = vld [vmem:[%s5 + $0x3e0] sm:$0xff]
    %v402 = vld [vmem:[%s5 + $0x3e8] sm:$0xff]
    %v403 = vld [vmem:[%s5 + $0x3f0] sm:$0xff]
    %v404 = vld [vmem:[%s5 + $0x3f8] sm:$0xff]
    %v405 = vld [vmem:[%s5 + $0x400] sm:$0xff]
    %v406 = vld [vmem:[%s5 + $0x408] sm:$0xff]
    %v407 = vld [vmem:[%s5 + $0x410] sm:$0xff]
    %v408 = vld [vmem:[%s5 + $0x418] sm:$0xff]
    %v409 = vld [vmem:[%s5 + $0x420] sm:$0xff]
    %v410 = vld [vmem:[%s5 + $0x428] sm:$0xff]
    %v411 = vld [vmem:[%s5 + $0x430] sm:$0xff]
    %v412 = vld [vmem:[%s5 + $0x438] sm:$0xff]
    %v413 = vld [vmem:[%s5 + $0x440] sm:$0xff]
    %v414 = vld [vmem:[%s5 + $0x448] sm:$0xff]
    %v415 = vld [vmem:[%s5 + $0x450] sm:$0xff]
    %v416 = vld [vmem:[%s5 + $0x458] sm:$0xff]
    %v417 = vld [vmem:[%s5 + $0x460] sm:$0xff]
    %v418 = vld [vmem:[%s5 + $0x468] sm:$0xff]
    %v419 = vld [vmem:[%s5 + $0x470] sm:$0xff]
    %v420 = vld [vmem:[%s5 + $0x478] sm:$0xff]
    %v421 = vld [vmem:[%s5 + $0x480] sm:$0xff]
    %v422 = vld [vmem:[%s5 + $0x488] sm:$0xff]
    %v423 = vld [vmem:[%s5 + $0x490] sm:$0xff]
    %v424 = vld [vmem:[%s5 + $0x498] sm:$0xff]
    %v425 = vld [vmem:[%s5 + $0x4a0] sm:$0xff]
    %v426 = vld [vmem:[%s5 + $0x4a8] sm:$0xff]
    %v427 = vld [vmem:[%s5 + $0x4b0] sm:$0xff]
    %v428 = vld [vmem:[%s5 + $0x4b8] sm:$0xff]
    %v429 = vld [vmem:[%s5 + $0x4c0] sm:$0xff]
    %v430 = vld [vmem:[%s5 + $0x4c8] sm:$0xff]
    %v431 = vld [vmem:[%s5 + $0x4d0] sm:$0xff]
    %v432 = vld [vmem:[%s5 + $0x4d8] sm:$0xff]
    %v433 = vld [vmem:[%s5 + $0x4e0] sm:$0xff]
    %v434 = vld [vmem:[%s5 + $0x4e8] sm:$0xff]
    %v435 = vld [vmem:[%s5 + $0x4f0] sm:$0xff]
    %v436 = vld [vmem:[%s5 + $0x4f8] sm:$0xff]
    %v437 = vld [vmem:[%s5 + $0x500] sm:$0xff]
    %v438 = vld [vmem:[%s5 + $0x508] sm:$0xff]
    %v439 = vld [vmem:[%s5 + $0x510] sm:$0xff]
    %v440 = vld [vmem:[%s5 + $0x518] sm:$0xff]
    %v441 = vld [vmem:[%s5 + $0x520] sm:$0xff]
    %v442 = vld [vmem:[%s5 + $0x528] sm:$0xff]
    %v443 = vld [vmem:[%s5 + $0x530] sm:$0xff]
    %v444 = vld [vmem:[%s5 + $0x538] sm:$0xff]
    %v445 = vld [vmem:[%s5 + $0x540] sm:$0xff]
    %v446 = vld [vmem:[%s5 + $0x548] sm:$0xff]
    %v447 = vld [vmem:[%s5 + $0x550] sm:$0xff]
    %v448 = vld [vmem:[%s5 + $0x558] sm:$0xff]
    %v449 = vld [vmem:[%s5 + $0x560] sm:$0xff]
    %v450 = vld [vmem:[%s5 + $0x568] sm:$0xff]
    %v451 = vld [vmem:[%s5 + $0x570] sm:$0xff]
    %v452 = vld [vmem:[%s5 + $0x578] sm:$0xff]
    %v453 = vld [vmem:[%s5 + $0x580] sm:$0xff]
    %v454 = vld [vmem:[%s5 + $0x588] sm:$0xff]
    %v455 = vld [vmem:[%s5 + $0x590] sm:$0xff]
    %v456 = vld [vmem:[%s5 + $0x598] sm:$0xff]
    %v457 = vld [vmem:[%s5 + $0x5a0] sm:$0xff]
    %v458 = vld [vmem:[%s5 + $0x5a8] sm:$0xff]
    %v459 = vld [vmem:[%s5 + $0x5b0] sm:$0xff]
    %v460 = vld [vmem:[%s5 + $0x5b8] sm:$0xff]
    %v461 = vld [vmem:[%s5 + $0x5c0] sm:$0xff]
    %v462 = vld [vmem:[%s5 + $0x5c8] sm:$0xff]
    %v463 = vld [vmem:[%s5 + $0x5d0] sm:$0xff]
    %v464 = vld [vmem:[%s5 + $0x5d8] sm:$0xff]
    %v465 = vld [vmem:[%s5 + $0x5e0] sm:$0xff]
    %v466 = vld [vmem:[%s5 + $0x5e8] sm:$0xff]
    %v467 = vld [vmem:[%s5 + $0x5f0] sm:$0xff]
    %v468 = vld [vmem:[%s5 + $0x5f8] sm:$0xff]
    %v469 = vld [vmem:[%s5 + $0x600] sm:$0xff]
    %v470 = vld [vmem:[%s5 + $0x608] sm:$0xff]
    %v471 = vld [vmem:[%s5 + $0x610] sm:$0xff]
    %v472 = vld [vmem:[%s5 + $0x618] sm:$0xff]
    %v473 = vld [vmem:[%s5 + $0x620] sm:$0xff]
    %v474 = vld [vmem:[%s5 + $0x628] sm:$0xff]
    %v475 = vld [vmem:[%s5 + $0x630] sm:$0xff]
    %v476 = vld [vmem:[%s5 + $0x638] sm:$0xff]
    %v477 = vld [vmem:[%s5 + $0x640] sm:$0xff]
    %v478 = vld [vmem:[%s5 + $0x648] sm:$0xff]
    %v479 = vld [vmem:[%s5 + $0x650] sm:$0xff]
    %v480 = vld [vmem:[%s5 + $0x658] sm:$0xff]
    %v481 = vld [vmem:[%s5 + $0x660] sm:$0xff]
    %v482 = vld [vmem:[%s5 + $0x668] sm:$0xff]
    %v483 = vld [vmem:[%s5 + $0x670] sm:$0xff]
    %v484 = vld [vmem:[%s5 + $0x678] sm:$0xff]
    %v485 = vld [vmem:[%s5 + $0x680] sm:$0xff]
    %v486 = vld [vmem:[%s5 + $0x688] sm:$0xff]
    %v487 = vld [vmem:[%s5 + $0x690] sm:$0xff]
    %v488 = vld [vmem:[%s5 + $0x698] sm:$0xff]
    %v489 = vld [vmem:[%s5 + $0x6a0] sm:$0xff]
    %v490 = vld [vmem:[%s5 + $0x6a8] sm:$0xff]
    %v491 = vld [vmem:[%s5 + $0x6b0] sm:$0xff]
    %v492 = vld [vmem:[%s5 + $0x6b8] sm:$0xff]
    %v493 = vld [vmem:[%s5 + $0x6c0] sm:$0xff]
    %v494 = vld [vmem:[%s5 + $0x6c8] sm:$0xff]
    %v495 = vld [vmem:[%s5 + $0x6d0] sm:$0xff]
    %v496 = vld [vmem:[%s5 + $0x6d8] sm:$0xff]
    %v497 = vld [vmem:[%s5 + $0x6e0] sm:$0xff]
    %v498 = vld [vmem:[%s5 + $0x6e8] sm:$0xff]
    %v499 = vld [vmem:[%s5 + $0x6f0] sm:$0xff]
    %v500 = vld [vmem:[%s5 + $0x6f8] sm:$0xff]
    %v501 = vld [vmem:[%s5 + $0x700] sm:$0xff]
    %v502 = vld [vmem:[%s5 + $0x708] sm:$0xff]
    %v503 = vld [vmem:[%s5 + $0x710] sm:$0xff]
    %v504 = vld [vmem:[%s5 + $0x718] sm:$0xff]
    %v505 = vld [vmem:[%s5 + $0x720] sm:$0xff]
    %v506 = vld [vmem:[%s5 + $0x728] sm:$0xff]
    %v507 = vld [vmem:[%s5 + $0x730] sm:$0xff]
    %v508 = vld [vmem:[%s5 + $0x738] sm:$0xff]
    %v509 = vld [vmem:[%s5 + $0x740] sm:$0xff]
    %v510 = vld [vmem:[%s5 + $0x748] sm:$0xff]
    %v511 = vld [vmem:[%s5 + $0x750] sm:$0xff]
    %v512 = vld [vmem:[%s5 + $0x758] sm:$0xff]
    %v513 = vld [vmem:[%s5 + $0x760] sm:$0xff]
    %v514 = vld [vmem:[%s5 + $0x768] sm:$0xff]
    %v515 = vld [vmem:[%s5 + $0x770] sm:$0xff]
    %v516 = vld [vmem:[%s5 + $0x778] sm:$0xff]
    %v517 = vld [vmem:[%s5 + $0x780] sm:$0xff]
    %v518 = vld [vmem:[%s5 + $0x788] sm:$0xff]
    %v519 = vld [vmem:[%s5 + $0x790] sm:$0xff]
    %v520 = vld [vmem:[%s5 + $0x798] sm:$0xff]
    %v521 = vld [vmem:[%s5 + $0x7a0] sm:$0xff]
    %v522 = vld [vmem:[%s5 + $0x7a8] sm:$0xff]
    %v523 = vld [vmem:[%s5 + $0x7b0] sm:$0xff]
    %v524 = vld [vmem:[%s5 + $0x7b8] sm:$0xff]
    %v525 = vld [vmem:[%s5 + $0x7c0] sm:$0xff]
    %v526 = vld [vmem:[%s5 + $0x7c8] sm:$0xff]
    %v527 = vld [vmem:[%s5 + $0x7d0] sm:$0xff]
    %v528 = vld [vmem:[%s5 + $0x7d8] sm:$0xff]
    %v529 = vld [vmem:[%s5 + $0x7e0] sm:$0xff]
    %v530 = vld [vmem:[%s5 + $0x7e8] sm:$0xff]
    %v531 = vld [vmem:[%s5 + $0x7f0] sm:$0xff]
    %v532 = vld [vmem:[%s5 + $0x7f8] sm:$0xff]
    %v533 = vld [vmem:[%s5 + $0x800] sm:$0xff]
    %v534 = vld [vmem:[%s5 + $0x808] sm:$0xff]
    %v535 = vld [vmem:[%s5 + $0x810] sm:$0xff]
    %v536 = vld [vmem:[%s5 + $0x818] sm:$0xff]
    %v537 = vld [vmem:[%s5 + $0x820] sm:$0xff]
    %v538 = vld [vmem:[%s5 + $0x828] sm:$0xff]
    %v539 = vld [vmem:[%s5 + $0x830] sm:$0xff]
    %v540 = vld [vmem:[%s5 + $0x838] sm:$0xff]
    %v541 = vld [vmem:[%s5 + $0x840] sm:$0xff]
    %v542 = vld [vmem:[%s5 + $0x848] sm:$0xff]
    %v543 = vld [vmem:[%s5 + $0x850] sm:$0xff]
    %v544 = vld [vmem:[%s5 + $0x858] sm:$0xff]
    %v545 = vld [vmem:[%s5 + $0x860] sm:$0xff]
    %v546 = vld [vmem:[%s5 + $0x868] sm:$0xff]
    %v547 = vld [vmem:[%s5 + $0x870] sm:$0xff]
    %v548 = vld [vmem:[%s5 + $0x878] sm:$0xff]
    %v549 = vld [vmem:[%s5 + $0x880] sm:$0xff]
    %v550 = vld [vmem:[%s5 + $0x888] sm:$0xff]
    %v551 = vld [vmem:[%s5 + $0x890] sm:$0xff]
    %v552 = vld [vmem:[%s5 + $0x898] sm:$0xff]
    %v553 = vld [vmem:[%s5 + $0x8a0] sm:$0xff]
    %v554 = vld [vmem:[%s5 + $0x8a8] sm:$0xff]
    %v555 = vld [vmem:[%s5 + $0x8b0] sm:$0xff]
    %v556 = vld [vmem:[%s5 + $0x8b8] sm:$0xff]
    %v557 = vld [vmem:[%s5 + $0x8c0] sm:$0xff]
    %v558 = vld [vmem:[%s5 + $0x8c8] sm:$0xff]
    %v559 = vld [vmem:[%s5 + $0x8d0] sm:$0xff]
    %v560 = vld [vmem:[%s5 + $0x8d8] sm:$0xff]
    %v561 = vld [vmem:[%s5 + $0x8e0] sm:$0xff]
    %v562 = vld [vmem:[%s5 + $0x8e8] sm:$0xff]
    %v563 = vld [vmem:[%s5 + $0x8f0] sm:$0xff]
    %v564 = vld [vmem:[%s5 + $0x8f8] sm:$0xff]
    %v565 = vld [vmem:[%s5 + $0x900] sm:$0xff]
    %v566 = vld [vmem:[%s5 + $0x908] sm:$0xff]
    %v567 = vld [vmem:[%s5 + $0x910] sm:$0xff]
    %v568 = vld [vmem:[%s5 + $0x918] sm:$0xff]
    %v569 = vld [vmem:[%s5 + $0x920] sm:$0xff]
    %v570 = vld [vmem:[%s5 + $0x928] sm:$0xff]
    %v571 = vld [vmem:[%s5 + $0x930] sm:$0xff]
    %v572 = vld [vmem:[%s5 + $0x938] sm:$0xff]
    %v573 = vld [vmem:[%s5 + $0x940] sm:$0xff]
    %v574 = vld [vmem:[%s5 + $0x948] sm:$0xff]
    %v575 = vld [vmem:[%s5 + $0x950] sm:$0xff]
    %v576 = vld [vmem:[%s5 + $0x958] sm:$0xff]
    %v577 = vld [vmem:[%s5 + $0x960] sm:$0xff]
    %v578 = vld [vmem:[%s5 + $0x968] sm:$0xff]
    %v579 = vld [vmem:[%s5 + $0x970] sm:$0xff]
    %v580 = vld [vmem:[%s5 + $0x978] sm:$0xff]
    %v581 = vld [vmem:[%s5 + $0x980] sm:$0xff]
    %v582 = vld [vmem:[%s5 + $0x988] sm:$0xff]
    %v583 = vld [vmem:[%s5 + $0x990] sm:$0xff]
    %v584 = vld [vmem:[%s5 + $0x998] sm:$0xff]
    %v585 = vld [vmem:[%s5 + $0x9a0] sm:$0xff]
    %v586 = vld [vmem:[%s5 + $0x9a8] sm:$0xff]
    %v587 = vld [vmem:[%s5 + $0x9b0] sm:$0xff]
    %v588 = vld [vmem:[%s5 + $0x9b8] sm:$0xff]
    %v589 = vld [vmem:[%s5 + $0x9c0] sm:$0xff]
    %v590 = vld [vmem:[%s5 + $0x9c8] sm:$0xff]
    %v591 = vld [vmem:[%s5 + $0x9d0] sm:$0xff]
    %v592 = vld [vmem:[%s5 + $0x9d8] sm:$0xff]
    %v593 = vld [vmem:[%s5 + $0x9e0] sm:$0xff]
    %v594 = vld [vmem:[%s5 + $0x9e8] sm:$0xff]
    %v595 = vld [vmem:[%s5 + $0x9f0] sm:$0xff]
    %v596 = vld [vmem:[%s5 + $0x9f8] sm:$0xff]
    %v597 = vld [vmem:[%s5 + $0xa00] sm:$0xff]
    %v598 = vld [vmem:[%s5 + $0xa08] sm:$0xff]
    %v599 = vld [vmem:[%s5 + $0xa10] sm:$0xff]
    %v600 = vld [vmem:[%s5 + $0xa18] sm:$0xff]
    %v601 = vld [vmem:[%s5 + $0xa20] sm:$0xff]
    %v602 = vld [vmem:[%s5 + $0xa28] sm:$0xff]
    %v603 = vld [vmem:[%s5 + $0xa30] sm:$0xff]
    %v604 = vld [vmem:[%s5 + $0xa38] sm:$0xff]
    %v605 = vld [vmem:[%s5 + $0xa40] sm:$0xff]
    %v606 = vld [vmem:[%s5 + $0xa48] sm:$0xff]
    %v607 = vld [vmem:[%s5 + $0xa50] sm:$0xff]
    %v608 = vld [vmem:[%s5 + $0xa58] sm:$0xff]
    %v609 = vld [vmem:[%s5 + $0xa60] sm:$0xff]
    %v610 = vld [vmem:[%s5 + $0xa68] sm:$0xff]
    %v611 = vld [vmem:[%s5 + $0xa70] sm:$0xff]
    %v612 = vld [vmem:[%s5 + $0xa78] sm:$0xff]
    %v613 = vld [vmem:[%s5 + $0xa80] sm:$0xff]
    %v614 = vld [vmem:[%s5 + $0xa88] sm:$0xff]
    %v615 = vld [vmem:[%s5 + $0xa90] sm:$0xff]
    %v616 = vld [vmem:[%s5 + $0xa98] sm:$0xff]
    %v617 = vld [vmem:[%s5 + $0xaa0] sm:$0xff]
    %v618 = vld [vmem:[%s5 + $0xaa8] sm:$0xff]
    %v619 = vld [vmem:[%s5 + $0xab0] sm:$0xff]
    %v620 = vld [vmem:[%s5 + $0xab8] sm:$0xff]
    %v621 = vld [vmem:[%s5 + $0xac0] sm:$0xff]
    %v622 = vld [vmem:[%s5 + $0xac8] sm:$0xff]
    %v623 = vld [vmem:[%s5 + $0xad0] sm:$0xff]
    %v624 = vld [vmem:[%s5 + $0xad8] sm:$0xff]
    %v625 = vld [vmem:[%s5 + $0xae0] sm:$0xff]
    %v626 = vld [vmem:[%s5 + $0xae8] sm:$0xff]
    %v627 = vld [vmem:[%s5 + $0xaf0] sm:$0xff]
    %v628 = vld [vmem:[%s5 + $0xaf8] sm:$0xff]
    %v629 = vld [vmem:[%s5 + $0xb00] sm:$0xff]
    %v630 = vld [vmem:[%s5 + $0xb08] sm:$0xff]
    %v631 = vld [vmem:[%s5 + $0xb10] sm:$0xff]
    %v632 = vld [vmem:[%s5 + $0xb18] sm:$0xff]
    %v633 = vld [vmem:[%s5 + $0xb20] sm:$0xff]
    %v634 = vld [vmem:[%s5 + $0xb28] sm:$0xff]
    %v635 = vld [vmem:[%s5 + $0xb30] sm:$0xff]
    %v636 = vld [vmem:[%s5 + $0xb38] sm:$0xff]
    %v637 = vld [vmem:[%s5 + $0xb40] sm:$0xff]
    %v638 = vld [vmem:[%s5 + $0xb48] sm:$0xff]
    %v639 = vld [vmem:[%s5 + $0xb50] sm:$0xff]
    %v640 = vld [vmem:[%s5 + $0xb58] sm:$0xff]
    %v641 = vld [vmem:[%s5 + $0xb60] sm:$0xff]
    %v642 = vld [vmem:[%s5 + $0xb68] sm:$0xff]
    %v643 = vld [vmem:[%s5 + $0xb70] sm:$0xff]
    %v644 = vld [vmem:[%s5 + $0xb78] sm:$0xff]
    %v645 = vld [vmem:[%s5 + $0xb80] sm:$0xff]
    %v646 = vld [vmem:[%s5 + $0xb88] sm:$0xff]
    %v647 = vld [vmem:[%s5 + $0xb90] sm:$0xff]
    %v648 = vld [vmem:[%s5 + $0xb98] sm:$0xff]
    %v649 = vld [vmem:[%s5 + $0xba0] sm:$0xff]
    %v650 = vld [vmem:[%s5 + $0xba8] sm:$0xff]
    %v651 = vld [vmem:[%s5 + $0xbb0] sm:$0xff]
    %v652 = vld [vmem:[%s5 + $0xbb8] sm:$0xff]
    %v653 = vld [vmem:[%s5 + $0xbc0] sm:$0xff]
    %v654 = vld [vmem:[%s5 + $0xbc8] sm:$0xff]
    %v655 = vld [vmem:[%s5 + $0xbd0] sm:$0xff]
    %v656 = vld [vmem:[%s5 + $0xbd8] sm:$0xff]
    %v657 = vld [vmem:[%s5 + $0xbe0] sm:$0xff]
    %v658 = vld [vmem:[%s5 + $0xbe8] sm:$0xff]
    %v659 = vld [vmem:[%s5 + $0xbf0] sm:$0xff]
    %v660 = vld [vmem:[%s5 + $0xbf8] sm:$0xff]
    %v661 = vld [vmem:[%s5 + $0xc00] sm:$0xff]
    %v662 = vld [vmem:[%s5 + $0xc08] sm:$0xff]
    %v663 = vld [vmem:[%s5 + $0xc10] sm:$0xff]
    %v664 = vld [vmem:[%s5 + $0xc18] sm:$0xff]
    %v665 = vld [vmem:[%s5 + $0xc20] sm:$0xff]
    %v666 = vld [vmem:[%s5 + $0xc28] sm:$0xff]
    %v667 = vld [vmem:[%s5 + $0xc30] sm:$0xff]
    %v668 = vld [vmem:[%s5 + $0xc38] sm:$0xff]
    %v669 = vld [vmem:[%s5 + $0xc40] sm:$0xff]
    %v670 = vld [vmem:[%s5 + $0xc48] sm:$0xff]
    %v671 = vld [vmem:[%s5 + $0xc50] sm:$0xff]
    %v672 = vld [vmem:[%s5 + $0xc58] sm:$0xff]
    %v673 = vld [vmem:[%s5 + $0xc60] sm:$0xff]
    %v674 = vld [vmem:[%s5 + $0xc68] sm:$0xff]
    %v675 = vld [vmem:[%s5 + $0xc70] sm:$0xff]
    %v676 = vld [vmem:[%s5 + $0xc78] sm:$0xff]
    %v677 = vld [vmem:[%s5 + $0xc80] sm:$0xff]
    %v678 = vld [vmem:[%s5 + $0xc88] sm:$0xff]
    %v679 = vld [vmem:[%s5 + $0xc90] sm:$0xff]
    %v680 = vld [vmem:[%s5 + $0xc98] sm:$0xff]
    %v681 = vld [vmem:[%s5 + $0xca0] sm:$0xff]
    %v682 = vld [vmem:[%s5 + $0xca8] sm:$0xff]
    %v683 = vld [vmem:[%s5 + $0xcb0] sm:$0xff]
    %v684 = vld [vmem:[%s5 + $0xcb8] sm:$0xff]
    %v685 = vld [vmem:[%s5 + $0xcc0] sm:$0xff]
    %v686 = vld [vmem:[%s5 + $0xcc8] sm:$0xff]
    %v687 = vld [vmem:[%s5 + $0xcd0] sm:$0xff]
    %v688 = vld [vmem:[%s5 + $0xcd8] sm:$0xff]
    %v689 = vld [vmem:[%s5 + $0xce0] sm:$0xff]
    %v690 = vld [vmem:[%s5 + $0xce8] sm:$0xff]
    %v691 = vld [vmem:[%s5 + $0xcf0] sm:$0xff]
    %v692 = vld [vmem:[%s5 + $0xcf8] sm:$0xff]
    %v693 = vld [vmem:[%s5 + $0xd00] sm:$0xff]
    %v694 = vld [vmem:[%s5 + $0xd08] sm:$0xff]
    %v695 = vld [vmem:[%s5 + $0xd10] sm:$0xff]
    %v696 = vld [vmem:[%s5 + $0xd18] sm:$0xff]
    %v697 = vld [vmem:[%s5 + $0xd20] sm:$0xff]
    %v698 = vld [vmem:[%s5 + $0xd28] sm:$0xff]
    %v699 = vld [vmem:[%s5 + $0xd30] sm:$0xff]
    %v700 = vld [vmem:[%s5 + $0xd38] sm:$0xff]
    %v701 = vld [vmem:[%s5 + $0xd40] sm:$0xff]
    %v702 = vld [vmem:[%s5 + $0xd48] sm:$0xff]
    %v703 = vld [vmem:[%s5 + $0xd50] sm:$0xff]
    %v704 = vld [vmem:[%s5 + $0xd58] sm:$0xff]
    %v705 = vld [vmem:[%s5 + $0xd60] sm:$0xff]
    %v706 = vld [vmem:[%s5 + $0xd68] sm:$0xff]
    %v707 = vld [vmem:[%s5 + $0xd70] sm:$0xff]
    %v708 = vld [vmem:[%s5 + $0xd78] sm:$0xff]
    %v709 = vld [vmem:[%s5 + $0xd80] sm:$0xff]
    %v710 = vld [vmem:[%s5 + $0xd88] sm:$0xff]
    %v711 = vld [vmem:[%s5 + $0xd90] sm:$0xff]
    %v712 = vld [vmem:[%s5 + $0xd98] sm:$0xff]
    %v713 = vld [vmem:[%s5 + $0xda0] sm:$0xff]
    %v714 = vld [vmem:[%s5 + $0xda8] sm:$0xff]
    %v715 = vld [vmem:[%s5 + $0xdb0] sm:$0xff]
    %v716 = vld [vmem:[%s5 + $0xdb8] sm:$0xff]
    %v717 = vld [vmem:[%s5 + $0xdc0] sm:$0xff]
    %v718 = vld [vmem:[%s5 + $0xdc8] sm:$0xff]
    %v719 = vld [vmem:[%s5 + $0xdd0] sm:$0xff]
    %v720 = vld [vmem:[%s5 + $0xdd8] sm:$0xff]
    %v721 = vld [vmem:[%s5 + $0xde0] sm:$0xff]
    %v722 = vld [vmem:[%s5 + $0xde8] sm:$0xff]
    %v723 = vld [vmem:[%s5 + $0xdf0] sm:$0xff]
    %v724 = vld [vmem:[%s5 + $0xdf8] sm:$0xff]
    %v725 = vld [vmem:[%s5 + $0xe00] sm:$0xff]
    %v726 = vld [vmem:[%s5 + $0xe08] sm:$0xff]
    %v727 = vld [vmem:[%s5 + $0xe10] sm:$0xff]
    %v728 = vld [vmem:[%s5 + $0xe18] sm:$0xff]
    %v729 = vld [vmem:[%s5 + $0xe20] sm:$0xff]
    %v730 = vld [vmem:[%s5 + $0xe28] sm:$0xff]
    %v731 = vld [vmem:[%s5 + $0xe30] sm:$0xff]
    %v732 = vld [vmem:[%s5 + $0xe38] sm:$0xff]
    %v733 = vld [vmem:[%s5 + $0xe40] sm:$0xff]
    %v734 = vld [vmem:[%s5 + $0xe48] sm:$0xff]
    %v735 = vld [vmem:[%s5 + $0xe50] sm:$0xff]
    %v736 = vld [vmem:[%s5 + $0xe58] sm:$0xff]
    %v737 = vld [vmem:[%s5 + $0xe60] sm:$0xff]
    %v738 = vld [vmem:[%s5 + $0xe68] sm:$0xff]
    %v739 = vld [vmem:[%s5 + $0xe70] sm:$0xff]
    %v740 = vld [vmem:[%s5 + $0xe78] sm:$0xff]
    %v741 = vld [vmem:[%s5 + $0xe80] sm:$0xff]
    %v742 = vld [vmem:[%s5 + $0xe88] sm:$0xff]
    %v743 = vld [vmem:[%s5 + $0xe90] sm:$0xff]
    %v744 = vld [vmem:[%s5 + $0xe98] sm:$0xff]
    %v745 = vld [vmem:[%s5 + $0xea0] sm:$0xff]
    %v746 = vld [vmem:[%s5 + $0xea8] sm:$0xff]
    %v747 = vld [vmem:[%s5 + $0xeb0] sm:$0xff]
    %v748 = vld [vmem:[%s5 + $0xeb8] sm:$0xff]
    %v749 = vld [vmem:[%s5 + $0xec0] sm:$0xff]
    %v750 = vld [vmem:[%s5 + $0xec8] sm:$0xff]
    %v751 = vld [vmem:[%s5 + $0xed0] sm:$0xff]
    %v752 = vld [vmem:[%s5 + $0xed8] sm:$0xff]
    %v753 = vld [vmem:[%s5 + $0xee0] sm:$0xff]
    %v754 = vld [vmem:[%s5 + $0xee8] sm:$0xff]
    %v755 = vld [vmem:[%s5 + $0xef0] sm:$0xff]
    %v756 = vld [vmem:[%s5 + $0xef8] sm:$0xff]
    %v757 = vld [vmem:[%s5 + $0xf00] sm:$0xff]
    %v758 = vld [vmem:[%s5 + $0xf08] sm:$0xff]
    %v759 = vld [vmem:[%s5 + $0xf10] sm:$0xff]
    %v760 = vld [vmem:[%s5 + $0xf18] sm:$0xff]
    %v761 = vld [vmem:[%s5 + $0xf20] sm:$0xff]
    %v762 = vld [vmem:[%s5 + $0xf28] sm:$0xff]
    %v763 = vld [vmem:[%s5 + $0xf30] sm:$0xff]
    %v764 = vld [vmem:[%s5 + $0xf38] sm:$0xff]
    %v765 = vld [vmem:[%s5 + $0xf40] sm:$0xff]
    %v766 = vld [vmem:[%s5 + $0xf48] sm:$0xff]
    %v767 = vld [vmem:[%s5 + $0xf50] sm:$0xff]
    %v768 = vld [vmem:[%s5 + $0xf58] sm:$0xff]
    %v769 = vld [vmem:[%s5 + $0xf60] sm:$0xff]
    %v770 = vld [vmem:[%s5 + $0xf68] sm:$0xff]
    %v771 = vld [vmem:[%s5 + $0xf70] sm:$0xff]
    %v772 = vld [vmem:[%s5 + $0xf78] sm:$0xff]
    %v773 = vld [vmem:[%s5 + $0xf80] sm:$0xff]
    %v774 = vld [vmem:[%s5 + $0xf88] sm:$0xff]
    %v775 = vld [vmem:[%s5 + $0xf90] sm:$0xff]
    %v776 = vld [vmem:[%s5 + $0xf98] sm:$0xff]
    %v777 = vld [vmem:[%s5 + $0xfa0] sm:$0xff]
    %v778 = vld [vmem:[%s5 + $0xfa8] sm:$0xff]
    %v779 = vld [vmem:[%s5 + $0xfb0] sm:$0xff]
    %v780 = vld [vmem:[%s5 + $0xfb8] sm:$0xff]
    %v781 = vld [vmem:[%s5 + $0xfc0] sm:$0xff]
    %v782 = vld [vmem:[%s5 + $0xfc8] sm:$0xff]
    %v783 = vld [vmem:[%s5 + $0xfd0] sm:$0xff]
    %v784 = vld [vmem:[%s5 + $0xfd8] sm:$0xff]
    %v785 = vld [vmem:[%s5 + $0xfe0] sm:$0xff]
    %v786 = vld [vmem:[%s5 + $0xfe8] sm:$0xff]
    %v787 = vld [vmem:[%s5 + $0xff0] sm:$0xff]
    %v788 = vld [vmem:[%s5 + $0xff8] sm:$0xff]
    %v789 = vld [vmem:[%s5 + $0x1000] sm:$0xff]
    %v790 = vld [vmem:[%s5 + $0x1008] sm:$0xff]
    %v791 = vld [vmem:[%s5 + $0x1010] sm:$0xff]
    %v792 = vld [vmem:[%s5 + $0x1018] sm:$0xff]
    %v793 = vld [vmem:[%s5 + $0x1020] sm:$0xff]
    %v794 = vld [vmem:[%s5 + $0x1028] sm:$0xff]
    %v795 = vld [vmem:[%s5 + $0x1030] sm:$0xff]
    %v796 = vld [vmem:[%s5 + $0x1038] sm:$0xff]
    %v797 = vld [vmem:[%s5 + $0x1040] sm:$0xff]
    %v798 = vld [vmem:[%s5 + $0x1048] sm:$0xff]
    %v799 = vld [vmem:[%s5 + $0x1050] sm:$0xff]
    %v800 = vld [vmem:[%s5 + $0x1058] sm:$0xff]
    %v801 = vld [vmem:[%s5 + $0x1060] sm:$0xff]
    %v802 = vld [vmem:[%s5 + $0x1068] sm:$0xff]
    %v803 = vld [vmem:[%s5 + $0x1070] sm:$0xff]
    %v804 = vld [vmem:[%s5 + $0x1078] sm:$0xff]
    %v805 = vld [vmem:[%s5 + $0x1080] sm:$0xff]
    %v806 = vld [vmem:[%s5 + $0x1088] sm:$0xff]
    %v807 = vld [vmem:[%s5 + $0x1090] sm:$0xff]
    %v808 = vld [vmem:[%s5 + $0x1098] sm:$0xff]
    %v809 = vld [vmem:[%s5 + $0x10a0] sm:$0xff]
    %v810 = vld [vmem:[%s5 + $0x10a8] sm:$0xff]
    %v811 = vld [vmem:[%s5 + $0x10b0] sm:$0xff]
    %v812 = vld [vmem:[%s5 + $0x10b8] sm:$0xff]
    %v813 = vld [vmem:[%s5 + $0x10c0] sm:$0xff]
    %v814 = vld [vmem:[%s5 + $0x10c8] sm:$0xff]
    %v815 = vld [vmem:[%s5 + $0x10d0] sm:$0xff]
    %v816 = vld [vmem:[%s5 + $0x10d8] sm:$0xff]
    %v817 = vld [vmem:[%s5 + $0x10e0] sm:$0xff]
    %v818 = vld [vmem:[%s5 + $0x10e8] sm:$0xff]
    %v819 = vld [vmem:[%s5 + $0x10f0] sm:$0xff]
    %v820 = vld [vmem:[%s5 + $0x10f8] sm:$0xff]
    %v821 = vld [vmem:[%s5 + $0x1100] sm:$0xff]
    %v822 = vld [vmem:[%s5 + $0x1108] sm:$0xff]
    %v823 = vld [vmem:[%s5 + $0x1110] sm:$0xff]
    %v824 = vld [vmem:[%s5 + $0x1118] sm:$0xff]
    %v825 = vld [vmem:[%s5 + $0x1120] sm:$0xff]
    %v826 = vld [vmem:[%s5 + $0x1128] sm:$0xff]
    %v827 = vld [vmem:[%s5 + $0x1130] sm:$0xff]
    %v828 = vld [vmem:[%s5 + $0x1138] sm:$0xff]
    %v829 = vld [vmem:[%s5 + $0x1140] sm:$0xff]
    %v830 = vld [vmem:[%s5 + $0x1148] sm:$0xff]
    %v831 = vld [vmem:[%s5 + $0x1150] sm:$0xff]
    %v832 = vld [vmem:[%s5 + $0x1158] sm:$0xff]
    %v833 = vld [vmem:[%s5 + $0x1160] sm:$0xff]
    %v834 = vld [vmem:[%s5 + $0x1168] sm:$0xff]
    %v835 = vld [vmem:[%s5 + $0x1170] sm:$0xff]
    %v836 = vld [vmem:[%s5 + $0x1178] sm:$0xff]
    %v837 = vld [vmem:[%s5 + $0x1180] sm:$0xff]
    %v838 = vld [vmem:[%s5 + $0x1188] sm:$0xff]
    %v839 = vld [vmem:[%s5 + $0x1190] sm:$0xff]
    %v840 = vld [vmem:[%s5 + $0x1198] sm:$0xff]
    %v841 = vld [vmem:[%s5 + $0x11a0] sm:$0xff]
    %v842 = vld [vmem:[%s5 + $0x11a8] sm:$0xff]
    %v843 = vld [vmem:[%s5 + $0x11b0] sm:$0xff]
    %v844 = vld [vmem:[%s5 + $0x11b8] sm:$0xff]
    %v845 = vld [vmem:[%s5 + $0x11c0] sm:$0xff]
    %v846 = vld [vmem:[%s5 + $0x11c8] sm:$0xff]
    %v847 = vld [vmem:[%s5 + $0x11d0] sm:$0xff]
    %v848 = vld [vmem:[%s5 + $0x11d8] sm:$0xff]
    %v849 = vld [vmem:[%s5 + $0x11e0] sm:$0xff]
    %v850 = vld [vmem:[%s5 + $0x11e8] sm:$0xff]
    %v851 = vld [vmem:[%s5 + $0x11f0] sm:$0xff]
    %v852 = vld [vmem:[%s5 + $0x11f8] sm:$0xff]
    %v853 = vld [vmem:[%s5 + $0x1200] sm:$0xff]
    %v854 = vld [vmem:[%s5 + $0x1208] sm:$0xff]
    %v855 = vld [vmem:[%s5 + $0x1210] sm:$0xff]
    %v856 = vld [vmem:[%s5 + $0x1218] sm:$0xff]
    %v857 = vld [vmem:[%s5 + $0x1220] sm:$0xff]
    %v858 = vld [vmem:[%s5 + $0x1228] sm:$0xff]
    %v859 = vld [vmem:[%s5 + $0x1230] sm:$0xff]
    %v860 = vld [vmem:[%s5 + $0x1238] sm:$0xff]
    %v861 = vld [vmem:[%s5 + $0x1240] sm:$0xff]
    %v862 = vld [vmem:[%s5 + $0x1248] sm:$0xff]
    %v863 = vld [vmem:[%s5 + $0x1250] sm:$0xff]
    %v864 = vld [vmem:[%s5 + $0x1258] sm:$0xff]
    %v865 = vld [vmem:[%s5 + $0x1260] sm:$0xff]
    %v866 = vld [vmem:[%s5 + $0x1268] sm:$0xff]
    %v867 = vld [vmem:[%s5 + $0x1270] sm:$0xff]
    %v868 = vld [vmem:[%s5 + $0x1278] sm:$0xff]
    %v869 = vld [vmem:[%s5 + $0x1280] sm:$0xff]
    %v870 = vld [vmem:[%s5 + $0x1288] sm:$0xff]
    %v871 = vld [vmem:[%s5 + $0x1290] sm:$0xff]
    %v872 = vld [vmem:[%s5 + $0x1298] sm:$0xff]
    %v873 = vld [vmem:[%s5 + $0x12a0] sm:$0xff]
    %v874 = vld [vmem:[%s5 + $0x12a8] sm:$0xff]
    %v875 = vld [vmem:[%s5 + $0x12b0] sm:$0xff]
    %v876 = vld [vmem:[%s5 + $0x12b8] sm:$0xff]
    %v877 = vld [vmem:[%s6] sm:$0xff]
    %v878 = vld [vmem:[%s7] sm:$0xff]
    %v879 = vld [vmem:[%s7 + $0x8] sm:$0xff]
    %v880 = vld [vmem:[%s7 + $0x10] sm:$0xff]
    %v881 = vld [vmem:[%s7 + $0x18] sm:$0xff]
    %v882 = vld [vmem:[%s8] sm:$0xff]
    %v883 = vld [vmem:[%s8 + $0x8] sm:$0xff]
    %v884 = vld [vmem:[%s8 + $0x10] sm:$0xff]
    %v885 = vld [vmem:[%s8 + $0x18] sm:$0xff]
    %v887 = vlaneseq
    %v888 = vshrl.u32 %v887, 7
    %v889 = vsub.s32 0, %v888
    %v890 = vrot.slane %v276, %v889
    %v891 = vlaneseq
    %v892 = vshrl.u32 %v891, 7
    %v893 = vsub.s32 1, %v892
    %v894 = vrot.slane %v276, %v893
    %v895 = vlaneseq
    %v896 = vshrl.u32 %v895, 7
    %v897 = vsub.s32 2, %v896
    %v898 = vrot.slane %v276, %v897
    %v899 = vlaneseq
    %v900 = vshrl.u32 %v899, 7
    %v901 = vsub.s32 3, %v900
    %v902 = vrot.slane %v276, %v901
    %v903 = vlaneseq
    %v904 = vshrl.u32 %v903, 7
    %v905 = vsub.s32 4, %v904
    %v906 = vrot.slane %v276, %v905
    %v914 = vcombine.high %v84, %v84
    %vm916 = vcmask 359424
    %v917 = vsel %vm916, %v85, 0
    %vm919 = vcmask 1043456
    %v921 = vsel %vm919, %v271, 0
    %v924 = vsel %vm919, %v272, 0
    %v927 = vsel %vm919, %v273, 0
    %v930 = vsel %vm919, %v274, 0
    %v933 = vsel %vm919, %v275, 0
    %935 = vmatprep.subr.mxu0 %v87
    %936 = vmatpush1.msra.mxu0 %v86
    %937 = vmatprep.subr.mxu0 %v92
    %938 = vmatpush1.msra.mxu0 %v91
    %939 = vmatprep.subr.mxu0 %v97
    %940 = vmatpush1.msra.mxu0 %v96
    %941 = vmatprep.subr.mxu0 %v102
    %942 = vmatpush1.msra.mxu0 %v101
    %943 = vmatprep.subr.mxu0 %v107
    %944 = vmatpush1.msra.mxu0 %v106
    %945 = vmatprep.subr.mxu0 %v112
    %946 = vmatpush1.msra.mxu0 %v111
    %947 = vmatprep.subr.mxu0 %v117
    %948 = vmatpush1.msra.mxu0 %v116
    %949 = vmatprep.subr.mxu0 %v122
    %950 = vmatpush1.msra.mxu0 %v121
    %951 = vmatprep.subr.mxu0 %v127
    %952 = vmatpush1.msra.mxu0 %v126
    %953 = vmatprep.subr.mxu0 %v132
    %954 = vmatpush1.msra.mxu0 %v131
    %955 = vmatprep.subr.mxu0 %v137
    %956 = vmatpush1.msra.mxu0 %v136
    %957 = vmatprep.subr.mxu0 %v142
    %958 = vmatpush1.msra.mxu0 %v141
    %959 = vmatprep.subr.mxu0 %v147
    %960 = vmatpush1.msra.mxu0 %v146
    %961 = vmatprep.subr.mxu0 %v152
    %962 = vmatpush1.msra.mxu0 %v151
    %963 = vmatprep.subr.mxu0 %v157
    %964 = vmatpush1.msra.mxu0 %v156
    %965 = vmatprep.subr.mxu0 %v162
    %966 = vmatpush1.msra.mxu0 %v161
    %967 = vmatprep.subr.mxu0 %v167
    %968 = vmatpush1.msra.mxu0 %v166
    %969 = vmatprep.subr.mxu0 %v172
    %970 = vmatpush1.msra.mxu0 %v171
    %971 = vmatprep.subr.mxu0 %v177
    %972 = vmatpush1.msra.mxu0 %v176
    %973 = vmatprep.subr.mxu0 %v182
    %974 = vmatpush1.msra.mxu0 %v181
    %975 = vmatprep.subr.mxu0 %v187
    %976 = vmatpush1.msra.mxu0 %v186
    %977 = vmatprep.subr.mxu0 %v192
    %978 = vmatpush1.msra.mxu0 %v191
    %979 = vmatprep.subr.mxu0 %v197
    %980 = vmatpush1.msra.mxu0 %v196
    %981 = vmatprep.subr.mxu0 %v202
    %982 = vmatpush1.msra.mxu0 %v201
    %983 = vmatprep.subr.mxu0 %v207
    %984 = vmatpush1.msra.mxu0 %v206
    %985 = vmatprep.subr.mxu0 %v212
    %986 = vmatpush1.msra.mxu0 %v211
    %987 = vmatprep.subr.mxu0 %v217
    %988 = vmatpush1.msra.mxu0 %v216
    %989 = vmatprep.subr.mxu0 %v222
    %990 = vmatpush1.msra.mxu0 %v221
    %991 = vmatprep.subr.mxu0 %v227
    %992 = vmatpush1.msra.mxu0 %v226
    %993 = vmatprep.subr.mxu0 %v232
    %994 = vmatpush1.msra.mxu0 %v231
    %995 = vmatprep.subr.mxu0 %v237
    %996 = vmatpush1.msra.mxu0 %v236
    %997 = vmatprep.subr.mxu0 %v242
    %998 = vmatpush1.msra.mxu0 %v241
    %999 = vmatprep.mubr.f32.mxu0 %v914
    %1000 = vmatmul.mubr.f32.gmra.mrb[0].mxu0 %v84
    %v1001 = vpop.f32.mrb[0].mxu0
    %v1002 = vadd.f32 %v890, %v1001
    %v1003 = vpop.f32.mrb[0].mxu0
    %v1004 = vadd.f32 %v894, %v1003
    %1005 = vdwg.mxu0
    %1006 = vmatprep.subr.mxu0 %v247
    %1007 = vmatpush1.msra.mxu0 %v246
    %1008 = vmatprep.subr.mxu0 %v252
    %1009 = vmatpush1.msra.mxu0 %v251
    %1010 = vmatprep.subr.mxu0 %v257
    %1011 = vmatpush1.msra.mxu0 %v256
    %1012 = vmatprep.subr.mxu0 %v262
    %1013 = vmatpush1.msra.mxu0 %v261
    %1014 = vmatprep.subr.mxu0 %v267
    %1015 = vmatpush1.msra.mxu0 %v266
    %1016 = vmatprep.subr.mxu0 %v924
    %1017 = vmatpush1.msra.mxu0 %v921
    %1018 = vmatprep.subr.mxu0 0.0
    %1019 = vmatpush1.msra.mxu0 0.0
    %1020 = vmatprep.subr.mxu0 0.0
    %1021 = vmatpush1.msra.mxu0 0.0
    %1022 = vmatprep.subr.mxu0 0.0
    %1023 = vmatpush1.msra.mxu0 0.0
    %1024 = vmatprep.subr.mxu0 0.0
    %1025 = vmatpush1.msra.mxu0 0.0
    %1026 = vmatprep.subr.mxu0 0.0
    %1027 = vmatpush1.msra.mxu0 0.0
    %1028 = vmatprep.subr.mxu0 0.0
    %1029 = vmatpush1.msra.mxu0 0.0
    %1030 = vmatprep.subr.mxu0 0.0
    %1031 = vmatpush1.msra.mxu0 0.0
    %1032 = vmatprep.subr.mxu0 0.0
    %1033 = vmatpush1.msra.mxu0 0.0
    %1034 = vmatprep.subr.mxu0 0.0
    %1035 = vmatpush1.msra.mxu0 0.0
    %1036 = vmatprep.subr.mxu0 0.0
    %1037 = vmatpush1.msra.mxu0 0.0
    %1038 = vmatprep.subr.mxu0 0.0
    %1039 = vmatpush1.msra.mxu0 0.0
    %1040 = vmatprep.subr.mxu0 0.0
    %1041 = vmatpush1.msra.mxu0 0.0
    %1042 = vmatprep.subr.mxu0 0.0
    %1043 = vmatpush1.msra.mxu0 0.0
    %1044 = vmatprep.subr.mxu0 0.0
    %1045 = vmatpush1.msra.mxu0 0.0
    %1046 = vmatprep.subr.mxu0 0.0
    %1047 = vmatpush1.msra.mxu0 0.0
    %1048 = vmatprep.subr.mxu0 0.0
    %1049 = vmatpush1.msra.mxu0 0.0
    %1050 = vmatprep.subr.mxu0 0.0
    %1051 = vmatpush1.msra.mxu0 0.0
    %1052 = vmatprep.subr.mxu0 0.0
    %1053 = vmatpush1.msra.mxu0 0.0
    %1054 = vmatprep.subr.mxu0 0.0
    %1055 = vmatpush1.msra.mxu0 0.0
    %1056 = vmatprep.subr.mxu0 0.0
    %1057 = vmatpush1.msra.mxu0 0.0
    %1058 = vmatprep.subr.mxu0 0.0
    %1059 = vmatpush1.msra.mxu0 0.0
    %1060 = vmatprep.subr.mxu0 0.0
    %1061 = vmatpush1.msra.mxu0 0.0
    %1062 = vmatprep.subr.mxu0 0.0
    %1063 = vmatpush1.msra.mxu0 0.0
    %1064 = vmatprep.subr.mxu0 0.0
    %1065 = vmatpush1.msra.mxu0 0.0
    %1066 = vmatprep.subr.mxu0 0.0
    %1067 = vmatpush1.msra.mxu0 0.0
    %1068 = vmatprep.subr.mxu0 0.0
    %1069 = vmatpush1.msra.mxu0 0.0
    %1070 = vmatprep.mubr.f32.mxu0 0.0
    %1071 = vmatmul.mubr.f32.gmra.mrb[0].mxu0 %v917
    %v1072 = vpop.f32.mrb[0].mxu0
    %v1073 = vadd.f32 %v1002, %v1072
    %v1074 = vpop.f32.mrb[0].mxu0
    %v1075 = vadd.f32 %v1004, %v1074
    %1076 = vdwg.mxu0
    %1077 = vmatprep.subr.mxu0 %v89
    %1078 = vmatpush1.msra.mxu0 %v88
    %1079 = vmatprep.subr.mxu0 %v94
    %1080 = vmatpush1.msra.mxu0 %v93
    %1081 = vmatprep.subr.mxu0 %v99
    %1082 = vmatpush1.msra.mxu0 %v98
    %1083 = vmatprep.subr.mxu0 %v104
    %1084 = vmatpush1.msra.mxu0 %v103
    %1085 = vmatprep.subr.mxu0 %v109
    %1086 = vmatpush1.msra.mxu0 %v108
    %1087 = vmatprep.subr.mxu0 %v114
    %1088 = vmatpush1.msra.mxu0 %v113
    %1089 = vmatprep.subr.mxu0 %v119
    %1090 = vmatpush1.msra.mxu0 %v118
    %1091 = vmatprep.subr.mxu0 %v124
    %1092 = vmatpush1.msra.mxu0 %v123
    %1093 = vmatprep.subr.mxu0 %v129
    %1094 = vmatpush1.msra.mxu0 %v128
    %1095 = vmatprep.subr.mxu0 %v134
    %1096 = vmatpush1.msra.mxu0 %v133
    %1097 = vmatprep.subr.mxu0 %v139
    %1098 = vmatpush1.msra.mxu0 %v138
    %1099 = vmatprep.subr.mxu0 %v144
    %1100 = vmatpush1.msra.mxu0 %v143
    %1101 = vmatprep.subr.mxu0 %v149
    %1102 = vmatpush1.msra.mxu0 %v148
    %1103 = vmatprep.subr.mxu0 %v154
    %1104 = vmatpush1.msra.mxu0 %v153
    %1105 = vmatprep.subr.mxu0 %v159
    %1106 = vmatpush1.msra.mxu0 %v158
    %1107 = vmatprep.subr.mxu0 %v164
    %1108 = vmatpush1.msra.mxu0 %v163
    %1109 = vmatprep.subr.mxu0 %v169
    %1110 = vmatpush1.msra.mxu0 %v168
    %1111 = vmatprep.subr.mxu0 %v174
    %1112 = vmatpush1.msra.mxu0 %v173
    %1113 = vmatprep.subr.mxu0 %v179
    %1114 = vmatpush1.msra.mxu0 %v178
    %1115 = vmatprep.subr.mxu0 %v184
    %1116 = vmatpush1.msra.mxu0 %v183
    %1117 = vmatprep.subr.mxu0 %v189
    %1118 = vmatpush1.msra.mxu0 %v188
    %1119 = vmatprep.subr.mxu0 %v194
    %1120 = vmatpush1.msra.mxu0 %v193
    %1121 = vmatprep.subr.mxu0 %v199
    %1122 = vmatpush1.msra.mxu0 %v198
    %1123 = vmatprep.subr.mxu0 %v204
    %1124 = vmatpush1.msra.mxu0 %v203
    %1125 = vmatprep.subr.mxu0 %v209
    %1126 = vmatpush1.msra.mxu0 %v208
    %1127 = vmatprep.subr.mxu0 %v214
    %1128 = vmatpush1.msra.mxu0 %v213
    %1129 = vmatprep.subr.mxu0 %v219
    %1130 = vmatpush1.msra.mxu0 %v218
    %1131 = vmatprep.subr.mxu0 %v224
    %1132 = vmatpush1.msra.mxu0 %v223
    %1133 = vmatprep.subr.mxu0 %v229
    %1134 = vmatpush1.msra.mxu0 %v228
    %1135 = vmatprep.subr.mxu0 %v234
    %1136 = vmatpush1.msra.mxu0 %v233
    %1137 = vmatprep.subr.mxu0 %v239
    %1138 = vmatpush1.msra.mxu0 %v238
    %1139 = vmatprep.subr.mxu0 %v244
    %1140 = vmatpush1.msra.mxu0 %v243
    %1141 = vmatprep.mubr.f32.mxu0 %v914
    %1142 = vmatmul.mubr.f32.gmra.mrb[0].mxu0 %v84
    %v1143 = vpop.f32.mrb[0].mxu0
    %v1144 = vadd.f32 %v898, %v1143
    %v1145 = vpop.f32.mrb[0].mxu0
    %v1146 = vadd.f32 %v902, %v1145
    %1147 = vdwg.mxu0
    %1148 = vmatprep.subr.mxu0 %v249
    %1149 = vmatpush1.msra.mxu0 %v248
    %1150 = vmatprep.subr.mxu0 %v254
    %1151 = vmatpush1.msra.mxu0 %v253
    %1152 = vmatprep.subr.mxu0 %v259
    %1153 = vmatpush1.msra.mxu0 %v258
    %1154 = vmatprep.subr.mxu0 %v264
    %1155 = vmatpush1.msra.mxu0 %v263
    %1156 = vmatprep.subr.mxu0 %v269
    %1157 = vmatpush1.msra.mxu0 %v268
    %1158 = vmatprep.subr.mxu0 %v930
    %1159 = vmatpush1.msra.mxu0 %v927
    %1160 = vmatprep.subr.mxu0 0.0
    %1161 = vmatpush1.msra.mxu0 0.0
    %1162 = vmatprep.subr.mxu0 0.0
    %1163 = vmatpush1.msra.mxu0 0.0
    %1164 = vmatprep.subr.mxu0 0.0
    %1165 = vmatpush1.msra.mxu0 0.0
    %1166 = vmatprep.subr.mxu0 0.0
    %1167 = vmatpush1.msra.mxu0 0.0
    %1168 = vmatprep.subr.mxu0 0.0
    %1169 = vmatpush1.msra.mxu0 0.0
    %1170 = vmatprep.subr.mxu0 0.0
    %1171 = vmatpush1.msra.mxu0 0.0
    %1172 = vmatprep.subr.mxu0 0.0
    %1173 = vmatpush1.msra.mxu0 0.0
    %1174 = vmatprep.subr.mxu0 0.0
    %1175 = vmatpush1.msra.mxu0 0.0
    %1176 = vmatprep.subr.mxu0 0.0
    %1177 = vmatpush1.msra.mxu0 0.0
    %1178 = vmatprep.subr.mxu0 0.0
    %1179 = vmatpush1.msra.mxu0 0.0
    %1180 = vmatprep.subr.mxu0 0.0
    %1181 = vmatpush1.msra.mxu0 0.0
    %1182 = vmatprep.subr.mxu0 0.0
    %1183 = vmatpush1.msra.mxu0 0.0
    %1184 = vmatprep.subr.mxu0 0.0
    %1185 = vmatpush1.msra.mxu0 0.0
    %1186 = vmatprep.subr.mxu0 0.0
    %1187 = vmatpush1.msra.mxu0 0.0
    %1188 = vmatprep.subr.mxu0 0.0
    %1189 = vmatpush1.msra.mxu0 0.0
    %1190 = vmatprep.subr.mxu0 0.0
    %1191 = vmatpush1.msra.mxu0 0.0
    %1192 = vmatprep.subr.mxu0 0.0
    %1193 = vmatpush1.msra.mxu0 0.0
    %1194 = vmatprep.subr.mxu0 0.0
    %1195 = vmatpush1.msra.mxu0 0.0
    %1196 = vmatprep.subr.mxu0 0.0
    %1197 = vmatpush1.msra.mxu0 0.0
    %1198 = vmatprep.subr.mxu0 0.0
    %1199 = vmatpush1.msra.mxu0 0.0
    %1200 = vmatprep.subr.mxu0 0.0
    %1201 = vmatpush1.msra.mxu0 0.0
    %1202 = vmatprep.subr.mxu0 0.0
    %1203 = vmatpush1.msra.mxu0 0.0
    %1204 = vmatprep.subr.mxu0 0.0
    %1205 = vmatpush1.msra.mxu0 0.0
    %1206 = vmatprep.subr.mxu0 0.0
    %1207 = vmatpush1.msra.mxu0 0.0
    %1208 = vmatprep.subr.mxu0 0.0
    %1209 = vmatpush1.msra.mxu0 0.0
    %1210 = vmatprep.subr.mxu0 0.0
    %1211 = vmatpush1.msra.mxu0 0.0
    %1212 = vmatprep.mubr.f32.mxu0 0.0
    %1213 = vmatmul.mubr.f32.gmra.mrb[0].mxu0 %v917
    %v1214 = vpop.f32.mrb[0].mxu0
    %v1215 = vadd.f32 %v1144, %v1214
    %v1216 = vpop.f32.mrb[0].mxu0
    %v1217 = vadd.f32 %v1146, %v1216
    %1218 = vdwg.mxu0
    %1219 = vmatprep.subr.mxu0 0.0
    %1220 = vmatpush1.msra.mxu0 %v90
    %1221 = vmatprep.subr.mxu0 0.0
    %1222 = vmatpush1.msra.mxu0 %v95
    %1223 = vmatprep.subr.mxu0 0.0
    %1224 = vmatpush1.msra.mxu0 %v100
    %1225 = vmatprep.subr.mxu0 0.0
    %1226 = vmatpush1.msra.mxu0 %v105
    %1227 = vmatprep.subr.mxu0 0.0
    %1228 = vmatpush1.msra.mxu0 %v110
    %1229 = vmatprep.subr.mxu0 0.0
    %1230 = vmatpush1.msra.mxu0 %v115
    %1231 = vmatprep.subr.mxu0 0.0
    %1232 = vmatpush1.msra.mxu0 %v120
    %1233 = vmatprep.subr.mxu0 0.0
    %1234 = vmatpush1.msra.mxu0 %v125
    %1235 = vmatprep.subr.mxu0 0.0
    %1236 = vmatpush1.msra.mxu0 %v130
    %1237 = vmatprep.subr.mxu0 0.0
    %1238 = vmatpush1.msra.mxu0 %v135
    %1239 = vmatprep.subr.mxu0 0.0
    %1240 = vmatpush1.msra.mxu0 %v140
    %1241 = vmatprep.subr.mxu0 0.0
    %1242 = vmatpush1.msra.mxu0 %v145
    %1243 = vmatprep.subr.mxu0 0.0
    %1244 = vmatpush1.msra.mxu0 %v150
    %1245 = vmatprep.subr.mxu0 0.0
    %1246 = vmatpush1.msra.mxu0 %v155
    %1247 = vmatprep.subr.mxu0 0.0
    %1248 = vmatpush1.msra.mxu0 %v160
    %1249 = vmatprep.subr.mxu0 0.0
    %1250 = vmatpush1.msra.mxu0 %v165
    %1251 = vmatprep.subr.mxu0 0.0
    %1252 = vmatpush1.msra.mxu0 %v170
    %1253 = vmatprep.subr.mxu0 0.0
    %1254 = vmatpush1.msra.mxu0 %v175
    %1255 = vmatprep.subr.mxu0 0.0
    %1256 = vmatpush1.msra.mxu0 %v180
    %1257 = vmatprep.subr.mxu0 0.0
    %1258 = vmatpush1.msra.mxu0 %v185
    %1259 = vmatprep.subr.mxu0 0.0
    %1260 = vmatpush1.msra.mxu0 %v190
    %1261 = vmatprep.subr.mxu0 0.0
    %1262 = vmatpush1.msra.mxu0 %v195
    %1263 = vmatprep.subr.mxu0 0.0
    %1264 = vmatpush1.msra.mxu0 %v200
    %1265 = vmatprep.subr.mxu0 0.0
    %1266 = vmatpush1.msra.mxu0 %v205
    %1267 = vmatprep.subr.mxu0 0.0
    %1268 = vmatpush1.msra.mxu0 %v210
    %1269 = vmatprep.subr.mxu0 0.0
    %1270 = vmatpush1.msra.mxu0 %v215
    %1271 = vmatprep.subr.mxu0 0.0
    %1272 = vmatpush1.msra.mxu0 %v220
    %1273 = vmatprep.subr.mxu0 0.0
    %1274 = vmatpush1.msra.mxu0 %v225
    %1275 = vmatprep.subr.mxu0 0.0
    %1276 = vmatpush1.msra.mxu0 %v230
    %1277 = vmatprep.subr.mxu0 0.0
    %1278 = vmatpush1.msra.mxu0 %v235
    %1279 = vmatprep.subr.mxu0 0.0
    %1280 = vmatpush1.msra.mxu0 %v240
    %1281 = vmatprep.subr.mxu0 0.0
    %1282 = vmatpush1.msra.mxu0 %v245
    %1283 = vmatprep.mubr.f32.mxu0 %v914
    %1284 = vmatmul.mubr.f32.gmra.mrb[0].mxu0 %v84
    %v1285 = vpop.f32.mrb[0].mxu0
    %v1286 = vadd.f32 %v906, %v1285
    %v1287 = vpop.f32.mrb[0].mxu0
    %1288 = vdwg.mxu0
    %1289 = vmatprep.subr.mxu0 0.0
    %1290 = vmatpush1.msra.mxu0 %v250
    %1291 = vmatprep.subr.mxu0 0.0
    %1292 = vmatpush1.msra.mxu0 %v255
    %1293 = vmatprep.subr.mxu0 0.0
    %1294 = vmatpush1.msra.mxu0 %v260
    %1295 = vmatprep.subr.mxu0 0.0
    %1296 = vmatpush1.msra.mxu0 %v265
    %1297 = vmatprep.subr.mxu0 0.0
    %1298 = vmatpush1.msra.mxu0 %v270
    %1299 = vmatprep.subr.mxu0 0.0
    %1300 = vmatpush1.msra.mxu0 %v933
    %1301 = vmatprep.subr.mxu0 0.0
    %1302 = vmatpush1.msra.mxu0 0.0
    %1303 = vmatprep.subr.mxu0 0.0
    %1304 = vmatpush1.msra.mxu0 0.0
    %1305 = vmatprep.subr.mxu0 0.0
    %1306 = vmatpush1.msra.mxu0 0.0
    %1307 = vmatprep.subr.mxu0 0.0
    %1308 = vmatpush1.msra.mxu0 0.0
    %1309 = vmatprep.subr.mxu0 0.0
    %1310 = vmatpush1.msra.mxu0 0.0
    %1311 = vmatprep.subr.mxu0 0.0
    %1312 = vmatpush1.msra.mxu0 0.0
    %1313 = vmatprep.subr.mxu0 0.0
    %1314 = vmatpush1.msra.mxu0 0.0
    %1315 = vmatprep.subr.mxu0 0.0
    %1316 = vmatpush1.msra.mxu0 0.0
    %1317 = vmatprep.subr.mxu0 0.0
    %1318 = vmatpush1.msra.mxu0 0.0
    %1319 = vmatprep.subr.mxu0 0.0
    %1320 = vmatpush1.msra.mxu0 0.0
    %1321 = vmatprep.subr.mxu0 0.0
    %1322 = vmatpush1.msra.mxu0 0.0
    %1323 = vmatprep.subr.mxu0 0.0
    %1324 = vmatpush1.msra.mxu0 0.0
    %1325 = vmatprep.subr.mxu0 0.0
    %1326 = vmatpush1.msra.mxu0 0.0
    %1327 = vmatprep.subr.mxu0 0.0
    %1328 = vmatpush1.msra.mxu0 0.0
    %1329 = vmatprep.subr.mxu0 0.0
    %1330 = vmatpush1.msra.mxu0 0.0
    %1331 = vmatprep.subr.mxu0 0.0
    %1332 = vmatpush1.msra.mxu0 0.0
    %1333 = vmatprep.subr.mxu0 0.0
    %1334 = vmatpush1.msra.mxu0 0.0
    %1335 = vmatprep.subr.mxu0 0.0
    %1336 = vmatpush1.msra.mxu0 0.0
    %1337 = vmatprep.subr.mxu0 0.0
    %1338 = vmatpush1.msra.mxu0 0.0
    %1339 = vmatprep.subr.mxu0 0.0
    %1340 = vmatpush1.msra.mxu0 0.0
    %1341 = vmatprep.subr.mxu0 0.0
    %1342 = vmatpush1.msra.mxu0 0.0
    %1343 = vmatprep.subr.mxu0 0.0
    %1344 = vmatpush1.msra.mxu0 0.0
    %1345 = vmatprep.subr.mxu0 0.0
    %1346 = vmatpush1.msra.mxu0 0.0
    %1347 = vmatprep.subr.mxu0 0.0
    %1348 = vmatpush1.msra.mxu0 0.0
    %1349 = vmatprep.subr.mxu0 0.0
    %1350 = vmatpush1.msra.mxu0 0.0
    %1351 = vmatprep.subr.mxu0 0.0
    %1352 = vmatpush1.msra.mxu0 0.0
    %1353 = vmatprep.mubr.f32.mxu0 0.0
    %1354 = vmatmul.mubr.f32.gmra.mrb[0].mxu0 %v917
    %v1355 = vpop.f32.mrb[0].mxu0
    %v1356 = vadd.f32 %v1286, %v1355
    %v1357 = vpop.f32.mrb[0].mxu0
    %1358 = vdwg.mxu0
    %v1359 = vxor.u32 %v1073, 2147483648
    %v1360 = vxor.u32 %v1075, 2147483648
    %v1361 = vxor.u32 %v1215, 2147483648
    %v1362 = vxor.u32 %v1217, 2147483648
    %v1363 = vxor.u32 %v1356, 2147483648
    %v1364 = vmul.f32 %v1359, 1.442695
    %v1365 = vpow.pop %v1364
    %v1366 = vmul.f32 %v1360, 1.442695
    %v1367 = vpow.pop %v1366
    %v1368 = vmul.f32 %v1361, 1.442695
    %v1369 = vpow.pop %v1368
    %v1370 = vmul.f32 %v1362, 1.442695
    %v1371 = vpow.pop %v1370
    %v1372 = vmul.f32 %v1363, 1.442695
    %v1373 = vpow.pop %v1372
    %v1374 = vadd.f32 %v1365, 1.0
    %v1375 = vadd.f32 %v1367, 1.0
    %v1376 = vadd.f32 %v1369, 1.0
    %v1377 = vadd.f32 %v1371, 1.0
    %v1378 = vadd.f32 %v1373, 1.0
    %v1379 = vrcp.pop %v1374
    %v1380 = vmul.f32 1.0, %v1379
    %v1381 = vrcp.pop %v1375
    %v1382 = vmul.f32 1.0, %v1381
    %v1383 = vrcp.pop %v1376
    %v1384 = vmul.f32 1.0, %v1383
    %v1385 = vrcp.pop %v1377
    %v1386 = vmul.f32 1.0, %v1385
    %v1387 = vrcp.pop %v1378
    %v1388 = vmul.f32 1.0, %v1387
    %v1390 = vlaneseq
    %v1391 = vshrl.u32 %v1390, 7
    %v1392 = vsub.s32 0, %v1391
    %v1393 = vrot.slane %v877, %v1392
    %v1394 = vlaneseq
    %v1395 = vshrl.u32 %v1394, 7
    %v1396 = vsub.s32 1, %v1395
    %v1397 = vrot.slane %v877, %v1396
    %v1398 = vlaneseq
    %v1399 = vshrl.u32 %v1398, 7
    %v1400 = vsub.s32 2, %v1399
    %v1401 = vrot.slane %v877, %v1400
    %v1402 = vlaneseq
    %v1403 = vshrl.u32 %v1402, 7
    %v1404 = vsub.s32 3, %v1403
    %v1405 = vrot.slane %v877, %v1404
    %v1406 = vlaneseq
    %v1407 = vshrl.u32 %v1406, 7
    %v1408 = vsub.s32 4, %v1407
    %v1409 = vrot.slane %v877, %v1408
    %v1410 = vlaneseq
    %v1411 = vshrl.u32 %v1410, 7
    %v1412 = vsub.s32 5, %v1411
    %v1413 = vrot.slane %v877, %v1412
    %v1414 = vlaneseq
    %v1415 = vshrl.u32 %v1414, 7
    %v1416 = vsub.s32 6, %v1415
    %v1417 = vrot.slane %v877, %v1416
    %v1418 = vlaneseq
    %v1419 = vshrl.u32 %v1418, 7
    %v1420 = vsub.s32 7, %v1419
    %v1421 = vrot.slane %v877, %v1420
    %vm1430 = vcmask 719872
    %v1432 = vsel %vm1430, %v1388, 0
    %1434 = vmatprep.subr.mxu0 %v278
    %1435 = vmatpush1.msra.mxu0 %v277
    %1436 = vmatprep.subr.mxu0 %v286
    %1437 = vmatpush1.msra.mxu0 %v285
    %1438 = vmatprep.subr.mxu0 %v294
    %1439 = vmatpush1.msra.mxu0 %v293
    %1440 = vmatprep.subr.mxu0 %v302
    %1441 = vmatpush1.msra.mxu0 %v301
    %1442 = vmatprep.subr.mxu0 %v310
    %1443 = vmatpush1.msra.mxu0 %v309
    %1444 = vmatprep.subr.mxu0 %v318
    %1445 = vmatpush1.msra.mxu0 %v317
    %1446 = vmatprep.subr.mxu0 %v326
    %1447 = vmatpush1.msra.mxu0 %v325
    %1448 = vmatprep.subr.mxu0 %v334
    %1449 = vmatpush1.msra.mxu0 %v333
    %1450 = vmatprep.subr.mxu0 %v342
    %1451 = vmatpush1.msra.mxu0 %v341
    %1452 = vmatprep.subr.mxu0 %v350
    %1453 = vmatpush1.msra.mxu0 %v349
    %1454 = vmatprep.subr.mxu0 %v358
    %1455 = vmatpush1.msra.mxu0 %v357
    %1456 = vmatprep.subr.mxu0 %v366
    %1457 = vmatpush1.msra.mxu0 %v365
    %1458 = vmatprep.subr.mxu0 %v374
    %1459 = vmatpush1.msra.mxu0 %v373
    %1460 = vmatprep.subr.mxu0 %v382
    %1461 = vmatpush1.msra.mxu0 %v381
    %1462 = vmatprep.subr.mxu0 %v390
    %1463 = vmatpush1.msra.mxu0 %v389
    %1464 = vmatprep.subr.mxu0 %v398
    %1465 = vmatpush1.msra.mxu0 %v397
    %1466 = vmatprep.subr.mxu0 %v406
    %1467 = vmatpush1.msra.mxu0 %v405
    %1468 = vmatprep.subr.mxu0 %v414
    %1469 = vmatpush1.msra.mxu0 %v413
    %1470 = vmatprep.subr.mxu0 %v422
    %1471 = vmatpush1.msra.mxu0 %v421
    %1472 = vmatprep.subr.mxu0 %v430
    %1473 = vmatpush1.msra.mxu0 %v429
    %1474 = vmatprep.subr.mxu0 %v438
    %1475 = vmatpush1.msra.mxu0 %v437
    %1476 = vmatprep.subr.mxu0 %v446
    %1477 = vmatpush1.msra.mxu0 %v445
    %1478 = vmatprep.subr.mxu0 %v454
    %1479 = vmatpush1.msra.mxu0 %v453
    %1480 = vmatprep.subr.mxu0 %v462
    %1481 = vmatpush1.msra.mxu0 %v461
    %1482 = vmatprep.subr.mxu0 %v470
    %1483 = vmatpush1.msra.mxu0 %v469
    %1484 = vmatprep.subr.mxu0 %v478
    %1485 = vmatpush1.msra.mxu0 %v477
    %1486 = vmatprep.subr.mxu0 %v486
    %1487 = vmatpush1.msra.mxu0 %v485
    %1488 = vmatprep.subr.mxu0 %v494
    %1489 = vmatpush1.msra.mxu0 %v493
    %1490 = vmatprep.subr.mxu0 %v502
    %1491 = vmatpush1.msra.mxu0 %v501
    %1492 = vmatprep.subr.mxu0 %v510
    %1493 = vmatpush1.msra.mxu0 %v509
    %1494 = vmatprep.subr.mxu0 %v518
    %1495 = vmatpush1.msra.mxu0 %v517
    %1496 = vmatprep.subr.mxu0 %v526
    %1497 = vmatpush1.msra.mxu0 %v525
    %1498 = vmatprep.mubr.f32.mxu0 %v1382
    %1499 = vmatmul.mubr.f32.gmra.mrb[0].mxu0 %v1380
    %v1500 = vpop.f32.mrb[0].mxu0
    %v1501 = vadd.f32 %v1393, %v1500
    %v1502 = vpop.f32.mrb[0].mxu0
    %v1503 = vadd.f32 %v1397, %v1502
    %1504 = vdwg.mxu0
    %1505 = vmatprep.subr.mxu0 %v534
    %1506 = vmatpush1.msra.mxu0 %v533
    %1507 = vmatprep.subr.mxu0 %v542
    %1508 = vmatpush1.msra.mxu0 %v541
    %1509 = vmatprep.subr.mxu0 %v550
    %1510 = vmatpush1.msra.mxu0 %v549
    %1511 = vmatprep.subr.mxu0 %v558
    %1512 = vmatpush1.msra.mxu0 %v557
    %1513 = vmatprep.subr.mxu0 %v566
    %1514 = vmatpush1.msra.mxu0 %v565
    %1515 = vmatprep.subr.mxu0 %v574
    %1516 = vmatpush1.msra.mxu0 %v573
    %1517 = vmatprep.subr.mxu0 %v582
    %1518 = vmatpush1.msra.mxu0 %v581
    %1519 = vmatprep.subr.mxu0 %v590
    %1520 = vmatpush1.msra.mxu0 %v589
    %1521 = vmatprep.subr.mxu0 %v598
    %1522 = vmatpush1.msra.mxu0 %v597
    %1523 = vmatprep.subr.mxu0 %v606
    %1524 = vmatpush1.msra.mxu0 %v605
    %1525 = vmatprep.subr.mxu0 %v614
    %1526 = vmatpush1.msra.mxu0 %v613
    %1527 = vmatprep.subr.mxu0 %v622
    %1528 = vmatpush1.msra.mxu0 %v621
    %1529 = vmatprep.subr.mxu0 %v630
    %1530 = vmatpush1.msra.mxu0 %v629
    %1531 = vmatprep.subr.mxu0 %v638
    %1532 = vmatpush1.msra.mxu0 %v637
    %1533 = vmatprep.subr.mxu0 %v646
    %1534 = vmatpush1.msra.mxu0 %v645
    %1535 = vmatprep.subr.mxu0 %v654
    %1536 = vmatpush1.msra.mxu0 %v653
    %1537 = vmatprep.subr.mxu0 %v662
    %1538 = vmatpush1.msra.mxu0 %v661
    %1539 = vmatprep.subr.mxu0 %v670
    %1540 = vmatpush1.msra.mxu0 %v669
    %1541 = vmatprep.subr.mxu0 %v678
    %1542 = vmatpush1.msra.mxu0 %v677
    %1543 = vmatprep.subr.mxu0 %v686
    %1544 = vmatpush1.msra.mxu0 %v685
    %1545 = vmatprep.subr.mxu0 %v694
    %1546 = vmatpush1.msra.mxu0 %v693
    %1547 = vmatprep.subr.mxu0 %v702
    %1548 = vmatpush1.msra.mxu0 %v701
    %1549 = vmatprep.subr.mxu0 %v710
    %1550 = vmatpush1.msra.mxu0 %v709
    %1551 = vmatprep.subr.mxu0 %v718
    %1552 = vmatpush1.msra.mxu0 %v717
    %1553 = vmatprep.subr.mxu0 %v726
    %1554 = vmatpush1.msra.mxu0 %v725
    %1555 = vmatprep.subr.mxu0 %v734
    %1556 = vmatpush1.msra.mxu0 %v733
    %1557 = vmatprep.subr.mxu0 %v742
    %1558 = vmatpush1.msra.mxu0 %v741
    %1559 = vmatprep.subr.mxu0 %v750
    %1560 = vmatpush1.msra.mxu0 %v749
    %1561 = vmatprep.subr.mxu0 %v758
    %1562 = vmatpush1.msra.mxu0 %v757
    %1563 = vmatprep.subr.mxu0 %v766
    %1564 = vmatpush1.msra.mxu0 %v765
    %1565 = vmatprep.subr.mxu0 %v774
    %1566 = vmatpush1.msra.mxu0 %v773
    %1567 = vmatprep.subr.mxu0 %v782
    %1568 = vmatpush1.msra.mxu0 %v781
    %1569 = vmatprep.mubr.f32.mxu0 %v1386
    %1570 = vmatmul.mubr.f32.gmra.mrb[0].mxu0 %v1384
    %v1571 = vpop.f32.mrb[0].mxu0
    %v1572 = vadd.f32 %v1501, %v1571
    %v1573 = vpop.f32.mrb[0].mxu0
    %v1574 = vadd.f32 %v1503, %v1573
    %1575 = vdwg.mxu0
    %1576 = vmatprep.subr.mxu0 %v790
    %1577 = vmatpush1.msra.mxu0 %v789
    %1578 = vmatprep.subr.mxu0 %v798
    %1579 = vmatpush1.msra.mxu0 %v797
    %1580 = vmatprep.subr.mxu0 %v806
    %1581 = vmatpush1.msra.mxu0 %v805
    %1582 = vmatprep.subr.mxu0 %v814
    %1583 = vmatpush1.msra.mxu0 %v813
    %1584 = vmatprep.subr.mxu0 %v822
    %1585 = vmatpush1.msra.mxu0 %v821
    %1586 = vmatprep.subr.mxu0 %v830
    %1587 = vmatpush1.msra.mxu0 %v829
    %1588 = vmatprep.subr.mxu0 %v838
    %1589 = vmatpush1.msra.mxu0 %v837
    %1590 = vmatprep.subr.mxu0 %v846
    %1591 = vmatpush1.msra.mxu0 %v845
    %1592 = vmatprep.subr.mxu0 %v854
    %1593 = vmatpush1.msra.mxu0 %v853
    %1594 = vmatprep.subr.mxu0 %v862
    %1595 = vmatpush1.msra.mxu0 %v861
    %1596 = vmatprep.subr.mxu0 %v870
    %1597 = vmatpush1.msra.mxu0 %v869
    %1598 = vmatprep.subr.mxu0 0.0
    %1599 = vmatpush1.msra.mxu0 0.0
    %1600 = vmatprep.subr.mxu0 0.0
    %1601 = vmatpush1.msra.mxu0 0.0
    %1602 = vmatprep.subr.mxu0 0.0
    %1603 = vmatpush1.msra.mxu0 0.0
    %1604 = vmatprep.subr.mxu0 0.0
    %1605 = vmatpush1.msra.mxu0 0.0
    %1606 = vmatprep.subr.mxu0 0.0
    %1607 = vmatpush1.msra.mxu0 0.0
    %1608 = vmatprep.subr.mxu0 0.0
    %1609 = vmatpush1.msra.mxu0 0.0
    %1610 = vmatprep.subr.mxu0 0.0
    %1611 = vmatpush1.msra.mxu0 0.0
    %1612 = vmatprep.subr.mxu0 0.0
    %1613 = vmatpush1.msra.mxu0 0.0
    %1614 = vmatprep.subr.mxu0 0.0
    %1615 = vmatpush1.msra.mxu0 0.0
    %1616 = vmatprep.subr.mxu0 0.0
    %1617 = vmatpush1.msra.mxu0 0.0
    %1618 = vmatprep.subr.mxu0 0.0
    %1619 = vmatpush1.msra.mxu0 0.0
    %1620 = vmatprep.subr.mxu0 0.0
    %1621 = vmatpush1.msra.mxu0 0.0
    %1622 = vmatprep.subr.mxu0 0.0
    %1623 = vmatpush1.msra.mxu0 0.0
    %1624 = vmatprep.subr.mxu0 0.0
    %1625 = vmatpush1.msra.mxu0 0.0
    %1626 = vmatprep.subr.mxu0 0.0
    %1627 = vmatpush1.msra.mxu0 0.0
    %1628 = vmatprep.subr.mxu0 0.0
    %1629 = vmatpush1.msra.mxu0 0.0
    %1630 = vmatprep.subr.mxu0 0.0
    %1631 = vmatpush1.msra.mxu0 0.0
    %1632 = vmatprep.subr.mxu0 0.0
    %1633 = vmatpush1.msra.mxu0 0.0
    %1634 = vmatprep.subr.mxu0 0.0
    %1635 = vmatpush1.msra.mxu0 0.0
    %1636 = vmatprep.subr.mxu0 0.0
    %1637 = vmatpush1.msra.mxu0 0.0
    %1638 = vmatprep.subr.mxu0 0.0
    %1639 = vmatpush1.msra.mxu0 0.0
    %1640 = vmatprep.mubr.f32.mxu0 0.0
    %1641 = vmatmul.mubr.f32.gmra.mrb[0].mxu0 %v1432
    %v1642 = vpop.f32.mrb[0].mxu0
    %v1643 = vadd.f32 %v1572, %v1642
    %v1644 = vpop.f32.mrb[0].mxu0
    %v1645 = vadd.f32 %v1574, %v1644
    %1646 = vdwg.mxu0
    %1647 = vmatprep.subr.mxu0 %v280
    %1648 = vmatpush1.msra.mxu0 %v279
    %1649 = vmatprep.subr.mxu0 %v288
    %1650 = vmatpush1.msra.mxu0 %v287
    %1651 = vmatprep.subr.mxu0 %v296
    %1652 = vmatpush1.msra.mxu0 %v295
    %1653 = vmatprep.subr.mxu0 %v304
    %1654 = vmatpush1.msra.mxu0 %v303
    %1655 = vmatprep.subr.mxu0 %v312
    %1656 = vmatpush1.msra.mxu0 %v311
    %1657 = vmatprep.subr.mxu0 %v320
    %1658 = vmatpush1.msra.mxu0 %v319
    %1659 = vmatprep.subr.mxu0 %v328
    %1660 = vmatpush1.msra.mxu0 %v327
    %1661 = vmatprep.subr.mxu0 %v336
    %1662 = vmatpush1.msra.mxu0 %v335
    %1663 = vmatprep.subr.mxu0 %v344
    %1664 = vmatpush1.msra.mxu0 %v343
    %1665 = vmatprep.subr.mxu0 %v352
    %1666 = vmatpush1.msra.mxu0 %v351
    %1667 = vmatprep.subr.mxu0 %v360
    %1668 = vmatpush1.msra.mxu0 %v359
    %1669 = vmatprep.subr.mxu0 %v368
    %1670 = vmatpush1.msra.mxu0 %v367
    %1671 = vmatprep.subr.mxu0 %v376
    %1672 = vmatpush1.msra.mxu0 %v375
    %1673 = vmatprep.subr.mxu0 %v384
    %1674 = vmatpush1.msra.mxu0 %v383
    %1675 = vmatprep.subr.mxu0 %v392
    %1676 = vmatpush1.msra.mxu0 %v391
    %1677 = vmatprep.subr.mxu0 %v400
    %1678 = vmatpush1.msra.mxu0 %v399
    %1679 = vmatprep.subr.mxu0 %v408
    %1680 = vmatpush1.msra.mxu0 %v407
    %1681 = vmatprep.subr.mxu0 %v416
    %1682 = vmatpush1.msra.mxu0 %v415
    %1683 = vmatprep.subr.mxu0 %v424
    %1684 = vmatpush1.msra.mxu0 %v423
    %1685 = vmatprep.subr.mxu0 %v432
    %1686 = vmatpush1.msra.mxu0 %v431
    %1687 = vmatprep.subr.mxu0 %v440
    %1688 = vmatpush1.msra.mxu0 %v439
    %1689 = vmatprep.subr.mxu0 %v448
    %1690 = vmatpush1.msra.mxu0 %v447
    %1691 = vmatprep.subr.mxu0 %v456
    %1692 = vmatpush1.msra.mxu0 %v455
    %1693 = vmatprep.subr.mxu0 %v464
    %1694 = vmatpush1.msra.mxu0 %v463
    %1695 = vmatprep.subr.mxu0 %v472
    %1696 = vmatpush1.msra.mxu0 %v471
    %1697 = vmatprep.subr.mxu0 %v480
    %1698 = vmatpush1.msra.mxu0 %v479
    %1699 = vmatprep.subr.mxu0 %v488
    %1700 = vmatpush1.msra.mxu0 %v487
    %1701 = vmatprep.subr.mxu0 %v496
    %1702 = vmatpush1.msra.mxu0 %v495
    %1703 = vmatprep.subr.mxu0 %v504
    %1704 = vmatpush1.msra.mxu0 %v503
    %1705 = vmatprep.subr.mxu0 %v512
    %1706 = vmatpush1.msra.mxu0 %v511
    %1707 = vmatprep.subr.mxu0 %v520
    %1708 = vmatpush1.msra.mxu0 %v519
    %1709 = vmatprep.subr.mxu0 %v528
    %1710 = vmatpush1.msra.mxu0 %v527
    %1711 = vmatprep.mubr.f32.mxu0 %v1382
    %1712 = vmatmul.mubr.f32.gmra.mrb[0].mxu0 %v1380
    %v1713 = vpop.f32.mrb[0].mxu0
    %v1714 = vadd.f32 %v1401, %v1713
    %v1715 = vpop.f32.mrb[0].mxu0
    %v1716 = vadd.f32 %v1405, %v1715
    %1717 = vdwg.mxu0
    %1718 = vmatprep.subr.mxu0 %v536
    %1719 = vmatpush1.msra.mxu0 %v535
    %1720 = vmatprep.subr.mxu0 %v544
    %1721 = vmatpush1.msra.mxu0 %v543
    %1722 = vmatprep.subr.mxu0 %v552
    %1723 = vmatpush1.msra.mxu0 %v551
    %1724 = vmatprep.subr.mxu0 %v560
    %1725 = vmatpush1.msra.mxu0 %v559
    %1726 = vmatprep.subr.mxu0 %v568
    %1727 = vmatpush1.msra.mxu0 %v567
    %1728 = vmatprep.subr.mxu0 %v576
    %1729 = vmatpush1.msra.mxu0 %v575
    %1730 = vmatprep.subr.mxu0 %v584
    %1731 = vmatpush1.msra.mxu0 %v583
    %1732 = vmatprep.subr.mxu0 %v592
    %1733 = vmatpush1.msra.mxu0 %v591
    %1734 = vmatprep.subr.mxu0 %v600
    %1735 = vmatpush1.msra.mxu0 %v599
    %1736 = vmatprep.subr.mxu0 %v608
    %1737 = vmatpush1.msra.mxu0 %v607
    %1738 = vmatprep.subr.mxu0 %v616
    %1739 = vmatpush1.msra.mxu0 %v615
    %1740 = vmatprep.subr.mxu0 %v624
    %1741 = vmatpush1.msra.mxu0 %v623
    %1742 = vmatprep.subr.mxu0 %v632
    %1743 = vmatpush1.msra.mxu0 %v631
    %1744 = vmatprep.subr.mxu0 %v640
    %1745 = vmatpush1.msra.mxu0 %v639
    %1746 = vmatprep.subr.mxu0 %v648
    %1747 = vmatpush1.msra.mxu0 %v647
    %1748 = vmatprep.subr.mxu0 %v656
    %1749 = vmatpush1.msra.mxu0 %v655
    %1750 = vmatprep.subr.mxu0 %v664
    %1751 = vmatpush1.msra.mxu0 %v663
    %1752 = vmatprep.subr.mxu0 %v672
    %1753 = vmatpush1.msra.mxu0 %v671
    %1754 = vmatprep.subr.mxu0 %v680
    %1755 = vmatpush1.msra.mxu0 %v679
    %1756 = vmatprep.subr.mxu0 %v688
    %1757 = vmatpush1.msra.mxu0 %v687
    %1758 = vmatprep.subr.mxu0 %v696
    %1759 = vmatpush1.msra.mxu0 %v695
    %1760 = vmatprep.subr.mxu0 %v704
    %1761 = vmatpush1.msra.mxu0 %v703
    %1762 = vmatprep.subr.mxu0 %v712
    %1763 = vmatpush1.msra.mxu0 %v711
    %1764 = vmatprep.subr.mxu0 %v720
    %1765 = vmatpush1.msra.mxu0 %v719
    %1766 = vmatprep.subr.mxu0 %v728
    %1767 = vmatpush1.msra.mxu0 %v727
    %1768 = vmatprep.subr.mxu0 %v736
    %1769 = vmatpush1.msra.mxu0 %v735
    %1770 = vmatprep.subr.mxu0 %v744
    %1771 = vmatpush1.msra.mxu0 %v743
    %1772 = vmatprep.subr.mxu0 %v752
    %1773 = vmatpush1.msra.mxu0 %v751
    %1774 = vmatprep.subr.mxu0 %v760
    %1775 = vmatpush1.msra.mxu0 %v759
    %1776 = vmatprep.subr.mxu0 %v768
    %1777 = vmatpush1.msra.mxu0 %v767
    %1778 = vmatprep.subr.mxu0 %v776
    %1779 = vmatpush1.msra.mxu0 %v775
    %1780 = vmatprep.subr.mxu0 %v784
    %1781 = vmatpush1.msra.mxu0 %v783
    %1782 = vmatprep.mubr.f32.mxu0 %v1386
    %1783 = vmatmul.mubr.f32.gmra.mrb[0].mxu0 %v1384
    %v1784 = vpop.f32.mrb[0].mxu0
    %v1785 = vadd.f32 %v1714, %v1784
    %v1786 = vpop.f32.mrb[0].mxu0
    %v1787 = vadd.f32 %v1716, %v1786
    %1788 = vdwg.mxu0
    %1789 = vmatprep.subr.mxu0 %v792
    %1790 = vmatpush1.msra.mxu0 %v791
    %1791 = vmatprep.subr.mxu0 %v800
    %1792 = vmatpush1.msra.mxu0 %v799
    %1793 = vmatprep.subr.mxu0 %v808
    %1794 = vmatpush1.msra.mxu0 %v807
    %1795 = vmatprep.subr.mxu0 %v816
    %1796 = vmatpush1.msra.mxu0 %v815
    %1797 = vmatprep.subr.mxu0 %v824
    %1798 = vmatpush1.msra.mxu0 %v823
    %1799 = vmatprep.subr.mxu0 %v832
    %1800 = vmatpush1.msra.mxu0 %v831
    %1801 = vmatprep.subr.mxu0 %v840
    %1802 = vmatpush1.msra.mxu0 %v839
    %1803 = vmatprep.subr.mxu0 %v848
    %1804 = vmatpush1.msra.mxu0 %v847
    %1805 = vmatprep.subr.mxu0 %v856
    %1806 = vmatpush1.msra.mxu0 %v855
    %1807 = vmatprep.subr.mxu0 %v864
    %1808 = vmatpush1.msra.mxu0 %v863
    %1809 = vmatprep.subr.mxu0 %v872
    %1810 = vmatpush1.msra.mxu0 %v871
    %1811 = vmatprep.subr.mxu0 0.0
    %1812 = vmatpush1.msra.mxu0 0.0
    %1813 = vmatprep.subr.mxu0 0.0
    %1814 = vmatpush1.msra.mxu0 0.0
    %1815 = vmatprep.subr.mxu0 0.0
    %1816 = vmatpush1.msra.mxu0 0.0
    %1817 = vmatprep.subr.mxu0 0.0
    %1818 = vmatpush1.msra.mxu0 0.0
    %1819 = vmatprep.subr.mxu0 0.0
    %1820 = vmatpush1.msra.mxu0 0.0
    %1821 = vmatprep.subr.mxu0 0.0
    %1822 = vmatpush1.msra.mxu0 0.0
    %1823 = vmatprep.subr.mxu0 0.0
    %1824 = vmatpush1.msra.mxu0 0.0
    %1825 = vmatprep.subr.mxu0 0.0
    %1826 = vmatpush1.msra.mxu0 0.0
    %1827 = vmatprep.subr.mxu0 0.0
    %1828 = vmatpush1.msra.mxu0 0.0
    %1829 = vmatprep.subr.mxu0 0.0
    %1830 = vmatpush1.msra.mxu0 0.0
    %1831 = vmatprep.subr.mxu0 0.0
    %1832 = vmatpush1.msra.mxu0 0.0
    %1833 = vmatprep.subr.mxu0 0.0
    %1834 = vmatpush1.msra.mxu0 0.0
    %1835 = vmatprep.subr.mxu0 0.0
    %1836 = vmatpush1.msra.mxu0 0.0
    %1837 = vmatprep.subr.mxu0 0.0
    %1838 = vmatpush1.msra.mxu0 0.0
    %1839 = vmatprep.subr.mxu0 0.0
    %1840 = vmatpush1.msra.mxu0 0.0
    %1841 = vmatprep.subr.mxu0 0.0
    %1842 = vmatpush1.msra.mxu0 0.0
    %1843 = vmatprep.subr.mxu0 0.0
    %1844 = vmatpush1.msra.mxu0 0.0
    %1845 = vmatprep.subr.mxu0 0.0
    %1846 = vmatpush1.msra.mxu0 0.0
    %1847 = vmatprep.subr.mxu0 0.0
    %1848 = vmatpush1.msra.mxu0 0.0
    %1849 = vmatprep.subr.mxu0 0.0
    %1850 = vmatpush1.msra.mxu0 0.0
    %1851 = vmatprep.subr.mxu0 0.0
    %1852 = vmatpush1.msra.mxu0 0.0
    %1853 = vmatprep.mubr.f32.mxu0 0.0
    %1854 = vmatmul.mubr.f32.gmra.mrb[0].mxu0 %v1432
    %v1855 = vpop.f32.mrb[0].mxu0
    %v1856 = vadd.f32 %v1785, %v1855
    %v1857 = vpop.f32.mrb[0].mxu0
    %v1858 = vadd.f32 %v1787, %v1857
    %1859 = vdwg.mxu0
    %1860 = vmatprep.subr.mxu0 %v282
    %1861 = vmatpush1.msra.mxu0 %v281
    %1862 = vmatprep.subr.mxu0 %v290
    %1863 = vmatpush1.msra.mxu0 %v289
    %1864 = vmatprep.subr.mxu0 %v298
    %1865 = vmatpush1.msra.mxu0 %v297
    %1866 = vmatprep.subr.mxu0 %v306
    %1867 = vmatpush1.msra.mxu0 %v305
    %1868 = vmatprep.subr.mxu0 %v314
    %1869 = vmatpush1.msra.mxu0 %v313
    %1870 = vmatprep.subr.mxu0 %v322
    %1871 = vmatpush1.msra.mxu0 %v321
    %1872 = vmatprep.subr.mxu0 %v330
    %1873 = vmatpush1.msra.mxu0 %v329
    %1874 = vmatprep.subr.mxu0 %v338
    %1875 = vmatpush1.msra.mxu0 %v337
    %1876 = vmatprep.subr.mxu0 %v346
    %1877 = vmatpush1.msra.mxu0 %v345
    %1878 = vmatprep.subr.mxu0 %v354
    %1879 = vmatpush1.msra.mxu0 %v353
    %1880 = vmatprep.subr.mxu0 %v362
    %1881 = vmatpush1.msra.mxu0 %v361
    %1882 = vmatprep.subr.mxu0 %v370
    %1883 = vmatpush1.msra.mxu0 %v369
    %1884 = vmatprep.subr.mxu0 %v378
    %1885 = vmatpush1.msra.mxu0 %v377
    %1886 = vmatprep.subr.mxu0 %v386
    %1887 = vmatpush1.msra.mxu0 %v385
    %1888 = vmatprep.subr.mxu0 %v394
    %1889 = vmatpush1.msra.mxu0 %v393
    %1890 = vmatprep.subr.mxu0 %v402
    %1891 = vmatpush1.msra.mxu0 %v401
    %1892 = vmatprep.subr.mxu0 %v410
    %1893 = vmatpush1.msra.mxu0 %v409
    %1894 = vmatprep.subr.mxu0 %v418
    %1895 = vmatpush1.msra.mxu0 %v417
    %1896 = vmatprep.subr.mxu0 %v426
    %1897 = vmatpush1.msra.mxu0 %v425
    %1898 = vmatprep.subr.mxu0 %v434
    %1899 = vmatpush1.msra.mxu0 %v433
    %1900 = vmatprep.subr.mxu0 %v442
    %1901 = vmatpush1.msra.mxu0 %v441
    %1902 = vmatprep.subr.mxu0 %v450
    %1903 = vmatpush1.msra.mxu0 %v449
    %1904 = vmatprep.subr.mxu0 %v458
    %1905 = vmatpush1.msra.mxu0 %v457
    %1906 = vmatprep.subr.mxu0 %v466
    %1907 = vmatpush1.msra.mxu0 %v465
    %1908 = vmatprep.subr.mxu0 %v474
    %1909 = vmatpush1.msra.mxu0 %v473
    %1910 = vmatprep.subr.mxu0 %v482
    %1911 = vmatpush1.msra.mxu0 %v481
    %1912 = vmatprep.subr.mxu0 %v490
    %1913 = vmatpush1.msra.mxu0 %v489
    %1914 = vmatprep.subr.mxu0 %v498
    %1915 = vmatpush1.msra.mxu0 %v497
    %1916 = vmatprep.subr.mxu0 %v506
    %1917 = vmatpush1.msra.mxu0 %v505
    %1918 = vmatprep.subr.mxu0 %v514
    %1919 = vmatpush1.msra.mxu0 %v513
    %1920 = vmatprep.subr.mxu0 %v522
    %1921 = vmatpush1.msra.mxu0 %v521
    %1922 = vmatprep.subr.mxu0 %v530
    %1923 = vmatpush1.msra.mxu0 %v529
    %1924 = vmatprep.mubr.f32.mxu0 %v1382
    %1925 = vmatmul.mubr.f32.gmra.mrb[0].mxu0 %v1380
    %v1926 = vpop.f32.mrb[0].mxu0
    %v1927 = vadd.f32 %v1409, %v1926
    %v1928 = vpop.f32.mrb[0].mxu0
    %v1929 = vadd.f32 %v1413, %v1928
    %1930 = vdwg.mxu0
    %1931 = vmatprep.subr.mxu0 %v538
    %1932 = vmatpush1.msra.mxu0 %v537
    %1933 = vmatprep.subr.mxu0 %v546
    %1934 = vmatpush1.msra.mxu0 %v545
    %1935 = vmatprep.subr.mxu0 %v554
    %1936 = vmatpush1.msra.mxu0 %v553
    %1937 = vmatprep.subr.mxu0 %v562
    %1938 = vmatpush1.msra.mxu0 %v561
    %1939 = vmatprep.subr.mxu0 %v570
    %1940 = vmatpush1.msra.mxu0 %v569
    %1941 = vmatprep.subr.mxu0 %v578
    %1942 = vmatpush1.msra.mxu0 %v577
    %1943 = vmatprep.subr.mxu0 %v586
    %1944 = vmatpush1.msra.mxu0 %v585
    %1945 = vmatprep.subr.mxu0 %v594
    %1946 = vmatpush1.msra.mxu0 %v593
    %1947 = vmatprep.subr.mxu0 %v602
    %1948 = vmatpush1.msra.mxu0 %v601
    %1949 = vmatprep.subr.mxu0 %v610
    %1950 = vmatpush1.msra.mxu0 %v609
    %1951 = vmatprep.subr.mxu0 %v618
    %1952 = vmatpush1.msra.mxu0 %v617
    %1953 = vmatprep.subr.mxu0 %v626
    %1954 = vmatpush1.msra.mxu0 %v625
    %1955 = vmatprep.subr.mxu0 %v634
    %1956 = vmatpush1.msra.mxu0 %v633
    %1957 = vmatprep.subr.mxu0 %v642
    %1958 = vmatpush1.msra.mxu0 %v641
    %1959 = vmatprep.subr.mxu0 %v650
    %1960 = vmatpush1.msra.mxu0 %v649
    %1961 = vmatprep.subr.mxu0 %v658
    %1962 = vmatpush1.msra.mxu0 %v657
    %1963 = vmatprep.subr.mxu0 %v666
    %1964 = vmatpush1.msra.mxu0 %v665
    %1965 = vmatprep.subr.mxu0 %v674
    %1966 = vmatpush1.msra.mxu0 %v673
    %1967 = vmatprep.subr.mxu0 %v682
    %1968 = vmatpush1.msra.mxu0 %v681
    %1969 = vmatprep.subr.mxu0 %v690
    %1970 = vmatpush1.msra.mxu0 %v689
    %1971 = vmatprep.subr.mxu0 %v698
    %1972 = vmatpush1.msra.mxu0 %v697
    %1973 = vmatprep.subr.mxu0 %v706
    %1974 = vmatpush1.msra.mxu0 %v705
    %1975 = vmatprep.subr.mxu0 %v714
    %1976 = vmatpush1.msra.mxu0 %v713
    %1977 = vmatprep.subr.mxu0 %v722
    %1978 = vmatpush1.msra.mxu0 %v721
    %1979 = vmatprep.subr.mxu0 %v730
    %1980 = vmatpush1.msra.mxu0 %v729
    %1981 = vmatprep.subr.mxu0 %v738
    %1982 = vmatpush1.msra.mxu0 %v737
    %1983 = vmatprep.subr.mxu0 %v746
    %1984 = vmatpush1.msra.mxu0 %v745
    %1985 = vmatprep.subr.mxu0 %v754
    %1986 = vmatpush1.msra.mxu0 %v753
    %1987 = vmatprep.subr.mxu0 %v762
    %1988 = vmatpush1.msra.mxu0 %v761
    %1989 = vmatprep.subr.mxu0 %v770
    %1990 = vmatpush1.msra.mxu0 %v769
    %1991 = vmatprep.subr.mxu0 %v778
    %1992 = vmatpush1.msra.mxu0 %v777
    %1993 = vmatprep.subr.mxu0 %v786
    %1994 = vmatpush1.msra.mxu0 %v785
    %1995 = vmatprep.mubr.f32.mxu0 %v1386
    %1996 = vmatmul.mubr.f32.gmra.mrb[0].mxu0 %v1384
    %v1997 = vpop.f32.mrb[0].mxu0
    %v1998 = vadd.f32 %v1927, %v1997
    %v1999 = vpop.f32.mrb[0].mxu0
    %v2000 = vadd.f32 %v1929, %v1999
    %2001 = vdwg.mxu0
    %2002 = vmatprep.subr.mxu0 %v794
    %2003 = vmatpush1.msra.mxu0 %v793
    %2004 = vmatprep.subr.mxu0 %v802
    %2005 = vmatpush1.msra.mxu0 %v801
    %2006 = vmatprep.subr.mxu0 %v810
    %2007 = vmatpush1.msra.mxu0 %v809
    %2008 = vmatprep.subr.mxu0 %v818
    %2009 = vmatpush1.msra.mxu0 %v817
    %2010 = vmatprep.subr.mxu0 %v826
    %2011 = vmatpush1.msra.mxu0 %v825
    %2012 = vmatprep.subr.mxu0 %v834
    %2013 = vmatpush1.msra.mxu0 %v833
    %2014 = vmatprep.subr.mxu0 %v842
    %2015 = vmatpush1.msra.mxu0 %v841
    %2016 = vmatprep.subr.mxu0 %v850
    %2017 = vmatpush1.msra.mxu0 %v849
    %2018 = vmatprep.subr.mxu0 %v858
    %2019 = vmatpush1.msra.mxu0 %v857
    %2020 = vmatprep.subr.mxu0 %v866
    %2021 = vmatpush1.msra.mxu0 %v865
    %2022 = vmatprep.subr.mxu0 %v874
    %2023 = vmatpush1.msra.mxu0 %v873
    %2024 = vmatprep.subr.mxu0 0.0
    %2025 = vmatpush1.msra.mxu0 0.0
    %2026 = vmatprep.subr.mxu0 0.0
    %2027 = vmatpush1.msra.mxu0 0.0
    %2028 = vmatprep.subr.mxu0 0.0
    %2029 = vmatpush1.msra.mxu0 0.0
    %2030 = vmatprep.subr.mxu0 0.0
    %2031 = vmatpush1.msra.mxu0 0.0
    %2032 = vmatprep.subr.mxu0 0.0
    %2033 = vmatpush1.msra.mxu0 0.0
    %2034 = vmatprep.subr.mxu0 0.0
    %2035 = vmatpush1.msra.mxu0 0.0
    %2036 = vmatprep.subr.mxu0 0.0
    %2037 = vmatpush1.msra.mxu0 0.0
    %2038 = vmatprep.subr.mxu0 0.0
    %2039 = vmatpush1.msra.mxu0 0.0
    %2040 = vmatprep.subr.mxu0 0.0
    %2041 = vmatpush1.msra.mxu0 0.0
    %2042 = vmatprep.subr.mxu0 0.0
    %2043 = vmatpush1.msra.mxu0 0.0
    %2044 = vmatprep.subr.mxu0 0.0
    %2045 = vmatpush1.msra.mxu0 0.0
    %2046 = vmatprep.subr.mxu0 0.0
    %2047 = vmatpush1.msra.mxu0 0.0
    %2048 = vmatprep.subr.mxu0 0.0
    %2049 = vmatpush1.msra.mxu0 0.0
    %2050 = vmatprep.subr.mxu0 0.0
    %2051 = vmatpush1.msra.mxu0 0.0
    %2052 = vmatprep.subr.mxu0 0.0
    %2053 = vmatpush1.msra.mxu0 0.0
    %2054 = vmatprep.subr.mxu0 0.0
    %2055 = vmatpush1.msra.mxu0 0.0
    %2056 = vmatprep.subr.mxu0 0.0
    %2057 = vmatpush1.msra.mxu0 0.0
    %2058 = vmatprep.subr.mxu0 0.0
    %2059 = vmatpush1.msra.mxu0 0.0
    %2060 = vmatprep.subr.mxu0 0.0
    %2061 = vmatpush1.msra.mxu0 0.0
    %2062 = vmatprep.subr.mxu0 0.0
    %2063 = vmatpush1.msra.mxu0 0.0
    %2064 = vmatprep.subr.mxu0 0.0
    %2065 = vmatpush1.msra.mxu0 0.0
    %2066 = vmatprep.mubr.f32.mxu0 0.0
    %2067 = vmatmul.mubr.f32.gmra.mrb[0].mxu0 %v1432
    %v2068 = vpop.f32.mrb[0].mxu0
    %v2069 = vadd.f32 %v1998, %v2068
    %v2070 = vpop.f32.mrb[0].mxu0
    %v2071 = vadd.f32 %v2000, %v2070
    %2072 = vdwg.mxu0
    %2073 = vmatprep.subr.mxu0 %v284
    %2074 = vmatpush1.msra.mxu0 %v283
    %2075 = vmatprep.subr.mxu0 %v292
    %2076 = vmatpush1.msra.mxu0 %v291
    %2077 = vmatprep.subr.mxu0 %v300
    %2078 = vmatpush1.msra.mxu0 %v299
    %2079 = vmatprep.subr.mxu0 %v308
    %2080 = vmatpush1.msra.mxu0 %v307
    %2081 = vmatprep.subr.mxu0 %v316
    %2082 = vmatpush1.msra.mxu0 %v315
    %2083 = vmatprep.subr.mxu0 %v324
    %2084 = vmatpush1.msra.mxu0 %v323
    %2085 = vmatprep.subr.mxu0 %v332
    %2086 = vmatpush1.msra.mxu0 %v331
    %2087 = vmatprep.subr.mxu0 %v340
    %2088 = vmatpush1.msra.mxu0 %v339
    %2089 = vmatprep.subr.mxu0 %v348
    %2090 = vmatpush1.msra.mxu0 %v347
    %2091 = vmatprep.subr.mxu0 %v356
    %2092 = vmatpush1.msra.mxu0 %v355
    %2093 = vmatprep.subr.mxu0 %v364
    %2094 = vmatpush1.msra.mxu0 %v363
    %2095 = vmatprep.subr.mxu0 %v372
    %2096 = vmatpush1.msra.mxu0 %v371
    %2097 = vmatprep.subr.mxu0 %v380
    %2098 = vmatpush1.msra.mxu0 %v379
    %2099 = vmatprep.subr.mxu0 %v388
    %2100 = vmatpush1.msra.mxu0 %v387
    %2101 = vmatprep.subr.mxu0 %v396
    %2102 = vmatpush1.msra.mxu0 %v395
    %2103 = vmatprep.subr.mxu0 %v404
    %2104 = vmatpush1.msra.mxu0 %v403
    %2105 = vmatprep.subr.mxu0 %v412
    %2106 = vmatpush1.msra.mxu0 %v411
    %2107 = vmatprep.subr.mxu0 %v420
    %2108 = vmatpush1.msra.mxu0 %v419
    %2109 = vmatprep.subr.mxu0 %v428
    %2110 = vmatpush1.msra.mxu0 %v427
    %2111 = vmatprep.subr.mxu0 %v436
    %2112 = vmatpush1.msra.mxu0 %v435
    %2113 = vmatprep.subr.mxu0 %v444
    %2114 = vmatpush1.msra.mxu0 %v443
    %2115 = vmatprep.subr.mxu0 %v452
    %2116 = vmatpush1.msra.mxu0 %v451
    %2117 = vmatprep.subr.mxu0 %v460
    %2118 = vmatpush1.msra.mxu0 %v459
    %2119 = vmatprep.subr.mxu0 %v468
    %2120 = vmatpush1.msra.mxu0 %v467
    %2121 = vmatprep.subr.mxu0 %v476
    %2122 = vmatpush1.msra.mxu0 %v475
    %2123 = vmatprep.subr.mxu0 %v484
    %2124 = vmatpush1.msra.mxu0 %v483
    %2125 = vmatprep.subr.mxu0 %v492
    %2126 = vmatpush1.msra.mxu0 %v491
    %2127 = vmatprep.subr.mxu0 %v500
    %2128 = vmatpush1.msra.mxu0 %v499
    %2129 = vmatprep.subr.mxu0 %v508
    %2130 = vmatpush1.msra.mxu0 %v507
    %2131 = vmatprep.subr.mxu0 %v516
    %2132 = vmatpush1.msra.mxu0 %v515
    %2133 = vmatprep.subr.mxu0 %v524
    %2134 = vmatpush1.msra.mxu0 %v523
    %2135 = vmatprep.subr.mxu0 %v532
    %2136 = vmatpush1.msra.mxu0 %v531
    %2137 = vmatprep.mubr.f32.mxu0 %v1382
    %2138 = vmatmul.mubr.f32.gmra.mrb[0].mxu0 %v1380
    %v2139 = vpop.f32.mrb[0].mxu0
    %v2140 = vadd.f32 %v1417, %v2139
    %v2141 = vpop.f32.mrb[0].mxu0
    %v2142 = vadd.f32 %v1421, %v2141
    %2143 = vdwg.mxu0
    %2144 = vmatprep.subr.mxu0 %v540
    %2145 = vmatpush1.msra.mxu0 %v539
    %2146 = vmatprep.subr.mxu0 %v548
    %2147 = vmatpush1.msra.mxu0 %v547
    %2148 = vmatprep.subr.mxu0 %v556
    %2149 = vmatpush1.msra.mxu0 %v555
    %2150 = vmatprep.subr.mxu0 %v564
    %2151 = vmatpush1.msra.mxu0 %v563
    %2152 = vmatprep.subr.mxu0 %v572
    %2153 = vmatpush1.msra.mxu0 %v571
    %2154 = vmatprep.subr.mxu0 %v580
    %2155 = vmatpush1.msra.mxu0 %v579
    %2156 = vmatprep.subr.mxu0 %v588
    %2157 = vmatpush1.msra.mxu0 %v587
    %2158 = vmatprep.subr.mxu0 %v596
    %2159 = vmatpush1.msra.mxu0 %v595
    %2160 = vmatprep.subr.mxu0 %v604
    %2161 = vmatpush1.msra.mxu0 %v603
    %2162 = vmatprep.subr.mxu0 %v612
    %2163 = vmatpush1.msra.mxu0 %v611
    %2164 = vmatprep.subr.mxu0 %v620
    %2165 = vmatpush1.msra.mxu0 %v619
    %2166 = vmatprep.subr.mxu0 %v628
    %2167 = vmatpush1.msra.mxu0 %v627
    %2168 = vmatprep.subr.mxu0 %v636
    %2169 = vmatpush1.msra.mxu0 %v635
    %2170 = vmatprep.subr.mxu0 %v644
    %2171 = vmatpush1.msra.mxu0 %v643
    %2172 = vmatprep.subr.mxu0 %v652
    %2173 = vmatpush1.msra.mxu0 %v651
    %2174 = vmatprep.subr.mxu0 %v660
    %2175 = vmatpush1.msra.mxu0 %v659
    %2176 = vmatprep.subr.mxu0 %v668
    %2177 = vmatpush1.msra.mxu0 %v667
    %2178 = vmatprep.subr.mxu0 %v676
    %2179 = vmatpush1.msra.mxu0 %v675
    %2180 = vmatprep.subr.mxu0 %v684
    %2181 = vmatpush1.msra.mxu0 %v683
    %2182 = vmatprep.subr.mxu0 %v692
    %2183 = vmatpush1.msra.mxu0 %v691
    %2184 = vmatprep.subr.mxu0 %v700
    %2185 = vmatpush1.msra.mxu0 %v699
    %2186 = vmatprep.subr.mxu0 %v708
    %2187 = vmatpush1.msra.mxu0 %v707
    %2188 = vmatprep.subr.mxu0 %v716
    %2189 = vmatpush1.msra.mxu0 %v715
    %2190 = vmatprep.subr.mxu0 %v724
    %2191 = vmatpush1.msra.mxu0 %v723
    %2192 = vmatprep.subr.mxu0 %v732
    %2193 = vmatpush1.msra.mxu0 %v731
    %2194 = vmatprep.subr.mxu0 %v740
    %2195 = vmatpush1.msra.mxu0 %v739
    %2196 = vmatprep.subr.mxu0 %v748
    %2197 = vmatpush1.msra.mxu0 %v747
    %2198 = vmatprep.subr.mxu0 %v756
    %2199 = vmatpush1.msra.mxu0 %v755
    %2200 = vmatprep.subr.mxu0 %v764
    %2201 = vmatpush1.msra.mxu0 %v763
    %2202 = vmatprep.subr.mxu0 %v772
    %2203 = vmatpush1.msra.mxu0 %v771
    %2204 = vmatprep.subr.mxu0 %v780
    %2205 = vmatpush1.msra.mxu0 %v779
    %2206 = vmatprep.subr.mxu0 %v788
    %2207 = vmatpush1.msra.mxu0 %v787
    %2208 = vmatprep.mubr.f32.mxu0 %v1386
    %2209 = vmatmul.mubr.f32.gmra.mrb[0].mxu0 %v1384
    %v2210 = vpop.f32.mrb[0].mxu0
    %v2211 = vadd.f32 %v2140, %v2210
    %v2212 = vpop.f32.mrb[0].mxu0
    %v2213 = vadd.f32 %v2142, %v2212
    %2214 = vdwg.mxu0
    %2215 = vmatprep.subr.mxu0 %v796
    %2216 = vmatpush1.msra.mxu0 %v795
    %2217 = vmatprep.subr.mxu0 %v804
    %2218 = vmatpush1.msra.mxu0 %v803
    %2219 = vmatprep.subr.mxu0 %v812
    %2220 = vmatpush1.msra.mxu0 %v811
    %2221 = vmatprep.subr.mxu0 %v820
    %2222 = vmatpush1.msra.mxu0 %v819
    %2223 = vmatprep.subr.mxu0 %v828
    %2224 = vmatpush1.msra.mxu0 %v827
    %2225 = vmatprep.subr.mxu0 %v836
    %2226 = vmatpush1.msra.mxu0 %v835
    %2227 = vmatprep.subr.mxu0 %v844
    %2228 = vmatpush1.msra.mxu0 %v843
    %2229 = vmatprep.subr.mxu0 %v852
    %2230 = vmatpush1.msra.mxu0 %v851
    %2231 = vmatprep.subr.mxu0 %v860
    %2232 = vmatpush1.msra.mxu0 %v859
    %2233 = vmatprep.subr.mxu0 %v868
    %2234 = vmatpush1.msra.mxu0 %v867
    %2235 = vmatprep.subr.mxu0 %v876
    %2236 = vmatpush1.msra.mxu0 %v875
    %2237 = vmatprep.subr.mxu0 0.0
    %2238 = vmatpush1.msra.mxu0 0.0
    %2239 = vmatprep.subr.mxu0 0.0
    %2240 = vmatpush1.msra.mxu0 0.0
    %2241 = vmatprep.subr.mxu0 0.0
    %2242 = vmatpush1.msra.mxu0 0.0
    %2243 = vmatprep.subr.mxu0 0.0
    %2244 = vmatpush1.msra.mxu0 0.0
    %2245 = vmatprep.subr.mxu0 0.0
    %2246 = vmatpush1.msra.mxu0 0.0
    %2247 = vmatprep.subr.mxu0 0.0
    %2248 = vmatpush1.msra.mxu0 0.0
    %2249 = vmatprep.subr.mxu0 0.0
    %2250 = vmatpush1.msra.mxu0 0.0
    %2251 = vmatprep.subr.mxu0 0.0
    %2252 = vmatpush1.msra.mxu0 0.0
    %2253 = vmatprep.subr.mxu0 0.0
    %2254 = vmatpush1.msra.mxu0 0.0
    %2255 = vmatprep.subr.mxu0 0.0
    %2256 = vmatpush1.msra.mxu0 0.0
    %2257 = vmatprep.subr.mxu0 0.0
    %2258 = vmatpush1.msra.mxu0 0.0
    %2259 = vmatprep.subr.mxu0 0.0
    %2260 = vmatpush1.msra.mxu0 0.0
    %2261 = vmatprep.subr.mxu0 0.0
    %2262 = vmatpush1.msra.mxu0 0.0
    %2263 = vmatprep.subr.mxu0 0.0
    %2264 = vmatpush1.msra.mxu0 0.0
    %2265 = vmatprep.subr.mxu0 0.0
    %2266 = vmatpush1.msra.mxu0 0.0
    %2267 = vmatprep.subr.mxu0 0.0
    %2268 = vmatpush1.msra.mxu0 0.0
    %2269 = vmatprep.subr.mxu0 0.0
    %2270 = vmatpush1.msra.mxu0 0.0
    %2271 = vmatprep.subr.mxu0 0.0
    %2272 = vmatpush1.msra.mxu0 0.0
    %2273 = vmatprep.subr.mxu0 0.0
    %2274 = vmatpush1.msra.mxu0 0.0
    %2275 = vmatprep.subr.mxu0 0.0
    %2276 = vmatpush1.msra.mxu0 0.0
    %2277 = vmatprep.subr.mxu0 0.0
    %2278 = vmatpush1.msra.mxu0 0.0
    %2279 = vmatprep.mubr.f32.mxu0 0.0
    %2280 = vmatmul.mubr.f32.gmra.mrb[0].mxu0 %v1432
    %v2281 = vpop.f32.mrb[0].mxu0
    %v2282 = vadd.f32 %v2211, %v2281
    %v2283 = vpop.f32.mrb[0].mxu0
    %v2284 = vadd.f32 %v2213, %v2283
    %2285 = vdwg.mxu0
    %v2286 = vmax.f32 %v1643, 0.0
    %v2287 = vmax.f32 %v1645, 0.0
    %v2288 = vmax.f32 %v1856, 0.0
    %v2289 = vmax.f32 %v1858, 0.0
    %v2290 = vmax.f32 %v2069, 0.0
    %v2291 = vmax.f32 %v2071, 0.0
    %v2292 = vmax.f32 %v2282, 0.0
    %v2293 = vmax.f32 %v2284, 0.0
    %v2294 = vmul.f32 %v878, %v882
    %v2295 = vmul.f32 %v879, %v883
    %v2296 = vmul.f32 %v880, %v884
    %v2297 = vmul.f32 %v881, %v885
    %v2302 = vcombine.high %v2294, %v2294
    %v2303 = vcombine.high %v2295, %v2295
    %v2304 = vcombine.high %v2296, %v2296
    %v2305 = vcombine.high %v2297, %v2297
    %v2310 = vadd.f32 %v2286, %v2294
    %v2311 = vadd.f32 %v2287, %v2302
    %v2312 = vadd.f32 %v2288, %v2295
    %v2313 = vadd.f32 %v2289, %v2303
    %v2314 = vadd.f32 %v2290, %v2296
    %v2315 = vadd.f32 %v2291, %v2304
    %v2316 = vadd.f32 %v2292, %v2297
    %v2317 = vadd.f32 %v2293, %v2305
    %v2318 = vld [vmem:[%s9] sm:$0x77]
    %v2319 = vld [vmem:[%s9 + $0x8] sm:$0x7]
    %v2320 = vld [vmem:[#allocation3] sm:$0xff]
    %v2321 = vld [vmem:[#allocation3 + $0x8] sm:$0xff]
    %v2322 = vld [vmem:[#allocation3 + $0x10] sm:$0xff]
    %v2323 = vld [vmem:[#allocation3 + $0x18] sm:$0xff]
    %v2324 = vld [vmem:[#allocation3 + $0x20] sm:$0xff]
    %v2325 = vld [vmem:[#allocation3 + $0x28] sm:$0xff]
    %v2326 = vld [vmem:[#allocation3 + $0x30] sm:$0xff]
    %v2327 = vld [vmem:[#allocation3 + $0x38] sm:$0xff]
    %v2328 = vld [vmem:[#allocation3 + $0x40] sm:$0xff]
    %v2329 = vld [vmem:[#allocation3 + $0x48] sm:$0xff]
    %v2330 = vld [vmem:[#allocation3 + $0x50] sm:$0xff]
    %v2331 = vld [vmem:[#allocation3 + $0x58] sm:$0xff]
    %v2332 = vld [vmem:[#allocation3 + $0x60] sm:$0xff]
    %v2333 = vld [vmem:[#allocation3 + $0x68] sm:$0xff]
    %v2334 = vld [vmem:[#allocation3 + $0x70] sm:$0xff]
    %v2335 = vld [vmem:[#allocation3 + $0x78] sm:$0xff]
    %v2336 = vld [vmem:[#allocation3 + $0x80] sm:$0xff]
    %v2337 = vld [vmem:[#allocation3 + $0x88] sm:$0xff]
    %v2338 = vld [vmem:[#allocation3 + $0x90] sm:$0xff]
    %v2339 = vld [vmem:[#allocation3 + $0x98] sm:$0xff]
    %v2340 = vld [vmem:[#allocation3 + $0xa0] sm:$0xff]
    %v2341 = vld [vmem:[#allocation3 + $0xa8] sm:$0xff]
    %v2342 = vld [vmem:[#allocation3 + $0xb0] sm:$0xff]
    %v2343 = vld [vmem:[#allocation3 + $0xb8] sm:$0xff]
    %v2344 = vld [vmem:[#allocation3 + $0xc0] sm:$0xff]
    %v2345 = vld [vmem:[#allocation3 + $0xc8] sm:$0xff]
    %v2346 = vld [vmem:[#allocation3 + $0xd0] sm:$0xff]
    %v2347 = vld [vmem:[#allocation3 + $0xd8] sm:$0xff]
    %v2348 = vld [vmem:[#allocation3 + $0xe0] sm:$0xff]
    %v2349 = vld [vmem:[#allocation3 + $0xe8] sm:$0xff]
    %v2350 = vld [vmem:[#allocation3 + $0xf0] sm:$0xff]
    %v2351 = vld [vmem:[#allocation3 + $0xf8] sm:$0xff]
    %v2352 = vld [vmem:[#allocation3 + $0x100] sm:$0xff]
    %v2353 = vld [vmem:[#allocation3 + $0x108] sm:$0xff]
    %v2354 = vld [vmem:[#allocation3 + $0x110] sm:$0xff]
    %v2355 = vld [vmem:[#allocation3 + $0x118] sm:$0xff]
    %v2356 = vld [vmem:[#allocation3 + $0x120] sm:$0xff]
    %v2357 = vld [vmem:[#allocation3 + $0x128] sm:$0xff]
    %v2358 = vld [vmem:[#allocation3 + $0x130] sm:$0xff]
    %v2359 = vld [vmem:[#allocation3 + $0x138] sm:$0xff]
    %v2360 = vld [vmem:[#allocation3 + $0x140] sm:$0xff]
    %v2361 = vld [vmem:[#allocation3 + $0x148] sm:$0xff]
    %v2362 = vld [vmem:[#allocation3 + $0x150] sm:$0xff]
    %v2363 = vld [vmem:[#allocation3 + $0x158] sm:$0xff]
    %v2364 = vld [vmem:[#allocation3 + $0x160] sm:$0xff]
    %v2365 = vld [vmem:[#allocation3 + $0x168] sm:$0xff]
    %v2366 = vld [vmem:[#allocation3 + $0x170] sm:$0xff]
    %v2367 = vld [vmem:[#allocation3 + $0x178] sm:$0xff]
    %v2368 = vld [vmem:[#allocation3 + $0x180] sm:$0xff]
    %v2369 = vld [vmem:[#allocation3 + $0x188] sm:$0xff]
    %v2370 = vld [vmem:[#allocation3 + $0x190] sm:$0xff]
    %v2371 = vld [vmem:[#allocation3 + $0x198] sm:$0xff]
    %v2372 = vld [vmem:[#allocation3 + $0x1a0] sm:$0xff]
    %v2373 = vld [vmem:[#allocation3 + $0x1a8] sm:$0xff]
    %v2374 = vld [vmem:[#allocation3 + $0x1b0] sm:$0xff]
    %v2375 = vld [vmem:[#allocation3 + $0x1b8] sm:$0xff]
    %v2376 = vld [vmem:[#allocation3 + $0x1c0] sm:$0xff]
    %v2377 = vld [vmem:[#allocation3 + $0x1c8] sm:$0xff]
    %v2378 = vld [vmem:[#allocation3 + $0x1d0] sm:$0xff]
    %v2379 = vld [vmem:[#allocation3 + $0x1d8] sm:$0xff]
    %v2380 = vld [vmem:[#allocation3 + $0x1e0] sm:$0xff]
    %v2381 = vld [vmem:[#allocation3 + $0x1e8] sm:$0xff]
    %v2382 = vld [vmem:[#allocation3 + $0x1f0] sm:$0xff]
    %v2383 = vld [vmem:[#allocation3 + $0x1f8] sm:$0xff]
    %v2384 = vld [vmem:[#allocation3 + $0x200] sm:$0xff]
    %v2385 = vld [vmem:[#allocation3 + $0x208] sm:$0xff]
    %v2386 = vld [vmem:[#allocation3 + $0x210] sm:$0xff]
    %v2387 = vld [vmem:[#allocation3 + $0x218] sm:$0xff]
    %v2388 = vld [vmem:[#allocation3 + $0x220] sm:$0xff]
    %v2389 = vld [vmem:[#allocation3 + $0x228] sm:$0xff]
    %v2390 = vld [vmem:[#allocation3 + $0x230] sm:$0xff]
    %v2391 = vld [vmem:[#allocation3 + $0x238] sm:$0xff]
    %v2392 = vld [vmem:[#allocation3 + $0x240] sm:$0xff]
    %v2393 = vld [vmem:[#allocation3 + $0x248] sm:$0xff]
    %v2394 = vld [vmem:[#allocation3 + $0x250] sm:$0xff]
    %v2395 = vld [vmem:[#allocation3 + $0x258] sm:$0xff]
    %v2396 = vld [vmem:[#allocation3 + $0x260] sm:$0xff]
    %v2397 = vld [vmem:[#allocation3 + $0x268] sm:$0xff]
    %v2398 = vld [vmem:[#allocation3 + $0x270] sm:$0xff]
    %v2399 = vld [vmem:[#allocation3 + $0x278] sm:$0xff]
    %v2400 = vld [vmem:[#allocation3 + $0x280] sm:$0xff]
    %v2401 = vld [vmem:[#allocation3 + $0x288] sm:$0xff]
    %v2402 = vld [vmem:[#allocation3 + $0x290] sm:$0xff]
    %v2403 = vld [vmem:[#allocation3 + $0x298] sm:$0xff]
    %v2404 = vld [vmem:[#allocation3 + $0x2a0] sm:$0xff]
    %v2405 = vld [vmem:[#allocation3 + $0x2a8] sm:$0xff]
    %v2406 = vld [vmem:[#allocation3 + $0x2b0] sm:$0xff]
    %v2407 = vld [vmem:[#allocation3 + $0x2b8] sm:$0xff]
    %v2408 = vld [vmem:[#allocation3 + $0x2c0] sm:$0xff]
    %v2409 = vld [vmem:[#allocation3 + $0x2c8] sm:$0xff]
    %v2410 = vld [vmem:[#allocation3 + $0x2d0] sm:$0xff]
    %v2411 = vld [vmem:[#allocation3 + $0x2d8] sm:$0xff]
    %v2412 = vld [vmem:[#allocation3 + $0x2e0] sm:$0xff]
    %v2413 = vld [vmem:[#allocation3 + $0x2e8] sm:$0xff]
    %v2414 = vld [vmem:[#allocation3 + $0x2f0] sm:$0xff]
    %v2415 = vld [vmem:[#allocation3 + $0x2f8] sm:$0xff]
    %v2416 = vld [vmem:[#allocation3 + $0x300] sm:$0xff]
    %v2417 = vld [vmem:[#allocation3 + $0x308] sm:$0xff]
    %v2418 = vld [vmem:[#allocation3 + $0x310] sm:$0xff]
    %v2419 = vld [vmem:[#allocation3 + $0x318] sm:$0xff]
    %v2420 = vld [vmem:[#allocation3 + $0x320] sm:$0xff]
    %v2421 = vld [vmem:[#allocation3 + $0x328] sm:$0xff]
    %v2422 = vld [vmem:[#allocation3 + $0x330] sm:$0xff]
    %v2423 = vld [vmem:[#allocation3 + $0x338] sm:$0xff]
    %v2424 = vld [vmem:[#allocation3 + $0x340] sm:$0xff]
    %v2425 = vld [vmem:[#allocation3 + $0x348] sm:$0xff]
    %v2426 = vld [vmem:[#allocation3 + $0x350] sm:$0xff]
    %v2427 = vld [vmem:[#allocation3 + $0x358] sm:$0xff]
    %v2428 = vld [vmem:[#allocation3 + $0x360] sm:$0xff]
    %v2429 = vld [vmem:[#allocation3 + $0x368] sm:$0xff]
    %v2430 = vld [vmem:[#allocation3 + $0x370] sm:$0xff]
    %v2431 = vld [vmem:[#allocation3 + $0x378] sm:$0xff]
    %v2432 = vld [vmem:[#allocation3 + $0x380] sm:$0xff]
    %v2433 = vld [vmem:[#allocation3 + $0x388] sm:$0xff]
    %v2434 = vld [vmem:[#allocation3 + $0x390] sm:$0xff]
    %v2435 = vld [vmem:[#allocation3 + $0x398] sm:$0xff]
    %v2436 = vld [vmem:[#allocation3 + $0x3a0] sm:$0xff]
    %v2437 = vld [vmem:[#allocation3 + $0x3a8] sm:$0xff]
    %v2438 = vld [vmem:[#allocation3 + $0x3b0] sm:$0xff]
    %v2439 = vld [vmem:[#allocation3 + $0x3b8] sm:$0xff]
    %v2440 = vld [vmem:[#allocation3 + $0x3c0] sm:$0xff]
    %v2441 = vld [vmem:[#allocation3 + $0x3c8] sm:$0xff]
    %v2442 = vld [vmem:[#allocation3 + $0x3d0] sm:$0xff]
    %v2443 = vld [vmem:[#allocation3 + $0x3d8] sm:$0xff]
    %v2444 = vld [vmem:[#allocation3 + $0x3e0] sm:$0xff]
    %v2445 = vld [vmem:[#allocation3 + $0x3e8] sm:$0xff]
    %v2446 = vld [vmem:[#allocation3 + $0x3f0] sm:$0xff]
    %v2447 = vld [vmem:[#allocation3 + $0x3f8] sm:$0xff]
    %v2448 = vld [vmem:[#allocation3 + $0x400] sm:$0xff]
    %v2449 = vld [vmem:[#allocation3 + $0x408] sm:$0xff]
    %v2450 = vld [vmem:[#allocation3 + $0x410] sm:$0xff]
    %v2451 = vld [vmem:[#allocation3 + $0x418] sm:$0xff]
    %v2452 = vld [vmem:[#allocation3 + $0x420] sm:$0xff]
    %v2453 = vld [vmem:[#allocation3 + $0x428] sm:$0xff]
    %v2454 = vld [vmem:[#allocation3 + $0x430] sm:$0xff]
    %v2455 = vld [vmem:[#allocation3 + $0x438] sm:$0xff]
    %v2456 = vld [vmem:[#allocation3 + $0x440] sm:$0xff]
    %v2457 = vld [vmem:[#allocation3 + $0x448] sm:$0xff]
    %v2458 = vld [vmem:[#allocation3 + $0x450] sm:$0xff]
    %v2459 = vld [vmem:[#allocation3 + $0x458] sm:$0xff]
    %v2460 = vld [vmem:[#allocation3 + $0x460] sm:$0xff]
    %v2461 = vld [vmem:[#allocation3 + $0x468] sm:$0xff]
    %v2462 = vld [vmem:[#allocation3 + $0x470] sm:$0xff]
    %v2463 = vld [vmem:[#allocation3 + $0x478] sm:$0xff]
    %v2464 = vld [vmem:[#allocation3 + $0x480] sm:$0xff]
    %v2465 = vld [vmem:[#allocation3 + $0x488] sm:$0xff]
    %v2466 = vld [vmem:[#allocation3 + $0x490] sm:$0xff]
    %v2467 = vld [vmem:[#allocation3 + $0x498] sm:$0xff]
    %v2468 = vld [vmem:[#allocation3 + $0x4a0] sm:$0xff]
    %v2469 = vld [vmem:[#allocation3 + $0x4a8] sm:$0xff]
    %v2470 = vld [vmem:[#allocation3 + $0x4b0] sm:$0xff]
    %v2471 = vld [vmem:[#allocation3 + $0x4b8] sm:$0xff]
    %v2472 = vld [vmem:[#allocation3 + $0x4c0] sm:$0xff]
    %v2473 = vld [vmem:[#allocation3 + $0x4c8] sm:$0xff]
    %v2474 = vld [vmem:[#allocation3 + $0x4d0] sm:$0xff]
    %v2475 = vld [vmem:[#allocation3 + $0x4d8] sm:$0xff]
    %v2476 = vld [vmem:[#allocation3 + $0x4e0] sm:$0xff]
    %v2477 = vld [vmem:[#allocation3 + $0x4e8] sm:$0xff]
    %v2478 = vld [vmem:[#allocation3 + $0x4f0] sm:$0xff]
    %v2479 = vld [vmem:[#allocation3 + $0x4f8] sm:$0xff]
    %v2480 = vld [vmem:[#allocation3 + $0x500] sm:$0xff]
    %v2481 = vld [vmem:[#allocation3 + $0x508] sm:$0xff]
    %v2482 = vld [vmem:[#allocation3 + $0x510] sm:$0xff]
    %v2483 = vld [vmem:[#allocation3 + $0x518] sm:$0xff]
    %v2484 = vld [vmem:[#allocation3 + $0x520] sm:$0xff]
    %v2485 = vld [vmem:[#allocation3 + $0x528] sm:$0xff]
    %v2486 = vld [vmem:[#allocation3 + $0x530] sm:$0xff]
    %v2487 = vld [vmem:[#allocation3 + $0x538] sm:$0xff]
    %v2488 = vld [vmem:[#allocation3 + $0x540] sm:$0xff]
    %v2489 = vld [vmem:[#allocation3 + $0x548] sm:$0xff]
    %v2490 = vld [vmem:[#allocation3 + $0x550] sm:$0xff]
    %v2491 = vld [vmem:[#allocation3 + $0x558] sm:$0xff]
    %v2492 = vld [vmem:[#allocation3 + $0x560] sm:$0xff]
    %v2493 = vld [vmem:[#allocation3 + $0x568] sm:$0xff]
    %v2494 = vld [vmem:[#allocation3 + $0x570] sm:$0xff]
    %v2495 = vld [vmem:[#allocation3 + $0x578] sm:$0xff]
    %v2496 = vld [vmem:[#allocation3 + $0x580] sm:$0xff]
    %v2497 = vld [vmem:[#allocation3 + $0x588] sm:$0xff]
    %v2498 = vld [vmem:[#allocation3 + $0x590] sm:$0xff]
    %v2499 = vld [vmem:[#allocation3 + $0x598] sm:$0xff]
    %v2500 = vld [vmem:[#allocation3 + $0x5a0] sm:$0xff]
    %v2501 = vld [vmem:[#allocation3 + $0x5a8] sm:$0xff]
    %v2502 = vld [vmem:[#allocation3 + $0x5b0] sm:$0xff]
    %v2503 = vld [vmem:[#allocation3 + $0x5b8] sm:$0xff]
    %v2504 = vld [vmem:[#allocation3 + $0x5c0] sm:$0xff]
    %v2505 = vld [vmem:[#allocation3 + $0x5c8] sm:$0xf]
    %v2506 = vld [vmem:[#allocation3 + $0x5d0] sm:$0xf]
    %v2507 = vld [vmem:[#allocation3 + $0x5d8] sm:$0xf]
    %v2508 = vld [vmem:[#allocation3 + $0x5e0] sm:$0xf]
    %v2509 = vld [vmem:[#allocation3 + $0x5e8] sm:$0xf]
    %v2510 = vld [vmem:[%s11] sm:$0x1f]
    %v2511 = vld [vmem:[#allocation5] sm:$0xff]
    %v2512 = vld [vmem:[#allocation5 + $0x8] sm:$0xff]
    %v2513 = vld [vmem:[#allocation5 + $0x10] sm:$0xff]
    %v2514 = vld [vmem:[#allocation5 + $0x18] sm:$0xff]
    %v2515 = vld [vmem:[#allocation5 + $0x20] sm:$0xff]
    %v2516 = vld [vmem:[#allocation5 + $0x28] sm:$0xff]
    %v2517 = vld [vmem:[#allocation5 + $0x30] sm:$0xff]
    %v2518 = vld [vmem:[#allocation5 + $0x38] sm:$0xff]
    %v2519 = vld [vmem:[#allocation5 + $0x40] sm:$0xff]
    %v2520 = vld [vmem:[#allocation5 + $0x48] sm:$0xff]
    %v2521 = vld [vmem:[#allocation5 + $0x50] sm:$0xff]
    %v2522 = vld [vmem:[#allocation5 + $0x58] sm:$0xff]
    %v2523 = vld [vmem:[#allocation5 + $0x60] sm:$0xff]
    %v2524 = vld [vmem:[#allocation5 + $0x68] sm:$0xff]
    %v2525 = vld [vmem:[#allocation5 + $0x70] sm:$0xff]
    %v2526 = vld [vmem:[#allocation5 + $0x78] sm:$0xff]
    %v2527 = vld [vmem:[#allocation5 + $0x80] sm:$0xff]
    %v2528 = vld [vmem:[#allocation5 + $0x88] sm:$0xff]
    %v2529 = vld [vmem:[#allocation5 + $0x90] sm:$0xff]
    %v2530 = vld [vmem:[#allocation5 + $0x98] sm:$0xff]
    %v2531 = vld [vmem:[#allocation5 + $0xa0] sm:$0xff]
    %v2532 = vld [vmem:[#allocation5 + $0xa8] sm:$0xff]
    %v2533 = vld [vmem:[#allocation5 + $0xb0] sm:$0xff]
    %v2534 = vld [vmem:[#allocation5 + $0xb8] sm:$0xff]
    %v2535 = vld [vmem:[#allocation5 + $0xc0] sm:$0xff]
    %v2536 = vld [vmem:[#allocation5 + $0xc8] sm:$0xff]
    %v2537 = vld [vmem:[#allocation5 + $0xd0] sm:$0xff]
    %v2538 = vld [vmem:[#allocation5 + $0xd8] sm:$0xff]
    %v2539 = vld [vmem:[#allocation5 + $0xe0] sm:$0xff]
    %v2540 = vld [vmem:[#allocation5 + $0xe8] sm:$0xff]
    %v2541 = vld [vmem:[#allocation5 + $0xf0] sm:$0xff]
    %v2542 = vld [vmem:[#allocation5 + $0xf8] sm:$0xff]
    %v2543 = vld [vmem:[#allocation5 + $0x100] sm:$0xff]
    %v2544 = vld [vmem:[#allocation5 + $0x108] sm:$0xff]
    %v2545 = vld [vmem:[#allocation5 + $0x110] sm:$0xff]
    %v2546 = vld [vmem:[#allocation5 + $0x118] sm:$0xff]
    %v2547 = vld [vmem:[#allocation5 + $0x120] sm:$0xff]
    %v2548 = vld [vmem:[#allocation5 + $0x128] sm:$0xff]
    %v2549 = vld [vmem:[#allocation5 + $0x130] sm:$0xff]
    %v2550 = vld [vmem:[#allocation5 + $0x138] sm:$0xff]
    %v2551 = vld [vmem:[#allocation5 + $0x140] sm:$0xff]
    %v2552 = vld [vmem:[#allocation5 + $0x148] sm:$0xff]
    %v2553 = vld [vmem:[#allocation5 + $0x150] sm:$0xff]
    %v2554 = vld [vmem:[#allocation5 + $0x158] sm:$0xff]
    %v2555 = vld [vmem:[#allocation5 + $0x160] sm:$0xff]
    %v2556 = vld [vmem:[#allocation5 + $0x168] sm:$0xff]
    %v2557 = vld [vmem:[#allocation5 + $0x170] sm:$0xff]
    %v2558 = vld [vmem:[#allocation5 + $0x178] sm:$0xff]
    %v2559 = vld [vmem:[#allocation5 + $0x180] sm:$0xff]
    %v2560 = vld [vmem:[#allocation5 + $0x188] sm:$0xff]
    %v2561 = vld [vmem:[#allocation5 + $0x190] sm:$0xff]
    %v2562 = vld [vmem:[#allocation5 + $0x198] sm:$0xff]
    %v2563 = vld [vmem:[#allocation5 + $0x1a0] sm:$0xff]
    %v2564 = vld [vmem:[#allocation5 + $0x1a8] sm:$0xff]
    %v2565 = vld [vmem:[#allocation5 + $0x1b0] sm:$0xff]
    %v2566 = vld [vmem:[#allocation5 + $0x1b8] sm:$0xff]
    %v2567 = vld [vmem:[#allocation5 + $0x1c0] sm:$0xff]
    %v2568 = vld [vmem:[#allocation5 + $0x1c8] sm:$0xff]
    %v2569 = vld [vmem:[#allocation5 + $0x1d0] sm:$0xff]
    %v2570 = vld [vmem:[#allocation5 + $0x1d8] sm:$0xff]
    %v2571 = vld [vmem:[#allocation5 + $0x1e0] sm:$0xff]
    %v2572 = vld [vmem:[#allocation5 + $0x1e8] sm:$0xff]
    %v2573 = vld [vmem:[#allocation5 + $0x1f0] sm:$0xff]
    %v2574 = vld [vmem:[#allocation5 + $0x1f8] sm:$0xff]
    %v2575 = vld [vmem:[#allocation5 + $0x200] sm:$0xff]
    %v2576 = vld [vmem:[#allocation5 + $0x208] sm:$0xff]
    %v2577 = vld [vmem:[#allocation5 + $0x210] sm:$0xff]
    %v2578 = vld [vmem:[#allocation5 + $0x218] sm:$0xff]
    %v2579 = vld [vmem:[#allocation5 + $0x220] sm:$0xff]
    %v2580 = vld [vmem:[#allocation5 + $0x228] sm:$0xff]
    %v2581 = vld [vmem:[#allocation5 + $0x230] sm:$0xff]
    %v2582 = vld [vmem:[#allocation5 + $0x238] sm:$0xff]
    %v2583 = vld [vmem:[#allocation5 + $0x240] sm:$0xff]
    %v2584 = vld [vmem:[#allocation5 + $0x248] sm:$0xff]
    %v2585 = vld [vmem:[#allocation5 + $0x250] sm:$0xff]
    %v2586 = vld [vmem:[#allocation5 + $0x258] sm:$0xff]
    %v2587 = vld [vmem:[#allocation5 + $0x260] sm:$0xff]
    %v2588 = vld [vmem:[#allocation5 + $0x268] sm:$0xff]
    %v2589 = vld [vmem:[#allocation5 + $0x270] sm:$0xff]
    %v2590 = vld [vmem:[#allocation5 + $0x278] sm:$0xff]
    %v2591 = vld [vmem:[#allocation5 + $0x280] sm:$0xff]
    %v2592 = vld [vmem:[#allocation5 + $0x288] sm:$0xff]
    %v2593 = vld [vmem:[#allocation5 + $0x290] sm:$0xff]
    %v2594 = vld [vmem:[#allocation5 + $0x298] sm:$0xff]
    %v2595 = vld [vmem:[#allocation5 + $0x2a0] sm:$0xff]
    %v2596 = vld [vmem:[#allocation5 + $0x2a8] sm:$0xff]
    %v2597 = vld [vmem:[#allocation5 + $0x2b0] sm:$0xff]
    %v2598 = vld [vmem:[#allocation5 + $0x2b8] sm:$0xff]
    %v2599 = vld [vmem:[#allocation5 + $0x2c0] sm:$0xff]
    %v2600 = vld [vmem:[#allocation5 + $0x2c8] sm:$0xff]
    %v2601 = vld [vmem:[#allocation5 + $0x2d0] sm:$0xff]
    %v2602 = vld [vmem:[#allocation5 + $0x2d8] sm:$0xff]
    %v2603 = vld [vmem:[#allocation5 + $0x2e0] sm:$0xff]
    %v2604 = vld [vmem:[#allocation5 + $0x2e8] sm:$0xff]
    %v2605 = vld [vmem:[#allocation5 + $0x2f0] sm:$0xff]
    %v2606 = vld [vmem:[#allocation5 + $0x2f8] sm:$0xff]
    %v2607 = vld [vmem:[#allocation5 + $0x300] sm:$0xff]
    %v2608 = vld [vmem:[#allocation5 + $0x308] sm:$0xff]
    %v2609 = vld [vmem:[#allocation5 + $0x310] sm:$0xff]
    %v2610 = vld [vmem:[#allocation5 + $0x318] sm:$0xff]
    %v2611 = vld [vmem:[#allocation5 + $0x320] sm:$0xff]
    %v2612 = vld [vmem:[#allocation5 + $0x328] sm:$0xff]
    %v2613 = vld [vmem:[#allocation5 + $0x330] sm:$0xff]
    %v2614 = vld [vmem:[#allocation5 + $0x338] sm:$0xff]
    %v2615 = vld [vmem:[#allocation5 + $0x340] sm:$0xff]
    %v2616 = vld [vmem:[#allocation5 + $0x348] sm:$0xff]
    %v2617 = vld [vmem:[#allocation5 + $0x350] sm:$0xff]
    %v2618 = vld [vmem:[#allocation5 + $0x358] sm:$0xff]
    %v2619 = vld [vmem:[#allocation5 + $0x360] sm:$0xff]
    %v2620 = vld [vmem:[#allocation5 + $0x368] sm:$0xff]
    %v2621 = vld [vmem:[#allocation5 + $0x370] sm:$0xff]
    %v2622 = vld [vmem:[#allocation5 + $0x378] sm:$0xff]
    %v2623 = vld [vmem:[#allocation5 + $0x380] sm:$0xff]
    %v2624 = vld [vmem:[#allocation5 + $0x388] sm:$0xff]
    %v2625 = vld [vmem:[#allocation5 + $0x390] sm:$0xff]
    %v2626 = vld [vmem:[#allocation5 + $0x398] sm:$0xff]
    %v2627 = vld [vmem:[#allocation5 + $0x3a0] sm:$0xff]
    %v2628 = vld [vmem:[#allocation5 + $0x3a8] sm:$0xff]
    %v2629 = vld [vmem:[#allocation5 + $0x3b0] sm:$0xff]
    %v2630 = vld [vmem:[#allocation5 + $0x3b8] sm:$0xff]
    %v2631 = vld [vmem:[#allocation5 + $0x3c0] sm:$0xff]
    %v2632 = vld [vmem:[#allocation5 + $0x3c8] sm:$0xff]
    %v2633 = vld [vmem:[#allocation5 + $0x3d0] sm:$0xff]
    %v2634 = vld [vmem:[#allocation5 + $0x3d8] sm:$0xff]
    %v2635 = vld [vmem:[#allocation5 + $0x3e0] sm:$0xff]
    %v2636 = vld [vmem:[#allocation5 + $0x3e8] sm:$0xff]
    %v2637 = vld [vmem:[#allocation5 + $0x3f0] sm:$0xff]
    %v2638 = vld [vmem:[#allocation5 + $0x3f8] sm:$0xff]
    %v2639 = vld [vmem:[#allocation5 + $0x400] sm:$0xff]
    %v2640 = vld [vmem:[#allocation5 + $0x408] sm:$0xff]
    %v2641 = vld [vmem:[#allocation5 + $0x410] sm:$0xff]
    %v2642 = vld [vmem:[#allocation5 + $0x418] sm:$0xff]
    %v2643 = vld [vmem:[#allocation5 + $0x420] sm:$0xff]
    %v2644 = vld [vmem:[#allocation5 + $0x428] sm:$0xff]
    %v2645 = vld [vmem:[#allocation5 + $0x430] sm:$0xff]
    %v2646 = vld [vmem:[#allocation5 + $0x438] sm:$0xff]
    %v2647 = vld [vmem:[#allocation5 + $0x440] sm:$0xff]
    %v2648 = vld [vmem:[#allocation5 + $0x448] sm:$0xff]
    %v2649 = vld [vmem:[#allocation5 + $0x450] sm:$0xff]
    %v2650 = vld [vmem:[#allocation5 + $0x458] sm:$0xff]
    %v2651 = vld [vmem:[#allocation5 + $0x460] sm:$0xff]
    %v2652 = vld [vmem:[#allocation5 + $0x468] sm:$0xff]
    %v2653 = vld [vmem:[#allocation5 + $0x470] sm:$0xff]
    %v2654 = vld [vmem:[#allocation5 + $0x478] sm:$0xff]
    %v2655 = vld [vmem:[#allocation5 + $0x480] sm:$0xff]
    %v2656 = vld [vmem:[#allocation5 + $0x488] sm:$0xff]
    %v2657 = vld [vmem:[#allocation5 + $0x490] sm:$0xff]
    %v2658 = vld [vmem:[#allocation5 + $0x498] sm:$0xff]
    %v2659 = vld [vmem:[#allocation5 + $0x4a0] sm:$0xff]
    %v2660 = vld [vmem:[#allocation5 + $0x4a8] sm:$0xff]
    %v2661 = vld [vmem:[#allocation5 + $0x4b0] sm:$0xff]
    %v2662 = vld [vmem:[#allocation5 + $0x4b8] sm:$0xff]
    %v2663 = vld [vmem:[#allocation5 + $0x4c0] sm:$0xff]
    %v2664 = vld [vmem:[#allocation5 + $0x4c8] sm:$0xff]
    %v2665 = vld [vmem:[#allocation5 + $0x4d0] sm:$0xff]
    %v2666 = vld [vmem:[#allocation5 + $0x4d8] sm:$0xff]
    %v2667 = vld [vmem:[#allocation5 + $0x4e0] sm:$0xff]
    %v2668 = vld [vmem:[#allocation5 + $0x4e8] sm:$0xff]
    %v2669 = vld [vmem:[#allocation5 + $0x4f0] sm:$0xff]
    %v2670 = vld [vmem:[#allocation5 + $0x4f8] sm:$0xff]
    %v2671 = vld [vmem:[#allocation5 + $0x500] sm:$0xff]
    %v2672 = vld [vmem:[#allocation5 + $0x508] sm:$0xff]
    %v2673 = vld [vmem:[#allocation5 + $0x510] sm:$0xff]
    %v2674 = vld [vmem:[#allocation5 + $0x518] sm:$0xff]
    %v2675 = vld [vmem:[#allocation5 + $0x520] sm:$0xff]
    %v2676 = vld [vmem:[#allocation5 + $0x528] sm:$0xff]
    %v2677 = vld [vmem:[#allocation5 + $0x530] sm:$0xff]
    %v2678 = vld [vmem:[#allocation5 + $0x538] sm:$0xff]
    %v2679 = vld [vmem:[#allocation5 + $0x540] sm:$0xff]
    %v2680 = vld [vmem:[#allocation5 + $0x548] sm:$0xff]
    %v2681 = vld [vmem:[#allocation5 + $0x550] sm:$0xff]
    %v2682 = vld [vmem:[#allocation5 + $0x558] sm:$0xff]
    %v2683 = vld [vmem:[#allocation5 + $0x560] sm:$0xff]
    %v2684 = vld [vmem:[#allocation5 + $0x568] sm:$0xff]
    %v2685 = vld [vmem:[#allocation5 + $0x570] sm:$0xff]
    %v2686 = vld [vmem:[#allocation5 + $0x578] sm:$0xff]
    %v2687 = vld [vmem:[#allocation5 + $0x580] sm:$0xff]
    %v2688 = vld [vmem:[#allocation5 + $0x588] sm:$0xff]
    %v2689 = vld [vmem:[#allocation5 + $0x590] sm:$0xff]
    %v2690 = vld [vmem:[#allocation5 + $0x598] sm:$0xff]
    %v2691 = vld [vmem:[#allocation5 + $0x5a0] sm:$0xff]
    %v2692 = vld [vmem:[#allocation5 + $0x5a8] sm:$0xff]
    %v2693 = vld [vmem:[#allocation5 + $0x5b0] sm:$0xff]
    %v2694 = vld [vmem:[#allocation5 + $0x5b8] sm:$0xff]
    %v2695 = vld [vmem:[#allocation5 + $0x5c0] sm:$0xff]
    %v2696 = vld [vmem:[#allocation5 + $0x5c8] sm:$0xff]
    %v2697 = vld [vmem:[#allocation5 + $0x5d0] sm:$0xff]
    %v2698 = vld [vmem:[#allocation5 + $0x5d8] sm:$0xff]
    %v2699 = vld [vmem:[#allocation5 + $0x5e0] sm:$0xff]
    %v2700 = vld [vmem:[#allocation5 + $0x5e8] sm:$0xff]
    %v2701 = vld [vmem:[#allocation5 + $0x5f0] sm:$0xff]
    %v2702 = vld [vmem:[#allocation5 + $0x5f8] sm:$0xff]
    %v2703 = vld [vmem:[#allocation5 + $0x600] sm:$0xff]
    %v2704 = vld [vmem:[#allocation5 + $0x608] sm:$0xff]
    %v2705 = vld [vmem:[#allocation5 + $0x610] sm:$0xff]
    %v2706 = vld [vmem:[#allocation5 + $0x618] sm:$0xff]
    %v2707 = vld [vmem:[#allocation5 + $0x620] sm:$0xff]
    %v2708 = vld [vmem:[#allocation5 + $0x628] sm:$0xff]
    %v2709 = vld [vmem:[#allocation5 + $0x630] sm:$0xff]
    %v2710 = vld [vmem:[#allocation5 + $0x638] sm:$0xff]
    %v2711 = vld [vmem:[#allocation5 + $0x640] sm:$0xff]
    %v2712 = vld [vmem:[#allocation5 + $0x648] sm:$0xff]
    %v2713 = vld [vmem:[#allocation5 + $0x650] sm:$0xff]
    %v2714 = vld [vmem:[#allocation5 + $0x658] sm:$0xff]
    %v2715 = vld [vmem:[#allocation5 + $0x660] sm:$0xff]
    %v2716 = vld [vmem:[#allocation5 + $0x668] sm:$0xff]
    %v2717 = vld [vmem:[#allocation5 + $0x670] sm:$0xff]
    %v2718 = vld [vmem:[#allocation5 + $0x678] sm:$0xff]
    %v2719 = vld [vmem:[#allocation5 + $0x680] sm:$0xff]
    %v2720 = vld [vmem:[#allocation5 + $0x688] sm:$0xff]
    %v2721 = vld [vmem:[#allocation5 + $0x690] sm:$0xff]
    %v2722 = vld [vmem:[#allocation5 + $0x698] sm:$0xff]
    %v2723 = vld [vmem:[#allocation5 + $0x6a0] sm:$0xff]
    %v2724 = vld [vmem:[#allocation5 + $0x6a8] sm:$0xff]
    %v2725 = vld [vmem:[#allocation5 + $0x6b0] sm:$0xff]
    %v2726 = vld [vmem:[#allocation5 + $0x6b8] sm:$0xff]
    %v2727 = vld [vmem:[#allocation5 + $0x6c0] sm:$0xff]
    %v2728 = vld [vmem:[#allocation5 + $0x6c8] sm:$0xff]
    %v2729 = vld [vmem:[#allocation5 + $0x6d0] sm:$0xff]
    %v2730 = vld [vmem:[#allocation5 + $0x6d8] sm:$0xff]
    %v2731 = vld [vmem:[#allocation5 + $0x6e0] sm:$0xff]
    %v2732 = vld [vmem:[#allocation5 + $0x6e8] sm:$0xff]
    %v2733 = vld [vmem:[#allocation5 + $0x6f0] sm:$0xff]
    %v2734 = vld [vmem:[#allocation5 + $0x6f8] sm:$0xff]
    %v2735 = vld [vmem:[#allocation5 + $0x700] sm:$0xff]
    %v2736 = vld [vmem:[#allocation5 + $0x708] sm:$0xff]
    %v2737 = vld [vmem:[#allocation5 + $0x710] sm:$0xff]
    %v2738 = vld [vmem:[#allocation5 + $0x718] sm:$0xff]
    %v2739 = vld [vmem:[#allocation5 + $0x720] sm:$0xff]
    %v2740 = vld [vmem:[#allocation5 + $0x728] sm:$0xff]
    %v2741 = vld [vmem:[#allocation5 + $0x730] sm:$0xff]
    %v2742 = vld [vmem:[#allocation5 + $0x738] sm:$0xff]
    %v2743 = vld [vmem:[#allocation5 + $0x740] sm:$0xff]
    %v2744 = vld [vmem:[#allocation5 + $0x748] sm:$0xff]
    %v2745 = vld [vmem:[#allocation5 + $0x750] sm:$0xff]
    %v2746 = vld [vmem:[#allocation5 + $0x758] sm:$0xff]
    %v2747 = vld [vmem:[#allocation5 + $0x760] sm:$0xff]
    %v2748 = vld [vmem:[#allocation5 + $0x768] sm:$0xff]
    %v2749 = vld [vmem:[#allocation5 + $0x770] sm:$0xff]
    %v2750 = vld [vmem:[#allocation5 + $0x778] sm:$0xff]
    %v2751 = vld [vmem:[#allocation5 + $0x780] sm:$0xff]
    %v2752 = vld [vmem:[#allocation5 + $0x788] sm:$0xff]
    %v2753 = vld [vmem:[#allocation5 + $0x790] sm:$0xff]
    %v2754 = vld [vmem:[#allocation5 + $0x798] sm:$0xff]
    %v2755 = vld [vmem:[#allocation5 + $0x7a0] sm:$0xff]
    %v2756 = vld [vmem:[#allocation5 + $0x7a8] sm:$0xff]
    %v2757 = vld [vmem:[#allocation5 + $0x7b0] sm:$0xff]
    %v2758 = vld [vmem:[#allocation5 + $0x7b8] sm:$0xff]
    %v2759 = vld [vmem:[#allocation5 + $0x7c0] sm:$0xff]
    %v2760 = vld [vmem:[#allocation5 + $0x7c8] sm:$0xff]
    %v2761 = vld [vmem:[#allocation5 + $0x7d0] sm:$0xff]
    %v2762 = vld [vmem:[#allocation5 + $0x7d8] sm:$0xff]
    %v2763 = vld [vmem:[#allocation5 + $0x7e0] sm:$0xff]
    %v2764 = vld [vmem:[#allocation5 + $0x7e8] sm:$0xff]
    %v2765 = vld [vmem:[#allocation5 + $0x7f0] sm:$0xff]
    %v2766 = vld [vmem:[#allocation5 + $0x7f8] sm:$0xff]
    %v2767 = vld [vmem:[#allocation5 + $0x800] sm:$0xff]
    %v2768 = vld [vmem:[#allocation5 + $0x808] sm:$0xff]
    %v2769 = vld [vmem:[#allocation5 + $0x810] sm:$0xff]
    %v2770 = vld [vmem:[#allocation5 + $0x818] sm:$0xff]
    %v2771 = vld [vmem:[#allocation5 + $0x820] sm:$0xff]
    %v2772 = vld [vmem:[#allocation5 + $0x828] sm:$0xff]
    %v2773 = vld [vmem:[#allocation5 + $0x830] sm:$0xff]
    %v2774 = vld [vmem:[#allocation5 + $0x838] sm:$0xff]
    %v2775 = vld [vmem:[#allocation5 + $0x840] sm:$0xff]
    %v2776 = vld [vmem:[#allocation5 + $0x848] sm:$0xff]
    %v2777 = vld [vmem:[#allocation5 + $0x850] sm:$0xff]
    %v2778 = vld [vmem:[#allocation5 + $0x858] sm:$0xff]
    %v2779 = vld [vmem:[#allocation5 + $0x860] sm:$0xff]
    %v2780 = vld [vmem:[#allocation5 + $0x868] sm:$0xff]
    %v2781 = vld [vmem:[#allocation5 + $0x870] sm:$0xff]
    %v2782 = vld [vmem:[#allocation5 + $0x878] sm:$0xff]
    %v2783 = vld [vmem:[#allocation5 + $0x880] sm:$0xff]
    %v2784 = vld [vmem:[#allocation5 + $0x888] sm:$0xff]
    %v2785 = vld [vmem:[#allocation5 + $0x890] sm:$0xff]
    %v2786 = vld [vmem:[#allocation5 + $0x898] sm:$0xff]
    %v2787 = vld [vmem:[#allocation5 + $0x8a0] sm:$0xff]
    %v2788 = vld [vmem:[#allocation5 + $0x8a8] sm:$0xff]
    %v2789 = vld [vmem:[#allocation5 + $0x8b0] sm:$0xff]
    %v2790 = vld [vmem:[#allocation5 + $0x8b8] sm:$0xff]
    %v2791 = vld [vmem:[#allocation5 + $0x8c0] sm:$0xff]
    %v2792 = vld [vmem:[#allocation5 + $0x8c8] sm:$0xff]
    %v2793 = vld [vmem:[#allocation5 + $0x8d0] sm:$0xff]
    %v2794 = vld [vmem:[#allocation5 + $0x8d8] sm:$0xff]
    %v2795 = vld [vmem:[#allocation5 + $0x8e0] sm:$0xff]
    %v2796 = vld [vmem:[#allocation5 + $0x8e8] sm:$0xff]
    %v2797 = vld [vmem:[#allocation5 + $0x8f0] sm:$0xff]
    %v2798 = vld [vmem:[#allocation5 + $0x8f8] sm:$0xff]
    %v2799 = vld [vmem:[#allocation5 + $0x900] sm:$0xff]
    %v2800 = vld [vmem:[#allocation5 + $0x908] sm:$0xff]
    %v2801 = vld [vmem:[#allocation5 + $0x910] sm:$0xff]
    %v2802 = vld [vmem:[#allocation5 + $0x918] sm:$0xff]
    %v2803 = vld [vmem:[#allocation5 + $0x920] sm:$0xff]
    %v2804 = vld [vmem:[#allocation5 + $0x928] sm:$0xff]
    %v2805 = vld [vmem:[#allocation5 + $0x930] sm:$0xff]
    %v2806 = vld [vmem:[#allocation5 + $0x938] sm:$0xff]
    %v2807 = vld [vmem:[#allocation5 + $0x940] sm:$0xff]
    %v2808 = vld [vmem:[#allocation5 + $0x948] sm:$0xff]
    %v2809 = vld [vmem:[#allocation5 + $0x950] sm:$0xff]
    %v2810 = vld [vmem:[#allocation5 + $0x958] sm:$0xff]
    %v2811 = vld [vmem:[#allocation5 + $0x960] sm:$0xff]
    %v2812 = vld [vmem:[#allocation5 + $0x968] sm:$0xff]
    %v2813 = vld [vmem:[#allocation5 + $0x970] sm:$0xff]
    %v2814 = vld [vmem:[#allocation5 + $0x978] sm:$0xff]
    %v2815 = vld [vmem:[#allocation5 + $0x980] sm:$0xff]
    %v2816 = vld [vmem:[#allocation5 + $0x988] sm:$0xff]
    %v2817 = vld [vmem:[#allocation5 + $0x990] sm:$0xff]
    %v2818 = vld [vmem:[#allocation5 + $0x998] sm:$0xff]
    %v2819 = vld [vmem:[#allocation5 + $0x9a0] sm:$0xff]
    %v2820 = vld [vmem:[#allocation5 + $0x9a8] sm:$0xff]
    %v2821 = vld [vmem:[#allocation5 + $0x9b0] sm:$0xff]
    %v2822 = vld [vmem:[#allocation5 + $0x9b8] sm:$0xff]
    %v2823 = vld [vmem:[#allocation5 + $0x9c0] sm:$0xff]
    %v2824 = vld [vmem:[#allocation5 + $0x9c8] sm:$0xff]
    %v2825 = vld [vmem:[#allocation5 + $0x9d0] sm:$0xff]
    %v2826 = vld [vmem:[#allocation5 + $0x9d8] sm:$0xff]
    %v2827 = vld [vmem:[#allocation5 + $0x9e0] sm:$0xff]
    %v2828 = vld [vmem:[#allocation5 + $0x9e8] sm:$0xff]
    %v2829 = vld [vmem:[#allocation5 + $0x9f0] sm:$0xff]
    %v2830 = vld [vmem:[#allocation5 + $0x9f8] sm:$0xff]
    %v2831 = vld [vmem:[#allocation5 + $0xa00] sm:$0xff]
    %v2832 = vld [vmem:[#allocation5 + $0xa08] sm:$0xff]
    %v2833 = vld [vmem:[#allocation5 + $0xa10] sm:$0xff]
    %v2834 = vld [vmem:[#allocation5 + $0xa18] sm:$0xff]
    %v2835 = vld [vmem:[#allocation5 + $0xa20] sm:$0xff]
    %v2836 = vld [vmem:[#allocation5 + $0xa28] sm:$0xff]
    %v2837 = vld [vmem:[#allocation5 + $0xa30] sm:$0xff]
    %v2838 = vld [vmem:[#allocation5 + $0xa38] sm:$0xff]
    %v2839 = vld [vmem:[#allocation5 + $0xa40] sm:$0xff]
    %v2840 = vld [vmem:[#allocation5 + $0xa48] sm:$0xff]
    %v2841 = vld [vmem:[#allocation5 + $0xa50] sm:$0xff]
    %v2842 = vld [vmem:[#allocation5 + $0xa58] sm:$0xff]
    %v2843 = vld [vmem:[#allocation5 + $0xa60] sm:$0xff]
    %v2844 = vld [vmem:[#allocation5 + $0xa68] sm:$0xff]
    %v2845 = vld [vmem:[#allocation5 + $0xa70] sm:$0xff]
    %v2846 = vld [vmem:[#allocation5 + $0xa78] sm:$0xff]
    %v2847 = vld [vmem:[#allocation5 + $0xa80] sm:$0xff]
    %v2848 = vld [vmem:[#allocation5 + $0xa88] sm:$0xff]
    %v2849 = vld [vmem:[#allocation5 + $0xa90] sm:$0xff]
    %v2850 = vld [vmem:[#allocation5 + $0xa98] sm:$0xff]
    %v2851 = vld [vmem:[#allocation5 + $0xaa0] sm:$0xff]
    %v2852 = vld [vmem:[#allocation5 + $0xaa8] sm:$0xff]
    %v2853 = vld [vmem:[#allocation5 + $0xab0] sm:$0xff]
    %v2854 = vld [vmem:[#allocation5 + $0xab8] sm:$0xff]
    %v2855 = vld [vmem:[#allocation5 + $0xac0] sm:$0xff]
    %v2856 = vld [vmem:[#allocation5 + $0xac8] sm:$0xff]
    %v2857 = vld [vmem:[#allocation5 + $0xad0] sm:$0xff]
    %v2858 = vld [vmem:[#allocation5 + $0xad8] sm:$0xff]
    %v2859 = vld [vmem:[#allocation5 + $0xae0] sm:$0xff]
    %v2860 = vld [vmem:[#allocation5 + $0xae8] sm:$0xff]
    %v2861 = vld [vmem:[#allocation5 + $0xaf0] sm:$0xff]
    %v2862 = vld [vmem:[#allocation5 + $0xaf8] sm:$0xff]
    %v2863 = vld [vmem:[#allocation5 + $0xb00] sm:$0xff]
    %v2864 = vld [vmem:[#allocation5 + $0xb08] sm:$0xff]
    %v2865 = vld [vmem:[#allocation5 + $0xb10] sm:$0xff]
    %v2866 = vld [vmem:[#allocation5 + $0xb18] sm:$0xff]
    %v2867 = vld [vmem:[#allocation5 + $0xb20] sm:$0xff]
    %v2868 = vld [vmem:[#allocation5 + $0xb28] sm:$0xff]
    %v2869 = vld [vmem:[#allocation5 + $0xb30] sm:$0xff]
    %v2870 = vld [vmem:[#allocation5 + $0xb38] sm:$0xff]
    %v2871 = vld [vmem:[#allocation5 + $0xb40] sm:$0xff]
    %v2872 = vld [vmem:[#allocation5 + $0xb48] sm:$0xff]
    %v2873 = vld [vmem:[#allocation5 + $0xb50] sm:$0xff]
    %v2874 = vld [vmem:[#allocation5 + $0xb58] sm:$0xff]
    %v2875 = vld [vmem:[#allocation5 + $0xb60] sm:$0xff]
    %v2876 = vld [vmem:[#allocation5 + $0xb68] sm:$0xff]
    %v2877 = vld [vmem:[#allocation5 + $0xb70] sm:$0xff]
    %v2878 = vld [vmem:[#allocation5 + $0xb78] sm:$0xff]
    %v2879 = vld [vmem:[#allocation5 + $0xb80] sm:$0xff]
    %v2880 = vld [vmem:[#allocation5 + $0xb88] sm:$0xff]
    %v2881 = vld [vmem:[#allocation5 + $0xb90] sm:$0xff]
    %v2882 = vld [vmem:[#allocation5 + $0xb98] sm:$0xff]
    %v2883 = vld [vmem:[#allocation5 + $0xba0] sm:$0xff]
    %v2884 = vld [vmem:[#allocation5 + $0xba8] sm:$0xff]
    %v2885 = vld [vmem:[#allocation5 + $0xbb0] sm:$0xff]
    %v2886 = vld [vmem:[#allocation5 + $0xbb8] sm:$0xff]
    %v2887 = vld [vmem:[#allocation5 + $0xbc0] sm:$0xff]
    %v2888 = vld [vmem:[#allocation5 + $0xbc8] sm:$0xff]
    %v2889 = vld [vmem:[#allocation5 + $0xbd0] sm:$0xff]
    %v2890 = vld [vmem:[#allocation5 + $0xbd8] sm:$0xff]
    %v2891 = vld [vmem:[#allocation5 + $0xbe0] sm:$0xff]
    %v2892 = vld [vmem:[#allocation5 + $0xbe8] sm:$0xff]
    %v2893 = vld [vmem:[#allocation5 + $0xbf0] sm:$0xff]
    %v2894 = vld [vmem:[#allocation5 + $0xbf8] sm:$0xff]
    %v2895 = vld [vmem:[#allocation5 + $0xc00] sm:$0xff]
    %v2896 = vld [vmem:[#allocation5 + $0xc08] sm:$0xff]
    %v2897 = vld [vmem:[#allocation5 + $0xc10] sm:$0xff]
    %v2898 = vld [vmem:[#allocation5 + $0xc18] sm:$0xff]
    %v2899 = vld [vmem:[#allocation5 + $0xc20] sm:$0xff]
    %v2900 = vld [vmem:[#allocation5 + $0xc28] sm:$0xff]
    %v2901 = vld [vmem:[#allocation5 + $0xc30] sm:$0xff]
    %v2902 = vld [vmem:[#allocation5 + $0xc38] sm:$0xff]
    %v2903 = vld [vmem:[#allocation5 + $0xc40] sm:$0xff]
    %v2904 = vld [vmem:[#allocation5 + $0xc48] sm:$0xff]
    %v2905 = vld [vmem:[#allocation5 + $0xc50] sm:$0xff]
    %v2906 = vld [vmem:[#allocation5 + $0xc58] sm:$0xff]
    %v2907 = vld [vmem:[#allocation5 + $0xc60] sm:$0xff]
    %v2908 = vld [vmem:[#allocation5 + $0xc68] sm:$0xff]
    %v2909 = vld [vmem:[#allocation5 + $0xc70] sm:$0xff]
    %v2910 = vld [vmem:[#allocation5 + $0xc78] sm:$0xff]
    %v2911 = vld [vmem:[#allocation5 + $0xc80] sm:$0xff]
    %v2912 = vld [vmem:[#allocation5 + $0xc88] sm:$0xff]
    %v2913 = vld [vmem:[#allocation5 + $0xc90] sm:$0xff]
    %v2914 = vld [vmem:[#allocation5 + $0xc98] sm:$0xff]
    %v2915 = vld [vmem:[#allocation5 + $0xca0] sm:$0xff]
    %v2916 = vld [vmem:[#allocation5 + $0xca8] sm:$0xff]
    %v2917 = vld [vmem:[#allocation5 + $0xcb0] sm:$0xff]
    %v2918 = vld [vmem:[#allocation5 + $0xcb8] sm:$0xff]
    %v2919 = vld [vmem:[#allocation5 + $0xcc0] sm:$0xff]
    %v2920 = vld [vmem:[#allocation5 + $0xcc8] sm:$0xff]
    %v2921 = vld [vmem:[#allocation5 + $0xcd0] sm:$0xff]
    %v2922 = vld [vmem:[#allocation5 + $0xcd8] sm:$0xff]
    %v2923 = vld [vmem:[#allocation5 + $0xce0] sm:$0xff]
    %v2924 = vld [vmem:[#allocation5 + $0xce8] sm:$0xff]
    %v2925 = vld [vmem:[#allocation5 + $0xcf0] sm:$0xff]
    %v2926 = vld [vmem:[#allocation5 + $0xcf8] sm:$0xff]
    %v2927 = vld [vmem:[#allocation5 + $0xd00] sm:$0xff]
    %v2928 = vld [vmem:[#allocation5 + $0xd08] sm:$0xff]
    %v2929 = vld [vmem:[#allocation5 + $0xd10] sm:$0xff]
    %v2930 = vld [vmem:[#allocation5 + $0xd18] sm:$0xff]
    %v2931 = vld [vmem:[#allocation5 + $0xd20] sm:$0xff]
    %v2932 = vld [vmem:[#allocation5 + $0xd28] sm:$0xff]
    %v2933 = vld [vmem:[#allocation5 + $0xd30] sm:$0xff]
    %v2934 = vld [vmem:[#allocation5 + $0xd38] sm:$0xff]
    %v2935 = vld [vmem:[#allocation5 + $0xd40] sm:$0xff]
    %v2936 = vld [vmem:[#allocation5 + $0xd48] sm:$0xff]
    %v2937 = vld [vmem:[#allocation5 + $0xd50] sm:$0xff]
    %v2938 = vld [vmem:[#allocation5 + $0xd58] sm:$0xff]
    %v2939 = vld [vmem:[#allocation5 + $0xd60] sm:$0xff]
    %v2940 = vld [vmem:[#allocation5 + $0xd68] sm:$0xff]
    %v2941 = vld [vmem:[#allocation5 + $0xd70] sm:$0xff]
    %v2942 = vld [vmem:[#allocation5 + $0xd78] sm:$0xff]
    %v2943 = vld [vmem:[#allocation5 + $0xd80] sm:$0xff]
    %v2944 = vld [vmem:[#allocation5 + $0xd88] sm:$0xff]
    %v2945 = vld [vmem:[#allocation5 + $0xd90] sm:$0xff]
    %v2946 = vld [vmem:[#allocation5 + $0xd98] sm:$0xff]
    %v2947 = vld [vmem:[#allocation5 + $0xda0] sm:$0xff]
    %v2948 = vld [vmem:[#allocation5 + $0xda8] sm:$0xff]
    %v2949 = vld [vmem:[#allocation5 + $0xdb0] sm:$0xff]
    %v2950 = vld [vmem:[#allocation5 + $0xdb8] sm:$0xff]
    %v2951 = vld [vmem:[#allocation5 + $0xdc0] sm:$0xff]
    %v2952 = vld [vmem:[#allocation5 + $0xdc8] sm:$0xff]
    %v2953 = vld [vmem:[#allocation5 + $0xdd0] sm:$0xff]
    %v2954 = vld [vmem:[#allocation5 + $0xdd8] sm:$0xff]
    %v2955 = vld [vmem:[#allocation5 + $0xde0] sm:$0xff]
    %v2956 = vld [vmem:[#allocation5 + $0xde8] sm:$0xff]
    %v2957 = vld [vmem:[#allocation5 + $0xdf0] sm:$0xff]
    %v2958 = vld [vmem:[#allocation5 + $0xdf8] sm:$0xff]
    %v2959 = vld [vmem:[#allocation5 + $0xe00] sm:$0xff]
    %v2960 = vld [vmem:[#allocation5 + $0xe08] sm:$0xff]
    %v2961 = vld [vmem:[#allocation5 + $0xe10] sm:$0xff]
    %v2962 = vld [vmem:[#allocation5 + $0xe18] sm:$0xff]
    %v2963 = vld [vmem:[#allocation5 + $0xe20] sm:$0xff]
    %v2964 = vld [vmem:[#allocation5 + $0xe28] sm:$0xff]
    %v2965 = vld [vmem:[#allocation5 + $0xe30] sm:$0xff]
    %v2966 = vld [vmem:[#allocation5 + $0xe38] sm:$0xff]
    %v2967 = vld [vmem:[#allocation5 + $0xe40] sm:$0xff]
    %v2968 = vld [vmem:[#allocation5 + $0xe48] sm:$0xff]
    %v2969 = vld [vmem:[#allocation5 + $0xe50] sm:$0xff]
    %v2970 = vld [vmem:[#allocation5 + $0xe58] sm:$0xff]
    %v2971 = vld [vmem:[#allocation5 + $0xe60] sm:$0xff]
    %v2972 = vld [vmem:[#allocation5 + $0xe68] sm:$0xff]
    %v2973 = vld [vmem:[#allocation5 + $0xe70] sm:$0xff]
    %v2974 = vld [vmem:[#allocation5 + $0xe78] sm:$0xff]
    %v2975 = vld [vmem:[#allocation5 + $0xe80] sm:$0xff]
    %v2976 = vld [vmem:[#allocation5 + $0xe88] sm:$0xff]
    %v2977 = vld [vmem:[#allocation5 + $0xe90] sm:$0xff]
    %v2978 = vld [vmem:[#allocation5 + $0xe98] sm:$0xff]
    %v2979 = vld [vmem:[#allocation5 + $0xea0] sm:$0xff]
    %v2980 = vld [vmem:[#allocation5 + $0xea8] sm:$0xff]
    %v2981 = vld [vmem:[#allocation5 + $0xeb0] sm:$0xff]
    %v2982 = vld [vmem:[#allocation5 + $0xeb8] sm:$0xff]
    %v2983 = vld [vmem:[#allocation5 + $0xec0] sm:$0xff]
    %v2984 = vld [vmem:[#allocation5 + $0xec8] sm:$0xff]
    %v2985 = vld [vmem:[#allocation5 + $0xed0] sm:$0xff]
    %v2986 = vld [vmem:[#allocation5 + $0xed8] sm:$0xff]
    %v2987 = vld [vmem:[#allocation5 + $0xee0] sm:$0xff]
    %v2988 = vld [vmem:[#allocation5 + $0xee8] sm:$0xff]
    %v2989 = vld [vmem:[#allocation5 + $0xef0] sm:$0xff]
    %v2990 = vld [vmem:[#allocation5 + $0xef8] sm:$0xff]
    %v2991 = vld [vmem:[#allocation5 + $0xf00] sm:$0xff]
    %v2992 = vld [vmem:[#allocation5 + $0xf08] sm:$0xff]
    %v2993 = vld [vmem:[#allocation5 + $0xf10] sm:$0xff]
    %v2994 = vld [vmem:[#allocation5 + $0xf18] sm:$0xff]
    %v2995 = vld [vmem:[#allocation5 + $0xf20] sm:$0xff]
    %v2996 = vld [vmem:[#allocation5 + $0xf28] sm:$0xff]
    %v2997 = vld [vmem:[#allocation5 + $0xf30] sm:$0xff]
    %v2998 = vld [vmem:[#allocation5 + $0xf38] sm:$0xff]
    %v2999 = vld [vmem:[#allocation5 + $0xf40] sm:$0xff]
    %v3000 = vld [vmem:[#allocation5 + $0xf48] sm:$0xff]
    %v3001 = vld [vmem:[#allocation5 + $0xf50] sm:$0xff]
    %v3002 = vld [vmem:[#allocation5 + $0xf58] sm:$0xff]
    %v3003 = vld [vmem:[#allocation5 + $0xf60] sm:$0xff]
    %v3004 = vld [vmem:[#allocation5 + $0xf68] sm:$0xff]
    %v3005 = vld [vmem:[#allocation5 + $0xf70] sm:$0xff]
    %v3006 = vld [vmem:[#allocation5 + $0xf78] sm:$0xff]
    %v3007 = vld [vmem:[#allocation5 + $0xf80] sm:$0xff]
    %v3008 = vld [vmem:[#allocation5 + $0xf88] sm:$0xff]
    %v3009 = vld [vmem:[#allocation5 + $0xf90] sm:$0xff]
    %v3010 = vld [vmem:[#allocation5 + $0xf98] sm:$0xff]
    %v3011 = vld [vmem:[#allocation5 + $0xfa0] sm:$0xff]
    %v3012 = vld [vmem:[#allocation5 + $0xfa8] sm:$0xff]
    %v3013 = vld [vmem:[#allocation5 + $0xfb0] sm:$0xff]
    %v3014 = vld [vmem:[#allocation5 + $0xfb8] sm:$0xff]
    %v3015 = vld [vmem:[#allocation5 + $0xfc0] sm:$0xff]
    %v3016 = vld [vmem:[#allocation5 + $0xfc8] sm:$0xff]
    %v3017 = vld [vmem:[#allocation5 + $0xfd0] sm:$0xff]
    %v3018 = vld [vmem:[#allocation5 + $0xfd8] sm:$0xff]
    %v3019 = vld [vmem:[#allocation5 + $0xfe0] sm:$0xff]
    %v3020 = vld [vmem:[#allocation5 + $0xfe8] sm:$0xff]
    %v3021 = vld [vmem:[#allocation5 + $0xff0] sm:$0xff]
    %v3022 = vld [vmem:[#allocation5 + $0xff8] sm:$0xff]
    %v3023 = vld [vmem:[#allocation5 + $0x1000] sm:$0xff]
    %v3024 = vld [vmem:[#allocation5 + $0x1008] sm:$0xff]
    %v3025 = vld [vmem:[#allocation5 + $0x1010] sm:$0xff]
    %v3026 = vld [vmem:[#allocation5 + $0x1018] sm:$0xff]
    %v3027 = vld [vmem:[#allocation5 + $0x1020] sm:$0xff]
    %v3028 = vld [vmem:[#allocation5 + $0x1028] sm:$0xff]
    %v3029 = vld [vmem:[#allocation5 + $0x1030] sm:$0xff]
    %v3030 = vld [vmem:[#allocation5 + $0x1038] sm:$0xff]
    %v3031 = vld [vmem:[#allocation5 + $0x1040] sm:$0xff]
    %v3032 = vld [vmem:[#allocation5 + $0x1048] sm:$0xff]
    %v3033 = vld [vmem:[#allocation5 + $0x1050] sm:$0xff]
    %v3034 = vld [vmem:[#allocation5 + $0x1058] sm:$0xff]
    %v3035 = vld [vmem:[#allocation5 + $0x1060] sm:$0xff]
    %v3036 = vld [vmem:[#allocation5 + $0x1068] sm:$0xff]
    %v3037 = vld [vmem:[#allocation5 + $0x1070] sm:$0xff]
    %v3038 = vld [vmem:[#allocation5 + $0x1078] sm:$0xff]
    %v3039 = vld [vmem:[#allocation5 + $0x1080] sm:$0xff]
    %v3040 = vld [vmem:[#allocation5 + $0x1088] sm:$0xff]
    %v3041 = vld [vmem:[#allocation5 + $0x1090] sm:$0xff]
    %v3042 = vld [vmem:[#allocation5 + $0x1098] sm:$0xff]
    %v3043 = vld [vmem:[#allocation5 + $0x10a0] sm:$0xff]
    %v3044 = vld [vmem:[#allocation5 + $0x10a8] sm:$0xff]
    %v3045 = vld [vmem:[#allocation5 + $0x10b0] sm:$0xff]
    %v3046 = vld [vmem:[#allocation5 + $0x10b8] sm:$0xff]
    %v3047 = vld [vmem:[#allocation5 + $0x10c0] sm:$0xff]
    %v3048 = vld [vmem:[#allocation5 + $0x10c8] sm:$0xff]
    %v3049 = vld [vmem:[#allocation5 + $0x10d0] sm:$0xff]
    %v3050 = vld [vmem:[#allocation5 + $0x10d8] sm:$0xff]
    %v3051 = vld [vmem:[#allocation5 + $0x10e0] sm:$0xff]
    %v3052 = vld [vmem:[#allocation5 + $0x10e8] sm:$0xff]
    %v3053 = vld [vmem:[#allocation5 + $0x10f0] sm:$0xff]
    %v3054 = vld [vmem:[#allocation5 + $0x10f8] sm:$0xff]
    %v3055 = vld [vmem:[#allocation5 + $0x1100] sm:$0xff]
    %v3056 = vld [vmem:[#allocation5 + $0x1108] sm:$0xff]
    %v3057 = vld [vmem:[#allocation5 + $0x1110] sm:$0xff]
    %v3058 = vld [vmem:[#allocation5 + $0x1118] sm:$0xff]
    %v3059 = vld [vmem:[#allocation5 + $0x1120] sm:$0xff]
    %v3060 = vld [vmem:[#allocation5 + $0x1128] sm:$0xff]
    %v3061 = vld [vmem:[#allocation5 + $0x1130] sm:$0xff]
    %v3062 = vld [vmem:[#allocation5 + $0x1138] sm:$0xff]
    %v3063 = vld [vmem:[#allocation5 + $0x1140] sm:$0xff]
    %v3064 = vld [vmem:[#allocation5 + $0x1148] sm:$0xff]
    %v3065 = vld [vmem:[#allocation5 + $0x1150] sm:$0xff]
    %v3066 = vld [vmem:[#allocation5 + $0x1158] sm:$0xff]
    %v3067 = vld [vmem:[#allocation5 + $0x1160] sm:$0xff]
    %v3068 = vld [vmem:[#allocation5 + $0x1168] sm:$0xff]
    %v3069 = vld [vmem:[#allocation5 + $0x1170] sm:$0xff]
    %v3070 = vld [vmem:[#allocation5 + $0x1178] sm:$0xff]
    %v3071 = vld [vmem:[#allocation5 + $0x1180] sm:$0xff]
    %v3072 = vld [vmem:[#allocation5 + $0x1188] sm:$0xff]
    %v3073 = vld [vmem:[#allocation5 + $0x1190] sm:$0xff]
    %v3074 = vld [vmem:[#allocation5 + $0x1198] sm:$0xff]
    %v3075 = vld [vmem:[#allocation5 + $0x11a0] sm:$0xff]
    %v3076 = vld [vmem:[#allocation5 + $0x11a8] sm:$0xff]
    %v3077 = vld [vmem:[#allocation5 + $0x11b0] sm:$0xff]
    %v3078 = vld [vmem:[#allocation5 + $0x11b8] sm:$0xff]
    %v3079 = vld [vmem:[#allocation5 + $0x11c0] sm:$0xff]
    %v3080 = vld [vmem:[#allocation5 + $0x11c8] sm:$0xff]
    %v3081 = vld [vmem:[#allocation5 + $0x11d0] sm:$0xff]
    %v3082 = vld [vmem:[#allocation5 + $0x11d8] sm:$0xff]
    %v3083 = vld [vmem:[#allocation5 + $0x11e0] sm:$0xff]
    %v3084 = vld [vmem:[#allocation5 + $0x11e8] sm:$0xff]
    %v3085 = vld [vmem:[#allocation5 + $0x11f0] sm:$0xff]
    %v3086 = vld [vmem:[#allocation5 + $0x11f8] sm:$0xff]
    %v3087 = vld [vmem:[#allocation5 + $0x1200] sm:$0xff]
    %v3088 = vld [vmem:[#allocation5 + $0x1208] sm:$0xff]
    %v3089 = vld [vmem:[#allocation5 + $0x1210] sm:$0xff]
    %v3090 = vld [vmem:[#allocation5 + $0x1218] sm:$0xff]
    %v3091 = vld [vmem:[#allocation5 + $0x1220] sm:$0xff]
    %v3092 = vld [vmem:[#allocation5 + $0x1228] sm:$0xff]
    %v3093 = vld [vmem:[#allocation5 + $0x1230] sm:$0xff]
    %v3094 = vld [vmem:[#allocation5 + $0x1238] sm:$0xff]
    %v3095 = vld [vmem:[#allocation5 + $0x1240] sm:$0xff]
    %v3096 = vld [vmem:[#allocation5 + $0x1248] sm:$0xff]
    %v3097 = vld [vmem:[#allocation5 + $0x1250] sm:$0xff]
    %v3098 = vld [vmem:[#allocation5 + $0x1258] sm:$0xff]
    %v3099 = vld [vmem:[#allocation5 + $0x1260] sm:$0xff]
    %v3100 = vld [vmem:[#allocation5 + $0x1268] sm:$0xff]
    %v3101 = vld [vmem:[#allocation5 + $0x1270] sm:$0xff]
    %v3102 = vld [vmem:[#allocation5 + $0x1278] sm:$0xff]
    %v3103 = vld [vmem:[#allocation5 + $0x1280] sm:$0xff]
    %v3104 = vld [vmem:[#allocation5 + $0x1288] sm:$0xff]
    %v3105 = vld [vmem:[#allocation5 + $0x1290] sm:$0xff]
    %v3106 = vld [vmem:[#allocation5 + $0x1298] sm:$0xff]
    %v3107 = vld [vmem:[#allocation5 + $0x12a0] sm:$0xff]
    %v3108 = vld [vmem:[#allocation5 + $0x12a8] sm:$0xff]
    %v3109 = vld [vmem:[#allocation5 + $0x12b0] sm:$0xff]
    %v3110 = vld [vmem:[#allocation5 + $0x12b8] sm:$0xff]
    %v3111 = vld [vmem:[%s13] sm:$0xff]
    %v3112 = vld [vmem:[%s14] sm:$0x77]
    %v3113 = vld [vmem:[%s14 + $0x8] sm:$0x77]
    %v3114 = vld [vmem:[%s14 + $0x10] sm:$0x77]
    %v3115 = vld [vmem:[%s14 + $0x18] sm:$0x77]
    %v3116 = vld [vmem:[%s15] sm:$0x77]
    %v3117 = vld [vmem:[%s15 + $0x8] sm:$0x77]
    %v3118 = vld [vmem:[%s15 + $0x10] sm:$0x77]
    %v3119 = vld [vmem:[%s15 + $0x18] sm:$0x77]
    %v3121 = vlaneseq
    %v3122 = vshrl.u32 %v3121, 7
    %v3123 = vsub.s32 0, %v3122
    %v3124 = vrot.slane %v2510, %v3123
    %v3125 = vlaneseq
    %v3126 = vshrl.u32 %v3125, 7
    %v3127 = vsub.s32 1, %v3126
    %v3128 = vrot.slane %v2510, %v3127
    %v3129 = vlaneseq
    %v3130 = vshrl.u32 %v3129, 7
    %v3131 = vsub.s32 2, %v3130
    %v3132 = vrot.slane %v2510, %v3131
    %v3133 = vlaneseq
    %v3134 = vshrl.u32 %v3133, 7
    %v3135 = vsub.s32 3, %v3134
    %v3136 = vrot.slane %v2510, %v3135
    %v3137 = vlaneseq
    %v3138 = vshrl.u32 %v3137, 7
    %v3139 = vsub.s32 4, %v3138
    %v3140 = vrot.slane %v2510, %v3139
    %v3148 = vcombine.high %v2318, %v2318
    %v3150 = vsel %vm916, %v2319, 0
    %v3153 = vsel %vm919, %v2505, 0
    %v3156 = vsel %vm919, %v2506, 0
    %v3159 = vsel %vm919, %v2507, 0
    %v3162 = vsel %vm919, %v2508, 0
    %v3165 = vsel %vm919, %v2509, 0
    %3167 = vmatprep.subr.mxu0 %v2321
    %3168 = vmatpush1.msra.mxu0 %v2320
    %3169 = vmatprep.subr.mxu0 %v2326
    %3170 = vmatpush1.msra.mxu0 %v2325
    %3171 = vmatprep.subr.mxu0 %v2331
    %3172 = vmatpush1.msra.mxu0 %v2330
    %3173 = vmatprep.subr.mxu0 %v2336
    %3174 = vmatpush1.msra.mxu0 %v2335
    %3175 = vmatprep.subr.mxu0 %v2341
    %3176 = vmatpush1.msra.mxu0 %v2340
    %3177 = vmatprep.subr.mxu0 %v2346
    %3178 = vmatpush1.msra.mxu0 %v2345
    %3179 = vmatprep.subr.mxu0 %v2351
    %3180 = vmatpush1.msra.mxu0 %v2350
    %3181 = vmatprep.subr.mxu0 %v2356
    %3182 = vmatpush1.msra.mxu0 %v2355
    %3183 = vmatprep.subr.mxu0 %v2361
    %3184 = vmatpush1.msra.mxu0 %v2360
    %3185 = vmatprep.subr.mxu0 %v2366
    %3186 = vmatpush1.msra.mxu0 %v2365
    %3187 = vmatprep.subr.mxu0 %v2371
    %3188 = vmatpush1.msra.mxu0 %v2370
    %3189 = vmatprep.subr.mxu0 %v2376
    %3190 = vmatpush1.msra.mxu0 %v2375
    %3191 = vmatprep.subr.mxu0 %v2381
    %3192 = vmatpush1.msra.mxu0 %v2380
    %3193 = vmatprep.subr.mxu0 %v2386
    %3194 = vmatpush1.msra.mxu0 %v2385
    %3195 = vmatprep.subr.mxu0 %v2391
    %3196 = vmatpush1.msra.mxu0 %v2390
    %3197 = vmatprep.subr.mxu0 %v2396
    %3198 = vmatpush1.msra.mxu0 %v2395
    %3199 = vmatprep.subr.mxu0 %v2401
    %3200 = vmatpush1.msra.mxu0 %v2400
    %3201 = vmatprep.subr.mxu0 %v2406
    %3202 = vmatpush1.msra.mxu0 %v2405
    %3203 = vmatprep.subr.mxu0 %v2411
    %3204 = vmatpush1.msra.mxu0 %v2410
    %3205 = vmatprep.subr.mxu0 %v2416
    %3206 = vmatpush1.msra.mxu0 %v2415
    %3207 = vmatprep.subr.mxu0 %v2421
    %3208 = vmatpush1.msra.mxu0 %v2420
    %3209 = vmatprep.subr.mxu0 %v2426
    %3210 = vmatpush1.msra.mxu0 %v2425
    %3211 = vmatprep.subr.mxu0 %v2431
    %3212 = vmatpush1.msra.mxu0 %v2430
    %3213 = vmatprep.subr.mxu0 %v2436
    %3214 = vmatpush1.msra.mxu0 %v2435
    %3215 = vmatprep.subr.mxu0 %v2441
    %3216 = vmatpush1.msra.mxu0 %v2440
    %3217 = vmatprep.subr.mxu0 %v2446
    %3218 = vmatpush1.msra.mxu0 %v2445
    %3219 = vmatprep.subr.mxu0 %v2451
    %3220 = vmatpush1.msra.mxu0 %v2450
    %3221 = vmatprep.subr.mxu0 %v2456
    %3222 = vmatpush1.msra.mxu0 %v2455
    %3223 = vmatprep.subr.mxu0 %v2461
    %3224 = vmatpush1.msra.mxu0 %v2460
    %3225 = vmatprep.subr.mxu0 %v2466
    %3226 = vmatpush1.msra.mxu0 %v2465
    %3227 = vmatprep.subr.mxu0 %v2471
    %3228 = vmatpush1.msra.mxu0 %v2470
    %3229 = vmatprep.subr.mxu0 %v2476
    %3230 = vmatpush1.msra.mxu0 %v2475
    %3231 = vmatprep.mubr.f32.mxu0 %v3148
    %3232 = vmatmul.mubr.f32.gmra.mrb[0].mxu0 %v2318
    %v3233 = vpop.f32.mrb[0].mxu0
    %v3234 = vadd.f32 %v3124, %v3233
    %v3235 = vpop.f32.mrb[0].mxu0
    %v3236 = vadd.f32 %v3128, %v3235
    %3237 = vdwg.mxu0
    %3238 = vmatprep.subr.mxu0 %v2481
    %3239 = vmatpush1.msra.mxu0 %v2480
    %3240 = vmatprep.subr.mxu0 %v2486
    %3241 = vmatpush1.msra.mxu0 %v2485
    %3242 = vmatprep.subr.mxu0 %v2491
    %3243 = vmatpush1.msra.mxu0 %v2490
    %3244 = vmatprep.subr.mxu0 %v2496
    %3245 = vmatpush1.msra.mxu0 %v2495
    %3246 = vmatprep.subr.mxu0 %v2501
    %3247 = vmatpush1.msra.mxu0 %v2500
    %3248 = vmatprep.subr.mxu0 %v3156
    %3249 = vmatpush1.msra.mxu0 %v3153
    %3250 = vmatprep.subr.mxu0 0.0
    %3251 = vmatpush1.msra.mxu0 0.0
    %3252 = vmatprep.subr.mxu0 0.0
    %3253 = vmatpush1.msra.mxu0 0.0
    %3254 = vmatprep.subr.mxu0 0.0
    %3255 = vmatpush1.msra.mxu0 0.0
    %3256 = vmatprep.subr.mxu0 0.0
    %3257 = vmatpush1.msra.mxu0 0.0
    %3258 = vmatprep.subr.mxu0 0.0
    %3259 = vmatpush1.msra.mxu0 0.0
    %3260 = vmatprep.subr.mxu0 0.0
    %3261 = vmatpush1.msra.mxu0 0.0
    %3262 = vmatprep.subr.mxu0 0.0
    %3263 = vmatpush1.msra.mxu0 0.0
    %3264 = vmatprep.subr.mxu0 0.0
    %3265 = vmatpush1.msra.mxu0 0.0
    %3266 = vmatprep.subr.mxu0 0.0
    %3267 = vmatpush1.msra.mxu0 0.0
    %3268 = vmatprep.subr.mxu0 0.0
    %3269 = vmatpush1.msra.mxu0 0.0
    %3270 = vmatprep.subr.mxu0 0.0
    %3271 = vmatpush1.msra.mxu0 0.0
    %3272 = vmatprep.subr.mxu0 0.0
    %3273 = vmatpush1.msra.mxu0 0.0
    %3274 = vmatprep.subr.mxu0 0.0
    %3275 = vmatpush1.msra.mxu0 0.0
    %3276 = vmatprep.subr.mxu0 0.0
    %3277 = vmatpush1.msra.mxu0 0.0
    %3278 = vmatprep.subr.mxu0 0.0
    %3279 = vmatpush1.msra.mxu0 0.0
    %3280 = vmatprep.subr.mxu0 0.0
    %3281 = vmatpush1.msra.mxu0 0.0
    %3282 = vmatprep.subr.mxu0 0.0
    %3283 = vmatpush1.msra.mxu0 0.0
    %3284 = vmatprep.subr.mxu0 0.0
    %3285 = vmatpush1.msra.mxu0 0.0
    %3286 = vmatprep.subr.mxu0 0.0
    %3287 = vmatpush1.msra.mxu0 0.0
    %3288 = vmatprep.subr.mxu0 0.0
    %3289 = vmatpush1.msra.mxu0 0.0
    %3290 = vmatprep.subr.mxu0 0.0
    %3291 = vmatpush1.msra.mxu0 0.0
    %3292 = vmatprep.subr.mxu0 0.0
    %3293 = vmatpush1.msra.mxu0 0.0
    %3294 = vmatprep.subr.mxu0 0.0
    %3295 = vmatpush1.msra.mxu0 0.0
    %3296 = vmatprep.subr.mxu0 0.0
    %3297 = vmatpush1.msra.mxu0 0.0
    %3298 = vmatprep.subr.mxu0 0.0
    %3299 = vmatpush1.msra.mxu0 0.0
    %3300 = vmatprep.subr.mxu0 0.0
    %3301 = vmatpush1.msra.mxu0 0.0
    %3302 = vmatprep.mubr.f32.mxu0 0.0
    %3303 = vmatmul.mubr.f32.gmra.mrb[0].mxu0 %v3150
    %v3304 = vpop.f32.mrb[0].mxu0
    %v3305 = vadd.f32 %v3234, %v3304
    %v3306 = vpop.f32.mrb[0].mxu0
    %v3307 = vadd.f32 %v3236, %v3306
    %3308 = vdwg.mxu0
    %3309 = vmatprep.subr.mxu0 %v2323
    %3310 = vmatpush1.msra.mxu0 %v2322
    %3311 = vmatprep.subr.mxu0 %v2328
    %3312 = vmatpush1.msra.mxu0 %v2327
    %3313 = vmatprep.subr.mxu0 %v2333
    %3314 = vmatpush1.msra.mxu0 %v2332
    %3315 = vmatprep.subr.mxu0 %v2338
    %3316 = vmatpush1.msra.mxu0 %v2337
    %3317 = vmatprep.subr.mxu0 %v2343
    %3318 = vmatpush1.msra.mxu0 %v2342
    %3319 = vmatprep.subr.mxu0 %v2348
    %3320 = vmatpush1.msra.mxu0 %v2347
    %3321 = vmatprep.subr.mxu0 %v2353
    %3322 = vmatpush1.msra.mxu0 %v2352
    %3323 = vmatprep.subr.mxu0 %v2358
    %3324 = vmatpush1.msra.mxu0 %v2357
    %3325 = vmatprep.subr.mxu0 %v2363
    %3326 = vmatpush1.msra.mxu0 %v2362
    %3327 = vmatprep.subr.mxu0 %v2368
    %3328 = vmatpush1.msra.mxu0 %v2367
    %3329 = vmatprep.subr.mxu0 %v2373
    %3330 = vmatpush1.msra.mxu0 %v2372
    %3331 = vmatprep.subr.mxu0 %v2378
    %3332 = vmatpush1.msra.mxu0 %v2377
    %3333 = vmatprep.subr.mxu0 %v2383
    %3334 = vmatpush1.msra.mxu0 %v2382
    %3335 = vmatprep.subr.mxu0 %v2388
    %3336 = vmatpush1.msra.mxu0 %v2387
    %3337 = vmatprep.subr.mxu0 %v2393
    %3338 = vmatpush1.msra.mxu0 %v2392
    %3339 = vmatprep.subr.mxu0 %v2398
    %3340 = vmatpush1.msra.mxu0 %v2397
    %3341 = vmatprep.subr.mxu0 %v2403
    %3342 = vmatpush1.msra.mxu0 %v2402
    %3343 = vmatprep.subr.mxu0 %v2408
    %3344 = vmatpush1.msra.mxu0 %v2407
    %3345 = vmatprep.subr.mxu0 %v2413
    %3346 = vmatpush1.msra.mxu0 %v2412
    %3347 = vmatprep.subr.mxu0 %v2418
    %3348 = vmatpush1.msra.mxu0 %v2417
    %3349 = vmatprep.subr.mxu0 %v2423
    %3350 = vmatpush1.msra.mxu0 %v2422
    %3351 = vmatprep.subr.mxu0 %v2428
    %3352 = vmatpush1.msra.mxu0 %v2427
    %3353 = vmatprep.subr.mxu0 %v2433
    %3354 = vmatpush1.msra.mxu0 %v2432
    %3355 = vmatprep.subr.mxu0 %v2438
    %3356 = vmatpush1.msra.mxu0 %v2437
    %3357 = vmatprep.subr.mxu0 %v2443
    %3358 = vmatpush1.msra.mxu0 %v2442
    %3359 = vmatprep.subr.mxu0 %v2448
    %3360 = vmatpush1.msra.mxu0 %v2447
    %3361 = vmatprep.subr.mxu0 %v2453
    %3362 = vmatpush1.msra.mxu0 %v2452
    %3363 = vmatprep.subr.mxu0 %v2458
    %3364 = vmatpush1.msra.mxu0 %v2457
    %3365 = vmatprep.subr.mxu0 %v2463
    %3366 = vmatpush1.msra.mxu0 %v2462
    %3367 = vmatprep.subr.mxu0 %v2468
    %3368 = vmatpush1.msra.mxu0 %v2467
    %3369 = vmatprep.subr.mxu0 %v2473
    %3370 = vmatpush1.msra.mxu0 %v2472
    %3371 = vmatprep.subr.mxu0 %v2478
    %3372 = vmatpush1.msra.mxu0 %v2477
    %3373 = vmatprep.mubr.f32.mxu0 %v3148
    %3374 = vmatmul.mubr.f32.gmra.mrb[0].mxu0 %v2318
    %v3375 = vpop.f32.mrb[0].mxu0
    %v3376 = vadd.f32 %v3132, %v3375
    %v3377 = vpop.f32.mrb[0].mxu0
    %v3378 = vadd.f32 %v3136, %v3377
    %3379 = vdwg.mxu0
    %3380 = vmatprep.subr.mxu0 %v2483
    %3381 = vmatpush1.msra.mxu0 %v2482
    %3382 = vmatprep.subr.mxu0 %v2488
    %3383 = vmatpush1.msra.mxu0 %v2487
    %3384 = vmatprep.subr.mxu0 %v2493
    %3385 = vmatpush1.msra.mxu0 %v2492
    %3386 = vmatprep.subr.mxu0 %v2498
    %3387 = vmatpush1.msra.mxu0 %v2497
    %3388 = vmatprep.subr.mxu0 %v2503
    %3389 = vmatpush1.msra.mxu0 %v2502
    %3390 = vmatprep.subr.mxu0 %v3162
    %3391 = vmatpush1.msra.mxu0 %v3159
    %3392 = vmatprep.subr.mxu0 0.0
    %3393 = vmatpush1.msra.mxu0 0.0
    %3394 = vmatprep.subr.mxu0 0.0
    %3395 = vmatpush1.msra.mxu0 0.0
    %3396 = vmatprep.subr.mxu0 0.0
    %3397 = vmatpush1.msra.mxu0 0.0
    %3398 = vmatprep.subr.mxu0 0.0
    %3399 = vmatpush1.msra.mxu0 0.0
    %3400 = vmatprep.subr.mxu0 0.0
    %3401 = vmatpush1.msra.mxu0 0.0
    %3402 = vmatprep.subr.mxu0 0.0
    %3403 = vmatpush1.msra.mxu0 0.0
    %3404 = vmatprep.subr.mxu0 0.0
    %3405 = vmatpush1.msra.mxu0 0.0
    %3406 = vmatprep.subr.mxu0 0.0
    %3407 = vmatpush1.msra.mxu0 0.0
    %3408 = vmatprep.subr.mxu0 0.0
    %3409 = vmatpush1.msra.mxu0 0.0
    %3410 = vmatprep.subr.mxu0 0.0
    %3411 = vmatpush1.msra.mxu0 0.0
    %3412 = vmatprep.subr.mxu0 0.0
    %3413 = vmatpush1.msra.mxu0 0.0
    %3414 = vmatprep.subr.mxu0 0.0
    %3415 = vmatpush1.msra.mxu0 0.0
    %3416 = vmatprep.subr.mxu0 0.0
    %3417 = vmatpush1.msra.mxu0 0.0
    %3418 = vmatprep.subr.mxu0 0.0
    %3419 = vmatpush1.msra.mxu0 0.0
    %3420 = vmatprep.subr.mxu0 0.0
    %3421 = vmatpush1.msra.mxu0 0.0
    %3422 = vmatprep.subr.mxu0 0.0
    %3423 = vmatpush1.msra.mxu0 0.0
    %3424 = vmatprep.subr.mxu0 0.0
    %3425 = vmatpush1.msra.mxu0 0.0
    %3426 = vmatprep.subr.mxu0 0.0
    %3427 = vmatpush1.msra.mxu0 0.0
    %3428 = vmatprep.subr.mxu0 0.0
    %3429 = vmatpush1.msra.mxu0 0.0
    %3430 = vmatprep.subr.mxu0 0.0
    %3431 = vmatpush1.msra.mxu0 0.0
    %3432 = vmatprep.subr.mxu0 0.0
    %3433 = vmatpush1.msra.mxu0 0.0
    %3434 = vmatprep.subr.mxu0 0.0
    %3435 = vmatpush1.msra.mxu0 0.0
    %3436 = vmatprep.subr.mxu0 0.0
    %3437 = vmatpush1.msra.mxu0 0.0
    %3438 = vmatprep.subr.mxu0 0.0
    %3439 = vmatpush1.msra.mxu0 0.0
    %3440 = vmatprep.subr.mxu0 0.0
    %3441 = vmatpush1.msra.mxu0 0.0
    %3442 = vmatprep.subr.mxu0 0.0
    %3443 = vmatpush1.msra.mxu0 0.0
    %3444 = vmatprep.mubr.f32.mxu0 0.0
    %3445 = vmatmul.mubr.f32.gmra.mrb[0].mxu0 %v3150
    %v3446 = vpop.f32.mrb[0].mxu0
    %v3447 = vadd.f32 %v3376, %v3446
    %v3448 = vpop.f32.mrb[0].mxu0
    %v3449 = vadd.f32 %v3378, %v3448
    %3450 = vdwg.mxu0
    %3451 = vmatprep.subr.mxu0 0.0
    %3452 = vmatpush1.msra.mxu0 %v2324
    %3453 = vmatprep.subr.mxu0 0.0
    %3454 = vmatpush1.msra.mxu0 %v2329
    %3455 = vmatprep.subr.mxu0 0.0
    %3456 = vmatpush1.msra.mxu0 %v2334
    %3457 = vmatprep.subr.mxu0 0.0
    %3458 = vmatpush1.msra.mxu0 %v2339
    %3459 = vmatprep.subr.mxu0 0.0
    %3460 = vmatpush1.msra.mxu0 %v2344
    %3461 = vmatprep.subr.mxu0 0.0
    %3462 = vmatpush1.msra.mxu0 %v2349
    %3463 = vmatprep.subr.mxu0 0.0
    %3464 = vmatpush1.msra.mxu0 %v2354
    %3465 = vmatprep.subr.mxu0 0.0
    %3466 = vmatpush1.msra.mxu0 %v2359
    %3467 = vmatprep.subr.mxu0 0.0
    %3468 = vmatpush1.msra.mxu0 %v2364
    %3469 = vmatprep.subr.mxu0 0.0
    %3470 = vmatpush1.msra.mxu0 %v2369
    %3471 = vmatprep.subr.mxu0 0.0
    %3472 = vmatpush1.msra.mxu0 %v2374
    %3473 = vmatprep.subr.mxu0 0.0
    %3474 = vmatpush1.msra.mxu0 %v2379
    %3475 = vmatprep.subr.mxu0 0.0
    %3476 = vmatpush1.msra.mxu0 %v2384
    %3477 = vmatprep.subr.mxu0 0.0
    %3478 = vmatpush1.msra.mxu0 %v2389
    %3479 = vmatprep.subr.mxu0 0.0
    %3480 = vmatpush1.msra.mxu0 %v2394
    %3481 = vmatprep.subr.mxu0 0.0
    %3482 = vmatpush1.msra.mxu0 %v2399
    %3483 = vmatprep.subr.mxu0 0.0
    %3484 = vmatpush1.msra.mxu0 %v2404
    %3485 = vmatprep.subr.mxu0 0.0
    %3486 = vmatpush1.msra.mxu0 %v2409
    %3487 = vmatprep.subr.mxu0 0.0
    %3488 = vmatpush1.msra.mxu0 %v2414
    %3489 = vmatprep.subr.mxu0 0.0
    %3490 = vmatpush1.msra.mxu0 %v2419
    %3491 = vmatprep.subr.mxu0 0.0
    %3492 = vmatpush1.msra.mxu0 %v2424
    %3493 = vmatprep.subr.mxu0 0.0
    %3494 = vmatpush1.msra.mxu0 %v2429
    %3495 = vmatprep.subr.mxu0 0.0
    %3496 = vmatpush1.msra.mxu0 %v2434
    %3497 = vmatprep.subr.mxu0 0.0
    %3498 = vmatpush1.msra.mxu0 %v2439
    %3499 = vmatprep.subr.mxu0 0.0
    %3500 = vmatpush1.msra.mxu0 %v2444
    %3501 = vmatprep.subr.mxu0 0.0
    %3502 = vmatpush1.msra.mxu0 %v2449
    %3503 = vmatprep.subr.mxu0 0.0
    %3504 = vmatpush1.msra.mxu0 %v2454
    %3505 = vmatprep.subr.mxu0 0.0
    %3506 = vmatpush1.msra.mxu0 %v2459
    %3507 = vmatprep.subr.mxu0 0.0
    %3508 = vmatpush1.msra.mxu0 %v2464
    %3509 = vmatprep.subr.mxu0 0.0
    %3510 = vmatpush1.msra.mxu0 %v2469
    %3511 = vmatprep.subr.mxu0 0.0
    %3512 = vmatpush1.msra.mxu0 %v2474
    %3513 = vmatprep.subr.mxu0 0.0
    %3514 = vmatpush1.msra.mxu0 %v2479
    %3515 = vmatprep.mubr.f32.mxu0 %v3148
    %3516 = vmatmul.mubr.f32.gmra.mrb[0].mxu0 %v2318
    %v3517 = vpop.f32.mrb[0].mxu0
    %v3518 = vadd.f32 %v3140, %v3517
    %v3519 = vpop.f32.mrb[0].mxu0
    %3520 = vdwg.mxu0
    %3521 = vmatprep.subr.mxu0 0.0
    %3522 = vmatpush1.msra.mxu0 %v2484
    %3523 = vmatprep.subr.mxu0 0.0
    %3524 = vmatpush1.msra.mxu0 %v2489
    %3525 = vmatprep.subr.mxu0 0.0
    %3526 = vmatpush1.msra.mxu0 %v2494
    %3527 = vmatprep.subr.mxu0 0.0
    %3528 = vmatpush1.msra.mxu0 %v2499
    %3529 = vmatprep.subr.mxu0 0.0
    %3530 = vmatpush1.msra.mxu0 %v2504
    %3531 = vmatprep.subr.mxu0 0.0
    %3532 = vmatpush1.msra.mxu0 %v3165
    %3533 = vmatprep.subr.mxu0 0.0
    %3534 = vmatpush1.msra.mxu0 0.0
    %3535 = vmatprep.subr.mxu0 0.0
    %3536 = vmatpush1.msra.mxu0 0.0
    %3537 = vmatprep.subr.mxu0 0.0
    %3538 = vmatpush1.msra.mxu0 0.0
    %3539 = vmatprep.subr.mxu0 0.0
    %3540 = vmatpush1.msra.mxu0 0.0
    %3541 = vmatprep.subr.mxu0 0.0
    %3542 = vmatpush1.msra.mxu0 0.0
    %3543 = vmatprep.subr.mxu0 0.0
    %3544 = vmatpush1.msra.mxu0 0.0
    %3545 = vmatprep.subr.mxu0 0.0
    %3546 = vmatpush1.msra.mxu0 0.0
    %3547 = vmatprep.subr.mxu0 0.0
    %3548 = vmatpush1.msra.mxu0 0.0
    %3549 = vmatprep.subr.mxu0 0.0
    %3550 = vmatpush1.msra.mxu0 0.0
    %3551 = vmatprep.subr.mxu0 0.0
    %3552 = vmatpush1.msra.mxu0 0.0
    %3553 = vmatprep.subr.mxu0 0.0
    %3554 = vmatpush1.msra.mxu0 0.0
    %3555 = vmatprep.subr.mxu0 0.0
    %3556 = vmatpush1.msra.mxu0 0.0
    %3557 = vmatprep.subr.mxu0 0.0
    %3558 = vmatpush1.msra.mxu0 0.0
    %3559 = vmatprep.subr.mxu0 0.0
    %3560 = vmatpush1.msra.mxu0 0.0
    %3561 = vmatprep.subr.mxu0 0.0
    %3562 = vmatpush1.msra.mxu0 0.0
    %3563 = vmatprep.subr.mxu0 0.0
    %3564 = vmatpush1.msra.mxu0 0.0
    %3565 = vmatprep.subr.mxu0 0.0
    %3566 = vmatpush1.msra.mxu0 0.0
    %3567 = vmatprep.subr.mxu0 0.0
    %3568 = vmatpush1.msra.mxu0 0.0
    %3569 = vmatprep.subr.mxu0 0.0
    %3570 = vmatpush1.msra.mxu0 0.0
    %3571 = vmatprep.subr.mxu0 0.0
    %3572 = vmatpush1.msra.mxu0 0.0
    %3573 = vmatprep.subr.mxu0 0.0
    %3574 = vmatpush1.msra.mxu0 0.0
    %3575 = vmatprep.subr.mxu0 0.0
    %3576 = vmatpush1.msra.mxu0 0.0
    %3577 = vmatprep.subr.mxu0 0.0
    %3578 = vmatpush1.msra.mxu0 0.0
    %3579 = vmatprep.subr.mxu0 0.0
    %3580 = vmatpush1.msra.mxu0 0.0
    %3581 = vmatprep.subr.mxu0 0.0
    %3582 = vmatpush1.msra.mxu0 0.0
    %3583 = vmatprep.subr.mxu0 0.0
    %3584 = vmatpush1.msra.mxu0 0.0
    %3585 = vmatprep.mubr.f32.mxu0 0.0
    %3586 = vmatmul.mubr.f32.gmra.mrb[0].mxu0 %v3150
    %v3587 = vpop.f32.mrb[0].mxu0
    %v3588 = vadd.f32 %v3518, %v3587
    %v3589 = vpop.f32.mrb[0].mxu0
    %3590 = vdwg.mxu0
    %v3591 = vxor.u32 %v3305, 2147483648
    %v3592 = vxor.u32 %v3307, 2147483648
    %v3593 = vxor.u32 %v3447, 2147483648
    %v3594 = vxor.u32 %v3449, 2147483648
    %v3595 = vxor.u32 %v3588, 2147483648
    %v3596 = vmul.f32 %v3591, 1.442695
    %v3597 = vpow.pop %v3596
    %v3598 = vmul.f32 %v3592, 1.442695
    %v3599 = vpow.pop %v3598
    %v3600 = vmul.f32 %v3593, 1.442695
    %v3601 = vpow.pop %v3600
    %v3602 = vmul.f32 %v3594, 1.442695
    %v3603 = vpow.pop %v3602
    %v3604 = vmul.f32 %v3595, 1.442695
    %v3605 = vpow.pop %v3604
    %v3606 = vadd.f32 %v3597, 1.0
    %v3607 = vadd.f32 %v3599, 1.0
    %v3608 = vadd.f32 %v3601, 1.0
    %v3609 = vadd.f32 %v3603, 1.0
    %v3610 = vadd.f32 %v3605, 1.0
    %v3611 = vrcp.pop %v3606
    %v3612 = vmul.f32 1.0, %v3611
    %v3613 = vrcp.pop %v3607
    %v3614 = vmul.f32 1.0, %v3613
    %v3615 = vrcp.pop %v3608
    %v3616 = vmul.f32 1.0, %v3615
    %v3617 = vrcp.pop %v3609
    %v3618 = vmul.f32 1.0, %v3617
    %v3619 = vrcp.pop %v3610
    %v3620 = vmul.f32 1.0, %v3619
    %v3622 = vlaneseq
    %v3623 = vshrl.u32 %v3622, 7
    %v3624 = vsub.s32 0, %v3623
    %v3625 = vrot.slane %v3111, %v3624
    %v3626 = vlaneseq
    %v3627 = vshrl.u32 %v3626, 7
    %v3628 = vsub.s32 1, %v3627
    %v3629 = vrot.slane %v3111, %v3628
    %v3630 = vlaneseq
    %v3631 = vshrl.u32 %v3630, 7
    %v3632 = vsub.s32 2, %v3631
    %v3633 = vrot.slane %v3111, %v3632
    %v3634 = vlaneseq
    %v3635 = vshrl.u32 %v3634, 7
    %v3636 = vsub.s32 3, %v3635
    %v3637 = vrot.slane %v3111, %v3636
    %v3638 = vlaneseq
    %v3639 = vshrl.u32 %v3638, 7
    %v3640 = vsub.s32 4, %v3639
    %v3641 = vrot.slane %v3111, %v3640
    %v3642 = vlaneseq
    %v3643 = vshrl.u32 %v3642, 7
    %v3644 = vsub.s32 5, %v3643
    %v3645 = vrot.slane %v3111, %v3644
    %v3646 = vlaneseq
    %v3647 = vshrl.u32 %v3646, 7
    %v3648 = vsub.s32 6, %v3647
    %v3649 = vrot.slane %v3111, %v3648
    %v3650 = vlaneseq
    %v3651 = vshrl.u32 %v3650, 7
    %v3652 = vsub.s32 7, %v3651
    %v3653 = vrot.slane %v3111, %v3652
    %v3663 = vsel %vm1430, %v3620, 0
    %3665 = vmatprep.subr.mxu0 %v2512
    %3666 = vmatpush1.msra.mxu0 %v2511
    %3667 = vmatprep.subr.mxu0 %v2520
    %3668 = vmatpush1.msra.mxu0 %v2519
    %3669 = vmatprep.subr.mxu0 %v2528
    %3670 = vmatpush1.msra.mxu0 %v2527
    %3671 = vmatprep.subr.mxu0 %v2536
    %3672 = vmatpush1.msra.mxu0 %v2535
    %3673 = vmatprep.subr.mxu0 %v2544
    %3674 = vmatpush1.msra.mxu0 %v2543
    %3675 = vmatprep.subr.mxu0 %v2552
    %3676 = vmatpush1.msra.mxu0 %v2551
    %3677 = vmatprep.subr.mxu0 %v2560
    %3678 = vmatpush1.msra.mxu0 %v2559
    %3679 = vmatprep.subr.mxu0 %v2568
    %3680 = vmatpush1.msra.mxu0 %v2567
    %3681 = vmatprep.subr.mxu0 %v2576
    %3682 = vmatpush1.msra.mxu0 %v2575
    %3683 = vmatprep.subr.mxu0 %v2584
    %3684 = vmatpush1.msra.mxu0 %v2583
    %3685 = vmatprep.subr.mxu0 %v2592
    %3686 = vmatpush1.msra.mxu0 %v2591
    %3687 = vmatprep.subr.mxu0 %v2600
    %3688 = vmatpush1.msra.mxu0 %v2599
    %3689 = vmatprep.subr.mxu0 %v2608
    %3690 = vmatpush1.msra.mxu0 %v2607
    %3691 = vmatprep.subr.mxu0 %v2616
    %3692 = vmatpush1.msra.mxu0 %v2615
    %3693 = vmatprep.subr.mxu0 %v2624
    %3694 = vmatpush1.msra.mxu0 %v2623
    %3695 = vmatprep.subr.mxu0 %v2632
    %3696 = vmatpush1.msra.mxu0 %v2631
    %3697 = vmatprep.subr.mxu0 %v2640
    %3698 = vmatpush1.msra.mxu0 %v2639
    %3699 = vmatprep.subr.mxu0 %v2648
    %3700 = vmatpush1.msra.mxu0 %v2647
    %3701 = vmatprep.subr.mxu0 %v2656
    %3702 = vmatpush1.msra.mxu0 %v2655
    %3703 = vmatprep.subr.mxu0 %v2664
    %3704 = vmatpush1.msra.mxu0 %v2663
    %3705 = vmatprep.subr.mxu0 %v2672
    %3706 = vmatpush1.msra.mxu0 %v2671
    %3707 = vmatprep.subr.mxu0 %v2680
    %3708 = vmatpush1.msra.mxu0 %v2679
    %3709 = vmatprep.subr.mxu0 %v2688
    %3710 = vmatpush1.msra.mxu0 %v2687
    %3711 = vmatprep.subr.mxu0 %v2696
    %3712 = vmatpush1.msra.mxu0 %v2695
    %3713 = vmatprep.subr.mxu0 %v2704
    %3714 = vmatpush1.msra.mxu0 %v2703
    %3715 = vmatprep.subr.mxu0 %v2712
    %3716 = vmatpush1.msra.mxu0 %v2711
    %3717 = vmatprep.subr.mxu0 %v2720
    %3718 = vmatpush1.msra.mxu0 %v2719
    %3719 = vmatprep.subr.mxu0 %v2728
    %3720 = vmatpush1.msra.mxu0 %v2727
    %3721 = vmatprep.subr.mxu0 %v2736
    %3722 = vmatpush1.msra.mxu0 %v2735
    %3723 = vmatprep.subr.mxu0 %v2744
    %3724 = vmatpush1.msra.mxu0 %v2743
    %3725 = vmatprep.subr.mxu0 %v2752
    %3726 = vmatpush1.msra.mxu0 %v2751
    %3727 = vmatprep.subr.mxu0 %v2760
    %3728 = vmatpush1.msra.mxu0 %v2759
    %3729 = vmatprep.mubr.f32.mxu0 %v3614
    %3730 = vmatmul.mubr.f32.gmra.mrb[0].mxu0 %v3612
    %v3731 = vpop.f32.mrb[0].mxu0
    %v3732 = vadd.f32 %v3625, %v3731
    %v3733 = vpop.f32.mrb[0].mxu0
    %v3734 = vadd.f32 %v3629, %v3733
    %3735 = vdwg.mxu0
    %3736 = vmatprep.subr.mxu0 %v2768
    %3737 = vmatpush1.msra.mxu0 %v2767
    %3738 = vmatprep.subr.mxu0 %v2776
    %3739 = vmatpush1.msra.mxu0 %v2775
    %3740 = vmatprep.subr.mxu0 %v2784
    %3741 = vmatpush1.msra.mxu0 %v2783
    %3742 = vmatprep.subr.mxu0 %v2792
    %3743 = vmatpush1.msra.mxu0 %v2791
    %3744 = vmatprep.subr.mxu0 %v2800
    %3745 = vmatpush1.msra.mxu0 %v2799
    %3746 = vmatprep.subr.mxu0 %v2808
    %3747 = vmatpush1.msra.mxu0 %v2807
    %3748 = vmatprep.subr.mxu0 %v2816
    %3749 = vmatpush1.msra.mxu0 %v2815
    %3750 = vmatprep.subr.mxu0 %v2824
    %3751 = vmatpush1.msra.mxu0 %v2823
    %3752 = vmatprep.subr.mxu0 %v2832
    %3753 = vmatpush1.msra.mxu0 %v2831
    %3754 = vmatprep.subr.mxu0 %v2840
    %3755 = vmatpush1.msra.mxu0 %v2839
    %3756 = vmatprep.subr.mxu0 %v2848
    %3757 = vmatpush1.msra.mxu0 %v2847
    %3758 = vmatprep.subr.mxu0 %v2856
    %3759 = vmatpush1.msra.mxu0 %v2855
    %3760 = vmatprep.subr.mxu0 %v2864
    %3761 = vmatpush1.msra.mxu0 %v2863
    %3762 = vmatprep.subr.mxu0 %v2872
    %3763 = vmatpush1.msra.mxu0 %v2871
    %3764 = vmatprep.subr.mxu0 %v2880
    %3765 = vmatpush1.msra.mxu0 %v2879
    %3766 = vmatprep.subr.mxu0 %v2888
    %3767 = vmatpush1.msra.mxu0 %v2887
    %3768 = vmatprep.subr.mxu0 %v2896
    %3769 = vmatpush1.msra.mxu0 %v2895
    %3770 = vmatprep.subr.mxu0 %v2904
    %3771 = vmatpush1.msra.mxu0 %v2903
    %3772 = vmatprep.subr.mxu0 %v2912
    %3773 = vmatpush1.msra.mxu0 %v2911
    %3774 = vmatprep.subr.mxu0 %v2920
    %3775 = vmatpush1.msra.mxu0 %v2919
    %3776 = vmatprep.subr.mxu0 %v2928
    %3777 = vmatpush1.msra.mxu0 %v2927
    %3778 = vmatprep.subr.mxu0 %v2936
    %3779 = vmatpush1.msra.mxu0 %v2935
    %3780 = vmatprep.subr.mxu0 %v2944
    %3781 = vmatpush1.msra.mxu0 %v2943
    %3782 = vmatprep.subr.mxu0 %v2952
    %3783 = vmatpush1.msra.mxu0 %v2951
    %3784 = vmatprep.subr.mxu0 %v2960
    %3785 = vmatpush1.msra.mxu0 %v2959
    %3786 = vmatprep.subr.mxu0 %v2968
    %3787 = vmatpush1.msra.mxu0 %v2967
    %3788 = vmatprep.subr.mxu0 %v2976
    %3789 = vmatpush1.msra.mxu0 %v2975
    %3790 = vmatprep.subr.mxu0 %v2984
    %3791 = vmatpush1.msra.mxu0 %v2983
    %3792 = vmatprep.subr.mxu0 %v2992
    %3793 = vmatpush1.msra.mxu0 %v2991
    %3794 = vmatprep.subr.mxu0 %v3000
    %3795 = vmatpush1.msra.mxu0 %v2999
    %3796 = vmatprep.subr.mxu0 %v3008
    %3797 = vmatpush1.msra.mxu0 %v3007
    %3798 = vmatprep.subr.mxu0 %v3016
    %3799 = vmatpush1.msra.mxu0 %v3015
    %3800 = vmatprep.mubr.f32.mxu0 %v3618
    %3801 = vmatmul.mubr.f32.gmra.mrb[0].mxu0 %v3616
    %v3802 = vpop.f32.mrb[0].mxu0
    %v3803 = vadd.f32 %v3732, %v3802
    %v3804 = vpop.f32.mrb[0].mxu0
    %v3805 = vadd.f32 %v3734, %v3804
    %3806 = vdwg.mxu0
    %3807 = vmatprep.subr.mxu0 %v3024
    %3808 = vmatpush1.msra.mxu0 %v3023
    %3809 = vmatprep.subr.mxu0 %v3032
    %3810 = vmatpush1.msra.mxu0 %v3031
    %3811 = vmatprep.subr.mxu0 %v3040
    %3812 = vmatpush1.msra.mxu0 %v3039
    %3813 = vmatprep.subr.mxu0 %v3048
    %3814 = vmatpush1.msra.mxu0 %v3047
    %3815 = vmatprep.subr.mxu0 %v3056
    %3816 = vmatpush1.msra.mxu0 %v3055
    %3817 = vmatprep.subr.mxu0 %v3064
    %3818 = vmatpush1.msra.mxu0 %v3063
    %3819 = vmatprep.subr.mxu0 %v3072
    %3820 = vmatpush1.msra.mxu0 %v3071
    %3821 = vmatprep.subr.mxu0 %v3080
    %3822 = vmatpush1.msra.mxu0 %v3079
    %3823 = vmatprep.subr.mxu0 %v3088
    %3824 = vmatpush1.msra.mxu0 %v3087
    %3825 = vmatprep.subr.mxu0 %v3096
    %3826 = vmatpush1.msra.mxu0 %v3095
    %3827 = vmatprep.subr.mxu0 %v3104
    %3828 = vmatpush1.msra.mxu0 %v3103
    %3829 = vmatprep.subr.mxu0 0.0
    %3830 = vmatpush1.msra.mxu0 0.0
    %3831 = vmatprep.subr.mxu0 0.0
    %3832 = vmatpush1.msra.mxu0 0.0
    %3833 = vmatprep.subr.mxu0 0.0
    %3834 = vmatpush1.msra.mxu0 0.0
    %3835 = vmatprep.subr.mxu0 0.0
    %3836 = vmatpush1.msra.mxu0 0.0
    %3837 = vmatprep.subr.mxu0 0.0
    %3838 = vmatpush1.msra.mxu0 0.0
    %3839 = vmatprep.subr.mxu0 0.0
    %3840 = vmatpush1.msra.mxu0 0.0
    %3841 = vmatprep.subr.mxu0 0.0
    %3842 = vmatpush1.msra.mxu0 0.0
    %3843 = vmatprep.subr.mxu0 0.0
    %3844 = vmatpush1.msra.mxu0 0.0
    %3845 = vmatprep.subr.mxu0 0.0
    %3846 = vmatpush1.msra.mxu0 0.0
    %3847 = vmatprep.subr.mxu0 0.0
    %3848 = vmatpush1.msra.mxu0 0.0
    %3849 = vmatprep.subr.mxu0 0.0
    %3850 = vmatpush1.msra.mxu0 0.0
    %3851 = vmatprep.subr.mxu0 0.0
    %3852 = vmatpush1.msra.mxu0 0.0
    %3853 = vmatprep.subr.mxu0 0.0
    %3854 = vmatpush1.msra.mxu0 0.0
    %3855 = vmatprep.subr.mxu0 0.0
    %3856 = vmatpush1.msra.mxu0 0.0
    %3857 = vmatprep.subr.mxu0 0.0
    %3858 = vmatpush1.msra.mxu0 0.0
    %3859 = vmatprep.subr.mxu0 0.0
    %3860 = vmatpush1.msra.mxu0 0.0
    %3861 = vmatprep.subr.mxu0 0.0
    %3862 = vmatpush1.msra.mxu0 0.0
    %3863 = vmatprep.subr.mxu0 0.0
    %3864 = vmatpush1.msra.mxu0 0.0
    %3865 = vmatprep.subr.mxu0 0.0
    %3866 = vmatpush1.msra.mxu0 0.0
    %3867 = vmatprep.subr.mxu0 0.0
    %3868 = vmatpush1.msra.mxu0 0.0
    %3869 = vmatprep.subr.mxu0 0.0
    %3870 = vmatpush1.msra.mxu0 0.0
    %3871 = vmatprep.mubr.f32.mxu0 0.0
    %3872 = vmatmul.mubr.f32.gmra.mrb[0].mxu0 %v3663
    %v3873 = vpop.f32.mrb[0].mxu0
    %v3874 = vadd.f32 %v3803, %v3873
    %v3875 = vpop.f32.mrb[0].mxu0
    %v3876 = vadd.f32 %v3805, %v3875
    %3877 = vdwg.mxu0
    %3878 = vmatprep.subr.mxu0 %v2514
    %3879 = vmatpush1.msra.mxu0 %v2513
    %3880 = vmatprep.subr.mxu0 %v2522
    %3881 = vmatpush1.msra.mxu0 %v2521
    %3882 = vmatprep.subr.mxu0 %v2530
    %3883 = vmatpush1.msra.mxu0 %v2529
    %3884 = vmatprep.subr.mxu0 %v2538
    %3885 = vmatpush1.msra.mxu0 %v2537
    %3886 = vmatprep.subr.mxu0 %v2546
    %3887 = vmatpush1.msra.mxu0 %v2545
    %3888 = vmatprep.subr.mxu0 %v2554
    %3889 = vmatpush1.msra.mxu0 %v2553
    %3890 = vmatprep.subr.mxu0 %v2562
    %3891 = vmatpush1.msra.mxu0 %v2561
    %3892 = vmatprep.subr.mxu0 %v2570
    %3893 = vmatpush1.msra.mxu0 %v2569
    %3894 = vmatprep.subr.mxu0 %v2578
    %3895 = vmatpush1.msra.mxu0 %v2577
    %3896 = vmatprep.subr.mxu0 %v2586
    %3897 = vmatpush1.msra.mxu0 %v2585
    %3898 = vmatprep.subr.mxu0 %v2594
    %3899 = vmatpush1.msra.mxu0 %v2593
    %3900 = vmatprep.subr.mxu0 %v2602
    %3901 = vmatpush1.msra.mxu0 %v2601
    %3902 = vmatprep.subr.mxu0 %v2610
    %3903 = vmatpush1.msra.mxu0 %v2609
    %3904 = vmatprep.subr.mxu0 %v2618
    %3905 = vmatpush1.msra.mxu0 %v2617
    %3906 = vmatprep.subr.mxu0 %v2626
    %3907 = vmatpush1.msra.mxu0 %v2625
    %3908 = vmatprep.subr.mxu0 %v2634
    %3909 = vmatpush1.msra.mxu0 %v2633
    %3910 = vmatprep.subr.mxu0 %v2642
    %3911 = vmatpush1.msra.mxu0 %v2641
    %3912 = vmatprep.subr.mxu0 %v2650
    %3913 = vmatpush1.msra.mxu0 %v2649
    %3914 = vmatprep.subr.mxu0 %v2658
    %3915 = vmatpush1.msra.mxu0 %v2657
    %3916 = vmatprep.subr.mxu0 %v2666
    %3917 = vmatpush1.msra.mxu0 %v2665
    %3918 = vmatprep.subr.mxu0 %v2674
    %3919 = vmatpush1.msra.mxu0 %v2673
    %3920 = vmatprep.subr.mxu0 %v2682
    %3921 = vmatpush1.msra.mxu0 %v2681
    %3922 = vmatprep.subr.mxu0 %v2690
    %3923 = vmatpush1.msra.mxu0 %v2689
    %3924 = vmatprep.subr.mxu0 %v2698
    %3925 = vmatpush1.msra.mxu0 %v2697
    %3926 = vmatprep.subr.mxu0 %v2706
    %3927 = vmatpush1.msra.mxu0 %v2705
    %3928 = vmatprep.subr.mxu0 %v2714
    %3929 = vmatpush1.msra.mxu0 %v2713
    %3930 = vmatprep.subr.mxu0 %v2722
    %3931 = vmatpush1.msra.mxu0 %v2721
    %3932 = vmatprep.subr.mxu0 %v2730
    %3933 = vmatpush1.msra.mxu0 %v2729
    %3934 = vmatprep.subr.mxu0 %v2738
    %3935 = vmatpush1.msra.mxu0 %v2737
    %3936 = vmatprep.subr.mxu0 %v2746
    %3937 = vmatpush1.msra.mxu0 %v2745
    %3938 = vmatprep.subr.mxu0 %v2754
    %3939 = vmatpush1.msra.mxu0 %v2753
    %3940 = vmatprep.subr.mxu0 %v2762
    %3941 = vmatpush1.msra.mxu0 %v2761
    %3942 = vmatprep.mubr.f32.mxu0 %v3614
    %3943 = vmatmul.mubr.f32.gmra.mrb[0].mxu0 %v3612
    %v3944 = vpop.f32.mrb[0].mxu0
    %v3945 = vadd.f32 %v3633, %v3944
    %v3946 = vpop.f32.mrb[0].mxu0
    %v3947 = vadd.f32 %v3637, %v3946
    %3948 = vdwg.mxu0
    %3949 = vmatprep.subr.mxu0 %v2770
    %3950 = vmatpush1.msra.mxu0 %v2769
    %3951 = vmatprep.subr.mxu0 %v2778
    %3952 = vmatpush1.msra.mxu0 %v2777
    %3953 = vmatprep.subr.mxu0 %v2786
    %3954 = vmatpush1.msra.mxu0 %v2785
    %3955 = vmatprep.subr.mxu0 %v2794
    %3956 = vmatpush1.msra.mxu0 %v2793
    %3957 = vmatprep.subr.mxu0 %v2802
    %3958 = vmatpush1.msra.mxu0 %v2801
    %3959 = vmatprep.subr.mxu0 %v2810
    %3960 = vmatpush1.msra.mxu0 %v2809
    %3961 = vmatprep.subr.mxu0 %v2818
    %3962 = vmatpush1.msra.mxu0 %v2817
    %3963 = vmatprep.subr.mxu0 %v2826
    %3964 = vmatpush1.msra.mxu0 %v2825
    %3965 = vmatprep.subr.mxu0 %v2834
    %3966 = vmatpush1.msra.mxu0 %v2833
    %3967 = vmatprep.subr.mxu0 %v2842
    %3968 = vmatpush1.msra.mxu0 %v2841
    %3969 = vmatprep.subr.mxu0 %v2850
    %3970 = vmatpush1.msra.mxu0 %v2849
    %3971 = vmatprep.subr.mxu0 %v2858
    %3972 = vmatpush1.msra.mxu0 %v2857
    %3973 = vmatprep.subr.mxu0 %v2866
    %3974 = vmatpush1.msra.mxu0 %v2865
    %3975 = vmatprep.subr.mxu0 %v2874
    %3976 = vmatpush1.msra.mxu0 %v2873
    %3977 = vmatprep.subr.mxu0 %v2882
    %3978 = vmatpush1.msra.mxu0 %v2881
    %3979 = vmatprep.subr.mxu0 %v2890
    %3980 = vmatpush1.msra.mxu0 %v2889
    %3981 = vmatprep.subr.mxu0 %v2898
    %3982 = vmatpush1.msra.mxu0 %v2897
    %3983 = vmatprep.subr.mxu0 %v2906
    %3984 = vmatpush1.msra.mxu0 %v2905
    %3985 = vmatprep.subr.mxu0 %v2914
    %3986 = vmatpush1.msra.mxu0 %v2913
    %3987 = vmatprep.subr.mxu0 %v2922
    %3988 = vmatpush1.msra.mxu0 %v2921
    %3989 = vmatprep.subr.mxu0 %v2930
    %3990 = vmatpush1.msra.mxu0 %v2929
    %3991 = vmatprep.subr.mxu0 %v2938
    %3992 = vmatpush1.msra.mxu0 %v2937
    %3993 = vmatprep.subr.mxu0 %v2946
    %3994 = vmatpush1.msra.mxu0 %v2945
    %3995 = vmatprep.subr.mxu0 %v2954
    %3996 = vmatpush1.msra.mxu0 %v2953
    %3997 = vmatprep.subr.mxu0 %v2962
    %3998 = vmatpush1.msra.mxu0 %v2961
    %3999 = vmatprep.subr.mxu0 %v2970
    %4000 = vmatpush1.msra.mxu0 %v2969
    %4001 = vmatprep.subr.mxu0 %v2978
    %4002 = vmatpush1.msra.mxu0 %v2977
    %4003 = vmatprep.subr.mxu0 %v2986
    %4004 = vmatpush1.msra.mxu0 %v2985
    %4005 = vmatprep.subr.mxu0 %v2994
    %4006 = vmatpush1.msra.mxu0 %v2993
    %4007 = vmatprep.subr.mxu0 %v3002
    %4008 = vmatpush1.msra.mxu0 %v3001
    %4009 = vmatprep.subr.mxu0 %v3010
    %4010 = vmatpush1.msra.mxu0 %v3009
    %4011 = vmatprep.subr.mxu0 %v3018
    %4012 = vmatpush1.msra.mxu0 %v3017
    %4013 = vmatprep.mubr.f32.mxu0 %v3618
    %4014 = vmatmul.mubr.f32.gmra.mrb[0].mxu0 %v3616
    %v4015 = vpop.f32.mrb[0].mxu0
    %v4016 = vadd.f32 %v3945, %v4015
    %v4017 = vpop.f32.mrb[0].mxu0
    %v4018 = vadd.f32 %v3947, %v4017
    %4019 = vdwg.mxu0
    %4020 = vmatprep.subr.mxu0 %v3026
    %4021 = vmatpush1.msra.mxu0 %v3025
    %4022 = vmatprep.subr.mxu0 %v3034
    %4023 = vmatpush1.msra.mxu0 %v3033
    %4024 = vmatprep.subr.mxu0 %v3042
    %4025 = vmatpush1.msra.mxu0 %v3041
    %4026 = vmatprep.subr.mxu0 %v3050
    %4027 = vmatpush1.msra.mxu0 %v3049
    %4028 = vmatprep.subr.mxu0 %v3058
    %4029 = vmatpush1.msra.mxu0 %v3057
    %4030 = vmatprep.subr.mxu0 %v3066
    %4031 = vmatpush1.msra.mxu0 %v3065
    %4032 = vmatprep.subr.mxu0 %v3074
    %4033 = vmatpush1.msra.mxu0 %v3073
    %4034 = vmatprep.subr.mxu0 %v3082
    %4035 = vmatpush1.msra.mxu0 %v3081
    %4036 = vmatprep.subr.mxu0 %v3090
    %4037 = vmatpush1.msra.mxu0 %v3089
    %4038 = vmatprep.subr.mxu0 %v3098
    %4039 = vmatpush1.msra.mxu0 %v3097
    %4040 = vmatprep.subr.mxu0 %v3106
    %4041 = vmatpush1.msra.mxu0 %v3105
    %4042 = vmatprep.subr.mxu0 0.0
    %4043 = vmatpush1.msra.mxu0 0.0
    %4044 = vmatprep.subr.mxu0 0.0
    %4045 = vmatpush1.msra.mxu0 0.0
    %4046 = vmatprep.subr.mxu0 0.0
    %4047 = vmatpush1.msra.mxu0 0.0
    %4048 = vmatprep.subr.mxu0 0.0
    %4049 = vmatpush1.msra.mxu0 0.0
    %4050 = vmatprep.subr.mxu0 0.0
    %4051 = vmatpush1.msra.mxu0 0.0
    %4052 = vmatprep.subr.mxu0 0.0
    %4053 = vmatpush1.msra.mxu0 0.0
    %4054 = vmatprep.subr.mxu0 0.0
    %4055 = vmatpush1.msra.mxu0 0.0
    %4056 = vmatprep.subr.mxu0 0.0
    %4057 = vmatpush1.msra.mxu0 0.0
    %4058 = vmatprep.subr.mxu0 0.0
    %4059 = vmatpush1.msra.mxu0 0.0
    %4060 = vmatprep.subr.mxu0 0.0
    %4061 = vmatpush1.msra.mxu0 0.0
    %4062 = vmatprep.subr.mxu0 0.0
    %4063 = vmatpush1.msra.mxu0 0.0
    %4064 = vmatprep.subr.mxu0 0.0
    %4065 = vmatpush1.msra.mxu0 0.0
    %4066 = vmatprep.subr.mxu0 0.0
    %4067 = vmatpush1.msra.mxu0 0.0
    %4068 = vmatprep.subr.mxu0 0.0
    %4069 = vmatpush1.msra.mxu0 0.0
    %4070 = vmatprep.subr.mxu0 0.0
    %4071 = vmatpush1.msra.mxu0 0.0
    %4072 = vmatprep.subr.mxu0 0.0
    %4073 = vmatpush1.msra.mxu0 0.0
    %4074 = vmatprep.subr.mxu0 0.0
    %4075 = vmatpush1.msra.mxu0 0.0
    %4076 = vmatprep.subr.mxu0 0.0
    %4077 = vmatpush1.msra.mxu0 0.0
    %4078 = vmatprep.subr.mxu0 0.0
    %4079 = vmatpush1.msra.mxu0 0.0
    %4080 = vmatprep.subr.mxu0 0.0
    %4081 = vmatpush1.msra.mxu0 0.0
    %4082 = vmatprep.subr.mxu0 0.0
    %4083 = vmatpush1.msra.mxu0 0.0
    %4084 = vmatprep.mubr.f32.mxu0 0.0
    %4085 = vmatmul.mubr.f32.gmra.mrb[0].mxu0 %v3663
    %v4086 = vpop.f32.mrb[0].mxu0
    %v4087 = vadd.f32 %v4016, %v4086
    %v4088 = vpop.f32.mrb[0].mxu0
    %v4089 = vadd.f32 %v4018, %v4088
    %4090 = vdwg.mxu0
    %4091 = vmatprep.subr.mxu0 %v2516
    %4092 = vmatpush1.msra.mxu0 %v2515
    %4093 = vmatprep.subr.mxu0 %v2524
    %4094 = vmatpush1.msra.mxu0 %v2523
    %4095 = vmatprep.subr.mxu0 %v2532
    %4096 = vmatpush1.msra.mxu0 %v2531
    %4097 = vmatprep.subr.mxu0 %v2540
    %4098 = vmatpush1.msra.mxu0 %v2539
    %4099 = vmatprep.subr.mxu0 %v2548
    %4100 = vmatpush1.msra.mxu0 %v2547
    %4101 = vmatprep.subr.mxu0 %v2556
    %4102 = vmatpush1.msra.mxu0 %v2555
    %4103 = vmatprep.subr.mxu0 %v2564
    %4104 = vmatpush1.msra.mxu0 %v2563
    %4105 = vmatprep.subr.mxu0 %v2572
    %4106 = vmatpush1.msra.mxu0 %v2571
    %4107 = vmatprep.subr.mxu0 %v2580
    %4108 = vmatpush1.msra.mxu0 %v2579
    %4109 = vmatprep.subr.mxu0 %v2588
    %4110 = vmatpush1.msra.mxu0 %v2587
    %4111 = vmatprep.subr.mxu0 %v2596
    %4112 = vmatpush1.msra.mxu0 %v2595
    %4113 = vmatprep.subr.mxu0 %v2604
    %4114 = vmatpush1.msra.mxu0 %v2603
    %4115 = vmatprep.subr.mxu0 %v2612
    %4116 = vmatpush1.msra.mxu0 %v2611
    %4117 = vmatprep.subr.mxu0 %v2620
    %4118 = vmatpush1.msra.mxu0 %v2619
    %4119 = vmatprep.subr.mxu0 %v2628
    %4120 = vmatpush1.msra.mxu0 %v2627
    %4121 = vmatprep.subr.mxu0 %v2636
    %4122 = vmatpush1.msra.mxu0 %v2635
    %4123 = vmatprep.subr.mxu0 %v2644
    %4124 = vmatpush1.msra.mxu0 %v2643
    %4125 = vmatprep.subr.mxu0 %v2652
    %4126 = vmatpush1.msra.mxu0 %v2651
    %4127 = vmatprep.subr.mxu0 %v2660
    %4128 = vmatpush1.msra.mxu0 %v2659
    %4129 = vmatprep.subr.mxu0 %v2668
    %4130 = vmatpush1.msra.mxu0 %v2667
    %4131 = vmatprep.subr.mxu0 %v2676
    %4132 = vmatpush1.msra.mxu0 %v2675
    %4133 = vmatprep.subr.mxu0 %v2684
    %4134 = vmatpush1.msra.mxu0 %v2683
    %4135 = vmatprep.subr.mxu0 %v2692
    %4136 = vmatpush1.msra.mxu0 %v2691
    %4137 = vmatprep.subr.mxu0 %v2700
    %4138 = vmatpush1.msra.mxu0 %v2699
    %4139 = vmatprep.subr.mxu0 %v2708
    %4140 = vmatpush1.msra.mxu0 %v2707
    %4141 = vmatprep.subr.mxu0 %v2716
    %4142 = vmatpush1.msra.mxu0 %v2715
    %4143 = vmatprep.subr.mxu0 %v2724
    %4144 = vmatpush1.msra.mxu0 %v2723
    %4145 = vmatprep.subr.mxu0 %v2732
    %4146 = vmatpush1.msra.mxu0 %v2731
    %4147 = vmatprep.subr.mxu0 %v2740
    %4148 = vmatpush1.msra.mxu0 %v2739
    %4149 = vmatprep.subr.mxu0 %v2748
    %4150 = vmatpush1.msra.mxu0 %v2747
    %4151 = vmatprep.subr.mxu0 %v2756
    %4152 = vmatpush1.msra.mxu0 %v2755
    %4153 = vmatprep.subr.mxu0 %v2764
    %4154 = vmatpush1.msra.mxu0 %v2763
    %4155 = vmatprep.mubr.f32.mxu0 %v3614
    %4156 = vmatmul.mubr.f32.gmra.mrb[0].mxu0 %v3612
    %v4157 = vpop.f32.mrb[0].mxu0
    %v4158 = vadd.f32 %v3641, %v4157
    %v4159 = vpop.f32.mrb[0].mxu0
    %v4160 = vadd.f32 %v3645, %v4159
    %4161 = vdwg.mxu0
    %4162 = vmatprep.subr.mxu0 %v2772
    %4163 = vmatpush1.msra.mxu0 %v2771
    %4164 = vmatprep.subr.mxu0 %v2780
    %4165 = vmatpush1.msra.mxu0 %v2779
    %4166 = vmatprep.subr.mxu0 %v2788
    %4167 = vmatpush1.msra.mxu0 %v2787
    %4168 = vmatprep.subr.mxu0 %v2796
    %4169 = vmatpush1.msra.mxu0 %v2795
    %4170 = vmatprep.subr.mxu0 %v2804
    %4171 = vmatpush1.msra.mxu0 %v2803
    %4172 = vmatprep.subr.mxu0 %v2812
    %4173 = vmatpush1.msra.mxu0 %v2811
    %4174 = vmatprep.subr.mxu0 %v2820
    %4175 = vmatpush1.msra.mxu0 %v2819
    %4176 = vmatprep.subr.mxu0 %v2828
    %4177 = vmatpush1.msra.mxu0 %v2827
    %4178 = vmatprep.subr.mxu0 %v2836
    %4179 = vmatpush1.msra.mxu0 %v2835
    %4180 = vmatprep.subr.mxu0 %v2844
    %4181 = vmatpush1.msra.mxu0 %v2843
    %4182 = vmatprep.subr.mxu0 %v2852
    %4183 = vmatpush1.msra.mxu0 %v2851
    %4184 = vmatprep.subr.mxu0 %v2860
    %4185 = vmatpush1.msra.mxu0 %v2859
    %4186 = vmatprep.subr.mxu0 %v2868
    %4187 = vmatpush1.msra.mxu0 %v2867
    %4188 = vmatprep.subr.mxu0 %v2876
    %4189 = vmatpush1.msra.mxu0 %v2875
    %4190 = vmatprep.subr.mxu0 %v2884
    %4191 = vmatpush1.msra.mxu0 %v2883
    %4192 = vmatprep.subr.mxu0 %v2892
    %4193 = vmatpush1.msra.mxu0 %v2891
    %4194 = vmatprep.subr.mxu0 %v2900
    %4195 = vmatpush1.msra.mxu0 %v2899
    %4196 = vmatprep.subr.mxu0 %v2908
    %4197 = vmatpush1.msra.mxu0 %v2907
    %4198 = vmatprep.subr.mxu0 %v2916
    %4199 = vmatpush1.msra.mxu0 %v2915
    %4200 = vmatprep.subr.mxu0 %v2924
    %4201 = vmatpush1.msra.mxu0 %v2923
    %4202 = vmatprep.subr.mxu0 %v2932
    %4203 = vmatpush1.msra.mxu0 %v2931
    %4204 = vmatprep.subr.mxu0 %v2940
    %4205 = vmatpush1.msra.mxu0 %v2939
    %4206 = vmatprep.subr.mxu0 %v2948
    %4207 = vmatpush1.msra.mxu0 %v2947
    %4208 = vmatprep.subr.mxu0 %v2956
    %4209 = vmatpush1.msra.mxu0 %v2955
    %4210 = vmatprep.subr.mxu0 %v2964
    %4211 = vmatpush1.msra.mxu0 %v2963
    %4212 = vmatprep.subr.mxu0 %v2972
    %4213 = vmatpush1.msra.mxu0 %v2971
    %4214 = vmatprep.subr.mxu0 %v2980
    %4215 = vmatpush1.msra.mxu0 %v2979
    %4216 = vmatprep.subr.mxu0 %v2988
    %4217 = vmatpush1.msra.mxu0 %v2987
    %4218 = vmatprep.subr.mxu0 %v2996
    %4219 = vmatpush1.msra.mxu0 %v2995
    %4220 = vmatprep.subr.mxu0 %v3004
    %4221 = vmatpush1.msra.mxu0 %v3003
    %4222 = vmatprep.subr.mxu0 %v3012
    %4223 = vmatpush1.msra.mxu0 %v3011
    %4224 = vmatprep.subr.mxu0 %v3020
    %4225 = vmatpush1.msra.mxu0 %v3019
    %4226 = vmatprep.mubr.f32.mxu0 %v3618
    %4227 = vmatmul.mubr.f32.gmra.mrb[0].mxu0 %v3616
    %v4228 = vpop.f32.mrb[0].mxu0
    %v4229 = vadd.f32 %v4158, %v4228
    %v4230 = vpop.f32.mrb[0].mxu0
    %v4231 = vadd.f32 %v4160, %v4230
    %4232 = vdwg.mxu0
    %4233 = vmatprep.subr.mxu0 %v3028
    %4234 = vmatpush1.msra.mxu0 %v3027
    %4235 = vmatprep.subr.mxu0 %v3036
    %4236 = vmatpush1.msra.mxu0 %v3035
    %4237 = vmatprep.subr.mxu0 %v3044
    %4238 = vmatpush1.msra.mxu0 %v3043
    %4239 = vmatprep.subr.mxu0 %v3052
    %4240 = vmatpush1.msra.mxu0 %v3051
    %4241 = vmatprep.subr.mxu0 %v3060
    %4242 = vmatpush1.msra.mxu0 %v3059
    %4243 = vmatprep.subr.mxu0 %v3068
    %4244 = vmatpush1.msra.mxu0 %v3067
    %4245 = vmatprep.subr.mxu0 %v3076
    %4246 = vmatpush1.msra.mxu0 %v3075
    %4247 = vmatprep.subr.mxu0 %v3084
    %4248 = vmatpush1.msra.mxu0 %v3083
    %4249 = vmatprep.subr.mxu0 %v3092
    %4250 = vmatpush1.msra.mxu0 %v3091
    %4251 = vmatprep.subr.mxu0 %v3100
    %4252 = vmatpush1.msra.mxu0 %v3099
    %4253 = vmatprep.subr.mxu0 %v3108
    %4254 = vmatpush1.msra.mxu0 %v3107
    %4255 = vmatprep.subr.mxu0 0.0
    %4256 = vmatpush1.msra.mxu0 0.0
    %4257 = vmatprep.subr.mxu0 0.0
    %4258 = vmatpush1.msra.mxu0 0.0
    %4259 = vmatprep.subr.mxu0 0.0
    %4260 = vmatpush1.msra.mxu0 0.0
    %4261 = vmatprep.subr.mxu0 0.0
    %4262 = vmatpush1.msra.mxu0 0.0
    %4263 = vmatprep.subr.mxu0 0.0
    %4264 = vmatpush1.msra.mxu0 0.0
    %4265 = vmatprep.subr.mxu0 0.0
    %4266 = vmatpush1.msra.mxu0 0.0
    %4267 = vmatprep.subr.mxu0 0.0
    %4268 = vmatpush1.msra.mxu0 0.0
    %4269 = vmatprep.subr.mxu0 0.0
    %4270 = vmatpush1.msra.mxu0 0.0
    %4271 = vmatprep.subr.mxu0 0.0
    %4272 = vmatpush1.msra.mxu0 0.0
    %4273 = vmatprep.subr.mxu0 0.0
    %4274 = vmatpush1.msra.mxu0 0.0
    %4275 = vmatprep.subr.mxu0 0.0
    %4276 = vmatpush1.msra.mxu0 0.0
    %4277 = vmatprep.subr.mxu0 0.0
    %4278 = vmatpush1.msra.mxu0 0.0
    %4279 = vmatprep.subr.mxu0 0.0
    %4280 = vmatpush1.msra.mxu0 0.0
    %4281 = vmatprep.subr.mxu0 0.0
    %4282 = vmatpush1.msra.mxu0 0.0
    %4283 = vmatprep.subr.mxu0 0.0
    %4284 = vmatpush1.msra.mxu0 0.0
    %4285 = vmatprep.subr.mxu0 0.0
    %4286 = vmatpush1.msra.mxu0 0.0
    %4287 = vmatprep.subr.mxu0 0.0
    %4288 = vmatpush1.msra.mxu0 0.0
    %4289 = vmatprep.subr.mxu0 0.0
    %4290 = vmatpush1.msra.mxu0 0.0
    %4291 = vmatprep.subr.mxu0 0.0
    %4292 = vmatpush1.msra.mxu0 0.0
    %4293 = vmatprep.subr.mxu0 0.0
    %4294 = vmatpush1.msra.mxu0 0.0
    %4295 = vmatprep.subr.mxu0 0.0
    %4296 = vmatpush1.msra.mxu0 0.0
    %4297 = vmatprep.mubr.f32.mxu0 0.0
    %4298 = vmatmul.mubr.f32.gmra.mrb[0].mxu0 %v3663
    %v4299 = vpop.f32.mrb[0].mxu0
    %v4300 = vadd.f32 %v4229, %v4299
    %v4301 = vpop.f32.mrb[0].mxu0
    %v4302 = vadd.f32 %v4231, %v4301
    %4303 = vdwg.mxu0
    %4304 = vmatprep.subr.mxu0 %v2518
    %4305 = vmatpush1.msra.mxu0 %v2517
    %4306 = vmatprep.subr.mxu0 %v2526
    %4307 = vmatpush1.msra.mxu0 %v2525
    %4308 = vmatprep.subr.mxu0 %v2534
    %4309 = vmatpush1.msra.mxu0 %v2533
    %4310 = vmatprep.subr.mxu0 %v2542
    %4311 = vmatpush1.msra.mxu0 %v2541
    %4312 = vmatprep.subr.mxu0 %v2550
    %4313 = vmatpush1.msra.mxu0 %v2549
    %4314 = vmatprep.subr.mxu0 %v2558
    %4315 = vmatpush1.msra.mxu0 %v2557
    %4316 = vmatprep.subr.mxu0 %v2566
    %4317 = vmatpush1.msra.mxu0 %v2565
    %4318 = vmatprep.subr.mxu0 %v2574
    %4319 = vmatpush1.msra.mxu0 %v2573
    %4320 = vmatprep.subr.mxu0 %v2582
    %4321 = vmatpush1.msra.mxu0 %v2581
    %4322 = vmatprep.subr.mxu0 %v2590
    %4323 = vmatpush1.msra.mxu0 %v2589
    %4324 = vmatprep.subr.mxu0 %v2598
    %4325 = vmatpush1.msra.mxu0 %v2597
    %4326 = vmatprep.subr.mxu0 %v2606
    %4327 = vmatpush1.msra.mxu0 %v2605
    %4328 = vmatprep.subr.mxu0 %v2614
    %4329 = vmatpush1.msra.mxu0 %v2613
    %4330 = vmatprep.subr.mxu0 %v2622
    %4331 = vmatpush1.msra.mxu0 %v2621
    %4332 = vmatprep.subr.mxu0 %v2630
    %4333 = vmatpush1.msra.mxu0 %v2629
    %4334 = vmatprep.subr.mxu0 %v2638
    %4335 = vmatpush1.msra.mxu0 %v2637
    %4336 = vmatprep.subr.mxu0 %v2646
    %4337 = vmatpush1.msra.mxu0 %v2645
    %4338 = vmatprep.subr.mxu0 %v2654
    %4339 = vmatpush1.msra.mxu0 %v2653
    %4340 = vmatprep.subr.mxu0 %v2662
    %4341 = vmatpush1.msra.mxu0 %v2661
    %4342 = vmatprep.subr.mxu0 %v2670
    %4343 = vmatpush1.msra.mxu0 %v2669
    %4344 = vmatprep.subr.mxu0 %v2678
    %4345 = vmatpush1.msra.mxu0 %v2677
    %4346 = vmatprep.subr.mxu0 %v2686
    %4347 = vmatpush1.msra.mxu0 %v2685
    %4348 = vmatprep.subr.mxu0 %v2694
    %4349 = vmatpush1.msra.mxu0 %v2693
    %4350 = vmatprep.subr.mxu0 %v2702
    %4351 = vmatpush1.msra.mxu0 %v2701
    %4352 = vmatprep.subr.mxu0 %v2710
    %4353 = vmatpush1.msra.mxu0 %v2709
    %4354 = vmatprep.subr.mxu0 %v2718
    %4355 = vmatpush1.msra.mxu0 %v2717
    %4356 = vmatprep.subr.mxu0 %v2726
    %4357 = vmatpush1.msra.mxu0 %v2725
    %4358 = vmatprep.subr.mxu0 %v2734
    %4359 = vmatpush1.msra.mxu0 %v2733
    %4360 = vmatprep.subr.mxu0 %v2742
    %4361 = vmatpush1.msra.mxu0 %v2741
    %4362 = vmatprep.subr.mxu0 %v2750
    %4363 = vmatpush1.msra.mxu0 %v2749
    %4364 = vmatprep.subr.mxu0 %v2758
    %4365 = vmatpush1.msra.mxu0 %v2757
    %4366 = vmatprep.subr.mxu0 %v2766
    %4367 = vmatpush1.msra.mxu0 %v2765
    %4368 = vmatprep.mubr.f32.mxu0 %v3614
    %4369 = vmatmul.mubr.f32.gmra.mrb[0].mxu0 %v3612
    %v4370 = vpop.f32.mrb[0].mxu0
    %v4371 = vadd.f32 %v3649, %v4370
    %v4372 = vpop.f32.mrb[0].mxu0
    %v4373 = vadd.f32 %v3653, %v4372
    %4374 = vdwg.mxu0
    %4375 = vmatprep.subr.mxu0 %v2774
    %4376 = vmatpush1.msra.mxu0 %v2773
    %4377 = vmatprep.subr.mxu0 %v2782
    %4378 = vmatpush1.msra.mxu0 %v2781
    %4379 = vmatprep.subr.mxu0 %v2790
    %4380 = vmatpush1.msra.mxu0 %v2789
    %4381 = vmatprep.subr.mxu0 %v2798
    %4382 = vmatpush1.msra.mxu0 %v2797
    %4383 = vmatprep.subr.mxu0 %v2806
    %4384 = vmatpush1.msra.mxu0 %v2805
    %4385 = vmatprep.subr.mxu0 %v2814
    %4386 = vmatpush1.msra.mxu0 %v2813
    %4387 = vmatprep.subr.mxu0 %v2822
    %4388 = vmatpush1.msra.mxu0 %v2821
    %4389 = vmatprep.subr.mxu0 %v2830
    %4390 = vmatpush1.msra.mxu0 %v2829
    %4391 = vmatprep.subr.mxu0 %v2838
    %4392 = vmatpush1.msra.mxu0 %v2837
    %4393 = vmatprep.subr.mxu0 %v2846
    %4394 = vmatpush1.msra.mxu0 %v2845
    %4395 = vmatprep.subr.mxu0 %v2854
    %4396 = vmatpush1.msra.mxu0 %v2853
    %4397 = vmatprep.subr.mxu0 %v2862
    %4398 = vmatpush1.msra.mxu0 %v2861
    %4399 = vmatprep.subr.mxu0 %v2870
    %4400 = vmatpush1.msra.mxu0 %v2869
    %4401 = vmatprep.subr.mxu0 %v2878
    %4402 = vmatpush1.msra.mxu0 %v2877
    %4403 = vmatprep.subr.mxu0 %v2886
    %4404 = vmatpush1.msra.mxu0 %v2885
    %4405 = vmatprep.subr.mxu0 %v2894
    %4406 = vmatpush1.msra.mxu0 %v2893
    %4407 = vmatprep.subr.mxu0 %v2902
    %4408 = vmatpush1.msra.mxu0 %v2901
    %4409 = vmatprep.subr.mxu0 %v2910
    %4410 = vmatpush1.msra.mxu0 %v2909
    %4411 = vmatprep.subr.mxu0 %v2918
    %4412 = vmatpush1.msra.mxu0 %v2917
    %4413 = vmatprep.subr.mxu0 %v2926
    %4414 = vmatpush1.msra.mxu0 %v2925
    %4415 = vmatprep.subr.mxu0 %v2934
    %4416 = vmatpush1.msra.mxu0 %v2933
    %4417 = vmatprep.subr.mxu0 %v2942
    %4418 = vmatpush1.msra.mxu0 %v2941
    %4419 = vmatprep.subr.mxu0 %v2950
    %4420 = vmatpush1.msra.mxu0 %v2949
    %4421 = vmatprep.subr.mxu0 %v2958
    %4422 = vmatpush1.msra.mxu0 %v2957
    %4423 = vmatprep.subr.mxu0 %v2966
    %4424 = vmatpush1.msra.mxu0 %v2965
    %4425 = vmatprep.subr.mxu0 %v2974
    %4426 = vmatpush1.msra.mxu0 %v2973
    %4427 = vmatprep.subr.mxu0 %v2982
    %4428 = vmatpush1.msra.mxu0 %v2981
    %4429 = vmatprep.subr.mxu0 %v2990
    %4430 = vmatpush1.msra.mxu0 %v2989
    %4431 = vmatprep.subr.mxu0 %v2998
    %4432 = vmatpush1.msra.mxu0 %v2997
    %4433 = vmatprep.subr.mxu0 %v3006
    %4434 = vmatpush1.msra.mxu0 %v3005
    %4435 = vmatprep.subr.mxu0 %v3014
    %4436 = vmatpush1.msra.mxu0 %v3013
    %4437 = vmatprep.subr.mxu0 %v3022
    %4438 = vmatpush1.msra.mxu0 %v3021
    %4439 = vmatprep.mubr.f32.mxu0 %v3618
    %4440 = vmatmul.mubr.f32.gmra.mrb[0].mxu0 %v3616
    %v4441 = vpop.f32.mrb[0].mxu0
    %v4442 = vadd.f32 %v4371, %v4441
    %v4443 = vpop.f32.mrb[0].mxu0
    %v4444 = vadd.f32 %v4373, %v4443
    %4445 = vdwg.mxu0
    %4446 = vmatprep.subr.mxu0 %v3030
    %4447 = vmatpush1.msra.mxu0 %v3029
    %4448 = vmatprep.subr.mxu0 %v3038
    %4449 = vmatpush1.msra.mxu0 %v3037
    %4450 = vmatprep.subr.mxu0 %v3046
    %4451 = vmatpush1.msra.mxu0 %v3045
    %4452 = vmatprep.subr.mxu0 %v3054
    %4453 = vmatpush1.msra.mxu0 %v3053
    %4454 = vmatprep.subr.mxu0 %v3062
    %4455 = vmatpush1.msra.mxu0 %v3061
    %4456 = vmatprep.subr.mxu0 %v3070
    %4457 = vmatpush1.msra.mxu0 %v3069
    %4458 = vmatprep.subr.mxu0 %v3078
    %4459 = vmatpush1.msra.mxu0 %v3077
    %4460 = vmatprep.subr.mxu0 %v3086
    %4461 = vmatpush1.msra.mxu0 %v3085
    %4462 = vmatprep.subr.mxu0 %v3094
    %4463 = vmatpush1.msra.mxu0 %v3093
    %4464 = vmatprep.subr.mxu0 %v3102
    %4465 = vmatpush1.msra.mxu0 %v3101
    %4466 = vmatprep.subr.mxu0 %v3110
    %4467 = vmatpush1.msra.mxu0 %v3109
    %4468 = vmatprep.subr.mxu0 0.0
    %4469 = vmatpush1.msra.mxu0 0.0
    %4470 = vmatprep.subr.mxu0 0.0
    %4471 = vmatpush1.msra.mxu0 0.0
    %4472 = vmatprep.subr.mxu0 0.0
    %4473 = vmatpush1.msra.mxu0 0.0
    %4474 = vmatprep.subr.mxu0 0.0
    %4475 = vmatpush1.msra.mxu0 0.0
    %4476 = vmatprep.subr.mxu0 0.0
    %4477 = vmatpush1.msra.mxu0 0.0
    %4478 = vmatprep.subr.mxu0 0.0
    %4479 = vmatpush1.msra.mxu0 0.0
    %4480 = vmatprep.subr.mxu0 0.0
    %4481 = vmatpush1.msra.mxu0 0.0
    %4482 = vmatprep.subr.mxu0 0.0
    %4483 = vmatpush1.msra.mxu0 0.0
    %4484 = vmatprep.subr.mxu0 0.0
    %4485 = vmatpush1.msra.mxu0 0.0
    %4486 = vmatprep.subr.mxu0 0.0
    %4487 = vmatpush1.msra.mxu0 0.0
    %4488 = vmatprep.subr.mxu0 0.0
    %4489 = vmatpush1.msra.mxu0 0.0
    %4490 = vmatprep.subr.mxu0 0.0
    %4491 = vmatpush1.msra.mxu0 0.0
    %4492 = vmatprep.subr.mxu0 0.0
    %4493 = vmatpush1.msra.mxu0 0.0
    %4494 = vmatprep.subr.mxu0 0.0
    %4495 = vmatpush1.msra.mxu0 0.0
    %4496 = vmatprep.subr.mxu0 0.0
    %4497 = vmatpush1.msra.mxu0 0.0
    %4498 = vmatprep.subr.mxu0 0.0
    %4499 = vmatpush1.msra.mxu0 0.0
    %4500 = vmatprep.subr.mxu0 0.0
    %4501 = vmatpush1.msra.mxu0 0.0
    %4502 = vmatprep.subr.mxu0 0.0
    %4503 = vmatpush1.msra.mxu0 0.0
    %4504 = vmatprep.subr.mxu0 0.0
    %4505 = vmatpush1.msra.mxu0 0.0
    %4506 = vmatprep.subr.mxu0 0.0
    %4507 = vmatpush1.msra.mxu0 0.0
    %4508 = vmatprep.subr.mxu0 0.0
    %4509 = vmatpush1.msra.mxu0 0.0
    %4510 = vmatprep.mubr.f32.mxu0 0.0
    %4511 = vmatmul.mubr.f32.gmra.mrb[0].mxu0 %v3663
    %v4512 = vpop.f32.mrb[0].mxu0
    %v4513 = vadd.f32 %v4442, %v4512
    %v4514 = vpop.f32.mrb[0].mxu0
    %v4515 = vadd.f32 %v4444, %v4514
    %4516 = vdwg.mxu0
    %v4517 = vmax.f32 %v3874, 0.0
    %v4518 = vmax.f32 %v3876, 0.0
    %v4519 = vmax.f32 %v4087, 0.0
    %v4520 = vmax.f32 %v4089, 0.0
    %v4521 = vmax.f32 %v4300, 0.0
    %v4522 = vmax.f32 %v4302, 0.0
    %v4523 = vmax.f32 %v4513, 0.0
    %v4524 = vmax.f32 %v4515, 0.0
    %v4525 = vmul.f32 %v3112, %v3116
    %v4526 = vmul.f32 %v3113, %v3117
    %v4527 = vmul.f32 %v3114, %v3118
    %v4528 = vmul.f32 %v3115, %v3119
    %v4533 = vcombine.high %v4525, %v4525
    %v4534 = vcombine.high %v4526, %v4526
    %v4535 = vcombine.high %v4527, %v4527
    %v4536 = vcombine.high %v4528, %v4528
    %v4541 = vadd.f32 %v4517, %v4525
    %v4542 = vadd.f32 %v4518, %v4533
    %v4543 = vadd.f32 %v4519, %v4526
    %v4544 = vadd.f32 %v4520, %v4534
    %v4545 = vadd.f32 %v4521, %v4527
    %v4546 = vadd.f32 %v4522, %v4535
    %v4547 = vadd.f32 %v4523, %v4528
    %v4548 = vadd.f32 %v4524, %v4536
    %v4557 = vrot.slane %v4541, 4
    %v4558 = vrot.slane %v4542, 4
    %v4559 = vrot.slane %v4543, 4
    %v4560 = vrot.slane %v4544, 4
    %v4561 = vrot.slane %v4545, 4
    %v4562 = vrot.slane %v4546, 4
    %v4563 = vrot.slane %v4547, 4
    %v4564 = vrot.slane %v4548, 4
    %v4573 = vsel %vm919, %v2310, %v4557
    %v4574 = vsel %vm919, %v2311, %v4558
    %v4575 = vsel %vm919, %v2312, %v4559
    %v4576 = vsel %vm919, %v2313, %v4560
    %v4577 = vsel %vm919, %v2314, %v4561
    %v4578 = vsel %vm919, %v2315, %v4562
    %v4579 = vsel %vm919, %v2316, %v4563
    %v4580 = vsel %vm919, %v2317, %v4564
    %vm4581 = vcmask 1046528
    %v4582 = vsel %vm4581, %v4573, 0.0
    %v4583 = vsel %vm4581, %v4574, 0.0
    %v4584 = vsel %vm4581, %v4575, 0.0
    %v4585 = vsel %vm4581, %v4576, 0.0
    %v4586 = vsel %vm4581, %v4577, 0.0
    %v4587 = vsel %vm4581, %v4578, 0.0
    %v4588 = vsel %vm4581, %v4579, 0.0
    %v4589 = vsel %vm4581, %v4580, 0.0
    %v4590 = vmul.f32 %v4582, %v4582
    %v4591 = vmul.f32 %v4583, %v4583
    %v4592 = vmul.f32 %v4584, %v4584
    %v4593 = vmul.f32 %v4585, %v4585
    %v4594 = vmul.f32 %v4586, %v4586
    %v4595 = vmul.f32 %v4587, %v4587
    %v4596 = vmul.f32 %v4588, %v4588
    %v4597 = vmul.f32 %v4589, %v4589
    %v4598 = vadd.f32 %v4590, %v4591
    %v4599 = vadd.f32 %v4598, %v4592
    %v4600 = vadd.f32 %v4599, %v4593
    %v4601 = vadd.f32 %v4600, %v4594
    %v4602 = vadd.f32 %v4601, %v4595
    %v4603 = vadd.f32 %v4602, %v4596
    %v4604 = vadd.f32 %v4603, %v4597
    %4605 = vadd.xlane.f32.xlu0 %v4604
    %v4606 = vpop.xlane.xlu0 %4605
    %4607 = vadd.xlane.f32.xlu0 0.0
    %v4608 = vpop.xlane.xlu0 %4607
    %v4609 = vrsqrt.pop %v4606
    %v4610 = vmul.f32 %v4606, %v4609
    %vm4611 = vcmp.eq.f32.partialorder %v4606, inf
    %v4612 = vsel %vm4611, %v4606, %v4610
    %vm4613 = vcmp.eq.f32.partialorder %v4606, 0.0
    %v4614 = vand.u32 %v4606, 2147483648
    %v4615 = vsel %vm4613, %v4614, %v4612
    %v4616 = vrsqrt.pop %v4608
    %v4617 = vmul.f32 %v4608, %v4616
    %vm4618 = vcmp.eq.f32.partialorder %v4608, inf
    %v4619 = vsel %vm4618, %v4608, %v4617
    %vm4620 = vcmp.eq.f32.partialorder %v4608, 0.0
    %v4621 = vand.u32 %v4608, 2147483648
    %v4622 = vsel %vm4620, %v4621, %v4619
    %v4623 = vadd.f32 %v4615, 1e-06
    %v4624 = vadd.f32 %v4622, 1e-06
    %v4625 = vrcp.pop %v4623
    %v4626 = vrcp.pop %v4624
    %v4627 = vmul.f32 %v4582, %v4625
    %v4628 = vmul.f32 %v4583, %v4625
    %v4629 = vmul.f32 %v4584, %v4625
    %v4630 = vmul.f32 %v4585, %v4625
    %v4631 = vmul.f32 %v4586, %v4625
    %v4632 = vmul.f32 %v4587, %v4625
    %v4633 = vmul.f32 %v4588, %v4625
    %v4634 = vmul.f32 %v4589, %v4625
    %v4635 = vmul.f32 %v4626, 0.0
    %v4636 = vld [vmem:[%s1] sm:$0xff]
    %v4637 = vld [vmem:[%s1 + $0x8] sm:$0xff]
    %v4638 = vmul.f32 %v4636, %v4636
    %v4639 = vmul.f32 %v4637, %v4637
    %v4642 = vcombine.high %v4638, %v4638
    %v4644 = vunpack.c.l.s4 1983009808
    %v4645 = vunpack.c.0.s8 %v4644
    %v4646 = vlaneseq
    %v4647 = vshrl.u32 %v4646, 7
    %v4648 = vsub.s32 %v4645, %v4647
    %v4649 = vrot.slane %v4638, %v4648
    %v4651 = vunpack.c.l.s4 1983009808
    %v4652 = vunpack.c.0.s8 %v4651
    %v4653 = vlaneseq
    %v4654 = vshrl.u32 %v4653, 7
    %v4655 = vsub.s32 %v4652, %v4654
    %v4656 = vrot.slane %v4642, %v4655
    %v4657 = vcombine.high %v4649, %v4649
    %v4658 = vcombine.high %v4656, %v4656
    %v4659 = vcombine.high %v4639, %v4639
    %v4661 = vunpack.c.l.s4 1983009808
    %v4662 = vunpack.c.0.s8 %v4661
    %v4663 = vlaneseq
    %v4664 = vshrl.u32 %v4663, 7
    %v4665 = vsub.s32 %v4662, %v4664
    %v4666 = vrot.slane %v4639, %v4665
    %v4668 = vunpack.c.l.s4 1983009808
    %v4669 = vunpack.c.0.s8 %v4668
    %v4670 = vlaneseq
    %v4671 = vshrl.u32 %v4670, 7
    %v4672 = vsub.s32 %v4669, %v4671
    %v4673 = vrot.slane %v4659, %v4672
    %v4674 = vcombine.high %v4666, %v4666
    %v4675 = vcombine.high %v4673, %v4673
    %vm4684 = vcmask 1041408
    %v4685 = vsel %vm4684, %v4649, 0.0
    %v4686 = vsel %vm4684, %v4657, 0.0
    %v4687 = vadd.f32 %v4685, %v4686
    %v4688 = vsel %vm4684, %v4656, 0.0
    %v4689 = vadd.f32 %v4687, %v4688
    %v4690 = vsel %vm4684, %v4658, 0.0
    %v4691 = vadd.f32 %v4689, %v4690
    %v4692 = vsel %vm4684, %v4666, 0.0
    %v4693 = vadd.f32 %v4691, %v4692
    %v4694 = vsel %vm4684, %v4674, 0.0
    %v4695 = vadd.f32 %v4693, %v4694
    %v4696 = vsel %vm4684, %v4673, 0.0
    %v4697 = vadd.f32 %v4695, %v4696
    %v4698 = vsel %vm4684, %v4675, 0.0
    %v4699 = vadd.f32 %v4697, %v4698
    %4700 = vadd.xlane.f32.xlu0 %v4699
    %v4701 = vpop.xlane.xlu0 %4700
    %v4702 = vrsqrt.pop %v4701
    %v4703 = vmul.f32 %v4701, %v4702
    %vm4704 = vcmp.eq.f32.partialorder %v4701, inf
    %v4705 = vsel %vm4704, %v4701, %v4703
    %vm4706 = vcmp.eq.f32.partialorder %v4701, 0.0
    %v4707 = vand.u32 %v4701, 2147483648
    %v4708 = vsel %vm4706, %v4707, %v4705
    %v4709 = vadd.f32 %v4708, 1e-06
    %v4710 = vrcp.pop %v4709
    %v4713 = vunpack.c.l.s4 269488144
    %v4714 = vunpack.c.0.s8 %v4713
    %v4715 = vlaneseq
    %v4716 = vshrl.u32 %v4715, 7
    %v4717 = vsub.s32 %v4714, %v4716
    %v4718 = vrot.slane %v4710, %v4717
    %v4720 = vmul.f32 %v4636, %v4718
    %v4721 = vmul.f32 %v4637, %v4718
    %s4722 = sld [smem:[#allocation2]]
    %v4725 = vcombine.high %v4720, %v4720
    %v4727 = vunpack.c.l.s4 1983009808
    %v4728 = vunpack.c.0.s8 %v4727
    %v4729 = vlaneseq
    %v4730 = vshrl.u32 %v4729, 7
    %v4731 = vsub.s32 %v4728, %v4730
    %v4732 = vrot.slane %v4720, %v4731
    %v4734 = vunpack.c.l.s4 1983009808
    %v4735 = vunpack.c.0.s8 %v4734
    %v4736 = vlaneseq
    %v4737 = vshrl.u32 %v4736, 7
    %v4738 = vsub.s32 %v4735, %v4737
    %v4739 = vrot.slane %v4725, %v4738
    %v4740 = vcombine.high %v4732, %v4732
    %v4741 = vcombine.high %v4739, %v4739
    %v4742 = vcombine.high %v4721, %v4721
    %v4744 = vunpack.c.l.s4 1983009808
    %v4745 = vunpack.c.0.s8 %v4744
    %v4746 = vlaneseq
    %v4747 = vshrl.u32 %v4746, 7
    %v4748 = vsub.s32 %v4745, %v4747
    %v4749 = vrot.slane %v4721, %v4748
    %v4751 = vunpack.c.l.s4 1983009808
    %v4752 = vunpack.c.0.s8 %v4751
    %v4753 = vlaneseq
    %v4754 = vshrl.u32 %v4753, 7
    %v4755 = vsub.s32 %v4752, %v4754
    %v4756 = vrot.slane %v4742, %v4755
    %v4757 = vcombine.high %v4749, %v4749
    %v4758 = vcombine.high %v4756, %v4756
    %4767 = vmatprep.subr.mxu0 %v4628
    %4768 = vmatpush1.xpose.msra.mxu0 %v4627
    %4769 = vmatprep.subr.mxu0 %v4635
    %4770 = vmatpush1.xpose.msra.mxu0 %v4635
    %4771 = vmatprep.subr.mxu0 %v4635
    %4772 = vmatpush1.xpose.msra.mxu0 %v4635
    %4773 = vmatprep.subr.mxu0 %v4635
    %4774 = vmatpush1.xpose.msra.mxu0 %v4635
    %4775 = vmatprep.subr.mxu0 %v4635
    %4776 = vmatpush1.xpose.msra.mxu0 %v4635
    %4777 = vmatprep.subr.mxu0 %v4635
    %4778 = vmatpush1.xpose.msra.mxu0 %v4635
    %4779 = vmatprep.subr.mxu0 %v4635
    %4780 = vmatpush1.xpose.msra.mxu0 %v4635
    %4781 = vmatprep.subr.mxu0 %v4635
    %4782 = vmatpush1.xpose.msra.mxu0 %v4635
    %4783 = vmatprep.subr.mxu0 %v4635
    %4784 = vmatpush1.xpose.msra.mxu0 %v4635
    %4785 = vmatprep.subr.mxu0 %v4635
    %4786 = vmatpush1.xpose.msra.mxu0 %v4635
    %4787 = vmatprep.subr.mxu0 %v4635
    %4788 = vmatpush1.xpose.msra.mxu0 %v4635
    %4789 = vmatprep.subr.mxu0 %v4635
    %4790 = vmatpush1.xpose.msra.mxu0 %v4635
    %4791 = vmatprep.subr.mxu0 %v4635
    %4792 = vmatpush1.xpose.msra.mxu0 %v4635
    %4793 = vmatprep.subr.mxu0 %v4635
    %4794 = vmatpush1.xpose.msra.mxu0 %v4635
    %4795 = vmatprep.subr.mxu0 %v4635
    %4796 = vmatpush1.xpose.msra.mxu0 %v4635
    %4797 = vmatprep.subr.mxu0 %v4635
    %4798 = vmatpush1.xpose.msra.mxu0 %v4635
    %4799 = vmatprep.subr.mxu0 0.0
    %4800 = vmatpush1.xpose.msra.mxu0 0.0
    %4801 = vmatprep.subr.mxu0 0.0
    %4802 = vmatpush1.xpose.msra.mxu0 0.0
    %4803 = vmatprep.subr.mxu0 0.0
    %4804 = vmatpush1.xpose.msra.mxu0 0.0
    %4805 = vmatprep.subr.mxu0 0.0
    %4806 = vmatpush1.xpose.msra.mxu0 0.0
    %4807 = vmatprep.subr.mxu0 0.0
    %4808 = vmatpush1.xpose.msra.mxu0 0.0
    %4809 = vmatprep.subr.mxu0 0.0
    %4810 = vmatpush1.xpose.msra.mxu0 0.0
    %4811 = vmatprep.subr.mxu0 0.0
    %4812 = vmatpush1.xpose.msra.mxu0 0.0
    %4813 = vmatprep.subr.mxu0 0.0
    %4814 = vmatpush1.xpose.msra.mxu0 0.0
    %4815 = vmatprep.subr.mxu0 0.0
    %4816 = vmatpush1.xpose.msra.mxu0 0.0
    %4817 = vmatprep.subr.mxu0 0.0
    %4818 = vmatpush1.xpose.msra.mxu0 0.0
    %4819 = vmatprep.subr.mxu0 0.0
    %4820 = vmatpush1.xpose.msra.mxu0 0.0
    %4821 = vmatprep.subr.mxu0 0.0
    %4822 = vmatpush1.xpose.msra.mxu0 0.0
    %4823 = vmatprep.subr.mxu0 0.0
    %4824 = vmatpush1.xpose.msra.mxu0 0.0
    %4825 = vmatprep.subr.mxu0 0.0
    %4826 = vmatpush1.xpose.msra.mxu0 0.0
    %4827 = vmatprep.subr.mxu0 0.0
    %4828 = vmatpush1.xpose.msra.mxu0 0.0
    %4829 = vmatprep.subr.mxu0 0.0
    %4830 = vmatpush1.xpose.msra.mxu0 0.0
    %4831 = vmatprep.mubr.f32.mxu0 %v4740
    %4832 = vmatmul.mubr.f32.gmra.mrb[0].mxu0 %v4732
    %v4833 = vpop.f32.mrb[0].mxu0
    %v4834 = vadd.f32 0.0, %v4833
    %v4835 = vpop.f32.mrb[0].mxu0
    %4836 = vdwg.mxu0
    %4837 = vmatprep.subr.mxu0 %v4630
    %4838 = vmatpush1.xpose.msra.mxu0 %v4629
    %4839 = vmatprep.subr.mxu0 %v4635
    %4840 = vmatpush1.xpose.msra.mxu0 %v4635
    %4841 = vmatprep.subr.mxu0 %v4635
    %4842 = vmatpush1.xpose.msra.mxu0 %v4635
    %4843 = vmatprep.subr.mxu0 %v4635
    %4844 = vmatpush1.xpose.msra.mxu0 %v4635
    %4845 = vmatprep.subr.mxu0 %v4635
    %4846 = vmatpush1.xpose.msra.mxu0 %v4635
    %4847 = vmatprep.subr.mxu0 %v4635
    %4848 = vmatpush1.xpose.msra.mxu0 %v4635
    %4849 = vmatprep.subr.mxu0 %v4635
    %4850 = vmatpush1.xpose.msra.mxu0 %v4635
    %4851 = vmatprep.subr.mxu0 %v4635
    %4852 = vmatpush1.xpose.msra.mxu0 %v4635
    %4853 = vmatprep.subr.mxu0 %v4635
    %4854 = vmatpush1.xpose.msra.mxu0 %v4635
    %4855 = vmatprep.subr.mxu0 %v4635
    %4856 = vmatpush1.xpose.msra.mxu0 %v4635
    %4857 = vmatprep.subr.mxu0 %v4635
    %4858 = vmatpush1.xpose.msra.mxu0 %v4635
    %4859 = vmatprep.subr.mxu0 %v4635
    %4860 = vmatpush1.xpose.msra.mxu0 %v4635
    %4861 = vmatprep.subr.mxu0 %v4635
    %4862 = vmatpush1.xpose.msra.mxu0 %v4635
    %4863 = vmatprep.subr.mxu0 %v4635
    %4864 = vmatpush1.xpose.msra.mxu0 %v4635
    %4865 = vmatprep.subr.mxu0 %v4635
    %4866 = vmatpush1.xpose.msra.mxu0 %v4635
    %4867 = vmatprep.subr.mxu0 %v4635
    %4868 = vmatpush1.xpose.msra.mxu0 %v4635
    %4869 = vmatprep.subr.mxu0 0.0
    %4870 = vmatpush1.xpose.msra.mxu0 0.0
    %4871 = vmatprep.subr.mxu0 0.0
    %4872 = vmatpush1.xpose.msra.mxu0 0.0
    %4873 = vmatprep.subr.mxu0 0.0
    %4874 = vmatpush1.xpose.msra.mxu0 0.0
    %4875 = vmatprep.subr.mxu0 0.0
    %4876 = vmatpush1.xpose.msra.mxu0 0.0
    %4877 = vmatprep.subr.mxu0 0.0
    %4878 = vmatpush1.xpose.msra.mxu0 0.0
    %4879 = vmatprep.subr.mxu0 0.0
    %4880 = vmatpush1.xpose.msra.mxu0 0.0
    %4881 = vmatprep.subr.mxu0 0.0
    %4882 = vmatpush1.xpose.msra.mxu0 0.0
    %4883 = vmatprep.subr.mxu0 0.0
    %4884 = vmatpush1.xpose.msra.mxu0 0.0
    %4885 = vmatprep.subr.mxu0 0.0
    %4886 = vmatpush1.xpose.msra.mxu0 0.0
    %4887 = vmatprep.subr.mxu0 0.0
    %4888 = vmatpush1.xpose.msra.mxu0 0.0
    %4889 = vmatprep.subr.mxu0 0.0
    %4890 = vmatpush1.xpose.msra.mxu0 0.0
    %4891 = vmatprep.subr.mxu0 0.0
    %4892 = vmatpush1.xpose.msra.mxu0 0.0
    %4893 = vmatprep.subr.mxu0 0.0
    %4894 = vmatpush1.xpose.msra.mxu0 0.0
    %4895 = vmatprep.subr.mxu0 0.0
    %4896 = vmatpush1.xpose.msra.mxu0 0.0
    %4897 = vmatprep.subr.mxu0 0.0
    %4898 = vmatpush1.xpose.msra.mxu0 0.0
    %4899 = vmatprep.subr.mxu0 0.0
    %4900 = vmatpush1.xpose.msra.mxu0 0.0
    %4901 = vmatprep.mubr.f32.mxu0 %v4741
    %4902 = vmatmul.mubr.f32.gmra.mrb[0].mxu0 %v4739
    %v4903 = vpop.f32.mrb[0].mxu0
    %v4904 = vadd.f32 %v4834, %v4903
    %v4905 = vpop.f32.mrb[0].mxu0
    %4906 = vdwg.mxu0
    %4907 = vmatprep.subr.mxu0 %v4632
    %4908 = vmatpush1.xpose.msra.mxu0 %v4631
    %4909 = vmatprep.subr.mxu0 %v4635
    %4910 = vmatpush1.xpose.msra.mxu0 %v4635
    %4911 = vmatprep.subr.mxu0 %v4635
    %4912 = vmatpush1.xpose.msra.mxu0 %v4635
    %4913 = vmatprep.subr.mxu0 %v4635
    %4914 = vmatpush1.xpose.msra.mxu0 %v4635
    %4915 = vmatprep.subr.mxu0 %v4635
    %4916 = vmatpush1.xpose.msra.mxu0 %v4635
    %4917 = vmatprep.subr.mxu0 %v4635
    %4918 = vmatpush1.xpose.msra.mxu0 %v4635
    %4919 = vmatprep.subr.mxu0 %v4635
    %4920 = vmatpush1.xpose.msra.mxu0 %v4635
    %4921 = vmatprep.subr.mxu0 %v4635
    %4922 = vmatpush1.xpose.msra.mxu0 %v4635
    %4923 = vmatprep.subr.mxu0 %v4635
    %4924 = vmatpush1.xpose.msra.mxu0 %v4635
    %4925 = vmatprep.subr.mxu0 %v4635
    %4926 = vmatpush1.xpose.msra.mxu0 %v4635
    %4927 = vmatprep.subr.mxu0 %v4635
    %4928 = vmatpush1.xpose.msra.mxu0 %v4635
    %4929 = vmatprep.subr.mxu0 %v4635
    %4930 = vmatpush1.xpose.msra.mxu0 %v4635
    %4931 = vmatprep.subr.mxu0 %v4635
    %4932 = vmatpush1.xpose.msra.mxu0 %v4635
    %4933 = vmatprep.subr.mxu0 %v4635
    %4934 = vmatpush1.xpose.msra.mxu0 %v4635
    %4935 = vmatprep.subr.mxu0 %v4635
    %4936 = vmatpush1.xpose.msra.mxu0 %v4635
    %4937 = vmatprep.subr.mxu0 %v4635
    %4938 = vmatpush1.xpose.msra.mxu0 %v4635
    %4939 = vmatprep.subr.mxu0 0.0
    %4940 = vmatpush1.xpose.msra.mxu0 0.0
    %4941 = vmatprep.subr.mxu0 0.0
    %4942 = vmatpush1.xpose.msra.mxu0 0.0
    %4943 = vmatprep.subr.mxu0 0.0
    %4944 = vmatpush1.xpose.msra.mxu0 0.0
    %4945 = vmatprep.subr.mxu0 0.0
    %4946 = vmatpush1.xpose.msra.mxu0 0.0
    %4947 = vmatprep.subr.mxu0 0.0
    %4948 = vmatpush1.xpose.msra.mxu0 0.0
    %4949 = vmatprep.subr.mxu0 0.0
    %4950 = vmatpush1.xpose.msra.mxu0 0.0
    %4951 = vmatprep.subr.mxu0 0.0
    %4952 = vmatpush1.xpose.msra.mxu0 0.0
    %4953 = vmatprep.subr.mxu0 0.0
    %4954 = vmatpush1.xpose.msra.mxu0 0.0
    %4955 = vmatprep.subr.mxu0 0.0
    %4956 = vmatpush1.xpose.msra.mxu0 0.0
    %4957 = vmatprep.subr.mxu0 0.0
    %4958 = vmatpush1.xpose.msra.mxu0 0.0
    %4959 = vmatprep.subr.mxu0 0.0
    %4960 = vmatpush1.xpose.msra.mxu0 0.0
    %4961 = vmatprep.subr.mxu0 0.0
    %4962 = vmatpush1.xpose.msra.mxu0 0.0
    %4963 = vmatprep.subr.mxu0 0.0
    %4964 = vmatpush1.xpose.msra.mxu0 0.0
    %4965 = vmatprep.subr.mxu0 0.0
    %4966 = vmatpush1.xpose.msra.mxu0 0.0
    %4967 = vmatprep.subr.mxu0 0.0
    %4968 = vmatpush1.xpose.msra.mxu0 0.0
    %4969 = vmatprep.subr.mxu0 0.0
    %4970 = vmatpush1.xpose.msra.mxu0 0.0
    %4971 = vmatprep.mubr.f32.mxu0 %v4757
    %4972 = vmatmul.mubr.f32.gmra.mrb[0].mxu0 %v4749
    %v4973 = vpop.f32.mrb[0].mxu0
    %v4974 = vadd.f32 %v4904, %v4973
    %v4975 = vpop.f32.mrb[0].mxu0
    %4976 = vdwg.mxu0
    %4977 = vmatprep.subr.mxu0 %v4634
    %4978 = vmatpush1.xpose.msra.mxu0 %v4633
    %4979 = vmatprep.subr.mxu0 %v4635
    %4980 = vmatpush1.xpose.msra.mxu0 %v4635
    %4981 = vmatprep.subr.mxu0 %v4635
    %4982 = vmatpush1.xpose.msra.mxu0 %v4635
    %4983 = vmatprep.subr.mxu0 %v4635
    %4984 = vmatpush1.xpose.msra.mxu0 %v4635
    %4985 = vmatprep.subr.mxu0 %v4635
    %4986 = vmatpush1.xpose.msra.mxu0 %v4635
    %4987 = vmatprep.subr.mxu0 %v4635
    %4988 = vmatpush1.xpose.msra.mxu0 %v4635
    %4989 = vmatprep.subr.mxu0 %v4635
    %4990 = vmatpush1.xpose.msra.mxu0 %v4635
    %4991 = vmatprep.subr.mxu0 %v4635
    %4992 = vmatpush1.xpose.msra.mxu0 %v4635
    %4993 = vmatprep.subr.mxu0 %v4635
    %4994 = vmatpush1.xpose.msra.mxu0 %v4635
    %4995 = vmatprep.subr.mxu0 %v4635
    %4996 = vmatpush1.xpose.msra.mxu0 %v4635
    %4997 = vmatprep.subr.mxu0 %v4635
    %4998 = vmatpush1.xpose.msra.mxu0 %v4635
    %4999 = vmatprep.subr.mxu0 %v4635
    %5000 = vmatpush1.xpose.msra.mxu0 %v4635
    %5001 = vmatprep.subr.mxu0 %v4635
    %5002 = vmatpush1.xpose.msra.mxu0 %v4635
    %5003 = vmatprep.subr.mxu0 %v4635
    %5004 = vmatpush1.xpose.msra.mxu0 %v4635
    %5005 = vmatprep.subr.mxu0 %v4635
    %5006 = vmatpush1.xpose.msra.mxu0 %v4635
    %5007 = vmatprep.subr.mxu0 %v4635
    %5008 = vmatpush1.xpose.msra.mxu0 %v4635
    %5009 = vmatprep.subr.mxu0 0.0
    %5010 = vmatpush1.xpose.msra.mxu0 0.0
    %5011 = vmatprep.subr.mxu0 0.0
    %5012 = vmatpush1.xpose.msra.mxu0 0.0
    %5013 = vmatprep.subr.mxu0 0.0
    %5014 = vmatpush1.xpose.msra.mxu0 0.0
    %5015 = vmatprep.subr.mxu0 0.0
    %5016 = vmatpush1.xpose.msra.mxu0 0.0
    %5017 = vmatprep.subr.mxu0 0.0
    %5018 = vmatpush1.xpose.msra.mxu0 0.0
    %5019 = vmatprep.subr.mxu0 0.0
    %5020 = vmatpush1.xpose.msra.mxu0 0.0
    %5021 = vmatprep.subr.mxu0 0.0
    %5022 = vmatpush1.xpose.msra.mxu0 0.0
    %5023 = vmatprep.subr.mxu0 0.0
    %5024 = vmatpush1.xpose.msra.mxu0 0.0
    %5025 = vmatprep.subr.mxu0 0.0
    %5026 = vmatpush1.xpose.msra.mxu0 0.0
    %5027 = vmatprep.subr.mxu0 0.0
    %5028 = vmatpush1.xpose.msra.mxu0 0.0
    %5029 = vmatprep.subr.mxu0 0.0
    %5030 = vmatpush1.xpose.msra.mxu0 0.0
    %5031 = vmatprep.subr.mxu0 0.0
    %5032 = vmatpush1.xpose.msra.mxu0 0.0
    %5033 = vmatprep.subr.mxu0 0.0
    %5034 = vmatpush1.xpose.msra.mxu0 0.0
    %5035 = vmatprep.subr.mxu0 0.0
    %5036 = vmatpush1.xpose.msra.mxu0 0.0
    %5037 = vmatprep.subr.mxu0 0.0
    %5038 = vmatpush1.xpose.msra.mxu0 0.0
    %5039 = vmatprep.subr.mxu0 0.0
    %5040 = vmatpush1.xpose.msra.mxu0 0.0
    %5041 = vmatprep.mubr.f32.mxu0 %v4758
    %5042 = vmatmul.mubr.f32.gmra.mrb[0].mxu0 %v4756
    %v5043 = vpop.f32.mrb[0].mxu0
    %v5044 = vadd.f32 %v4974, %v5043
    %v5045 = vpop.f32.mrb[0].mxu0
    %5046 = vdwg.mxu0
    %v5047 = vstv %s4722
    %v5048 = vmul.f32 %v5047, %v5044
    %5049 = vst [vmem:[%s16] sm:$0x3] %v5048
    %5050 = vst [vmem:[%s17] sm:$0xff] %v4627
    %5051 = vst [vmem:[%s17 + $0x8] sm:$0xff] %v4628
    %5052 = vst [vmem:[%s17 + $0x10] sm:$0xff] %v4629
    %5053 = vst [vmem:[%s17 + $0x18] sm:$0xff] %v4630
    %5054 = vst [vmem:[%s17 + $0x20] sm:$0xff] %v4631
    %5055 = vst [vmem:[%s17 + $0x28] sm:$0xff] %v4632
    %5056 = vst [vmem:[%s17 + $0x30] sm:$0xff] %v4633
    %5057 = vst [vmem:[%s17 + $0x38] sm:$0xff] %v4634
    %5058 = vst [vmem:[%s17 + $0x40] sm:$0xff] %v4635
    %5059 = vst [vmem:[%s17 + $0x48] sm:$0xff] %v4635
    %5060 = vst [vmem:[%s17 + $0x50] sm:$0xff] %v4635
    %5061 = vst [vmem:[%s17 + $0x58] sm:$0xff] %v4635
    %5062 = vst [vmem:[%s17 + $0x60] sm:$0xff] %v4635
    %5063 = vst [vmem:[%s17 + $0x68] sm:$0xff] %v4635
    %5064 = vst [vmem:[%s17 + $0x70] sm:$0xff] %v4635
    %5065 = vst [vmem:[%s17 + $0x78] sm:$0xff] %v4635
    %5066 = vst [vmem:[%s17 + $0x80] sm:$0xff] %v4635
    %5067 = vst [vmem:[%s17 + $0x88] sm:$0xff] %v4635
    %5068 = vst [vmem:[%s17 + $0x90] sm:$0xff] %v4635
    %5069 = vst [vmem:[%s17 + $0x98] sm:$0xff] %v4635
    %5070 = vst [vmem:[%s17 + $0xa0] sm:$0xff] %v4635
    %5071 = vst [vmem:[%s17 + $0xa8] sm:$0xff] %v4635
    %5072 = vst [vmem:[%s17 + $0xb0] sm:$0xff] %v4635
    %5073 = vst [vmem:[%s17 + $0xb8] sm:$0xff] %v4635
    %5074 = vst [vmem:[%s17 + $0xc0] sm:$0xff] %v4635
    %5075 = vst [vmem:[%s17 + $0xc8] sm:$0xff] %v4635
    %5076 = vst [vmem:[%s17 + $0xd0] sm:$0xff] %v4635
    %5077 = vst [vmem:[%s17 + $0xd8] sm:$0xff] %v4635
    %5078 = vst [vmem:[%s17 + $0xe0] sm:$0xff] %v4635
    %5079 = vst [vmem:[%s17 + $0xe8] sm:$0xff] %v4635
    %5080 = vst [vmem:[%s17 + $0xf0] sm:$0xff] %v4635
    %5081 = vst [vmem:[%s17 + $0xf8] sm:$0xff] %v4635
    %5082 = vst [vmem:[%s17 + $0x100] sm:$0xff] %v4635
    %5083 = vst [vmem:[%s17 + $0x108] sm:$0xff] %v4635
    %5084 = vst [vmem:[%s17 + $0x110] sm:$0xff] %v4635
    %5085 = vst [vmem:[%s17 + $0x118] sm:$0xff] %v4635
    %5086 = vst [vmem:[%s17 + $0x120] sm:$0xff] %v4635
    %5087 = vst [vmem:[%s17 + $0x128] sm:$0xff] %v4635
    %5088 = vst [vmem:[%s17 + $0x130] sm:$0xff] %v4635
    %5089 = vst [vmem:[%s17 + $0x138] sm:$0xff] %v4635
    %5090 = vst [vmem:[%s17 + $0x140] sm:$0xff] %v4635
    %5091 = vst [vmem:[%s17 + $0x148] sm:$0xff] %v4635
    %5092 = vst [vmem:[%s17 + $0x150] sm:$0xff] %v4635
    %5093 = vst [vmem:[%s17 + $0x158] sm:$0xff] %v4635
    %5094 = vst [vmem:[%s17 + $0x160] sm:$0xff] %v4635
    %5095 = vst [vmem:[%s17 + $0x168] sm:$0xff] %v4635
    %5096 = vst [vmem:[%s17 + $0x170] sm:$0xff] %v4635
    %5097 = vst [vmem:[%s17 + $0x178] sm:$0xff] %v4635
    %5098 = vst [vmem:[%s17 + $0x180] sm:$0xff] %v4635
    %5099 = vst [vmem:[%s17 + $0x188] sm:$0xff] %v4635
    %5100 = vst [vmem:[%s17 + $0x190] sm:$0xff] %v4635
    %5101 = vst [vmem:[%s17 + $0x198] sm:$0xff] %v4635
    %5102 = vst [vmem:[%s17 + $0x1a0] sm:$0xff] %v4635
    %5103 = vst [vmem:[%s17 + $0x1a8] sm:$0xff] %v4635
    %5104 = vst [vmem:[%s17 + $0x1b0] sm:$0xff] %v4635
    %5105 = vst [vmem:[%s17 + $0x1b8] sm:$0xff] %v4635
    %5106 = vst [vmem:[%s17 + $0x1c0] sm:$0xff] %v4635
    %5107 = vst [vmem:[%s17 + $0x1c8] sm:$0xff] %v4635
    %5108 = vst [vmem:[%s17 + $0x1d0] sm:$0xff] %v4635
    %5109 = vst [vmem:[%s17 + $0x1d8] sm:$0xff] %v4635
    %5110 = vst [vmem:[%s17 + $0x1e0] sm:$0xff] %v4635
    %5111 = vst [vmem:[%s17 + $0x1e8] sm:$0xff] %v4635
    %5112 = vst [vmem:[%s17 + $0x1f0] sm:$0xff] %v4635
    %5113 = vst [vmem:[%s17 + $0x1f8] sm:$0xff] %v4635
    %5114 = vst [vmem:[%s17 + $0x200] sm:$0xff] %v4635
    %5115 = vst [vmem:[%s17 + $0x208] sm:$0xff] %v4635
    %5116 = vst [vmem:[%s17 + $0x210] sm:$0xff] %v4635
    %5117 = vst [vmem:[%s17 + $0x218] sm:$0xff] %v4635
    %5118 = vst [vmem:[%s17 + $0x220] sm:$0xff] %v4635
    %5119 = vst [vmem:[%s17 + $0x228] sm:$0xff] %v4635
    %5120 = vst [vmem:[%s17 + $0x230] sm:$0xff] %v4635
    %5121 = vst [vmem:[%s17 + $0x238] sm:$0xff] %v4635
    %5122 = vst [vmem:[%s17 + $0x240] sm:$0xff] %v4635
    %5123 = vst [vmem:[%s17 + $0x248] sm:$0xff] %v4635
    %5124 = vst [vmem:[%s17 + $0x250] sm:$0xff] %v4635
    %5125 = vst [vmem:[%s17 + $0x258] sm:$0xff] %v4635
    %5126 = vst [vmem:[%s17 + $0x260] sm:$0xff] %v4635
    %5127 = vst [vmem:[%s17 + $0x268] sm:$0xff] %v4635
    %5128 = vst [vmem:[%s17 + $0x270] sm:$0xff] %v4635
    %5129 = vst [vmem:[%s17 + $0x278] sm:$0xff] %v4635
    %5130 = vst [vmem:[%s17 + $0x280] sm:$0xff] %v4635
    %5131 = vst [vmem:[%s17 + $0x288] sm:$0xff] %v4635
    %5132 = vst [vmem:[%s17 + $0x290] sm:$0xff] %v4635
    %5133 = vst [vmem:[%s17 + $0x298] sm:$0xff] %v4635
    %5134 = vst [vmem:[%s17 + $0x2a0] sm:$0xff] %v4635
    %5135 = vst [vmem:[%s17 + $0x2a8] sm:$0xff] %v4635
    %5136 = vst [vmem:[%s17 + $0x2b0] sm:$0xff] %v4635
    %5137 = vst [vmem:[%s17 + $0x2b8] sm:$0xff] %v4635
    %5138 = vst [vmem:[%s17 + $0x2c0] sm:$0xff] %v4635
    %5139 = vst [vmem:[%s17 + $0x2c8] sm:$0xff] %v4635
    %5140 = vst [vmem:[%s17 + $0x2d0] sm:$0xff] %v4635
    %5141 = vst [vmem:[%s17 + $0x2d8] sm:$0xff] %v4635
    %5142 = vst [vmem:[%s17 + $0x2e0] sm:$0xff] %v4635
    %5143 = vst [vmem:[%s17 + $0x2e8] sm:$0xff] %v4635
    %5144 = vst [vmem:[%s17 + $0x2f0] sm:$0xff] %v4635
    %5145 = vst [vmem:[%s17 + $0x2f8] sm:$0xff] %v4635
    %5146 = vst [vmem:[%s17 + $0x300] sm:$0xff] %v4635
    %5147 = vst [vmem:[%s17 + $0x308] sm:$0xff] %v4635
    %5148 = vst [vmem:[%s17 + $0x310] sm:$0xff] %v4635
    %5149 = vst [vmem:[%s17 + $0x318] sm:$0xff] %v4635
    %5150 = vst [vmem:[%s17 + $0x320] sm:$0xff] %v4635
    %5151 = vst [vmem:[%s17 + $0x328] sm:$0xff] %v4635
    %5152 = vst [vmem:[%s17 + $0x330] sm:$0xff] %v4635
    %5153 = vst [vmem:[%s17 + $0x338] sm:$0xff] %v4635
    %5154 = vst [vmem:[%s17 + $0x340] sm:$0xff] %v4635
    %5155 = vst [vmem:[%s17 + $0x348] sm:$0xff] %v4635
    %5156 = vst [vmem:[%s17 + $0x350] sm:$0xff] %v4635
    %5157 = vst [vmem:[%s17 + $0x358] sm:$0xff] %v4635
    %5158 = vst [vmem:[%s17 + $0x360] sm:$0xff] %v4635
    %5159 = vst [vmem:[%s17 + $0x368] sm:$0xff] %v4635
    %5160 = vst [vmem:[%s17 + $0x370] sm:$0xff] %v4635
    %5161 = vst [vmem:[%s17 + $0x378] sm:$0xff] %v4635
    %5162 = vst [vmem:[%s17 + $0x380] sm:$0xff] %v4635
    %5163 = vst [vmem:[%s17 + $0x388] sm:$0xff] %v4635
    %5164 = vst [vmem:[%s17 + $0x390] sm:$0xff] %v4635
    %5165 = vst [vmem:[%s17 + $0x398] sm:$0xff] %v4635
    %5166 = vst [vmem:[%s17 + $0x3a0] sm:$0xff] %v4635
    %5167 = vst [vmem:[%s17 + $0x3a8] sm:$0xff] %v4635
    %5168 = vst [vmem:[%s17 + $0x3b0] sm:$0xff] %v4635
    %5169 = vst [vmem:[%s17 + $0x3b8] sm:$0xff] %v4635
    %5170 = vst [vmem:[%s17 + $0x3c0] sm:$0xff] %v4635
    %5171 = vst [vmem:[%s17 + $0x3c8] sm:$0xff] %v4635
    %5172 = vst [vmem:[%s17 + $0x3d0] sm:$0xff] %v4635
    %5173 = vst [vmem:[%s17 + $0x3d8] sm:$0xff] %v4635
    %5174 = vst [vmem:[%s17 + $0x3e0] sm:$0xff] %v4635
    %5175 = vst [vmem:[%s17 + $0x3e8] sm:$0xff] %v4635
    %5176 = vst [vmem:[%s17 + $0x3f0] sm:$0xff] %v4635
    %5177 = vst [vmem:[%s17 + $0x3f8] sm:$0xff] %v4635
    // Predicated region
    $region74: #{custom_clip_forward.5} parent=1 // pred_check
      _
    $region75: #{custom_clip_forward.5} parent=1 // pred_check_branch
      %5179 = sbr.rel (0) target = $region77
    $region76: #{custom_clip_forward.5} parent=1 // pred_region
      _
    $region77: #{custom_clip_forward.5} parent=1 // pred_fallthru
      _
    // Predicated region
    $region78: #{custom_clip_forward.5} parent=1 // pred_check
      _
    $region79: #{custom_clip_forward.5} parent=1 // pred_check_branch
      %5181 = sbr.rel (0) target = $region81
    $region80: #{custom_clip_forward.5} parent=1 // pred_region
      _
    $region81: #{custom_clip_forward.5} parent=1 // pred_fallthru
      _
    // Predicated region
    $region82: #{custom_clip_forward.5} parent=1 // pred_check
      _
    $region83: #{custom_clip_forward.5} parent=1 // pred_check_branch
      %5183 = sbr.rel (0) target = $region85
    $region84: #{custom_clip_forward.5} parent=1 // pred_region
      _
    $region85: #{custom_clip_forward.5} parent=1 // pred_fallthru
      _
    // Predicated region
    $region86: #{custom_clip_forward.5} parent=1 // pred_check
      _
    $region87: #{custom_clip_forward.5} parent=1 // pred_check_branch
      %5185 = sbr.rel (0) target = $region89
    $region88: #{custom_clip_forward.5} parent=1 // pred_region
      _
    $region89: #{custom_clip_forward.5} parent=1 // pred_fallthru
      _
    %5186 = vsyncpa [#allocation4], 1
    %5187 = vsyncpa [#allocation6], 1

</llo_original>
